<compile_context>
chip_gen: v5e
topology: v5e:2x2
jax: 0.10.0
libtpu: 0.0.40
codegen_flags: <defaults>
</compile_context>

<pallas_src>
import functools

import numpy as np
import jax
import jax.numpy as jnp
from jax.experimental import pallas as pl
from jax.experimental.pallas import tpu as pltpu

CIN, C1, C2, C3, COUT = 3, 64, 128, 128, 3

# Explicit scoped-VMEM limit (v5e default is 16 MiB); per-step footprint here
# is ~2-3 MB at the test shapes, comfortably below every generation's VMEM.
_VMEM_LIMIT = 32 * 1024 * 1024


def _tap_shifts_and_masks(H, W):
    """Lane-roll amount and 0/1 validity mask for each of the 9 conv taps.

    For output pixel p and tap (dh, dw), the needed input pixel is
    p + (dh-1)*W + (dw-1); rolling the flat (C, H*W) activation by that amount
    along lanes and zeroing out-of-image contributions reproduces 3x3 conv
    with zero padding=1.
    """
    HW = H * W
    r = np.arange(H)[:, None]
    c = np.arange(W)[None, :]
    shifts, masks = [], []
    for dh in range(3):
        for dw in range(3):
            s = (dh - 1) * W + (dw - 1)
            shifts.append(int((-s) % HW))
            valid = ((r + dh - 1 >= 0) & (r + dh - 1 < H) &
                     (c + dw - 1 >= 0) & (c + dw - 1 < W))
            masks.append(valid.reshape(HW))
    return tuple(shifts), np.stack(masks).astype(np.float32)


# ---------------------------------------------------------------------------
# Fused kernel: one batch image per grid step.
# ---------------------------------------------------------------------------
def _deblur_kernel(x_ref, mask_ref,
                   w1_ref, b1_ref, w2_ref, b2_ref, w3_ref, b3_ref,
                   w4_ref, b4_ref, sw1_ref, sw2_ref,
                   o_ref,
                   cols1_ref, cols_ref, *, H, W, shifts):
    """Refs (per grid step):
      x_ref    : (1, 3, HW)    f32   NCHW input, spatial flattened onto lanes
      mask_ref : (9, HW)       f32   per-tap border validity masks
      w1_ref   : (64, 27)      bf16  conv1 weights, transposed im2col layout
      w2_ref   : (128, 576)    bf16  conv2
      w3_ref   : (128, 1152)   bf16  conv3
      w4_ref   : (9, 8, 128)   bf16  conv4 per-tap, Cout padded 3 -> 8
      b*_ref   : (Cout, 1)     f32   biases
      sw1_ref  : (8, 128)      f32   SE Linear(128->8) weight (PyTorch layout)
      sw2_ref  : (128, 8)      f32   SE Linear(8->128) weight
      o_ref    : (1, 3, HW)    f32   OUT, lane-dense (reshaped to NCHW outside)
      cols1_ref: (27, HW)      f32   VMEM scratch, conv1 im2col (tiny)
      cols_ref : (1152, HW)    bf16  VMEM scratch, reused for conv2/conv3 im2col
    """
    HW = H * W
    f32, bf16 = jnp.float32, jnp.bfloat16

    def tap(v, t):
        amt = shifts[t]
        rolled = v if amt == 0 else pltpu.roll(v, amt, axis=1)
        if t == 4:                      # centre tap: mask is all ones
            return rolled
        return rolled * mask_ref[t:t + 1, :]

    x0 = x_ref[0]                                            # (3, HW) f32

    # ---- conv1 (3 -> 64): single K=27 matmul. ----
    for t in range(9):
        cols1_ref[t * CIN:(t + 1) * CIN, :] = tap(x0, t)
    h1 = jnp.dot(w1_ref[...], cols1_ref[...].astype(bf16),
                 preferred_element_type=f32)
    h1 = jnp.maximum(h1 + b1_ref[...], 0.0)                  # (64, HW)

    # ---- conv2 (64 -> 128): single K=576 matmul from lane-aligned im2col. ----
    for t in range(9):
        cols_ref[t * C1:(t + 1) * C1, :] = tap(h1, t).astype(bf16)
    h2 = jnp.dot(w2_ref[...], cols_ref[0:9 * C1, :],
                 preferred_element_type=f32)
    h2 = jnp.maximum(h2 + b2_ref[...], 0.0)                  # (128, HW)

    # ---- SE block, fully in-kernel (squeeze + 2 tiny FCs + sigmoid). ----
    m = jnp.sum(h2, axis=1, keepdims=True) * (1.0 / HW)      # (128, 1)
    m8 = jnp.broadcast_to(m, (C2, 8))                        # lane-replicated
    y1 = jnp.maximum(jnp.dot(sw1_ref[...], m8, preferred_element_type=f32), 0.0)
    y2 = jnp.dot(sw2_ref[...], y1, preferred_element_type=f32)
    scale = jax.nn.sigmoid(y2[:, 0:1])                       # (128, 1)
    h2s = h2 * scale

    # ---- conv3 (128 -> 128): single K=1152 matmul (scratch reused). ----
    for t in range(9):
        cols_ref[t * C2:(t + 1) * C2, :] = tap(h2s, t).astype(bf16)
    h3 = jnp.dot(w3_ref[...], cols_ref[...], preferred_element_type=f32)
    h3 = jnp.maximum(h3 + b3_ref[...], 0.0)                  # (128, HW)

    # ---- conv4 (128 -> 3, padded to 8): per-tap matmuls, no second im2col.
    #      Masks applied to the small (8, HW) result; residual add fused. ----
    out = jnp.zeros((8, HW), f32)
    for t in range(9):
        amt = shifts[t]
        rolled = h3 if amt == 0 else pltpu.roll(h3, amt, axis=1)
        contrib = jnp.dot(w4_ref[t], rolled.astype(bf16),
                          preferred_element_type=f32)        # (8, HW)
        if t != 4:
            contrib = contrib * mask_ref[t:t + 1, :]
        out = out + contrib

    # Lane-dense store: (3, HW) rows, HW on lanes.
    o_ref[0] = out[0:COUT, :] + b4_ref[...] + x0


# ---------------------------------------------------------------------------
# Parameters + forward
# ---------------------------------------------------------------------------
def init_params(key):
    """Deterministic synthetic parameters, shapes matching DeblurHighFreqNet."""
    def conv_w(k, cin, cout):
        scale = 1.0 / np.sqrt(9.0 * cin)
        return jax.random.normal(k, (3, 3, cin, cout), jnp.float32) * scale

    def conv_b(k, cout):
        return jax.random.normal(k, (cout,), jnp.float32) * 0.01

    ks = jax.random.split(key, 10)
    return {
        "conv1_w": conv_w(ks[0], CIN, C1), "conv1_b": conv_b(ks[1], C1),
        "conv2_w": conv_w(ks[2], C1, C2),  "conv2_b": conv_b(ks[3], C2),
        "conv3_w": conv_w(ks[4], C2, C3),  "conv3_b": conv_b(ks[5], C3),
        "conv4_w": conv_w(ks[6], C3, COUT), "conv4_b": conv_b(ks[7], COUT),
        # PyTorch-native Linear weight layouts: (out_features, in_features).
        "se_w1": jax.random.normal(ks[8], (C2 // 16, C2), jnp.float32) / np.sqrt(C2),
        "se_w2": jax.random.normal(ks[9], (C2, C2 // 16), jnp.float32) / np.sqrt(C2 // 16),
    }


def _prepare_params(params):
    """Kernel-side layout: bf16 conv weights in transposed-im2col form
    (Cout, 9*Cin); conv4 per-tap (9, 8, 128) with Cout zero-padded 3 -> 8;
    f32 biases as (Cout, 1); SE weights f32 in PyTorch-native orientation."""
    w4 = params["conv4_w"].reshape(9, C3, COUT)
    w4t = jnp.transpose(w4, (0, 2, 1))                       # (9, 3, 128)
    w4t = jnp.pad(w4t, ((0, 0), (0, 8 - COUT), (0, 0)))      # (9, 8, 128)
    return dict(
        w1t=params["conv1_w"].reshape(9 * CIN, C1).T.astype(jnp.bfloat16),
        b1=params["conv1_b"].reshape(C1, 1).astype(jnp.float32),
        w2t=params["conv2_w"].reshape(9 * C1, C2).T.astype(jnp.bfloat16),
        b2=params["conv2_b"].reshape(C2, 1).astype(jnp.float32),
        w3t=params["conv3_w"].reshape(9 * C2, C3).T.astype(jnp.bfloat16),
        b3=params["conv3_b"].reshape(C3, 1).astype(jnp.float32),
        w4t=w4t.astype(jnp.bfloat16),
        b4=params["conv4_b"].reshape(COUT, 1).astype(jnp.float32),
        sw1=params["se_w1"].astype(jnp.float32),              # (8, 128)
        sw2=params["se_w2"].astype(jnp.float32),              # (128, 8)
    )


def deblur_forward(params, x_nchw):
    """Fused Pallas forward pass. Input/output NCHW, matching the PyTorch module."""
    N, cin, H, W = x_nchw.shape
    assert cin == CIN, cin
    HW = H * W
    assert HW % 128 == 0, "TODO(synk): pad / H-tile for non-128-multiple H*W"

    shifts, masks_np = _tap_shifts_and_masks(H, W)
    masks = jnp.asarray(masks_np)                             # (9, HW) f32
    kp = _prepare_params(params)
    # Free reshape: no host-side transpose or pad of the input.
    x_flat = x_nchw.reshape(N, CIN, HW).astype(jnp.float32)

    kernel = functools.partial(_deblur_kernel, H=H, W=W, shifts=shifts)
    out = pl.pallas_call(
        kernel,
        out_shape=jax.ShapeDtypeStruct((N, COUT, HW), jnp.float32),
        grid=(N,),
        in_specs=[
            pl.BlockSpec((1, CIN, HW), lambda n: (n, 0, 0)),      # x
            pl.BlockSpec((9, HW), lambda n: (0, 0)),              # tap masks
            pl.BlockSpec((C1, 9 * CIN), lambda n: (0, 0)),        # w1
            pl.BlockSpec((C1, 1), lambda n: (0, 0)),              # b1
            pl.BlockSpec((C2, 9 * C1), lambda n: (0, 0)),         # w2
            pl.BlockSpec((C2, 1), lambda n: (0, 0)),              # b2
            pl.BlockSpec((C3, 9 * C2), lambda n: (0, 0)),         # w3
            pl.BlockSpec((C3, 1), lambda n: (0, 0)),              # b3
            pl.BlockSpec((9, 8, C3), lambda n: (0, 0, 0)),        # w4 (per-tap)
            pl.BlockSpec((COUT, 1), lambda n: (0, 0)),            # b4
            pl.BlockSpec((8, C2), lambda n: (0, 0)),              # se_w1
            pl.BlockSpec((C2, 8), lambda n: (0, 0)),              # se_w2
        ],
        out_specs=pl.BlockSpec((1, COUT, HW), lambda n: (n, 0, 0)),
        scratch_shapes=[pltpu.VMEM((9 * CIN, HW), jnp.float32),   # conv1 im2col
                        pltpu.VMEM((9 * C2, HW), jnp.bfloat16)],  # conv2/3 im2col
        compiler_params=pltpu.CompilerParams(
            dimension_semantics=("parallel",),
            vmem_limit_bytes=_VMEM_LIMIT),
    )(x_flat, masks, kp["w1t"], kp["b1"], kp["w2t"], kp["b2"],
      kp["w3t"], kp["b3"], kp["w4t"], kp["b4"], kp["sw1"], kp["sw2"])
    return out.reshape(N, COUT, H, W)


# ---------------------------------------------------------------------------
# Reference (lax convs) with the same bf16 operand casts as the Pallas path:
# differences vs the kernel are accumulation order only.
# ---------------------------------------------------------------------------
def deblur_forward_ref(params, x_nchw):
    x = jnp.transpose(x_nchw, (0, 2, 3, 1)).astype(jnp.float32)   # NHWC

    def conv(v, w, b):
        y = jax.lax.conv_general_dilated(
            v.astype(jnp.bfloat16), w.astype(jnp.bfloat16), (1, 1), "SAME",
            dimension_numbers=("NHWC", "HWIO", "NHWC"),
            preferred_element_type=jnp.float32)
        return y + b.reshape(1, 1, 1, -1)

    h1 = jnp.maximum(conv(x, params["conv1_w"], params["conv1_b"]), 0.0)
    h2 = jnp.maximum(conv(h1, params["conv2_w"], params["conv2_b"]), 0.0)
    m = jnp.mean(h2, axis=(1, 2))                                 # (N, 128)
    y1 = jnp.maximum(m @ params["se_w1"].T, 0.0)                  # (N, 8)
    s = jax.nn.sigmoid(y1 @ params["se_w2"].T)                    # (N, 128)
    h3 = jnp.maximum(conv(h2 * s[:, None, None, :],
                          params["conv3_w"], params["conv3_b"]), 0.0)
    out = conv(h3, params["conv4_w"], params["conv4_b"])
    return jnp.transpose(x + out, (0, 3, 1, 2))                   # NCHW


if __name__ == "__main__":
    key = jax.random.PRNGKey(0)
    pkey, xkey = jax.random.split(key)
    params = init_params(pkey)

    # NCHW input, matching the PyTorch module's convention.
    x = jax.random.normal(xkey, (2, 3, 16, 16), jnp.float32)

    fwd = jax.jit(deblur_forward)
    out = jax.block_until_ready(fwd(params, x))
    ref = jax.block_until_ready(deblur_forward_ref(params, x))

    assert out.shape == (2, 3, 16, 16), out.shape
    max_err = float(jnp.max(jnp.abs(out - ref)))
    # Tolerance covers bf16 double-rounding divergence between the two paths;
    # real bugs would show up as O(1) errors.
    assert jnp.allclose(out, ref, rtol=2e-2, atol=2e-2), max_err

    print("KERNEL_OK")
</pallas_src>

<mosaic_0001>
module attributes {stable_mosaic.version = 11 : i64} {
  func.func @_deblur_kernel(%arg0: i32, %arg1: memref<1x3x256xf32, #tpu.memory_space<vmem>>, %arg2: memref<9x256xf32, #tpu.memory_space<vmem>>, %arg3: memref<64x27xbf16, #tpu.memory_space<vmem>>, %arg4: memref<64x1xf32, #tpu.memory_space<vmem>>, %arg5: memref<128x576xbf16, #tpu.memory_space<vmem>>, %arg6: memref<128x1xf32, #tpu.memory_space<vmem>>, %arg7: memref<128x1152xbf16, #tpu.memory_space<vmem>>, %arg8: memref<128x1xf32, #tpu.memory_space<vmem>>, %arg9: memref<9x8x128xbf16, #tpu.memory_space<vmem>>, %arg10: memref<3x1xf32, #tpu.memory_space<vmem>>, %arg11: memref<8x128xf32, #tpu.memory_space<vmem>>, %arg12: memref<128x8xf32, #tpu.memory_space<vmem>>, %arg13: memref<1x3x256xf32, #tpu.memory_space<vmem>>, %arg14: memref<27x256xf32, #tpu.memory_space<vmem>>, %arg15: memref<1152x256xbf16, #tpu.memory_space<vmem>>) attributes {dimension_semantics = [#tpu.dimension_semantics<parallel>], iteration_bounds = array<i64: 2>, scalar_prefetch = 0 : i64, scratch_operands = 2 : i64, tpu.core_type = #tpu.core_type<tc>, window_params = [{transform_indices = @transform_0, window_bounds = array<i64: 1, 3, 256>}, {pipeline_mode = #tpu.pipeline_mode<synchronous>, transform_indices = @transform_1, window_bounds = array<i64: 9, 256>}, {pipeline_mode = #tpu.pipeline_mode<synchronous>, transform_indices = @transform_2, window_bounds = array<i64: 64, 27>}, {pipeline_mode = #tpu.pipeline_mode<synchronous>, transform_indices = @transform_3, window_bounds = array<i64: 64, 1>}, {pipeline_mode = #tpu.pipeline_mode<synchronous>, transform_indices = @transform_4, window_bounds = array<i64: 128, 576>}, {pipeline_mode = #tpu.pipeline_mode<synchronous>, transform_indices = @transform_5, window_bounds = array<i64: 128, 1>}, {pipeline_mode = #tpu.pipeline_mode<synchronous>, transform_indices = @transform_6, window_bounds = array<i64: 128, 1152>}, {pipeline_mode = #tpu.pipeline_mode<synchronous>, transform_indices = @transform_7, window_bounds = array<i64: 128, 1>}, {pipeline_mode = #tpu.pipeline_mode<synchronous>, transform_indices = @transform_8, window_bounds = array<i64: 9, 8, 128>}, {pipeline_mode = #tpu.pipeline_mode<synchronous>, transform_indices = @transform_9, window_bounds = array<i64: 3, 1>}, {pipeline_mode = #tpu.pipeline_mode<synchronous>, transform_indices = @transform_10, window_bounds = array<i64: 8, 128>}, {pipeline_mode = #tpu.pipeline_mode<synchronous>, transform_indices = @transform_11, window_bounds = array<i64: 128, 8>}, {transform_indices = @transform_12, window_bounds = array<i64: 1, 3, 256>}]} {
    %c0 = arith.constant 0 : index
    %c0_0 = arith.constant 0 : index
    %c0_1 = arith.constant 0 : index
    %0 = vector.load %arg1[%c0, %c0_0, %c0_1] : memref<1x3x256xf32, #tpu.memory_space<vmem>>, vector<1x3x256xf32>
    %1 = vector.shape_cast %0 : vector<1x3x256xf32> to vector<3x256xf32>
    %c17_i32 = arith.constant 17 : i32
    %2 = tpu.dynamic_rotate %1 by %c17_i32 dim 1 : vector<3x256xf32>, i32 -> vector<3x256xf32>
    %c0_2 = arith.constant 0 : index
    %c0_3 = arith.constant 0 : index
    %3 = vector.load %arg2[%c0_2, %c0_3] : memref<9x256xf32, #tpu.memory_space<vmem>>, vector<1x256xf32>
    %4 = vector.broadcast %3 : vector<1x256xf32> to vector<3x256xf32>
    %5 = arith.mulf %2, %4 : vector<3x256xf32>
    %c0_4 = arith.constant 0 : index
    %c0_5 = arith.constant 0 : index
    %6 = vector.load %arg14[%c0_4, %c0_5] : memref<27x256xf32, #tpu.memory_space<vmem>>, vector<3x256xf32>
    tpu.vector_store %arg14[%c0_4, %c0_5], %5 {strides = array<i32>} : memref<27x256xf32, #tpu.memory_space<vmem>>, vector<3x256xf32>,
    %c16_i32 = arith.constant 16 : i32
    %7 = tpu.dynamic_rotate %1 by %c16_i32 dim 1 : vector<3x256xf32>, i32 -> vector<3x256xf32>
    %c1 = arith.constant 1 : index
    %c0_6 = arith.constant 0 : index
    %8 = vector.load %arg2[%c1, %c0_6] : memref<9x256xf32, #tpu.memory_space<vmem>>, vector<1x256xf32>
    %9 = vector.broadcast %8 : vector<1x256xf32> to vector<3x256xf32>
    %10 = arith.mulf %7, %9 : vector<3x256xf32>
    %c3 = arith.constant 3 : index
    %c0_7 = arith.constant 0 : index
    %11 = vector.load %arg14[%c3, %c0_7] : memref<27x256xf32, #tpu.memory_space<vmem>>, vector<3x256xf32>
    tpu.vector_store %arg14[%c3, %c0_7], %10 {strides = array<i32>} : memref<27x256xf32, #tpu.memory_space<vmem>>, vector<3x256xf32>,
    %c15_i32 = arith.constant 15 : i32
    %12 = tpu.dynamic_rotate %1 by %c15_i32 dim 1 : vector<3x256xf32>, i32 -> vector<3x256xf32>
    %c2 = arith.constant 2 : index
    %c0_8 = arith.constant 0 : index
    %13 = vector.load %arg2[%c2, %c0_8] : memref<9x256xf32, #tpu.memory_space<vmem>>, vector<1x256xf32>
    %14 = vector.broadcast %13 : vector<1x256xf32> to vector<3x256xf32>
    %15 = arith.mulf %12, %14 : vector<3x256xf32>
    %c6 = arith.constant 6 : index
    %c0_9 = arith.constant 0 : index
    %16 = vector.load %arg14[%c6, %c0_9] : memref<27x256xf32, #tpu.memory_space<vmem>>, vector<3x256xf32>
    tpu.vector_store %arg14[%c6, %c0_9], %15 {strides = array<i32>} : memref<27x256xf32, #tpu.memory_space<vmem>>, vector<3x256xf32>,
    %c1_i32 = arith.constant 1 : i32
    %17 = tpu.dynamic_rotate %1 by %c1_i32 dim 1 : vector<3x256xf32>, i32 -> vector<3x256xf32>
    %c3_10 = arith.constant 3 : index
    %c0_11 = arith.constant 0 : index
    %18 = vector.load %arg2[%c3_10, %c0_11] : memref<9x256xf32, #tpu.memory_space<vmem>>, vector<1x256xf32>
    %19 = vector.broadcast %18 : vector<1x256xf32> to vector<3x256xf32>
    %20 = arith.mulf %17, %19 : vector<3x256xf32>
    %c9 = arith.constant 9 : index
    %c0_12 = arith.constant 0 : index
    %21 = vector.load %arg14[%c9, %c0_12] : memref<27x256xf32, #tpu.memory_space<vmem>>, vector<3x256xf32>
    tpu.vector_store %arg14[%c9, %c0_12], %20 {strides = array<i32>} : memref<27x256xf32, #tpu.memory_space<vmem>>, vector<3x256xf32>,
    %c12 = arith.constant 12 : index
    %c0_13 = arith.constant 0 : index
    %22 = vector.load %arg14[%c12, %c0_13] : memref<27x256xf32, #tpu.memory_space<vmem>>, vector<3x256xf32>
    tpu.vector_store %arg14[%c12, %c0_13], %1 {strides = array<i32>} : memref<27x256xf32, #tpu.memory_space<vmem>>, vector<3x256xf32>,
    %c255_i32 = arith.constant 255 : i32
    %23 = tpu.dynamic_rotate %1 by %c255_i32 dim 1 : vector<3x256xf32>, i32 -> vector<3x256xf32>
    %c5 = arith.constant 5 : index
    %c0_14 = arith.constant 0 : index
    %24 = vector.load %arg2[%c5, %c0_14] : memref<9x256xf32, #tpu.memory_space<vmem>>, vector<1x256xf32>
    %25 = vector.broadcast %24 : vector<1x256xf32> to vector<3x256xf32>
    %26 = arith.mulf %23, %25 : vector<3x256xf32>
    %c15 = arith.constant 15 : index
    %c0_15 = arith.constant 0 : index
    %27 = vector.load %arg14[%c15, %c0_15] : memref<27x256xf32, #tpu.memory_space<vmem>>, vector<3x256xf32>
    tpu.vector_store %arg14[%c15, %c0_15], %26 {strides = array<i32>} : memref<27x256xf32, #tpu.memory_space<vmem>>, vector<3x256xf32>,
    %c241_i32 = arith.constant 241 : i32
    %28 = tpu.dynamic_rotate %1 by %c241_i32 dim 1 : vector<3x256xf32>, i32 -> vector<3x256xf32>
    %c6_16 = arith.constant 6 : index
    %c0_17 = arith.constant 0 : index
    %29 = vector.load %arg2[%c6_16, %c0_17] : memref<9x256xf32, #tpu.memory_space<vmem>>, vector<1x256xf32>
    %30 = vector.broadcast %29 : vector<1x256xf32> to vector<3x256xf32>
    %31 = arith.mulf %28, %30 : vector<3x256xf32>
    %c18 = arith.constant 18 : index
    %c0_18 = arith.constant 0 : index
    %32 = vector.load %arg14[%c18, %c0_18] : memref<27x256xf32, #tpu.memory_space<vmem>>, vector<3x256xf32>
    tpu.vector_store %arg14[%c18, %c0_18], %31 {strides = array<i32>} : memref<27x256xf32, #tpu.memory_space<vmem>>, vector<3x256xf32>,
    %c240_i32 = arith.constant 240 : i32
    %33 = tpu.dynamic_rotate %1 by %c240_i32 dim 1 : vector<3x256xf32>, i32 -> vector<3x256xf32>
    %c7 = arith.constant 7 : index
    %c0_19 = arith.constant 0 : index
    %34 = vector.load %arg2[%c7, %c0_19] : memref<9x256xf32, #tpu.memory_space<vmem>>, vector<1x256xf32>
    %35 = vector.broadcast %34 : vector<1x256xf32> to vector<3x256xf32>
    %36 = arith.mulf %33, %35 : vector<3x256xf32>
    %c21 = arith.constant 21 : index
    %c0_20 = arith.constant 0 : index
    %37 = vector.load %arg14[%c21, %c0_20] : memref<27x256xf32, #tpu.memory_space<vmem>>, vector<3x256xf32>
    tpu.vector_store %arg14[%c21, %c0_20], %36 {strides = array<i32>} : memref<27x256xf32, #tpu.memory_space<vmem>>, vector<3x256xf32>,
    %c239_i32 = arith.constant 239 : i32
    %38 = tpu.dynamic_rotate %1 by %c239_i32 dim 1 : vector<3x256xf32>, i32 -> vector<3x256xf32>
    %c8 = arith.constant 8 : index
    %c0_21 = arith.constant 0 : index
    %39 = vector.load %arg2[%c8, %c0_21] : memref<9x256xf32, #tpu.memory_space<vmem>>, vector<1x256xf32>
    %40 = vector.broadcast %39 : vector<1x256xf32> to vector<3x256xf32>
    %41 = arith.mulf %38, %40 : vector<3x256xf32>
    %c24 = arith.constant 24 : index
    %c0_22 = arith.constant 0 : index
    %42 = vector.load %arg14[%c24, %c0_22] : memref<27x256xf32, #tpu.memory_space<vmem>>, vector<3x256xf32>
    tpu.vector_store %arg14[%c24, %c0_22], %41 {strides = array<i32>} : memref<27x256xf32, #tpu.memory_space<vmem>>, vector<3x256xf32>,
    %c0_23 = arith.constant 0 : index
    %c0_24 = arith.constant 0 : index
    %43 = vector.load %arg3[%c0_23, %c0_24] : memref<64x27xbf16, #tpu.memory_space<vmem>>, vector<64x27xbf16>
    %c0_25 = arith.constant 0 : index
    %c0_26 = arith.constant 0 : index
    %44 = vector.load %arg14[%c0_25, %c0_26] : memref<27x256xf32, #tpu.memory_space<vmem>>, vector<27x256xf32>
    %45 = arith.truncf %44 : vector<27x256xf32> to vector<27x256xbf16>
    %cst = arith.constant dense<0.000000e+00> : vector<64x256xf32>
    %46 = tpu.matmul %43, %45, %cst {dimension_numbers = #tpu.dot_dimension_numbers<[1], [0], [0], [1], [0, 0, 1, 1], [], []>} : vector<64x27xbf16>, vector<27x256xbf16>, vector<64x256xf32> -> vector<64x256xf32>
    %c0_27 = arith.constant 0 : index
    %c0_28 = arith.constant 0 : index
    %47 = vector.load %arg4[%c0_27, %c0_28] : memref<64x1xf32, #tpu.memory_space<vmem>>, vector<64x1xf32>
    %48 = vector.broadcast %47 : vector<64x1xf32> to vector<64x256xf32>
    %49 = arith.addf %46, %48 : vector<64x256xf32>
    %cst_29 = arith.constant 0.000000e+00 : f32
    %50 = vector.broadcast %cst_29 : f32 to vector<64x256xf32>
    %51 = arith.maximumf %49, %50 : vector<64x256xf32>
    %c17_i32_30 = arith.constant 17 : i32
    %52 = tpu.dynamic_rotate %51 by %c17_i32_30 dim 1 : vector<64x256xf32>, i32 -> vector<64x256xf32>
    %c0_31 = arith.constant 0 : index
    %c0_32 = arith.constant 0 : index
    %53 = vector.load %arg2[%c0_31, %c0_32] : memref<9x256xf32, #tpu.memory_space<vmem>>, vector<1x256xf32>
    %54 = vector.broadcast %53 : vector<1x256xf32> to vector<64x256xf32>
    %55 = arith.mulf %52, %54 : vector<64x256xf32>
    %56 = arith.truncf %55 : vector<64x256xf32> to vector<64x256xbf16>
    %c0_33 = arith.constant 0 : index
    %c0_34 = arith.constant 0 : index
    %57 = vector.load %arg15[%c0_33, %c0_34] : memref<1152x256xbf16, #tpu.memory_space<vmem>>, vector<64x256xbf16>
    tpu.vector_store %arg15[%c0_33, %c0_34], %56 {strides = array<i32>} : memref<1152x256xbf16, #tpu.memory_space<vmem>>, vector<64x256xbf16>,
    %c16_i32_35 = arith.constant 16 : i32
    %58 = tpu.dynamic_rotate %51 by %c16_i32_35 dim 1 : vector<64x256xf32>, i32 -> vector<64x256xf32>
    %c1_36 = arith.constant 1 : index
    %c0_37 = arith.constant 0 : index
    %59 = vector.load %arg2[%c1_36, %c0_37] : memref<9x256xf32, #tpu.memory_space<vmem>>, vector<1x256xf32>
    %60 = vector.broadcast %59 : vector<1x256xf32> to vector<64x256xf32>
    %61 = arith.mulf %58, %60 : vector<64x256xf32>
    %62 = arith.truncf %61 : vector<64x256xf32> to vector<64x256xbf16>
    %c64 = arith.constant 64 : index
    %c0_38 = arith.constant 0 : index
    %63 = vector.load %arg15[%c64, %c0_38] : memref<1152x256xbf16, #tpu.memory_space<vmem>>, vector<64x256xbf16>
    tpu.vector_store %arg15[%c64, %c0_38], %62 {strides = array<i32>} : memref<1152x256xbf16, #tpu.memory_space<vmem>>, vector<64x256xbf16>,
    %c15_i32_39 = arith.constant 15 : i32
    %64 = tpu.dynamic_rotate %51 by %c15_i32_39 dim 1 : vector<64x256xf32>, i32 -> vector<64x256xf32>
    %c2_40 = arith.constant 2 : index
    %c0_41 = arith.constant 0 : index
    %65 = vector.load %arg2[%c2_40, %c0_41] : memref<9x256xf32, #tpu.memory_space<vmem>>, vector<1x256xf32>
    %66 = vector.broadcast %65 : vector<1x256xf32> to vector<64x256xf32>
    %67 = arith.mulf %64, %66 : vector<64x256xf32>
    %68 = arith.truncf %67 : vector<64x256xf32> to vector<64x256xbf16>
    %c128 = arith.constant 128 : index
    %c0_42 = arith.constant 0 : index
    %69 = vector.load %arg15[%c128, %c0_42] : memref<1152x256xbf16, #tpu.memory_space<vmem>>, vector<64x256xbf16>
    tpu.vector_store %arg15[%c128, %c0_42], %68 {strides = array<i32>} : memref<1152x256xbf16, #tpu.memory_space<vmem>>, vector<64x256xbf16>,
    %c1_i32_43 = arith.constant 1 : i32
    %70 = tpu.dynamic_rotate %51 by %c1_i32_43 dim 1 : vector<64x256xf32>, i32 -> vector<64x256xf32>
    %c3_44 = arith.constant 3 : index
    %c0_45 = arith.constant 0 : index
    %71 = vector.load %arg2[%c3_44, %c0_45] : memref<9x256xf32, #tpu.memory_space<vmem>>, vector<1x256xf32>
    %72 = vector.broadcast %71 : vector<1x256xf32> to vector<64x256xf32>
    %73 = arith.mulf %70, %72 : vector<64x256xf32>
    %74 = arith.truncf %73 : vector<64x256xf32> to vector<64x256xbf16>
    %c192 = arith.constant 192 : index
    %c0_46 = arith.constant 0 : index
    %75 = vector.load %arg15[%c192, %c0_46] : memref<1152x256xbf16, #tpu.memory_space<vmem>>, vector<64x256xbf16>
    tpu.vector_store %arg15[%c192, %c0_46], %74 {strides = array<i32>} : memref<1152x256xbf16, #tpu.memory_space<vmem>>, vector<64x256xbf16>,
    %76 = arith.truncf %51 : vector<64x256xf32> to vector<64x256xbf16>
    %c256 = arith.constant 256 : index
    %c0_47 = arith.constant 0 : index
    %77 = vector.load %arg15[%c256, %c0_47] : memref<1152x256xbf16, #tpu.memory_space<vmem>>, vector<64x256xbf16>
    tpu.vector_store %arg15[%c256, %c0_47], %76 {strides = array<i32>} : memref<1152x256xbf16, #tpu.memory_space<vmem>>, vector<64x256xbf16>,
    %c255_i32_48 = arith.constant 255 : i32
    %78 = tpu.dynamic_rotate %51 by %c255_i32_48 dim 1 : vector<64x256xf32>, i32 -> vector<64x256xf32>
    %c5_49 = arith.constant 5 : index
    %c0_50 = arith.constant 0 : index
    %79 = vector.load %arg2[%c5_49, %c0_50] : memref<9x256xf32, #tpu.memory_space<vmem>>, vector<1x256xf32>
    %80 = vector.broadcast %79 : vector<1x256xf32> to vector<64x256xf32>
    %81 = arith.mulf %78, %80 : vector<64x256xf32>
    %82 = arith.truncf %81 : vector<64x256xf32> to vector<64x256xbf16>
    %c320 = arith.constant 320 : index
    %c0_51 = arith.constant 0 : index
    %83 = vector.load %arg15[%c320, %c0_51] : memref<1152x256xbf16, #tpu.memory_space<vmem>>, vector<64x256xbf16>
    tpu.vector_store %arg15[%c320, %c0_51], %82 {strides = array<i32>} : memref<1152x256xbf16, #tpu.memory_space<vmem>>, vector<64x256xbf16>,
    %c241_i32_52 = arith.constant 241 : i32
    %84 = tpu.dynamic_rotate %51 by %c241_i32_52 dim 1 : vector<64x256xf32>, i32 -> vector<64x256xf32>
    %c6_53 = arith.constant 6 : index
    %c0_54 = arith.constant 0 : index
    %85 = vector.load %arg2[%c6_53, %c0_54] : memref<9x256xf32, #tpu.memory_space<vmem>>, vector<1x256xf32>
    %86 = vector.broadcast %85 : vector<1x256xf32> to vector<64x256xf32>
    %87 = arith.mulf %84, %86 : vector<64x256xf32>
    %88 = arith.truncf %87 : vector<64x256xf32> to vector<64x256xbf16>
    %c384 = arith.constant 384 : index
    %c0_55 = arith.constant 0 : index
    %89 = vector.load %arg15[%c384, %c0_55] : memref<1152x256xbf16, #tpu.memory_space<vmem>>, vector<64x256xbf16>
    tpu.vector_store %arg15[%c384, %c0_55], %88 {strides = array<i32>} : memref<1152x256xbf16, #tpu.memory_space<vmem>>, vector<64x256xbf16>,
    %c240_i32_56 = arith.constant 240 : i32
    %90 = tpu.dynamic_rotate %51 by %c240_i32_56 dim 1 : vector<64x256xf32>, i32 -> vector<64x256xf32>
    %c7_57 = arith.constant 7 : index
    %c0_58 = arith.constant 0 : index
    %91 = vector.load %arg2[%c7_57, %c0_58] : memref<9x256xf32, #tpu.memory_space<vmem>>, vector<1x256xf32>
    %92 = vector.broadcast %91 : vector<1x256xf32> to vector<64x256xf32>
    %93 = arith.mulf %90, %92 : vector<64x256xf32>
    %94 = arith.truncf %93 : vector<64x256xf32> to vector<64x256xbf16>
    %c448 = arith.constant 448 : index
    %c0_59 = arith.constant 0 : index
    %95 = vector.load %arg15[%c448, %c0_59] : memref<1152x256xbf16, #tpu.memory_space<vmem>>, vector<64x256xbf16>
    tpu.vector_store %arg15[%c448, %c0_59], %94 {strides = array<i32>} : memref<1152x256xbf16, #tpu.memory_space<vmem>>, vector<64x256xbf16>,
    %c239_i32_60 = arith.constant 239 : i32
    %96 = tpu.dynamic_rotate %51 by %c239_i32_60 dim 1 : vector<64x256xf32>, i32 -> vector<64x256xf32>
    %c8_61 = arith.constant 8 : index
    %c0_62 = arith.constant 0 : index
    %97 = vector.load %arg2[%c8_61, %c0_62] : memref<9x256xf32, #tpu.memory_space<vmem>>, vector<1x256xf32>
    %98 = vector.broadcast %97 : vector<1x256xf32> to vector<64x256xf32>
    %99 = arith.mulf %96, %98 : vector<64x256xf32>
    %100 = arith.truncf %99 : vector<64x256xf32> to vector<64x256xbf16>
    %c512 = arith.constant 512 : index
    %c0_63 = arith.constant 0 : index
    %101 = vector.load %arg15[%c512, %c0_63] : memref<1152x256xbf16, #tpu.memory_space<vmem>>, vector<64x256xbf16>
    tpu.vector_store %arg15[%c512, %c0_63], %100 {strides = array<i32>} : memref<1152x256xbf16, #tpu.memory_space<vmem>>, vector<64x256xbf16>,
    %c0_64 = arith.constant 0 : index
    %c0_65 = arith.constant 0 : index
    %102 = vector.load %arg5[%c0_64, %c0_65] : memref<128x576xbf16, #tpu.memory_space<vmem>>, vector<128x576xbf16>
    %c0_66 = arith.constant 0 : index
    %c0_67 = arith.constant 0 : index
    %103 = vector.load %arg15[%c0_66, %c0_67] : memref<1152x256xbf16, #tpu.memory_space<vmem>>, vector<576x256xbf16>
    %cst_68 = arith.constant dense<0.000000e+00> : vector<128x256xf32>
    %104 = tpu.matmul %102, %103, %cst_68 {dimension_numbers = #tpu.dot_dimension_numbers<[1], [0], [0], [1], [0, 0, 1, 1], [], []>} : vector<128x576xbf16>, vector<576x256xbf16>, vector<128x256xf32> -> vector<128x256xf32>
    %c0_69 = arith.constant 0 : index
    %c0_70 = arith.constant 0 : index
    %105 = vector.load %arg6[%c0_69, %c0_70] : memref<128x1xf32, #tpu.memory_space<vmem>>, vector<128x1xf32>
    %106 = vector.broadcast %105 : vector<128x1xf32> to vector<128x256xf32>
    %107 = arith.addf %104, %106 : vector<128x256xf32>
    %cst_71 = arith.constant 0.000000e+00 : f32
    %108 = vector.broadcast %cst_71 : f32 to vector<128x256xf32>
    %109 = arith.maximumf %107, %108 : vector<128x256xf32>
    %cst_72 = arith.constant dense<0.000000e+00> : vector<128xf32>
    %110 = vector.multi_reduction <add>, %109, %cst_72 [1] : vector<128x256xf32> to vector<128xf32>
    %111 = vector.shape_cast %110 : vector<128xf32> to vector<128x1xf32>
    %cst_73 = arith.constant 3.906250e-03 : f32
    %112 = vector.broadcast %cst_73 : f32 to vector<128x1xf32>
    %113 = arith.mulf %111, %112 : vector<128x1xf32>
    %114 = vector.shape_cast %113 : vector<128x1xf32> to vector<128x1xf32>
    %115 = vector.broadcast %114 : vector<128x1xf32> to vector<128x8xf32>
    %c0_74 = arith.constant 0 : index
    %c0_75 = arith.constant 0 : index
    %116 = vector.load %arg11[%c0_74, %c0_75] : memref<8x128xf32, #tpu.memory_space<vmem>>, vector<8x128xf32>
    %cst_76 = arith.constant dense<0.000000e+00> : vector<8x8xf32>
    %117 = tpu.matmul %116, %115, %cst_76 {dimension_numbers = #tpu.dot_dimension_numbers<[1], [0], [0], [1], [0, 0, 1, 1], [], []>} : vector<8x128xf32>, vector<128x8xf32>, vector<8x8xf32> -> vector<8x8xf32>
    %cst_77 = arith.constant 0.000000e+00 : f32
    %118 = vector.broadcast %cst_77 : f32 to vector<8x8xf32>
    %119 = arith.maximumf %117, %118 : vector<8x8xf32>
    %c0_78 = arith.constant 0 : index
    %c0_79 = arith.constant 0 : index
    %120 = vector.load %arg12[%c0_78, %c0_79] : memref<128x8xf32, #tpu.memory_space<vmem>>, vector<128x8xf32>
    %cst_80 = arith.constant dense<0.000000e+00> : vector<128x8xf32>
    %121 = tpu.matmul %120, %119, %cst_80 {dimension_numbers = #tpu.dot_dimension_numbers<[1], [0], [0], [1], [0, 0, 1, 1], [], []>} : vector<128x8xf32>, vector<8x8xf32>, vector<128x8xf32> -> vector<128x8xf32>
    %122 = vector.extract_strided_slice %121 {offsets = [0, 0], sizes = [128, 1], strides = [1, 1]} : vector<128x8xf32> to vector<128x1xf32>
    %123 = arith.negf %122 : vector<128x1xf32>
    %124 = math.exp %123 : vector<128x1xf32>
    %cst_81 = arith.constant 1.000000e+00 : f32
    %125 = vector.broadcast %cst_81 : f32 to vector<128x1xf32>
    %126 = arith.addf %125, %124 : vector<128x1xf32>
    %127 = arith.divf %125, %126 : vector<128x1xf32>
    %128 = vector.broadcast %127 : vector<128x1xf32> to vector<128x256xf32>
    %129 = arith.mulf %109, %128 : vector<128x256xf32>
    %c17_i32_82 = arith.constant 17 : i32
    %130 = tpu.dynamic_rotate %129 by %c17_i32_82 dim 1 : vector<128x256xf32>, i32 -> vector<128x256xf32>
    %c0_83 = arith.constant 0 : index
    %c0_84 = arith.constant 0 : index
    %131 = vector.load %arg2[%c0_83, %c0_84] : memref<9x256xf32, #tpu.memory_space<vmem>>, vector<1x256xf32>
    %132 = vector.broadcast %131 : vector<1x256xf32> to vector<128x256xf32>
    %133 = arith.mulf %130, %132 : vector<128x256xf32>
    %134 = arith.truncf %133 : vector<128x256xf32> to vector<128x256xbf16>
    %c0_85 = arith.constant 0 : index
    %c0_86 = arith.constant 0 : index
    %135 = vector.load %arg15[%c0_85, %c0_86] : memref<1152x256xbf16, #tpu.memory_space<vmem>>, vector<128x256xbf16>
    tpu.vector_store %arg15[%c0_85, %c0_86], %134 {strides = array<i32>} : memref<1152x256xbf16, #tpu.memory_space<vmem>>, vector<128x256xbf16>,
    %c16_i32_87 = arith.constant 16 : i32
    %136 = tpu.dynamic_rotate %129 by %c16_i32_87 dim 1 : vector<128x256xf32>, i32 -> vector<128x256xf32>
    %c1_88 = arith.constant 1 : index
    %c0_89 = arith.constant 0 : index
    %137 = vector.load %arg2[%c1_88, %c0_89] : memref<9x256xf32, #tpu.memory_space<vmem>>, vector<1x256xf32>
    %138 = vector.broadcast %137 : vector<1x256xf32> to vector<128x256xf32>
    %139 = arith.mulf %136, %138 : vector<128x256xf32>
    %140 = arith.truncf %139 : vector<128x256xf32> to vector<128x256xbf16>
    %c128_90 = arith.constant 128 : index
    %c0_91 = arith.constant 0 : index
    %141 = vector.load %arg15[%c128_90, %c0_91] : memref<1152x256xbf16, #tpu.memory_space<vmem>>, vector<128x256xbf16>
    tpu.vector_store %arg15[%c128_90, %c0_91], %140 {strides = array<i32>} : memref<1152x256xbf16, #tpu.memory_space<vmem>>, vector<128x256xbf16>,
    %c15_i32_92 = arith.constant 15 : i32
    %142 = tpu.dynamic_rotate %129 by %c15_i32_92 dim 1 : vector<128x256xf32>, i32 -> vector<128x256xf32>
    %c2_93 = arith.constant 2 : index
    %c0_94 = arith.constant 0 : index
    %143 = vector.load %arg2[%c2_93, %c0_94] : memref<9x256xf32, #tpu.memory_space<vmem>>, vector<1x256xf32>
    %144 = vector.broadcast %143 : vector<1x256xf32> to vector<128x256xf32>
    %145 = arith.mulf %142, %144 : vector<128x256xf32>
    %146 = arith.truncf %145 : vector<128x256xf32> to vector<128x256xbf16>
    %c256_95 = arith.constant 256 : index
    %c0_96 = arith.constant 0 : index
    %147 = vector.load %arg15[%c256_95, %c0_96] : memref<1152x256xbf16, #tpu.memory_space<vmem>>, vector<128x256xbf16>
    tpu.vector_store %arg15[%c256_95, %c0_96], %146 {strides = array<i32>} : memref<1152x256xbf16, #tpu.memory_space<vmem>>, vector<128x256xbf16>,
    %c1_i32_97 = arith.constant 1 : i32
    %148 = tpu.dynamic_rotate %129 by %c1_i32_97 dim 1 : vector<128x256xf32>, i32 -> vector<128x256xf32>
    %c3_98 = arith.constant 3 : index
    %c0_99 = arith.constant 0 : index
    %149 = vector.load %arg2[%c3_98, %c0_99] : memref<9x256xf32, #tpu.memory_space<vmem>>, vector<1x256xf32>
    %150 = vector.broadcast %149 : vector<1x256xf32> to vector<128x256xf32>
    %151 = arith.mulf %148, %150 : vector<128x256xf32>
    %152 = arith.truncf %151 : vector<128x256xf32> to vector<128x256xbf16>
    %c384_100 = arith.constant 384 : index
    %c0_101 = arith.constant 0 : index
    %153 = vector.load %arg15[%c384_100, %c0_101] : memref<1152x256xbf16, #tpu.memory_space<vmem>>, vector<128x256xbf16>
    tpu.vector_store %arg15[%c384_100, %c0_101], %152 {strides = array<i32>} : memref<1152x256xbf16, #tpu.memory_space<vmem>>, vector<128x256xbf16>,
    %154 = arith.truncf %129 : vector<128x256xf32> to vector<128x256xbf16>
    %c512_102 = arith.constant 512 : index
    %c0_103 = arith.constant 0 : index
    %155 = vector.load %arg15[%c512_102, %c0_103] : memref<1152x256xbf16, #tpu.memory_space<vmem>>, vector<128x256xbf16>
    tpu.vector_store %arg15[%c512_102, %c0_103], %154 {strides = array<i32>} : memref<1152x256xbf16, #tpu.memory_space<vmem>>, vector<128x256xbf16>,
    %c255_i32_104 = arith.constant 255 : i32
    %156 = tpu.dynamic_rotate %129 by %c255_i32_104 dim 1 : vector<128x256xf32>, i32 -> vector<128x256xf32>
    %c5_105 = arith.constant 5 : index
    %c0_106 = arith.constant 0 : index
    %157 = vector.load %arg2[%c5_105, %c0_106] : memref<9x256xf32, #tpu.memory_space<vmem>>, vector<1x256xf32>
    %158 = vector.broadcast %157 : vector<1x256xf32> to vector<128x256xf32>
    %159 = arith.mulf %156, %158 : vector<128x256xf32>
    %160 = arith.truncf %159 : vector<128x256xf32> to vector<128x256xbf16>
    %c640 = arith.constant 640 : index
    %c0_107 = arith.constant 0 : index
    %161 = vector.load %arg15[%c640, %c0_107] : memref<1152x256xbf16, #tpu.memory_space<vmem>>, vector<128x256xbf16>
    tpu.vector_store %arg15[%c640, %c0_107], %160 {strides = array<i32>} : memref<1152x256xbf16, #tpu.memory_space<vmem>>, vector<128x256xbf16>,
    %c241_i32_108 = arith.constant 241 : i32
    %162 = tpu.dynamic_rotate %129 by %c241_i32_108 dim 1 : vector<128x256xf32>, i32 -> vector<128x256xf32>
    %c6_109 = arith.constant 6 : index
    %c0_110 = arith.constant 0 : index
    %163 = vector.load %arg2[%c6_109, %c0_110] : memref<9x256xf32, #tpu.memory_space<vmem>>, vector<1x256xf32>
    %164 = vector.broadcast %163 : vector<1x256xf32> to vector<128x256xf32>
    %165 = arith.mulf %162, %164 : vector<128x256xf32>
    %166 = arith.truncf %165 : vector<128x256xf32> to vector<128x256xbf16>
    %c768 = arith.constant 768 : index
    %c0_111 = arith.constant 0 : index
    %167 = vector.load %arg15[%c768, %c0_111] : memref<1152x256xbf16, #tpu.memory_space<vmem>>, vector<128x256xbf16>
    tpu.vector_store %arg15[%c768, %c0_111], %166 {strides = array<i32>} : memref<1152x256xbf16, #tpu.memory_space<vmem>>, vector<128x256xbf16>,
    %c240_i32_112 = arith.constant 240 : i32
    %168 = tpu.dynamic_rotate %129 by %c240_i32_112 dim 1 : vector<128x256xf32>, i32 -> vector<128x256xf32>
    %c7_113 = arith.constant 7 : index
    %c0_114 = arith.constant 0 : index
    %169 = vector.load %arg2[%c7_113, %c0_114] : memref<9x256xf32, #tpu.memory_space<vmem>>, vector<1x256xf32>
    %170 = vector.broadcast %169 : vector<1x256xf32> to vector<128x256xf32>
    %171 = arith.mulf %168, %170 : vector<128x256xf32>
    %172 = arith.truncf %171 : vector<128x256xf32> to vector<128x256xbf16>
    %c896 = arith.constant 896 : index
    %c0_115 = arith.constant 0 : index
    %173 = vector.load %arg15[%c896, %c0_115] : memref<1152x256xbf16, #tpu.memory_space<vmem>>, vector<128x256xbf16>
    tpu.vector_store %arg15[%c896, %c0_115], %172 {strides = array<i32>} : memref<1152x256xbf16, #tpu.memory_space<vmem>>, vector<128x256xbf16>,
    %c239_i32_116 = arith.constant 239 : i32
    %174 = tpu.dynamic_rotate %129 by %c239_i32_116 dim 1 : vector<128x256xf32>, i32 -> vector<128x256xf32>
    %c8_117 = arith.constant 8 : index
    %c0_118 = arith.constant 0 : index
    %175 = vector.load %arg2[%c8_117, %c0_118] : memref<9x256xf32, #tpu.memory_space<vmem>>, vector<1x256xf32>
    %176 = vector.broadcast %175 : vector<1x256xf32> to vector<128x256xf32>
    %177 = arith.mulf %174, %176 : vector<128x256xf32>
    %178 = arith.truncf %177 : vector<128x256xf32> to vector<128x256xbf16>
    %c1024 = arith.constant 1024 : index
    %c0_119 = arith.constant 0 : index
    %179 = vector.load %arg15[%c1024, %c0_119] : memref<1152x256xbf16, #tpu.memory_space<vmem>>, vector<128x256xbf16>
    tpu.vector_store %arg15[%c1024, %c0_119], %178 {strides = array<i32>} : memref<1152x256xbf16, #tpu.memory_space<vmem>>, vector<128x256xbf16>,
    %c0_120 = arith.constant 0 : index
    %c0_121 = arith.constant 0 : index
    %180 = vector.load %arg7[%c0_120, %c0_121] : memref<128x1152xbf16, #tpu.memory_space<vmem>>, vector<128x1152xbf16>
    %c0_122 = arith.constant 0 : index
    %c0_123 = arith.constant 0 : index
    %181 = vector.load %arg15[%c0_122, %c0_123] : memref<1152x256xbf16, #tpu.memory_space<vmem>>, vector<1152x256xbf16>
    %cst_124 = arith.constant dense<0.000000e+00> : vector<128x256xf32>
    %182 = tpu.matmul %180, %181, %cst_124 {dimension_numbers = #tpu.dot_dimension_numbers<[1], [0], [0], [1], [0, 0, 1, 1], [], []>} : vector<128x1152xbf16>, vector<1152x256xbf16>, vector<128x256xf32> -> vector<128x256xf32>
    %c0_125 = arith.constant 0 : index
    %c0_126 = arith.constant 0 : index
    %183 = vector.load %arg8[%c0_125, %c0_126] : memref<128x1xf32, #tpu.memory_space<vmem>>, vector<128x1xf32>
    %184 = vector.broadcast %183 : vector<128x1xf32> to vector<128x256xf32>
    %185 = arith.addf %182, %184 : vector<128x256xf32>
    %cst_127 = arith.constant 0.000000e+00 : f32
    %186 = vector.broadcast %cst_127 : f32 to vector<128x256xf32>
    %187 = arith.maximumf %185, %186 : vector<128x256xf32>
    %cst_128 = arith.constant 0.000000e+00 : f32
    %188 = vector.broadcast %cst_128 : f32 to vector<8x256xf32>
    %c17_i32_129 = arith.constant 17 : i32
    %189 = tpu.dynamic_rotate %187 by %c17_i32_129 dim 1 : vector<128x256xf32>, i32 -> vector<128x256xf32>
    %c0_130 = arith.constant 0 : index
    %c0_131 = arith.constant 0 : index
    %c0_132 = arith.constant 0 : index
    %190 = vector.load %arg9[%c0_130, %c0_131, %c0_132] : memref<9x8x128xbf16, #tpu.memory_space<vmem>>, vector<1x8x128xbf16>
    %191 = vector.shape_cast %190 : vector<1x8x128xbf16> to vector<8x128xbf16>
    %192 = arith.truncf %189 : vector<128x256xf32> to vector<128x256xbf16>
    %cst_133 = arith.constant dense<0.000000e+00> : vector<8x256xf32>
    %193 = tpu.matmul %191, %192, %cst_133 {dimension_numbers = #tpu.dot_dimension_numbers<[1], [0], [0], [1], [0, 0, 1, 1], [], []>} : vector<8x128xbf16>, vector<128x256xbf16>, vector<8x256xf32> -> vector<8x256xf32>
    %c0_134 = arith.constant 0 : index
    %c0_135 = arith.constant 0 : index
    %194 = vector.load %arg2[%c0_134, %c0_135] : memref<9x256xf32, #tpu.memory_space<vmem>>, vector<1x256xf32>
    %195 = vector.broadcast %194 : vector<1x256xf32> to vector<8x256xf32>
    %196 = arith.mulf %193, %195 : vector<8x256xf32>
    %197 = arith.addf %188, %196 : vector<8x256xf32>
    %c16_i32_136 = arith.constant 16 : i32
    %198 = tpu.dynamic_rotate %187 by %c16_i32_136 dim 1 : vector<128x256xf32>, i32 -> vector<128x256xf32>
    %c1_137 = arith.constant 1 : index
    %c0_138 = arith.constant 0 : index
    %c0_139 = arith.constant 0 : index
    %199 = vector.load %arg9[%c1_137, %c0_138, %c0_139] : memref<9x8x128xbf16, #tpu.memory_space<vmem>>, vector<1x8x128xbf16>
    %200 = vector.shape_cast %199 : vector<1x8x128xbf16> to vector<8x128xbf16>
    %201 = arith.truncf %198 : vector<128x256xf32> to vector<128x256xbf16>
    %cst_140 = arith.constant dense<0.000000e+00> : vector<8x256xf32>
    %202 = tpu.matmul %200, %201, %cst_140 {dimension_numbers = #tpu.dot_dimension_numbers<[1], [0], [0], [1], [0, 0, 1, 1], [], []>} : vector<8x128xbf16>, vector<128x256xbf16>, vector<8x256xf32> -> vector<8x256xf32>
    %c1_141 = arith.constant 1 : index
    %c0_142 = arith.constant 0 : index
    %203 = vector.load %arg2[%c1_141, %c0_142] : memref<9x256xf32, #tpu.memory_space<vmem>>, vector<1x256xf32>
    %204 = vector.broadcast %203 : vector<1x256xf32> to vector<8x256xf32>
    %205 = arith.mulf %202, %204 : vector<8x256xf32>
    %206 = arith.addf %197, %205 : vector<8x256xf32>
    %c15_i32_143 = arith.constant 15 : i32
    %207 = tpu.dynamic_rotate %187 by %c15_i32_143 dim 1 : vector<128x256xf32>, i32 -> vector<128x256xf32>
    %c2_144 = arith.constant 2 : index
    %c0_145 = arith.constant 0 : index
    %c0_146 = arith.constant 0 : index
    %208 = vector.load %arg9[%c2_144, %c0_145, %c0_146] : memref<9x8x128xbf16, #tpu.memory_space<vmem>>, vector<1x8x128xbf16>
    %209 = vector.shape_cast %208 : vector<1x8x128xbf16> to vector<8x128xbf16>
    %210 = arith.truncf %207 : vector<128x256xf32> to vector<128x256xbf16>
    %cst_147 = arith.constant dense<0.000000e+00> : vector<8x256xf32>
    %211 = tpu.matmul %209, %210, %cst_147 {dimension_numbers = #tpu.dot_dimension_numbers<[1], [0], [0], [1], [0, 0, 1, 1], [], []>} : vector<8x128xbf16>, vector<128x256xbf16>, vector<8x256xf32> -> vector<8x256xf32>
    %c2_148 = arith.constant 2 : index
    %c0_149 = arith.constant 0 : index
    %212 = vector.load %arg2[%c2_148, %c0_149] : memref<9x256xf32, #tpu.memory_space<vmem>>, vector<1x256xf32>
    %213 = vector.broadcast %212 : vector<1x256xf32> to vector<8x256xf32>
    %214 = arith.mulf %211, %213 : vector<8x256xf32>
    %215 = arith.addf %206, %214 : vector<8x256xf32>
    %c1_i32_150 = arith.constant 1 : i32
    %216 = tpu.dynamic_rotate %187 by %c1_i32_150 dim 1 : vector<128x256xf32>, i32 -> vector<128x256xf32>
    %c3_151 = arith.constant 3 : index
    %c0_152 = arith.constant 0 : index
    %c0_153 = arith.constant 0 : index
    %217 = vector.load %arg9[%c3_151, %c0_152, %c0_153] : memref<9x8x128xbf16, #tpu.memory_space<vmem>>, vector<1x8x128xbf16>
    %218 = vector.shape_cast %217 : vector<1x8x128xbf16> to vector<8x128xbf16>
    %219 = arith.truncf %216 : vector<128x256xf32> to vector<128x256xbf16>
    %cst_154 = arith.constant dense<0.000000e+00> : vector<8x256xf32>
    %220 = tpu.matmul %218, %219, %cst_154 {dimension_numbers = #tpu.dot_dimension_numbers<[1], [0], [0], [1], [0, 0, 1, 1], [], []>} : vector<8x128xbf16>, vector<128x256xbf16>, vector<8x256xf32> -> vector<8x256xf32>
    %c3_155 = arith.constant 3 : index
    %c0_156 = arith.constant 0 : index
    %221 = vector.load %arg2[%c3_155, %c0_156] : memref<9x256xf32, #tpu.memory_space<vmem>>, vector<1x256xf32>
    %222 = vector.broadcast %221 : vector<1x256xf32> to vector<8x256xf32>
    %223 = arith.mulf %220, %222 : vector<8x256xf32>
    %224 = arith.addf %215, %223 : vector<8x256xf32>
    %c4 = arith.constant 4 : index
    %c0_157 = arith.constant 0 : index
    %c0_158 = arith.constant 0 : index
    %225 = vector.load %arg9[%c4, %c0_157, %c0_158] : memref<9x8x128xbf16, #tpu.memory_space<vmem>>, vector<1x8x128xbf16>
    %226 = vector.shape_cast %225 : vector<1x8x128xbf16> to vector<8x128xbf16>
    %227 = arith.truncf %187 : vector<128x256xf32> to vector<128x256xbf16>
    %cst_159 = arith.constant dense<0.000000e+00> : vector<8x256xf32>
    %228 = tpu.matmul %226, %227, %cst_159 {dimension_numbers = #tpu.dot_dimension_numbers<[1], [0], [0], [1], [0, 0, 1, 1], [], []>} : vector<8x128xbf16>, vector<128x256xbf16>, vector<8x256xf32> -> vector<8x256xf32>
    %229 = arith.addf %224, %228 : vector<8x256xf32>
    %c255_i32_160 = arith.constant 255 : i32
    %230 = tpu.dynamic_rotate %187 by %c255_i32_160 dim 1 : vector<128x256xf32>, i32 -> vector<128x256xf32>
    %c5_161 = arith.constant 5 : index
    %c0_162 = arith.constant 0 : index
    %c0_163 = arith.constant 0 : index
    %231 = vector.load %arg9[%c5_161, %c0_162, %c0_163] : memref<9x8x128xbf16, #tpu.memory_space<vmem>>, vector<1x8x128xbf16>
    %232 = vector.shape_cast %231 : vector<1x8x128xbf16> to vector<8x128xbf16>
    %233 = arith.truncf %230 : vector<128x256xf32> to vector<128x256xbf16>
    %cst_164 = arith.constant dense<0.000000e+00> : vector<8x256xf32>
    %234 = tpu.matmul %232, %233, %cst_164 {dimension_numbers = #tpu.dot_dimension_numbers<[1], [0], [0], [1], [0, 0, 1, 1], [], []>} : vector<8x128xbf16>, vector<128x256xbf16>, vector<8x256xf32> -> vector<8x256xf32>
    %c5_165 = arith.constant 5 : index
    %c0_166 = arith.constant 0 : index
    %235 = vector.load %arg2[%c5_165, %c0_166] : memref<9x256xf32, #tpu.memory_space<vmem>>, vector<1x256xf32>
    %236 = vector.broadcast %235 : vector<1x256xf32> to vector<8x256xf32>
    %237 = arith.mulf %234, %236 : vector<8x256xf32>
    %238 = arith.addf %229, %237 : vector<8x256xf32>
    %c241_i32_167 = arith.constant 241 : i32
    %239 = tpu.dynamic_rotate %187 by %c241_i32_167 dim 1 : vector<128x256xf32>, i32 -> vector<128x256xf32>
    %c6_168 = arith.constant 6 : index
    %c0_169 = arith.constant 0 : index
    %c0_170 = arith.constant 0 : index
    %240 = vector.load %arg9[%c6_168, %c0_169, %c0_170] : memref<9x8x128xbf16, #tpu.memory_space<vmem>>, vector<1x8x128xbf16>
    %241 = vector.shape_cast %240 : vector<1x8x128xbf16> to vector<8x128xbf16>
    %242 = arith.truncf %239 : vector<128x256xf32> to vector<128x256xbf16>
    %cst_171 = arith.constant dense<0.000000e+00> : vector<8x256xf32>
    %243 = tpu.matmul %241, %242, %cst_171 {dimension_numbers = #tpu.dot_dimension_numbers<[1], [0], [0], [1], [0, 0, 1, 1], [], []>} : vector<8x128xbf16>, vector<128x256xbf16>, vector<8x256xf32> -> vector<8x256xf32>
    %c6_172 = arith.constant 6 : index
    %c0_173 = arith.constant 0 : index
    %244 = vector.load %arg2[%c6_172, %c0_173] : memref<9x256xf32, #tpu.memory_space<vmem>>, vector<1x256xf32>
    %245 = vector.broadcast %244 : vector<1x256xf32> to vector<8x256xf32>
    %246 = arith.mulf %243, %245 : vector<8x256xf32>
    %247 = arith.addf %238, %246 : vector<8x256xf32>
    %c240_i32_174 = arith.constant 240 : i32
    %248 = tpu.dynamic_rotate %187 by %c240_i32_174 dim 1 : vector<128x256xf32>, i32 -> vector<128x256xf32>
    %c7_175 = arith.constant 7 : index
    %c0_176 = arith.constant 0 : index
    %c0_177 = arith.constant 0 : index
    %249 = vector.load %arg9[%c7_175, %c0_176, %c0_177] : memref<9x8x128xbf16, #tpu.memory_space<vmem>>, vector<1x8x128xbf16>
    %250 = vector.shape_cast %249 : vector<1x8x128xbf16> to vector<8x128xbf16>
    %251 = arith.truncf %248 : vector<128x256xf32> to vector<128x256xbf16>
    %cst_178 = arith.constant dense<0.000000e+00> : vector<8x256xf32>
    %252 = tpu.matmul %250, %251, %cst_178 {dimension_numbers = #tpu.dot_dimension_numbers<[1], [0], [0], [1], [0, 0, 1, 1], [], []>} : vector<8x128xbf16>, vector<128x256xbf16>, vector<8x256xf32> -> vector<8x256xf32>
    %c7_179 = arith.constant 7 : index
    %c0_180 = arith.constant 0 : index
    %253 = vector.load %arg2[%c7_179, %c0_180] : memref<9x256xf32, #tpu.memory_space<vmem>>, vector<1x256xf32>
    %254 = vector.broadcast %253 : vector<1x256xf32> to vector<8x256xf32>
    %255 = arith.mulf %252, %254 : vector<8x256xf32>
    %256 = arith.addf %247, %255 : vector<8x256xf32>
    %c239_i32_181 = arith.constant 239 : i32
    %257 = tpu.dynamic_rotate %187 by %c239_i32_181 dim 1 : vector<128x256xf32>, i32 -> vector<128x256xf32>
    %c8_182 = arith.constant 8 : index
    %c0_183 = arith.constant 0 : index
    %c0_184 = arith.constant 0 : index
    %258 = vector.load %arg9[%c8_182, %c0_183, %c0_184] : memref<9x8x128xbf16, #tpu.memory_space<vmem>>, vector<1x8x128xbf16>
    %259 = vector.shape_cast %258 : vector<1x8x128xbf16> to vector<8x128xbf16>
    %260 = arith.truncf %257 : vector<128x256xf32> to vector<128x256xbf16>
    %cst_185 = arith.constant dense<0.000000e+00> : vector<8x256xf32>
    %261 = tpu.matmul %259, %260, %cst_185 {dimension_numbers = #tpu.dot_dimension_numbers<[1], [0], [0], [1], [0, 0, 1, 1], [], []>} : vector<8x128xbf16>, vector<128x256xbf16>, vector<8x256xf32> -> vector<8x256xf32>
    %c8_186 = arith.constant 8 : index
    %c0_187 = arith.constant 0 : index
    %262 = vector.load %arg2[%c8_186, %c0_187] : memref<9x256xf32, #tpu.memory_space<vmem>>, vector<1x256xf32>
    %263 = vector.broadcast %262 : vector<1x256xf32> to vector<8x256xf32>
    %264 = arith.mulf %261, %263 : vector<8x256xf32>
    %265 = arith.addf %256, %264 : vector<8x256xf32>
    %266 = vector.extract_strided_slice %265 {offsets = [0, 0], sizes = [3, 256], strides = [1, 1]} : vector<8x256xf32> to vector<3x256xf32>
    %c0_188 = arith.constant 0 : index
    %c0_189 = arith.constant 0 : index
    %267 = vector.load %arg10[%c0_188, %c0_189] : memref<3x1xf32, #tpu.memory_space<vmem>>, vector<3x1xf32>
    %268 = vector.broadcast %267 : vector<3x1xf32> to vector<3x256xf32>
    %269 = arith.addf %266, %268 : vector<3x256xf32>
    %270 = arith.addf %269, %1 : vector<3x256xf32>
    %c0_190 = arith.constant 0 : index
    %c0_191 = arith.constant 0 : index
    %c0_192 = arith.constant 0 : index
    %271 = vector.load %arg13[%c0_190, %c0_191, %c0_192] : memref<1x3x256xf32, #tpu.memory_space<vmem>>, vector<1x3x256xf32>
    %272 = vector.shape_cast %271 : vector<1x3x256xf32> to vector<3x256xf32>
    %273 = vector.shape_cast %270 : vector<3x256xf32> to vector<1x3x256xf32>
    tpu.vector_store %arg13[%c0_190, %c0_191, %c0_192], %273 {strides = array<i32>} : memref<1x3x256xf32, #tpu.memory_space<vmem>>, vector<1x3x256xf32>,
    return
  }
  func.func @transform_0(%arg0: i32) -> (i32, i32, i32) {
    %c0_i32 = arith.constant 0 : i32
    %c0_i32_0 = arith.constant 0 : i32
    %c0_i32_1 = arith.constant 0 : i32
    return %arg0, %c0_i32, %c0_i32_0 : i32, i32, i32
  }
  func.func @transform_1(%arg0: i32) -> (i32, i32) {
    %c0_i32 = arith.constant 0 : i32
    %c0_i32_0 = arith.constant 0 : i32
    %c0_i32_1 = arith.constant 0 : i32
    return %c0_i32, %c0_i32_0 : i32, i32
  }
  func.func @transform_2(%arg0: i32) -> (i32, i32) {
    %c0_i32 = arith.constant 0 : i32
    %c0_i32_0 = arith.constant 0 : i32
    %c0_i32_1 = arith.constant 0 : i32
    return %c0_i32, %c0_i32_0 : i32, i32
  }
  func.func @transform_3(%arg0: i32) -> (i32, i32) {
    %c0_i32 = arith.constant 0 : i32
    %c0_i32_0 = arith.constant 0 : i32
    %c0_i32_1 = arith.constant 0 : i32
    return %c0_i32, %c0_i32_0 : i32, i32
  }
  func.func @transform_4(%arg0: i32) -> (i32, i32) {
    %c0_i32 = arith.constant 0 : i32
    %c0_i32_0 = arith.constant 0 : i32
    %c0_i32_1 = arith.constant 0 : i32
    return %c0_i32, %c0_i32_0 : i32, i32
  }
  func.func @transform_5(%arg0: i32) -> (i32, i32) {
    %c0_i32 = arith.constant 0 : i32
    %c0_i32_0 = arith.constant 0 : i32
    %c0_i32_1 = arith.constant 0 : i32
    return %c0_i32, %c0_i32_0 : i32, i32
  }
  func.func @transform_6(%arg0: i32) -> (i32, i32) {
    %c0_i32 = arith.constant 0 : i32
    %c0_i32_0 = arith.constant 0 : i32
    %c0_i32_1 = arith.constant 0 : i32
    return %c0_i32, %c0_i32_0 : i32, i32
  }
  func.func @transform_7(%arg0: i32) -> (i32, i32) {
    %c0_i32 = arith.constant 0 : i32
    %c0_i32_0 = arith.constant 0 : i32
    %c0_i32_1 = arith.constant 0 : i32
    return %c0_i32, %c0_i32_0 : i32, i32
  }
  func.func @transform_8(%arg0: i32) -> (i32, i32, i32) {
    %c0_i32 = arith.constant 0 : i32
    %c0_i32_0 = arith.constant 0 : i32
    %c0_i32_1 = arith.constant 0 : i32
    %c0_i32_2 = arith.constant 0 : i32
    return %c0_i32, %c0_i32_0, %c0_i32_1 : i32, i32, i32
  }
  func.func @transform_9(%arg0: i32) -> (i32, i32) {
    %c0_i32 = arith.constant 0 : i32
    %c0_i32_0 = arith.constant 0 : i32
    %c0_i32_1 = arith.constant 0 : i32
    return %c0_i32, %c0_i32_0 : i32, i32
  }
  func.func @transform_10(%arg0: i32) -> (i32, i32) {
    %c0_i32 = arith.constant 0 : i32
    %c0_i32_0 = arith.constant 0 : i32
    %c0_i32_1 = arith.constant 0 : i32
    return %c0_i32, %c0_i32_0 : i32, i32
  }
  func.func @transform_11(%arg0: i32) -> (i32, i32) {
    %c0_i32 = arith.constant 0 : i32
    %c0_i32_0 = arith.constant 0 : i32
    %c0_i32_1 = arith.constant 0 : i32
    return %c0_i32, %c0_i32_0 : i32, i32
  }
  func.func @transform_12(%arg0: i32) -> (i32, i32, i32) {
    %c0_i32 = arith.constant 0 : i32
    %c0_i32_0 = arith.constant 0 : i32
    %c0_i32_1 = arith.constant 0 : i32
    return %arg0, %c0_i32, %c0_i32_0 : i32, i32, i32
  }
}

</mosaic_0001>

<llo_original>
// kernel: deblur_forward.1
$region0: #{deblur_forward.1}
  #allocation0 [shape = 'u32[]', space=smem, size = 0x4, offset = 0x4, fixed_abs, tag = 'smem constant byte address 0x4 - core index']
  #allocation1 [shape = 'u32[72,128]{1,0:T(1,128)}', space=vmem, size = 0x9000, scoped, tag = 'internal scratch']
  #allocation2 [shape = 'f32[27,256]{1,0:T(8,128)}', space=vmem, size = 0x8000, scoped, tag = 'scratch operand']
  #allocation3 [shape = 'bf16[1152,256]{1,0:T(8,128)(2,1)}', space=vmem, size = 0x90000, scoped, tag = 'scratch operand']
  %s0 = inlined_call_operand.vmem [shape: f32[2,3,256], index: 0, kind: input, shape index: {}]
  %s1 = inlined_call_operand.vmem [shape: f32[9,256], index: 1, kind: input, shape index: {}]
  %s2 = inlined_call_operand.vmem [shape: bf16[64,27], index: 2, kind: input, shape index: {}]
  %s3 = inlined_call_operand.vmem [shape: f32[64,1], index: 3, kind: input, shape index: {}]
  %s4 = inlined_call_operand.vmem [shape: bf16[128,576], index: 4, kind: input, shape index: {}]
  %s5 = inlined_call_operand.vmem [shape: f32[128,1], index: 5, kind: input, shape index: {}]
  %s6 = inlined_call_operand.vmem [shape: bf16[128,1152], index: 6, kind: input, shape index: {}]
  %s7 = inlined_call_operand.vmem [shape: f32[128,1], index: 7, kind: input, shape index: {}]
  %s8 = inlined_call_operand.vmem [shape: bf16[9,8,128], index: 8, kind: input, shape index: {}]
  %s9 = inlined_call_operand.vmem [shape: f32[3,1], index: 9, kind: input, shape index: {}]
  %s10 = inlined_call_operand.vmem [shape: f32[8,128], index: 10, kind: input, shape index: {}]
  %s11 = inlined_call_operand.vmem [shape: f32[128,8], index: 11, kind: input, shape index: {}]
  %s12 = inlined_call_operand.vmem [shape: f32[2,3,256], index: 12, kind: output, shape index: {}]
  %s13 = sld [smem:[#allocation0]]
  $region81: #{deblur_forward.1} parent=0
    _
  %s15 = ssub.s32 1, %s13
  %s16 = scalar_select 0, %s15, %s13
  loop: start=0, step=1, limit=4
  $region2: #{deblur_forward.1} parent=0 // loop_pre_header
    _
  $region3: #{deblur_forward.1} parent=0 // loop_header
    %s18 = sphi 0, %s22
    %p19 = scmp.ge.s32.totalorder %s18, 4
    %s28 = sphi 0, %s30
    %s31 = sphi 0, %s28
    %s32 = sphi 0, %s31
    %s48 = sphi 0, %s32
    %s52 = sphi 0, %s52
    %s54 = sphi 0, %s52
    %s55 = sphi 0, %s54
    %s69 = sphi 0, %s55
    %s73 = sphi 0, %s73
    %s75 = sphi 0, %s73
    %s76 = sphi 0, %s75
    %s90 = sphi 0, %s76
    %s94 = sphi 0, %s94
    %s96 = sphi 0, %s94
    %s97 = sphi 0, %s96
    %s111 = sphi 0, %s97
    %s115 = sphi 0, %s115
    %s117 = sphi 0, %s115
    %s118 = sphi 0, %s117
    %s132 = sphi 0, %s118
    %s136 = sphi 0, %s136
    %s138 = sphi 0, %s136
    %s139 = sphi 0, %s138
    %s153 = sphi 0, %s139
    %s157 = sphi 0, %s157
    %s159 = sphi 0, %s157
    %s160 = sphi 0, %s159
    %s174 = sphi 0, %s160
    %s178 = sphi 0, %s178
    %s180 = sphi 0, %s178
    %s181 = sphi 0, %s180
    %s195 = sphi 0, %s181
    %s199 = sphi 0, %s199
    %s201 = sphi 0, %s199
    %s202 = sphi 0, %s201
    %s216 = sphi 0, %s202
    %s220 = sphi 0, %s220
    %s222 = sphi 0, %s220
    %s223 = sphi 0, %s222
    %s237 = sphi 0, %s223
    %s241 = sphi 0, %s241
    %s243 = sphi 0, %s241
    %s244 = sphi 0, %s243
    %s258 = sphi 0, %s244
    %s262 = sphi 0, %s262
    %s264 = sphi 0, %s262
    %s265 = sphi 0, %s264
    %s279 = sphi 0, %s265
    %s285 = sphi 0, %s287
    %s288 = sphi 0, %s285
    %s289 = sphi 0, %s288
    %s305 = sphi 0, %s289
  $region4: #{deblur_forward.1} parent=0 // loop_header_branch
    %21 = sbr.rel (%p19) target = $region8
  $region5: #{deblur_forward.1} parent=0 // loop_body
    %s23 = ssub.s32 %s18, 1
    %s24 = ssub.s32 %s18, 2
    %s25 = sadd.s32 %s18, 1
    %s26 = ssub.s32 %s18, %s25
    %p27 = scmp.eq.s32.totalorder %s26, 0
    %s29 = sadd.s32 %s28, 1
    %s30 = scalar_select %p27, %s28, %s29
    %p33 = pneg %p27
    %p34 = scmp.eq.s32.totalorder %s18, 1
    %p35 = por %p33, %p34
    %p36 = scmp.ne.s32.totalorder %s28, %s31
    %p37 = scmp.eq.s32.totalorder %s18, 0
    %p38 = por %p36, %p37
    %p39 = scmp.ne.s32.totalorder %s28, %s31
    %p40 = scmp.eq.s32.totalorder %s23, 1
    %p41 = por %p39, %p40
    %p42 = scmp.ne.s32.totalorder %s31, %s32
    %p43 = scmp.eq.s32.totalorder %s23, 0
    %p44 = por %p42, %p43
    %p45 = scmp.ne.s32.totalorder %s31, %s32
    %p46 = scmp.eq.s32.totalorder %s24, 1
    %p47 = por %p45, %p46
    %p49 = scmp.ne.s32.totalorder %s32, %s48
    %p50 = scmp.eq.s32.totalorder %s24, 0
    %p51 = por %p49, %p50
    %s53 = sadd.s32 %s52, 1
    %p56 = scmp.eq.s32.totalorder %s18, 1
    %p57 = scmp.ne.s32.totalorder %s52, %s54
    %p58 = scmp.eq.s32.totalorder %s18, 0
    %p59 = por %p57, %p58
    %p60 = scmp.ne.s32.totalorder %s52, %s54
    %p61 = scmp.eq.s32.totalorder %s23, 1
    %p62 = por %p60, %p61
    %p63 = scmp.ne.s32.totalorder %s54, %s55
    %p64 = scmp.eq.s32.totalorder %s23, 0
    %p65 = por %p63, %p64
    %p66 = scmp.ne.s32.totalorder %s54, %s55
    %p67 = scmp.eq.s32.totalorder %s24, 1
    %p68 = por %p66, %p67
    %p70 = scmp.ne.s32.totalorder %s55, %s69
    %p71 = scmp.eq.s32.totalorder %s24, 0
    %p72 = por %p70, %p71
    %s74 = sadd.s32 %s73, 1
    %p77 = scmp.eq.s32.totalorder %s18, 1
    %p78 = scmp.ne.s32.totalorder %s73, %s75
    %p79 = scmp.eq.s32.totalorder %s18, 0
    %p80 = por %p78, %p79
    %p81 = scmp.ne.s32.totalorder %s73, %s75
    %p82 = scmp.eq.s32.totalorder %s23, 1
    %p83 = por %p81, %p82
    %p84 = scmp.ne.s32.totalorder %s75, %s76
    %p85 = scmp.eq.s32.totalorder %s23, 0
    %p86 = por %p84, %p85
    %p87 = scmp.ne.s32.totalorder %s75, %s76
    %p88 = scmp.eq.s32.totalorder %s24, 1
    %p89 = por %p87, %p88
    %p91 = scmp.ne.s32.totalorder %s76, %s90
    %p92 = scmp.eq.s32.totalorder %s24, 0
    %p93 = por %p91, %p92
    %s95 = sadd.s32 %s94, 1
    %p98 = scmp.eq.s32.totalorder %s18, 1
    %p99 = scmp.ne.s32.totalorder %s94, %s96
    %p100 = scmp.eq.s32.totalorder %s18, 0
    %p101 = por %p99, %p100
    %p102 = scmp.ne.s32.totalorder %s94, %s96
    %p103 = scmp.eq.s32.totalorder %s23, 1
    %p104 = por %p102, %p103
    %p105 = scmp.ne.s32.totalorder %s96, %s97
    %p106 = scmp.eq.s32.totalorder %s23, 0
    %p107 = por %p105, %p106
    %p108 = scmp.ne.s32.totalorder %s96, %s97
    %p109 = scmp.eq.s32.totalorder %s24, 1
    %p110 = por %p108, %p109
    %p112 = scmp.ne.s32.totalorder %s97, %s111
    %p113 = scmp.eq.s32.totalorder %s24, 0
    %p114 = por %p112, %p113
    %s116 = sadd.s32 %s115, 1
    %p119 = scmp.eq.s32.totalorder %s18, 1
    %p120 = scmp.ne.s32.totalorder %s115, %s117
    %p121 = scmp.eq.s32.totalorder %s18, 0
    %p122 = por %p120, %p121
    %p123 = scmp.ne.s32.totalorder %s115, %s117
    %p124 = scmp.eq.s32.totalorder %s23, 1
    %p125 = por %p123, %p124
    %p126 = scmp.ne.s32.totalorder %s117, %s118
    %p127 = scmp.eq.s32.totalorder %s23, 0
    %p128 = por %p126, %p127
    %p129 = scmp.ne.s32.totalorder %s117, %s118
    %p130 = scmp.eq.s32.totalorder %s24, 1
    %p131 = por %p129, %p130
    %p133 = scmp.ne.s32.totalorder %s118, %s132
    %p134 = scmp.eq.s32.totalorder %s24, 0
    %p135 = por %p133, %p134
    %s137 = sadd.s32 %s136, 1
    %p140 = scmp.eq.s32.totalorder %s18, 1
    %p141 = scmp.ne.s32.totalorder %s136, %s138
    %p142 = scmp.eq.s32.totalorder %s18, 0
    %p143 = por %p141, %p142
    %p144 = scmp.ne.s32.totalorder %s136, %s138
    %p145 = scmp.eq.s32.totalorder %s23, 1
    %p146 = por %p144, %p145
    %p147 = scmp.ne.s32.totalorder %s138, %s139
    %p148 = scmp.eq.s32.totalorder %s23, 0
    %p149 = por %p147, %p148
    %p150 = scmp.ne.s32.totalorder %s138, %s139
    %p151 = scmp.eq.s32.totalorder %s24, 1
    %p152 = por %p150, %p151
    %p154 = scmp.ne.s32.totalorder %s139, %s153
    %p155 = scmp.eq.s32.totalorder %s24, 0
    %p156 = por %p154, %p155
    %s158 = sadd.s32 %s157, 1
    %p161 = scmp.eq.s32.totalorder %s18, 1
    %p162 = scmp.ne.s32.totalorder %s157, %s159
    %p163 = scmp.eq.s32.totalorder %s18, 0
    %p164 = por %p162, %p163
    %p165 = scmp.ne.s32.totalorder %s157, %s159
    %p166 = scmp.eq.s32.totalorder %s23, 1
    %p167 = por %p165, %p166
    %p168 = scmp.ne.s32.totalorder %s159, %s160
    %p169 = scmp.eq.s32.totalorder %s23, 0
    %p170 = por %p168, %p169
    %p171 = scmp.ne.s32.totalorder %s159, %s160
    %p172 = scmp.eq.s32.totalorder %s24, 1
    %p173 = por %p171, %p172
    %p175 = scmp.ne.s32.totalorder %s160, %s174
    %p176 = scmp.eq.s32.totalorder %s24, 0
    %p177 = por %p175, %p176
    %s179 = sadd.s32 %s178, 1
    %p182 = scmp.eq.s32.totalorder %s18, 1
    %p183 = scmp.ne.s32.totalorder %s178, %s180
    %p184 = scmp.eq.s32.totalorder %s18, 0
    %p185 = por %p183, %p184
    %p186 = scmp.ne.s32.totalorder %s178, %s180
    %p187 = scmp.eq.s32.totalorder %s23, 1
    %p188 = por %p186, %p187
    %p189 = scmp.ne.s32.totalorder %s180, %s181
    %p190 = scmp.eq.s32.totalorder %s23, 0
    %p191 = por %p189, %p190
    %p192 = scmp.ne.s32.totalorder %s180, %s181
    %p193 = scmp.eq.s32.totalorder %s24, 1
    %p194 = por %p192, %p193
    %p196 = scmp.ne.s32.totalorder %s181, %s195
    %p197 = scmp.eq.s32.totalorder %s24, 0
    %p198 = por %p196, %p197
    %s200 = sadd.s32 %s199, 1
    %p203 = scmp.eq.s32.totalorder %s18, 1
    %p204 = scmp.ne.s32.totalorder %s199, %s201
    %p205 = scmp.eq.s32.totalorder %s18, 0
    %p206 = por %p204, %p205
    %p207 = scmp.ne.s32.totalorder %s199, %s201
    %p208 = scmp.eq.s32.totalorder %s23, 1
    %p209 = por %p207, %p208
    %p210 = scmp.ne.s32.totalorder %s201, %s202
    %p211 = scmp.eq.s32.totalorder %s23, 0
    %p212 = por %p210, %p211
    %p213 = scmp.ne.s32.totalorder %s201, %s202
    %p214 = scmp.eq.s32.totalorder %s24, 1
    %p215 = por %p213, %p214
    %p217 = scmp.ne.s32.totalorder %s202, %s216
    %p218 = scmp.eq.s32.totalorder %s24, 0
    %p219 = por %p217, %p218
    %s221 = sadd.s32 %s220, 1
    %p224 = scmp.eq.s32.totalorder %s18, 1
    %p225 = scmp.ne.s32.totalorder %s220, %s222
    %p226 = scmp.eq.s32.totalorder %s18, 0
    %p227 = por %p225, %p226
    %p228 = scmp.ne.s32.totalorder %s220, %s222
    %p229 = scmp.eq.s32.totalorder %s23, 1
    %p230 = por %p228, %p229
    %p231 = scmp.ne.s32.totalorder %s222, %s223
    %p232 = scmp.eq.s32.totalorder %s23, 0
    %p233 = por %p231, %p232
    %p234 = scmp.ne.s32.totalorder %s222, %s223
    %p235 = scmp.eq.s32.totalorder %s24, 1
    %p236 = por %p234, %p235
    %p238 = scmp.ne.s32.totalorder %s223, %s237
    %p239 = scmp.eq.s32.totalorder %s24, 0
    %p240 = por %p238, %p239
    %s242 = sadd.s32 %s241, 1
    %p245 = scmp.eq.s32.totalorder %s18, 1
    %p246 = scmp.ne.s32.totalorder %s241, %s243
    %p247 = scmp.eq.s32.totalorder %s18, 0
    %p248 = por %p246, %p247
    %p249 = scmp.ne.s32.totalorder %s241, %s243
    %p250 = scmp.eq.s32.totalorder %s23, 1
    %p251 = por %p249, %p250
    %p252 = scmp.ne.s32.totalorder %s243, %s244
    %p253 = scmp.eq.s32.totalorder %s23, 0
    %p254 = por %p252, %p253
    %p255 = scmp.ne.s32.totalorder %s243, %s244
    %p256 = scmp.eq.s32.totalorder %s24, 1
    %p257 = por %p255, %p256
    %p259 = scmp.ne.s32.totalorder %s244, %s258
    %p260 = scmp.eq.s32.totalorder %s24, 0
    %p261 = por %p259, %p260
    %s263 = sadd.s32 %s262, 1
    %p266 = scmp.eq.s32.totalorder %s18, 1
    %p267 = scmp.ne.s32.totalorder %s262, %s264
    %p268 = scmp.eq.s32.totalorder %s18, 0
    %p269 = por %p267, %p268
    %p270 = scmp.ne.s32.totalorder %s262, %s264
    %p271 = scmp.eq.s32.totalorder %s23, 1
    %p272 = por %p270, %p271
    %p273 = scmp.ne.s32.totalorder %s264, %s265
    %p274 = scmp.eq.s32.totalorder %s23, 0
    %p275 = por %p273, %p274
    %p276 = scmp.ne.s32.totalorder %s264, %s265
    %p277 = scmp.eq.s32.totalorder %s24, 1
    %p278 = por %p276, %p277
    %p280 = scmp.ne.s32.totalorder %s265, %s279
    %p281 = scmp.eq.s32.totalorder %s24, 0
    %p282 = por %p280, %p281
    %s283 = ssub.s32 %s18, %s25
    %p284 = scmp.eq.s32.totalorder %s283, 0
    %s286 = sadd.s32 %s285, 1
    %s287 = scalar_select %p284, %s285, %s286
    %p290 = pneg %p284
    %p291 = scmp.eq.s32.totalorder %s18, 1
    %p292 = por %p290, %p291
    %p293 = scmp.ne.s32.totalorder %s285, %s288
    %p294 = scmp.eq.s32.totalorder %s18, 0
    %p295 = por %p293, %p294
    %p296 = scmp.ne.s32.totalorder %s285, %s288
    %p297 = scmp.eq.s32.totalorder %s23, 1
    %p298 = por %p296, %p297
    %p299 = scmp.ne.s32.totalorder %s288, %s289
    %p300 = scmp.eq.s32.totalorder %s23, 0
    %p301 = por %p299, %p300
    %p302 = scmp.ne.s32.totalorder %s288, %s289
    %p303 = scmp.eq.s32.totalorder %s24, 1
    %p304 = por %p302, %p303
    %p306 = scmp.ne.s32.totalorder %s289, %s305
    %p307 = scmp.eq.s32.totalorder %s24, 0
    %p308 = por %p306, %p307
    %p309 = scmp.le.s32.totalorder 1, %s18
    %p310 = scmp.lt.s32.totalorder %s18, 3
    %p311 = pnand %p309, %p310
    %p312 = pneg %p311
    // Predicated region
    $region9: #{deblur_forward.1} parent=5 // pred_check
      _
    $region10: #{deblur_forward.1} parent=5 // pred_check_branch
      %314 = sbr.rel (%p311) target = $region12
    $region11: #{deblur_forward.1} parent=5 // pred_region
      %s315 = ssub.s32 %s18, 1
      // Predicated region
      $region13: #{deblur_forward.1} parent=11 // pred_check
        %p316 = pneg %p65
      $region14: #{deblur_forward.1} parent=11 // pred_check_branch
        %318 = sbr.rel (%p316) target = $region16
      $region15: #{deblur_forward.1} parent=11 // pred_region
        _
      $region16: #{deblur_forward.1} parent=11 // pred_fallthru
        _
      // Predicated region
      $region17: #{deblur_forward.1} parent=11 // pred_check
        %p319 = pneg %p86
      $region18: #{deblur_forward.1} parent=11 // pred_check_branch
        %321 = sbr.rel (%p319) target = $region20
      $region19: #{deblur_forward.1} parent=11 // pred_region
        _
      $region20: #{deblur_forward.1} parent=11 // pred_fallthru
        _
      // Predicated region
      $region21: #{deblur_forward.1} parent=11 // pred_check
        %p322 = pneg %p107
      $region22: #{deblur_forward.1} parent=11 // pred_check_branch
        %324 = sbr.rel (%p322) target = $region24
      $region23: #{deblur_forward.1} parent=11 // pred_region
        _
      $region24: #{deblur_forward.1} parent=11 // pred_fallthru
        _
      // Predicated region
      $region25: #{deblur_forward.1} parent=11 // pred_check
        %p325 = pneg %p128
      $region26: #{deblur_forward.1} parent=11 // pred_check_branch
        %327 = sbr.rel (%p325) target = $region28
      $region27: #{deblur_forward.1} parent=11 // pred_region
        _
      $region28: #{deblur_forward.1} parent=11 // pred_fallthru
        _
      // Predicated region
      $region29: #{deblur_forward.1} parent=11 // pred_check
        %p328 = pneg %p149
      $region30: #{deblur_forward.1} parent=11 // pred_check_branch
        %330 = sbr.rel (%p328) target = $region32
      $region31: #{deblur_forward.1} parent=11 // pred_region
        _
      $region32: #{deblur_forward.1} parent=11 // pred_fallthru
        _
      // Predicated region
      $region33: #{deblur_forward.1} parent=11 // pred_check
        %p331 = pneg %p170
      $region34: #{deblur_forward.1} parent=11 // pred_check_branch
        %333 = sbr.rel (%p331) target = $region36
      $region35: #{deblur_forward.1} parent=11 // pred_region
        _
      $region36: #{deblur_forward.1} parent=11 // pred_fallthru
        _
      // Predicated region
      $region37: #{deblur_forward.1} parent=11 // pred_check
        %p334 = pneg %p191
      $region38: #{deblur_forward.1} parent=11 // pred_check_branch
        %336 = sbr.rel (%p334) target = $region40
      $region39: #{deblur_forward.1} parent=11 // pred_region
        _
      $region40: #{deblur_forward.1} parent=11 // pred_fallthru
        _
      // Predicated region
      $region41: #{deblur_forward.1} parent=11 // pred_check
        %p337 = pneg %p212
      $region42: #{deblur_forward.1} parent=11 // pred_check_branch
        %339 = sbr.rel (%p337) target = $region44
      $region43: #{deblur_forward.1} parent=11 // pred_region
        _
      $region44: #{deblur_forward.1} parent=11 // pred_fallthru
        _
      // Predicated region
      $region45: #{deblur_forward.1} parent=11 // pred_check
        %p340 = pneg %p233
      $region46: #{deblur_forward.1} parent=11 // pred_check_branch
        %342 = sbr.rel (%p340) target = $region48
      $region47: #{deblur_forward.1} parent=11 // pred_region
        _
      $region48: #{deblur_forward.1} parent=11 // pred_fallthru
        _
      // Predicated region
      $region49: #{deblur_forward.1} parent=11 // pred_check
        %p343 = pneg %p254
      $region50: #{deblur_forward.1} parent=11 // pred_check_branch
        %345 = sbr.rel (%p343) target = $region52
      $region51: #{deblur_forward.1} parent=11 // pred_region
        _
      $region52: #{deblur_forward.1} parent=11 // pred_fallthru
        _
      // Predicated region
      $region53: #{deblur_forward.1} parent=11 // pred_check
        %p346 = pneg %p275
      $region54: #{deblur_forward.1} parent=11 // pred_check_branch
        %348 = sbr.rel (%p346) target = $region56
      $region55: #{deblur_forward.1} parent=11 // pred_region
        _
      $region56: #{deblur_forward.1} parent=11 // pred_fallthru
        _
    $region12: #{deblur_forward.1} parent=5 // pred_fallthru
      _
    %p349 = scmp.lt.s32.totalorder %s18, 2
    // Predicated region
    $region57: #{deblur_forward.1} parent=5 // pred_check
      %p350 = pneg %p349
    $region58: #{deblur_forward.1} parent=5 // pred_check_branch
      %352 = sbr.rel (%p350) target = $region60
    $region59: #{deblur_forward.1} parent=5 // pred_region
      // Predicated region
      $region61: #{deblur_forward.1} parent=59 // pred_check
        %p353 = pneg %p38
      $region62: #{deblur_forward.1} parent=59 // pred_check_branch
        %355 = sbr.rel (%p353) target = $region64
      $region63: #{deblur_forward.1} parent=59 // pred_region
        %p356 = scmp.lt.s32.totalorder %s18, 1
        %s357 = scalar_select %p356, %s18, 1
        %s358 = smul.addr %s357, 2
        %s359 = smul.addr %s358, 4
        %s360 = scalar_lea.vmem %s0, %s359
      $region64: #{deblur_forward.1} parent=59 // pred_fallthru
        _
    $region60: #{deblur_forward.1} parent=5 // pred_fallthru
      _
    %p361 = scmp.le.s32.totalorder 1, %s18
    %p362 = scmp.lt.s32.totalorder %s18, 3
    %p363 = pnand %p361, %p362
    %p364 = pneg %p363
    // Predicated region
    $region65: #{deblur_forward.1} parent=5 // pred_check
      _
    $region66: #{deblur_forward.1} parent=5 // pred_check_branch
      %366 = sbr.rel (%p363) target = $region68
    $region67: #{deblur_forward.1} parent=5 // pred_region
      %s367 = ssub.s32 %s18, 1
      %p368 = scmp.lt.s32.totalorder %s23, 1
      %s369 = scalar_select %p368, %s23, 1
      %s370 = smul.addr %s369, 2
      %s371 = smul.addr %s370, 4
      %s372 = scalar_lea.vmem %s0, %s371
      %p373 = pneg %p44
      %p374 = pneg %p41
      %p375 = pneg %p65
      %p376 = pneg %p62
      %p377 = pneg %p86
      %p378 = pneg %p83
      %p379 = pneg %p107
      %p380 = pneg %p104
      %p381 = pneg %p128
      %p382 = pneg %p125
      %p383 = pneg %p149
      %p384 = pneg %p146
      %p385 = pneg %p170
      %p386 = pneg %p167
      %p387 = pneg %p191
      %p388 = pneg %p188
      %p389 = pneg %p212
      %p390 = pneg %p209
      %p391 = pneg %p233
      %p392 = pneg %p230
      %p393 = pneg %p254
      %p394 = pneg %p251
      %p395 = pneg %p275
      %p396 = pneg %p272
      %p397 = pneg %p301
      %p398 = pneg %p298
      %p399 = scmp.lt.s32.totalorder %s23, 1
      %s400 = scalar_select %p399, %s23, 1
      %s401 = smul.addr %s400, 2
      %s402 = smul.addr %s401, 4
      %s403 = scalar_lea.vmem %s12, %s402
      %p404 = scmp.lt.s32.totalorder %s23, 1
      %s405 = scalar_select %p404, %s23, 1
      %s406 = smul.addr %s405, 2
      %s407 = smul.addr %s406, 4
      %s408 = scalar_lea.vmem %s0, %s407
      %p409 = scmp.lt.s32.totalorder %s23, 1
      %s410 = scalar_select %p409, %s23, 1
      %s411 = smul.addr %s410, 2
      %s412 = smul.addr %s411, 4
      %s413 = scalar_lea.vmem %s12, %s412
      %v415 = vld [vmem:[%s408] sm:$0x77]
      %417 = vst [vmem:[#allocation1] ss:$2 sm:$0xff] %v415
      %v418 = vld.sshfl [vmem:[#allocation1] sm:$0xff pattern:$0x75316420]
      %v419 = vld.sshfl [vmem:[#allocation1 + $0x8] sm:$0xff pattern:$0x75316420]
      %422 = vrot.lane.b32.xlu0 %v418, 17
      %v423 = vpop.permute.xlu0 %422
      %424 = vrot.lane.b32.xlu0 %v419, 17
      %v425 = vpop.permute.xlu0 %424
      %v426 = vlaneseq
      %v427 = vand.u32 %v426, 127
      %vm428 = vcmp.lt.s32.totalorder %v427, 17
      %v429 = vsel %vm428, %v423, %v425
      %v430 = vsel %vm428, %v425, %v423
      %v431 = vld [vmem:[%s1] ss:$8 sm:$0x3]
      %v433 = vperm.slane %v431, 0
      %v434 = vperm.slane %v431, 1
      %v437 = vmul.f32 %v430, %v433
      %v438 = vmul.f32 %v429, %v434
      %439 = vst [vmem:[#allocation2] sm:$0x7] %v437
      %440 = vst [vmem:[#allocation2 + $0x8] sm:$0x7] %v438
      %441 = vst [vmem:[#allocation1] ss:$2 sm:$0xff] %v415
      %v442 = vld.sshfl [vmem:[#allocation1] sm:$0xff pattern:$0x75316420]
      %v443 = vld.sshfl [vmem:[#allocation1 + $0x8] sm:$0xff pattern:$0x75316420]
      %446 = vrot.lane.b32.xlu0 %v442, 16
      %v447 = vpop.permute.xlu0 %446
      %448 = vrot.lane.b32.xlu0 %v443, 16
      %v449 = vpop.permute.xlu0 %448
      %vm450 = vcmp.lt.s32.totalorder %v427, 16
      %v451 = vsel %vm450, %v447, %v449
      %v452 = vsel %vm450, %v449, %v447
      %s453 = scalar_lea.vmem %s1, 1
      %v454 = vld [vmem:[%s453] ss:$8 sm:$0x3]
      %v456 = vperm.slane %v454, 0
      %v457 = vperm.slane %v454, 1
      %v460 = vmul.f32 %v452, %v456
      %v461 = vmul.f32 %v451, %v457
      %v464 = vrot.slane %v460, 5
      %v465 = vrot.slane %v461, 5
      %468 = vst [vmem:[#allocation2] sm:$0x38] %v464
      %469 = vst [vmem:[#allocation2 + $0x8] sm:$0x38] %v465
      %470 = vst [vmem:[#allocation1] ss:$2 sm:$0xff] %v415
      %v471 = vld.sshfl [vmem:[#allocation1] sm:$0xff pattern:$0x75316420]
      %v472 = vld.sshfl [vmem:[#allocation1 + $0x8] sm:$0xff pattern:$0x75316420]
      %475 = vrot.lane.b32.xlu0 %v471, 15
      %v476 = vpop.permute.xlu0 %475
      %477 = vrot.lane.b32.xlu0 %v472, 15
      %v478 = vpop.permute.xlu0 %477
      %vm479 = vcmp.lt.s32.totalorder %v427, 15
      %v480 = vsel %vm479, %v476, %v478
      %v481 = vsel %vm479, %v478, %v476
      %s482 = scalar_lea.vmem %s1, 2
      %v483 = vld [vmem:[%s482] ss:$8 sm:$0x3]
      %v485 = vperm.slane %v483, 0
      %v486 = vperm.slane %v483, 1
      %v489 = vmul.f32 %v481, %v485
      %v490 = vmul.f32 %v480, %v486
      %v493 = vrot.slane %v489, 2
      %v494 = vrot.slane %v490, 2
      %497 = vst [vmem:[#allocation2] sm:$0xc0] %v493
      %498 = vst [vmem:[#allocation2 + $0x8] sm:$0xc0] %v494
      %499 = vst [vmem:[#allocation2 + $0x10] sm:$0x1] %v493
      %500 = vst [vmem:[#allocation2 + $0x18] sm:$0x1] %v494
      %501 = vst [vmem:[#allocation1] ss:$2 sm:$0xff] %v415
      %v502 = vld.sshfl [vmem:[#allocation1] sm:$0xff pattern:$0x75316420]
      %v503 = vld.sshfl [vmem:[#allocation1 + $0x8] sm:$0xff pattern:$0x75316420]
      %506 = vrot.lane.b32.xlu0 %v502, 1
      %v507 = vpop.permute.xlu0 %506
      %508 = vrot.lane.b32.xlu0 %v503, 1
      %v509 = vpop.permute.xlu0 %508
      %vm510 = vcmp.lt.s32.totalorder %v427, 1
      %v511 = vsel %vm510, %v507, %v509
      %v512 = vsel %vm510, %v509, %v507
      %s513 = scalar_lea.vmem %s1, 3
      %v514 = vld [vmem:[%s513] ss:$8 sm:$0x3]
      %v516 = vperm.slane %v514, 0
      %v517 = vperm.slane %v514, 1
      %v520 = vmul.f32 %v512, %v516
      %v521 = vmul.f32 %v511, %v517
      %v524 = vrot.slane %v520, 7
      %v525 = vrot.slane %v521, 7
      %528 = vst [vmem:[#allocation2 + $0x10] sm:$0xe] %v524
      %529 = vst [vmem:[#allocation2 + $0x18] sm:$0xe] %v525
      %s530 = scalar_lea.vmem [#allocation1], 1
      %531 = vst [vmem:[%s530] ss:$2 sm:$0xff] %v415
      %v532 = vld.sshfl [vmem:[#allocation1] sm:$0xff pattern:$0x75316420]
      %v533 = vld.sshfl [vmem:[#allocation1 + $0x8] sm:$0xff pattern:$0x75316420]
      %536 = vst [vmem:[#allocation2 + $0x10] sm:$0x70] %v532
      %537 = vst [vmem:[#allocation2 + $0x18] sm:$0x70] %v533
      %538 = vst [vmem:[#allocation1] ss:$2 sm:$0xff] %v415
      %v539 = vld.sshfl [vmem:[#allocation1] sm:$0xff pattern:$0x75316420]
      %v540 = vld.sshfl [vmem:[#allocation1 + $0x8] sm:$0xff pattern:$0x75316420]
      %543 = vrot.lane.b32.xlu0 %v539, 127
      %v544 = vpop.permute.xlu0 %543
      %545 = vrot.lane.b32.xlu0 %v540, 127
      %v546 = vpop.permute.xlu0 %545
      %vm547 = vcmp.lt.s32.totalorder %v427, 127
      %v548 = vsel %vm547, %v544, %v546
      %v549 = vsel %vm547, %v546, %v544
      %s550 = scalar_lea.vmem %s1, 5
      %v551 = vld [vmem:[%s550] ss:$8 sm:$0x3]
      %v553 = vperm.slane %v551, 0
      %v554 = vperm.slane %v551, 1
      %v557 = vmul.f32 %v548, %v553
      %v558 = vmul.f32 %v549, %v554
      %v561 = vrot.slane %v557, 1
      %v562 = vrot.slane %v558, 1
      %565 = vst [vmem:[#allocation2 + $0x10] sm:$0x80] %v561
      %566 = vst [vmem:[#allocation2 + $0x18] sm:$0x80] %v562
      %567 = vst [vmem:[#allocation2 + $0x20] sm:$0x3] %v561
      %568 = vst [vmem:[#allocation2 + $0x28] sm:$0x3] %v562
      %569 = vst [vmem:[#allocation1] ss:$2 sm:$0xff] %v415
      %v570 = vld.sshfl [vmem:[#allocation1] sm:$0xff pattern:$0x75316420]
      %v571 = vld.sshfl [vmem:[#allocation1 + $0x8] sm:$0xff pattern:$0x75316420]
      %574 = vrot.lane.b32.xlu0 %v570, 113
      %v575 = vpop.permute.xlu0 %574
      %576 = vrot.lane.b32.xlu0 %v571, 113
      %v577 = vpop.permute.xlu0 %576
      %vm578 = vcmp.lt.s32.totalorder %v427, 113
      %v579 = vsel %vm578, %v575, %v577
      %v580 = vsel %vm578, %v577, %v575
      %s581 = scalar_lea.vmem %s1, 6
      %v582 = vld [vmem:[%s581] ss:$8 sm:$0x3]
      %v584 = vperm.slane %v582, 0
      %v585 = vperm.slane %v582, 1
      %v588 = vmul.f32 %v579, %v584
      %v589 = vmul.f32 %v580, %v585
      %v592 = vrot.slane %v588, 6
      %v593 = vrot.slane %v589, 6
      %596 = vst [vmem:[#allocation2 + $0x20] sm:$0x1c] %v592
      %597 = vst [vmem:[#allocation2 + $0x28] sm:$0x1c] %v593
      %598 = vst [vmem:[#allocation1] ss:$2 sm:$0xff] %v415
      %v599 = vld.sshfl [vmem:[#allocation1] sm:$0xff pattern:$0x75316420]
      %v600 = vld.sshfl [vmem:[#allocation1 + $0x8] sm:$0xff pattern:$0x75316420]
      %603 = vrot.lane.b32.xlu0 %v599, 112
      %v604 = vpop.permute.xlu0 %603
      %605 = vrot.lane.b32.xlu0 %v600, 112
      %v606 = vpop.permute.xlu0 %605
      %vm607 = vcmp.lt.s32.totalorder %v427, 112
      %v608 = vsel %vm607, %v604, %v606
      %v609 = vsel %vm607, %v606, %v604
      %s610 = scalar_lea.vmem %s1, 7
      %v611 = vld [vmem:[%s610] ss:$8 sm:$0x3]
      %v613 = vperm.slane %v611, 0
      %v614 = vperm.slane %v611, 1
      %v617 = vmul.f32 %v608, %v613
      %v618 = vmul.f32 %v609, %v614
      %v621 = vrot.slane %v617, 3
      %v622 = vrot.slane %v618, 3
      %625 = vst [vmem:[#allocation2 + $0x20] sm:$0xe0] %v621
      %626 = vst [vmem:[#allocation2 + $0x28] sm:$0xe0] %v622
      %627 = vst [vmem:[#allocation1] ss:$2 sm:$0xff] %v415
      %v628 = vld.sshfl [vmem:[#allocation1] sm:$0xff pattern:$0x75316420]
      %v629 = vld.sshfl [vmem:[#allocation1 + $0x8] sm:$0xff pattern:$0x75316420]
      %632 = vrot.lane.b32.xlu0 %v628, 111
      %v633 = vpop.permute.xlu0 %632
      %634 = vrot.lane.b32.xlu0 %v629, 111
      %v635 = vpop.permute.xlu0 %634
      %vm636 = vcmp.lt.s32.totalorder %v427, 111
      %v637 = vsel %vm636, %v633, %v635
      %v638 = vsel %vm636, %v635, %v633
      %s639 = scalar_lea.vmem %s1, 16
      %v640 = vld [vmem:[%s639] ss:$8 sm:$0x3]
      %v642 = vperm.slane %v640, 0
      %v643 = vperm.slane %v640, 1
      %v646 = vmul.f32 %v637, %v642
      %v647 = vmul.f32 %v638, %v643
      %648 = vst [vmem:[#allocation2 + $0x30] sm:$0x7] %v646
      %649 = vst [vmem:[#allocation2 + $0x38] sm:$0x7] %v647
      %v650 = vld [vmem:[%s2] sm:$0xf]
      %v651 = vld [vmem:[%s2 + $0x4] sm:$0xf]
      %v652 = vld [vmem:[%s2 + $0x8] sm:$0xf]
      %v653 = vld [vmem:[%s2 + $0xc] sm:$0xf]
      %v654 = vld [vmem:[%s2 + $0x10] sm:$0xf]
      %v655 = vld [vmem:[%s2 + $0x14] sm:$0xf]
      %v656 = vld [vmem:[%s2 + $0x18] sm:$0xf]
      %v657 = vld [vmem:[%s2 + $0x1c] sm:$0xf]
      %v658 = vld [vmem:[#allocation2] sm:$0xff]
      %v659 = vld [vmem:[#allocation2 + $0x8] sm:$0xff]
      %v660 = vld [vmem:[#allocation2 + $0x10] sm:$0xff]
      %v661 = vld [vmem:[#allocation2 + $0x18] sm:$0xff]
      %v662 = vld [vmem:[#allocation2 + $0x20] sm:$0xff]
      %v663 = vld [vmem:[#allocation2 + $0x28] sm:$0xff]
      %v664 = vld [vmem:[#allocation2 + $0x30] sm:$0x7]
      %v665 = vld [vmem:[#allocation2 + $0x38] sm:$0x7]
      %v666 = vpack.c.bf16 %v660, %v658
      %v667 = vpack.c.bf16 %v661, %v659
      %v668 = vpack.c.bf16 %v664, %v662
      %v669 = vpack.c.bf16 %v665, %v663
      %v670 = vld [vmem:[%s3] sm:$0xff]
      %v671 = vld [vmem:[%s3 + $0x8] sm:$0xff]
      %v672 = vld [vmem:[%s3 + $0x10] sm:$0xff]
      %v673 = vld [vmem:[%s3 + $0x18] sm:$0xff]
      %v674 = vld [vmem:[%s3 + $0x20] sm:$0xff]
      %v675 = vld [vmem:[%s3 + $0x28] sm:$0xff]
      %v676 = vld [vmem:[%s3 + $0x30] sm:$0xff]
      %v677 = vld [vmem:[%s3 + $0x38] sm:$0xff]
      %679 = vset.pattern.permute.xlu0 0
      %680 = vperm.xlu0 %679, %v670
      %v681 = vpop.permute.xlu0 %680
      %684 = vset.pattern.permute.xlu0 0
      %685 = vperm.xlu0 %684, %v671
      %v686 = vpop.permute.xlu0 %685
      %689 = vset.pattern.permute.xlu0 0
      %690 = vperm.xlu0 %689, %v672
      %v691 = vpop.permute.xlu0 %690
      %694 = vset.pattern.permute.xlu0 0
      %695 = vperm.xlu0 %694, %v673
      %v696 = vpop.permute.xlu0 %695
      %699 = vset.pattern.permute.xlu0 0
      %700 = vperm.xlu0 %699, %v674
      %v701 = vpop.permute.xlu0 %700
      %704 = vset.pattern.permute.xlu0 0
      %705 = vperm.xlu0 %704, %v675
      %v706 = vpop.permute.xlu0 %705
      %709 = vset.pattern.permute.xlu0 0
      %710 = vperm.xlu0 %709, %v676
      %v711 = vpop.permute.xlu0 %710
      %714 = vset.pattern.permute.xlu0 0
      %715 = vperm.xlu0 %714, %v677
      %v716 = vpop.permute.xlu0 %715
      %v726 = vunpack.c.l.b16 %v650
      %v727 = vunpack.c.l.b16 %v651
      %v728 = vunpack.c.l.b16 %v652
      %v729 = vunpack.c.l.b16 %v653
      %v730 = vunpack.c.l.b16 %v654
      %v731 = vunpack.c.l.b16 %v655
      %v732 = vunpack.c.l.b16 %v656
      %v733 = vunpack.c.l.b16 %v657
      %v734 = vpack.c.b16 %v727, %v726
      %v735 = vpack.c.b16 %v729, %v728
      %v736 = vpack.c.b16 %v731, %v730
      %v737 = vpack.c.b16 %v733, %v732
      %vm738 = vcmask 220160
      %v740 = vsel %vm738, %v734, 0
      %v743 = vsel %vm738, %v735, 0
      %v746 = vsel %vm738, %v736, 0
      %v749 = vsel %vm738, %v737, 0
      %vm751 = vcmask 1044480
      %vm752 = vcmask 1045504
      %v753 = vsel %vm751, 4294967295, 65535
      %v754 = vsel %vm752, %v753, 0
      %v756 = vand.u32 %v668, %v754
      %v759 = vand.u32 %v669, %v754
      %761 = vmatpush.bf16.msra.mxu0 0
      %762 = vmatpush.bf16.msra.mxu0 0
      %763 = vmatpush.bf16.msra.mxu0 0
      %764 = vmatpush.bf16.msra.mxu0 0
      %765 = vmatpush.bf16.msra.mxu0 0
      %766 = vmatpush.bf16.msra.mxu0 0
      %767 = vmatpush.bf16.msra.mxu0 %v756
      %768 = vmatpush.bf16.msra.mxu0 %v666
      %769 = vmatmul.bf16.gmra.mxu0 %v740
      %v770 = vpop.f32.mrf.mxu0
      %v771 = vadd.f32 %v681, %v770
      %v772 = vpop.f32.mrf.mxu0
      %v773 = vadd.f32 %v686, %v772
      %774 = vmatmul.bf16.gmra.mxu0 %v743
      %v775 = vpop.f32.mrf.mxu0
      %v776 = vadd.f32 %v691, %v775
      %v777 = vpop.f32.mrf.mxu0
      %v778 = vadd.f32 %v696, %v777
      %779 = vmatmul.bf16.gmra.mxu0 %v746
      %v780 = vpop.f32.mrf.mxu0
      %v781 = vadd.f32 %v701, %v780
      %v782 = vpop.f32.mrf.mxu0
      %v783 = vadd.f32 %v706, %v782
      %784 = vmatmul.bf16.gmra.mxu0 %v749
      %v785 = vpop.f32.mrf.mxu0
      %v786 = vadd.f32 %v711, %v785
      %v787 = vpop.f32.mrf.mxu0
      %v788 = vadd.f32 %v716, %v787
      %789 = vdwg.mxu0
      %790 = vmatpush.bf16.msra.mxu0 0
      %791 = vmatpush.bf16.msra.mxu0 0
      %792 = vmatpush.bf16.msra.mxu0 0
      %793 = vmatpush.bf16.msra.mxu0 0
      %794 = vmatpush.bf16.msra.mxu0 0
      %795 = vmatpush.bf16.msra.mxu0 0
      %796 = vmatpush.bf16.msra.mxu0 %v759
      %797 = vmatpush.bf16.msra.mxu0 %v667
      %798 = vmatmul.bf16.gmra.mxu0 %v740
      %v799 = vpop.f32.mrf.mxu0
      %v800 = vadd.f32 %v681, %v799
      %v801 = vpop.f32.mrf.mxu0
      %v802 = vadd.f32 %v686, %v801
      %803 = vmatmul.bf16.gmra.mxu0 %v743
      %v804 = vpop.f32.mrf.mxu0
      %v805 = vadd.f32 %v691, %v804
      %v806 = vpop.f32.mrf.mxu0
      %v807 = vadd.f32 %v696, %v806
      %808 = vmatmul.bf16.gmra.mxu0 %v746
      %v809 = vpop.f32.mrf.mxu0
      %v810 = vadd.f32 %v701, %v809
      %v811 = vpop.f32.mrf.mxu0
      %v812 = vadd.f32 %v706, %v811
      %813 = vmatmul.bf16.gmra.mxu0 %v749
      %v814 = vpop.f32.mrf.mxu0
      %v815 = vadd.f32 %v711, %v814
      %v816 = vpop.f32.mrf.mxu0
      %v817 = vadd.f32 %v716, %v816
      %818 = vdwg.mxu0
      %v819 = vmax.f32 %v771, 0.0
      %v820 = vmax.f32 %v800, 0.0
      %v821 = vmax.f32 %v773, 0.0
      %v822 = vmax.f32 %v802, 0.0
      %v823 = vmax.f32 %v776, 0.0
      %v824 = vmax.f32 %v805, 0.0
      %v825 = vmax.f32 %v778, 0.0
      %v826 = vmax.f32 %v807, 0.0
      %v827 = vmax.f32 %v781, 0.0
      %v828 = vmax.f32 %v810, 0.0
      %v829 = vmax.f32 %v783, 0.0
      %v830 = vmax.f32 %v812, 0.0
      %v831 = vmax.f32 %v786, 0.0
      %v832 = vmax.f32 %v815, 0.0
      %v833 = vmax.f32 %v788, 0.0
      %v834 = vmax.f32 %v817, 0.0
      %835 = vrot.lane.b32.xlu0 %v819, 17
      %v836 = vpop.permute.xlu0 %835
      %837 = vrot.lane.b32.xlu0 %v821, 17
      %v838 = vpop.permute.xlu0 %837
      %839 = vrot.lane.b32.xlu0 %v823, 17
      %v840 = vpop.permute.xlu0 %839
      %841 = vrot.lane.b32.xlu0 %v825, 17
      %v842 = vpop.permute.xlu0 %841
      %843 = vrot.lane.b32.xlu0 %v827, 17
      %v844 = vpop.permute.xlu0 %843
      %845 = vrot.lane.b32.xlu0 %v829, 17
      %v846 = vpop.permute.xlu0 %845
      %847 = vrot.lane.b32.xlu0 %v831, 17
      %v848 = vpop.permute.xlu0 %847
      %849 = vrot.lane.b32.xlu0 %v833, 17
      %v850 = vpop.permute.xlu0 %849
      %851 = vrot.lane.b32.xlu0 %v820, 17
      %v852 = vpop.permute.xlu0 %851
      %853 = vrot.lane.b32.xlu0 %v822, 17
      %v854 = vpop.permute.xlu0 %853
      %855 = vrot.lane.b32.xlu0 %v824, 17
      %v856 = vpop.permute.xlu0 %855
      %857 = vrot.lane.b32.xlu0 %v826, 17
      %v858 = vpop.permute.xlu0 %857
      %859 = vrot.lane.b32.xlu0 %v828, 17
      %v860 = vpop.permute.xlu0 %859
      %861 = vrot.lane.b32.xlu0 %v830, 17
      %v862 = vpop.permute.xlu0 %861
      %863 = vrot.lane.b32.xlu0 %v832, 17
      %v864 = vpop.permute.xlu0 %863
      %865 = vrot.lane.b32.xlu0 %v834, 17
      %v866 = vpop.permute.xlu0 %865
      %v867 = vsel %vm428, %v836, %v852
      %v868 = vsel %vm428, %v838, %v854
      %v869 = vsel %vm428, %v840, %v856
      %v870 = vsel %vm428, %v842, %v858
      %v871 = vsel %vm428, %v844, %v860
      %v872 = vsel %vm428, %v846, %v862
      %v873 = vsel %vm428, %v848, %v864
      %v874 = vsel %vm428, %v850, %v866
      %v875 = vsel %vm428, %v852, %v836
      %v876 = vsel %vm428, %v854, %v838
      %v877 = vsel %vm428, %v856, %v840
      %v878 = vsel %vm428, %v858, %v842
      %v879 = vsel %vm428, %v860, %v844
      %v880 = vsel %vm428, %v862, %v846
      %v881 = vsel %vm428, %v864, %v848
      %v882 = vsel %vm428, %v866, %v850
      %v883 = vld [vmem:[%s1] ss:$8 sm:$0x3]
      %v885 = vperm.slane %v883, 0
      %v886 = vperm.slane %v883, 1
      %v889 = vmul.f32 %v875, %v885
      %v890 = vmul.f32 %v867, %v886
      %v891 = vmul.f32 %v876, %v885
      %v892 = vmul.f32 %v868, %v886
      %v893 = vmul.f32 %v877, %v885
      %v894 = vmul.f32 %v869, %v886
      %v895 = vmul.f32 %v878, %v885
      %v896 = vmul.f32 %v870, %v886
      %v897 = vmul.f32 %v879, %v885
      %v898 = vmul.f32 %v871, %v886
      %v899 = vmul.f32 %v880, %v885
      %v900 = vmul.f32 %v872, %v886
      %v901 = vmul.f32 %v881, %v885
      %v902 = vmul.f32 %v873, %v886
      %v903 = vmul.f32 %v882, %v885
      %v904 = vmul.f32 %v874, %v886
      %v905 = vpack.c.bf16 %v890, %v889
      %v906 = vpack.c.bf16 %v892, %v891
      %v907 = vpack.c.bf16 %v894, %v893
      %v908 = vpack.c.bf16 %v896, %v895
      %v909 = vpack.c.bf16 %v898, %v897
      %v910 = vpack.c.bf16 %v900, %v899
      %v911 = vpack.c.bf16 %v902, %v901
      %v912 = vpack.c.bf16 %v904, %v903
      %913 = vst [vmem:[#allocation3] sm:$0xff] %v905
      %914 = vst [vmem:[#allocation3 + $0x8] sm:$0xff] %v906
      %915 = vst [vmem:[#allocation3 + $0x10] sm:$0xff] %v907
      %916 = vst [vmem:[#allocation3 + $0x18] sm:$0xff] %v908
      %917 = vst [vmem:[#allocation3 + $0x20] sm:$0xff] %v909
      %918 = vst [vmem:[#allocation3 + $0x28] sm:$0xff] %v910
      %919 = vst [vmem:[#allocation3 + $0x30] sm:$0xff] %v911
      %920 = vst [vmem:[#allocation3 + $0x38] sm:$0xff] %v912
      %921 = vrot.lane.b32.xlu0 %v819, 16
      %v922 = vpop.permute.xlu0 %921
      %923 = vrot.lane.b32.xlu0 %v821, 16
      %v924 = vpop.permute.xlu0 %923
      %925 = vrot.lane.b32.xlu0 %v823, 16
      %v926 = vpop.permute.xlu0 %925
      %927 = vrot.lane.b32.xlu0 %v825, 16
      %v928 = vpop.permute.xlu0 %927
      %929 = vrot.lane.b32.xlu0 %v827, 16
      %v930 = vpop.permute.xlu0 %929
      %931 = vrot.lane.b32.xlu0 %v829, 16
      %v932 = vpop.permute.xlu0 %931
      %933 = vrot.lane.b32.xlu0 %v831, 16
      %v934 = vpop.permute.xlu0 %933
      %935 = vrot.lane.b32.xlu0 %v833, 16
      %v936 = vpop.permute.xlu0 %935
      %937 = vrot.lane.b32.xlu0 %v820, 16
      %v938 = vpop.permute.xlu0 %937
      %939 = vrot.lane.b32.xlu0 %v822, 16
      %v940 = vpop.permute.xlu0 %939
      %941 = vrot.lane.b32.xlu0 %v824, 16
      %v942 = vpop.permute.xlu0 %941
      %943 = vrot.lane.b32.xlu0 %v826, 16
      %v944 = vpop.permute.xlu0 %943
      %945 = vrot.lane.b32.xlu0 %v828, 16
      %v946 = vpop.permute.xlu0 %945
      %947 = vrot.lane.b32.xlu0 %v830, 16
      %v948 = vpop.permute.xlu0 %947
      %949 = vrot.lane.b32.xlu0 %v832, 16
      %v950 = vpop.permute.xlu0 %949
      %951 = vrot.lane.b32.xlu0 %v834, 16
      %v952 = vpop.permute.xlu0 %951
      %v953 = vsel %vm450, %v922, %v938
      %v954 = vsel %vm450, %v924, %v940
      %v955 = vsel %vm450, %v926, %v942
      %v956 = vsel %vm450, %v928, %v944
      %v957 = vsel %vm450, %v930, %v946
      %v958 = vsel %vm450, %v932, %v948
      %v959 = vsel %vm450, %v934, %v950
      %v960 = vsel %vm450, %v936, %v952
      %v961 = vsel %vm450, %v938, %v922
      %v962 = vsel %vm450, %v940, %v924
      %v963 = vsel %vm450, %v942, %v926
      %v964 = vsel %vm450, %v944, %v928
      %v965 = vsel %vm450, %v946, %v930
      %v966 = vsel %vm450, %v948, %v932
      %v967 = vsel %vm450, %v950, %v934
      %v968 = vsel %vm450, %v952, %v936
      %v969 = vld [vmem:[%s453] ss:$8 sm:$0x3]
      %v971 = vperm.slane %v969, 0
      %v972 = vperm.slane %v969, 1
      %v975 = vmul.f32 %v961, %v971
      %v976 = vmul.f32 %v953, %v972
      %v977 = vmul.f32 %v962, %v971
      %v978 = vmul.f32 %v954, %v972
      %v979 = vmul.f32 %v963, %v971
      %v980 = vmul.f32 %v955, %v972
      %v981 = vmul.f32 %v964, %v971
      %v982 = vmul.f32 %v956, %v972
      %v983 = vmul.f32 %v965, %v971
      %v984 = vmul.f32 %v957, %v972
      %v985 = vmul.f32 %v966, %v971
      %v986 = vmul.f32 %v958, %v972
      %v987 = vmul.f32 %v967, %v971
      %v988 = vmul.f32 %v959, %v972
      %v989 = vmul.f32 %v968, %v971
      %v990 = vmul.f32 %v960, %v972
      %v991 = vpack.c.bf16 %v976, %v975
      %v992 = vpack.c.bf16 %v978, %v977
      %v993 = vpack.c.bf16 %v980, %v979
      %v994 = vpack.c.bf16 %v982, %v981
      %v995 = vpack.c.bf16 %v984, %v983
      %v996 = vpack.c.bf16 %v986, %v985
      %v997 = vpack.c.bf16 %v988, %v987
      %v998 = vpack.c.bf16 %v990, %v989
      %999 = vst [vmem:[#allocation3 + $0x40] sm:$0xff] %v991
      %1000 = vst [vmem:[#allocation3 + $0x48] sm:$0xff] %v992
      %1001 = vst [vmem:[#allocation3 + $0x50] sm:$0xff] %v993
      %1002 = vst [vmem:[#allocation3 + $0x58] sm:$0xff] %v994
      %1003 = vst [vmem:[#allocation3 + $0x60] sm:$0xff] %v995
      %1004 = vst [vmem:[#allocation3 + $0x68] sm:$0xff] %v996
      %1005 = vst [vmem:[#allocation3 + $0x70] sm:$0xff] %v997
      %1006 = vst [vmem:[#allocation3 + $0x78] sm:$0xff] %v998
      %1007 = vrot.lane.b32.xlu0 %v819, 15
      %v1008 = vpop.permute.xlu0 %1007
      %1009 = vrot.lane.b32.xlu0 %v821, 15
      %v1010 = vpop.permute.xlu0 %1009
      %1011 = vrot.lane.b32.xlu0 %v823, 15
      %v1012 = vpop.permute.xlu0 %1011
      %1013 = vrot.lane.b32.xlu0 %v825, 15
      %v1014 = vpop.permute.xlu0 %1013
      %1015 = vrot.lane.b32.xlu0 %v827, 15
      %v1016 = vpop.permute.xlu0 %1015
      %1017 = vrot.lane.b32.xlu0 %v829, 15
      %v1018 = vpop.permute.xlu0 %1017
      %1019 = vrot.lane.b32.xlu0 %v831, 15
      %v1020 = vpop.permute.xlu0 %1019
      %1021 = vrot.lane.b32.xlu0 %v833, 15
      %v1022 = vpop.permute.xlu0 %1021
      %1023 = vrot.lane.b32.xlu0 %v820, 15
      %v1024 = vpop.permute.xlu0 %1023
      %1025 = vrot.lane.b32.xlu0 %v822, 15
      %v1026 = vpop.permute.xlu0 %1025
      %1027 = vrot.lane.b32.xlu0 %v824, 15
      %v1028 = vpop.permute.xlu0 %1027
      %1029 = vrot.lane.b32.xlu0 %v826, 15
      %v1030 = vpop.permute.xlu0 %1029
      %1031 = vrot.lane.b32.xlu0 %v828, 15
      %v1032 = vpop.permute.xlu0 %1031
      %1033 = vrot.lane.b32.xlu0 %v830, 15
      %v1034 = vpop.permute.xlu0 %1033
      %1035 = vrot.lane.b32.xlu0 %v832, 15
      %v1036 = vpop.permute.xlu0 %1035
      %1037 = vrot.lane.b32.xlu0 %v834, 15
      %v1038 = vpop.permute.xlu0 %1037
      %v1039 = vsel %vm479, %v1008, %v1024
      %v1040 = vsel %vm479, %v1010, %v1026
      %v1041 = vsel %vm479, %v1012, %v1028
      %v1042 = vsel %vm479, %v1014, %v1030
      %v1043 = vsel %vm479, %v1016, %v1032
      %v1044 = vsel %vm479, %v1018, %v1034
      %v1045 = vsel %vm479, %v1020, %v1036
      %v1046 = vsel %vm479, %v1022, %v1038
      %v1047 = vsel %vm479, %v1024, %v1008
      %v1048 = vsel %vm479, %v1026, %v1010
      %v1049 = vsel %vm479, %v1028, %v1012
      %v1050 = vsel %vm479, %v1030, %v1014
      %v1051 = vsel %vm479, %v1032, %v1016
      %v1052 = vsel %vm479, %v1034, %v1018
      %v1053 = vsel %vm479, %v1036, %v1020
      %v1054 = vsel %vm479, %v1038, %v1022
      %v1055 = vld [vmem:[%s482] ss:$8 sm:$0x3]
      %v1057 = vperm.slane %v1055, 0
      %v1058 = vperm.slane %v1055, 1
      %v1061 = vmul.f32 %v1047, %v1057
      %v1062 = vmul.f32 %v1039, %v1058
      %v1063 = vmul.f32 %v1048, %v1057
      %v1064 = vmul.f32 %v1040, %v1058
      %v1065 = vmul.f32 %v1049, %v1057
      %v1066 = vmul.f32 %v1041, %v1058
      %v1067 = vmul.f32 %v1050, %v1057
      %v1068 = vmul.f32 %v1042, %v1058
      %v1069 = vmul.f32 %v1051, %v1057
      %v1070 = vmul.f32 %v1043, %v1058
      %v1071 = vmul.f32 %v1052, %v1057
      %v1072 = vmul.f32 %v1044, %v1058
      %v1073 = vmul.f32 %v1053, %v1057
      %v1074 = vmul.f32 %v1045, %v1058
      %v1075 = vmul.f32 %v1054, %v1057
      %v1076 = vmul.f32 %v1046, %v1058
      %v1077 = vpack.c.bf16 %v1062, %v1061
      %v1078 = vpack.c.bf16 %v1064, %v1063
      %v1079 = vpack.c.bf16 %v1066, %v1065
      %v1080 = vpack.c.bf16 %v1068, %v1067
      %v1081 = vpack.c.bf16 %v1070, %v1069
      %v1082 = vpack.c.bf16 %v1072, %v1071
      %v1083 = vpack.c.bf16 %v1074, %v1073
      %v1084 = vpack.c.bf16 %v1076, %v1075
      %1085 = vst [vmem:[#allocation3 + $0x80] sm:$0xff] %v1077
      %1086 = vst [vmem:[#allocation3 + $0x88] sm:$0xff] %v1078
      %1087 = vst [vmem:[#allocation3 + $0x90] sm:$0xff] %v1079
      %1088 = vst [vmem:[#allocation3 + $0x98] sm:$0xff] %v1080
      %1089 = vst [vmem:[#allocation3 + $0xa0] sm:$0xff] %v1081
      %1090 = vst [vmem:[#allocation3 + $0xa8] sm:$0xff] %v1082
      %1091 = vst [vmem:[#allocation3 + $0xb0] sm:$0xff] %v1083
      %1092 = vst [vmem:[#allocation3 + $0xb8] sm:$0xff] %v1084
      %1093 = vrot.lane.b32.xlu0 %v819, 1
      %v1094 = vpop.permute.xlu0 %1093
      %1095 = vrot.lane.b32.xlu0 %v821, 1
      %v1096 = vpop.permute.xlu0 %1095
      %1097 = vrot.lane.b32.xlu0 %v823, 1
      %v1098 = vpop.permute.xlu0 %1097
      %1099 = vrot.lane.b32.xlu0 %v825, 1
      %v1100 = vpop.permute.xlu0 %1099
      %1101 = vrot.lane.b32.xlu0 %v827, 1
      %v1102 = vpop.permute.xlu0 %1101
      %1103 = vrot.lane.b32.xlu0 %v829, 1
      %v1104 = vpop.permute.xlu0 %1103
      %1105 = vrot.lane.b32.xlu0 %v831, 1
      %v1106 = vpop.permute.xlu0 %1105
      %1107 = vrot.lane.b32.xlu0 %v833, 1
      %v1108 = vpop.permute.xlu0 %1107
      %1109 = vrot.lane.b32.xlu0 %v820, 1
      %v1110 = vpop.permute.xlu0 %1109
      %1111 = vrot.lane.b32.xlu0 %v822, 1
      %v1112 = vpop.permute.xlu0 %1111
      %1113 = vrot.lane.b32.xlu0 %v824, 1
      %v1114 = vpop.permute.xlu0 %1113
      %1115 = vrot.lane.b32.xlu0 %v826, 1
      %v1116 = vpop.permute.xlu0 %1115
      %1117 = vrot.lane.b32.xlu0 %v828, 1
      %v1118 = vpop.permute.xlu0 %1117
      %1119 = vrot.lane.b32.xlu0 %v830, 1
      %v1120 = vpop.permute.xlu0 %1119
      %1121 = vrot.lane.b32.xlu0 %v832, 1
      %v1122 = vpop.permute.xlu0 %1121
      %1123 = vrot.lane.b32.xlu0 %v834, 1
      %v1124 = vpop.permute.xlu0 %1123
      %v1125 = vsel %vm510, %v1094, %v1110
      %v1126 = vsel %vm510, %v1096, %v1112
      %v1127 = vsel %vm510, %v1098, %v1114
      %v1128 = vsel %vm510, %v1100, %v1116
      %v1129 = vsel %vm510, %v1102, %v1118
      %v1130 = vsel %vm510, %v1104, %v1120
      %v1131 = vsel %vm510, %v1106, %v1122
      %v1132 = vsel %vm510, %v1108, %v1124
      %v1133 = vsel %vm510, %v1110, %v1094
      %v1134 = vsel %vm510, %v1112, %v1096
      %v1135 = vsel %vm510, %v1114, %v1098
      %v1136 = vsel %vm510, %v1116, %v1100
      %v1137 = vsel %vm510, %v1118, %v1102
      %v1138 = vsel %vm510, %v1120, %v1104
      %v1139 = vsel %vm510, %v1122, %v1106
      %v1140 = vsel %vm510, %v1124, %v1108
      %v1141 = vld [vmem:[%s513] ss:$8 sm:$0x3]
      %v1143 = vperm.slane %v1141, 0
      %v1144 = vperm.slane %v1141, 1
      %v1147 = vmul.f32 %v1133, %v1143
      %v1148 = vmul.f32 %v1125, %v1144
      %v1149 = vmul.f32 %v1134, %v1143
      %v1150 = vmul.f32 %v1126, %v1144
      %v1151 = vmul.f32 %v1135, %v1143
      %v1152 = vmul.f32 %v1127, %v1144
      %v1153 = vmul.f32 %v1136, %v1143
      %v1154 = vmul.f32 %v1128, %v1144
      %v1155 = vmul.f32 %v1137, %v1143
      %v1156 = vmul.f32 %v1129, %v1144
      %v1157 = vmul.f32 %v1138, %v1143
      %v1158 = vmul.f32 %v1130, %v1144
      %v1159 = vmul.f32 %v1139, %v1143
      %v1160 = vmul.f32 %v1131, %v1144
      %v1161 = vmul.f32 %v1140, %v1143
      %v1162 = vmul.f32 %v1132, %v1144
      %v1163 = vpack.c.bf16 %v1148, %v1147
      %v1164 = vpack.c.bf16 %v1150, %v1149
      %v1165 = vpack.c.bf16 %v1152, %v1151
      %v1166 = vpack.c.bf16 %v1154, %v1153
      %v1167 = vpack.c.bf16 %v1156, %v1155
      %v1168 = vpack.c.bf16 %v1158, %v1157
      %v1169 = vpack.c.bf16 %v1160, %v1159
      %v1170 = vpack.c.bf16 %v1162, %v1161
      %1171 = vst [vmem:[#allocation3 + $0xc0] sm:$0xff] %v1163
      %1172 = vst [vmem:[#allocation3 + $0xc8] sm:$0xff] %v1164
      %1173 = vst [vmem:[#allocation3 + $0xd0] sm:$0xff] %v1165
      %1174 = vst [vmem:[#allocation3 + $0xd8] sm:$0xff] %v1166
      %1175 = vst [vmem:[#allocation3 + $0xe0] sm:$0xff] %v1167
      %1176 = vst [vmem:[#allocation3 + $0xe8] sm:$0xff] %v1168
      %1177 = vst [vmem:[#allocation3 + $0xf0] sm:$0xff] %v1169
      %1178 = vst [vmem:[#allocation3 + $0xf8] sm:$0xff] %v1170
      %v1179 = vpack.c.bf16 %v820, %v819
      %v1180 = vpack.c.bf16 %v822, %v821
      %v1181 = vpack.c.bf16 %v824, %v823
      %v1182 = vpack.c.bf16 %v826, %v825
      %v1183 = vpack.c.bf16 %v828, %v827
      %v1184 = vpack.c.bf16 %v830, %v829
      %v1185 = vpack.c.bf16 %v832, %v831
      %v1186 = vpack.c.bf16 %v834, %v833
      %1187 = vst [vmem:[#allocation3 + $0x100] sm:$0xff] %v1179
      %1188 = vst [vmem:[#allocation3 + $0x108] sm:$0xff] %v1180
      %1189 = vst [vmem:[#allocation3 + $0x110] sm:$0xff] %v1181
      %1190 = vst [vmem:[#allocation3 + $0x118] sm:$0xff] %v1182
      %1191 = vst [vmem:[#allocation3 + $0x120] sm:$0xff] %v1183
      %1192 = vst [vmem:[#allocation3 + $0x128] sm:$0xff] %v1184
      %1193 = vst [vmem:[#allocation3 + $0x130] sm:$0xff] %v1185
      %1194 = vst [vmem:[#allocation3 + $0x138] sm:$0xff] %v1186
      %1195 = vrot.lane.b32.xlu0 %v819, 127
      %v1196 = vpop.permute.xlu0 %1195
      %1197 = vrot.lane.b32.xlu0 %v821, 127
      %v1198 = vpop.permute.xlu0 %1197
      %1199 = vrot.lane.b32.xlu0 %v823, 127
      %v1200 = vpop.permute.xlu0 %1199
      %1201 = vrot.lane.b32.xlu0 %v825, 127
      %v1202 = vpop.permute.xlu0 %1201
      %1203 = vrot.lane.b32.xlu0 %v827, 127
      %v1204 = vpop.permute.xlu0 %1203
      %1205 = vrot.lane.b32.xlu0 %v829, 127
      %v1206 = vpop.permute.xlu0 %1205
      %1207 = vrot.lane.b32.xlu0 %v831, 127
      %v1208 = vpop.permute.xlu0 %1207
      %1209 = vrot.lane.b32.xlu0 %v833, 127
      %v1210 = vpop.permute.xlu0 %1209
      %1211 = vrot.lane.b32.xlu0 %v820, 127
      %v1212 = vpop.permute.xlu0 %1211
      %1213 = vrot.lane.b32.xlu0 %v822, 127
      %v1214 = vpop.permute.xlu0 %1213
      %1215 = vrot.lane.b32.xlu0 %v824, 127
      %v1216 = vpop.permute.xlu0 %1215
      %1217 = vrot.lane.b32.xlu0 %v826, 127
      %v1218 = vpop.permute.xlu0 %1217
      %1219 = vrot.lane.b32.xlu0 %v828, 127
      %v1220 = vpop.permute.xlu0 %1219
      %1221 = vrot.lane.b32.xlu0 %v830, 127
      %v1222 = vpop.permute.xlu0 %1221
      %1223 = vrot.lane.b32.xlu0 %v832, 127
      %v1224 = vpop.permute.xlu0 %1223
      %1225 = vrot.lane.b32.xlu0 %v834, 127
      %v1226 = vpop.permute.xlu0 %1225
      %v1227 = vsel %vm547, %v1196, %v1212
      %v1228 = vsel %vm547, %v1198, %v1214
      %v1229 = vsel %vm547, %v1200, %v1216
      %v1230 = vsel %vm547, %v1202, %v1218
      %v1231 = vsel %vm547, %v1204, %v1220
      %v1232 = vsel %vm547, %v1206, %v1222
      %v1233 = vsel %vm547, %v1208, %v1224
      %v1234 = vsel %vm547, %v1210, %v1226
      %v1235 = vsel %vm547, %v1212, %v1196
      %v1236 = vsel %vm547, %v1214, %v1198
      %v1237 = vsel %vm547, %v1216, %v1200
      %v1238 = vsel %vm547, %v1218, %v1202
      %v1239 = vsel %vm547, %v1220, %v1204
      %v1240 = vsel %vm547, %v1222, %v1206
      %v1241 = vsel %vm547, %v1224, %v1208
      %v1242 = vsel %vm547, %v1226, %v1210
      %v1243 = vld [vmem:[%s550] ss:$8 sm:$0x3]
      %v1245 = vperm.slane %v1243, 0
      %v1246 = vperm.slane %v1243, 1
      %v1249 = vmul.f32 %v1227, %v1245
      %v1250 = vmul.f32 %v1235, %v1246
      %v1251 = vmul.f32 %v1228, %v1245
      %v1252 = vmul.f32 %v1236, %v1246
      %v1253 = vmul.f32 %v1229, %v1245
      %v1254 = vmul.f32 %v1237, %v1246
      %v1255 = vmul.f32 %v1230, %v1245
      %v1256 = vmul.f32 %v1238, %v1246
      %v1257 = vmul.f32 %v1231, %v1245
      %v1258 = vmul.f32 %v1239, %v1246
      %v1259 = vmul.f32 %v1232, %v1245
      %v1260 = vmul.f32 %v1240, %v1246
      %v1261 = vmul.f32 %v1233, %v1245
      %v1262 = vmul.f32 %v1241, %v1246
      %v1263 = vmul.f32 %v1234, %v1245
      %v1264 = vmul.f32 %v1242, %v1246
      %v1265 = vpack.c.bf16 %v1250, %v1249
      %v1266 = vpack.c.bf16 %v1252, %v1251
      %v1267 = vpack.c.bf16 %v1254, %v1253
      %v1268 = vpack.c.bf16 %v1256, %v1255
      %v1269 = vpack.c.bf16 %v1258, %v1257
      %v1270 = vpack.c.bf16 %v1260, %v1259
      %v1271 = vpack.c.bf16 %v1262, %v1261
      %v1272 = vpack.c.bf16 %v1264, %v1263
      %1273 = vst [vmem:[#allocation3 + $0x140] sm:$0xff] %v1265
      %1274 = vst [vmem:[#allocation3 + $0x148] sm:$0xff] %v1266
      %1275 = vst [vmem:[#allocation3 + $0x150] sm:$0xff] %v1267
      %1276 = vst [vmem:[#allocation3 + $0x158] sm:$0xff] %v1268
      %1277 = vst [vmem:[#allocation3 + $0x160] sm:$0xff] %v1269
      %1278 = vst [vmem:[#allocation3 + $0x168] sm:$0xff] %v1270
      %1279 = vst [vmem:[#allocation3 + $0x170] sm:$0xff] %v1271
      %1280 = vst [vmem:[#allocation3 + $0x178] sm:$0xff] %v1272
      %1281 = vrot.lane.b32.xlu0 %v819, 113
      %v1282 = vpop.permute.xlu0 %1281
      %1283 = vrot.lane.b32.xlu0 %v821, 113
      %v1284 = vpop.permute.xlu0 %1283
      %1285 = vrot.lane.b32.xlu0 %v823, 113
      %v1286 = vpop.permute.xlu0 %1285
      %1287 = vrot.lane.b32.xlu0 %v825, 113
      %v1288 = vpop.permute.xlu0 %1287
      %1289 = vrot.lane.b32.xlu0 %v827, 113
      %v1290 = vpop.permute.xlu0 %1289
      %1291 = vrot.lane.b32.xlu0 %v829, 113
      %v1292 = vpop.permute.xlu0 %1291
      %1293 = vrot.lane.b32.xlu0 %v831, 113
      %v1294 = vpop.permute.xlu0 %1293
      %1295 = vrot.lane.b32.xlu0 %v833, 113
      %v1296 = vpop.permute.xlu0 %1295
      %1297 = vrot.lane.b32.xlu0 %v820, 113
      %v1298 = vpop.permute.xlu0 %1297
      %1299 = vrot.lane.b32.xlu0 %v822, 113
      %v1300 = vpop.permute.xlu0 %1299
      %1301 = vrot.lane.b32.xlu0 %v824, 113
      %v1302 = vpop.permute.xlu0 %1301
      %1303 = vrot.lane.b32.xlu0 %v826, 113
      %v1304 = vpop.permute.xlu0 %1303
      %1305 = vrot.lane.b32.xlu0 %v828, 113
      %v1306 = vpop.permute.xlu0 %1305
      %1307 = vrot.lane.b32.xlu0 %v830, 113
      %v1308 = vpop.permute.xlu0 %1307
      %1309 = vrot.lane.b32.xlu0 %v832, 113
      %v1310 = vpop.permute.xlu0 %1309
      %1311 = vrot.lane.b32.xlu0 %v834, 113
      %v1312 = vpop.permute.xlu0 %1311
      %v1313 = vsel %vm578, %v1282, %v1298
      %v1314 = vsel %vm578, %v1284, %v1300
      %v1315 = vsel %vm578, %v1286, %v1302
      %v1316 = vsel %vm578, %v1288, %v1304
      %v1317 = vsel %vm578, %v1290, %v1306
      %v1318 = vsel %vm578, %v1292, %v1308
      %v1319 = vsel %vm578, %v1294, %v1310
      %v1320 = vsel %vm578, %v1296, %v1312
      %v1321 = vsel %vm578, %v1298, %v1282
      %v1322 = vsel %vm578, %v1300, %v1284
      %v1323 = vsel %vm578, %v1302, %v1286
      %v1324 = vsel %vm578, %v1304, %v1288
      %v1325 = vsel %vm578, %v1306, %v1290
      %v1326 = vsel %vm578, %v1308, %v1292
      %v1327 = vsel %vm578, %v1310, %v1294
      %v1328 = vsel %vm578, %v1312, %v1296
      %v1329 = vld [vmem:[%s581] ss:$8 sm:$0x3]
      %v1331 = vperm.slane %v1329, 0
      %v1332 = vperm.slane %v1329, 1
      %v1335 = vmul.f32 %v1313, %v1331
      %v1336 = vmul.f32 %v1321, %v1332
      %v1337 = vmul.f32 %v1314, %v1331
      %v1338 = vmul.f32 %v1322, %v1332
      %v1339 = vmul.f32 %v1315, %v1331
      %v1340 = vmul.f32 %v1323, %v1332
      %v1341 = vmul.f32 %v1316, %v1331
      %v1342 = vmul.f32 %v1324, %v1332
      %v1343 = vmul.f32 %v1317, %v1331
      %v1344 = vmul.f32 %v1325, %v1332
      %v1345 = vmul.f32 %v1318, %v1331
      %v1346 = vmul.f32 %v1326, %v1332
      %v1347 = vmul.f32 %v1319, %v1331
      %v1348 = vmul.f32 %v1327, %v1332
      %v1349 = vmul.f32 %v1320, %v1331
      %v1350 = vmul.f32 %v1328, %v1332
      %v1351 = vpack.c.bf16 %v1336, %v1335
      %v1352 = vpack.c.bf16 %v1338, %v1337
      %v1353 = vpack.c.bf16 %v1340, %v1339
      %v1354 = vpack.c.bf16 %v1342, %v1341
      %v1355 = vpack.c.bf16 %v1344, %v1343
      %v1356 = vpack.c.bf16 %v1346, %v1345
      %v1357 = vpack.c.bf16 %v1348, %v1347
      %v1358 = vpack.c.bf16 %v1350, %v1349
      %1359 = vst [vmem:[#allocation3 + $0x180] sm:$0xff] %v1351
      %1360 = vst [vmem:[#allocation3 + $0x188] sm:$0xff] %v1352
      %1361 = vst [vmem:[#allocation3 + $0x190] sm:$0xff] %v1353
      %1362 = vst [vmem:[#allocation3 + $0x198] sm:$0xff] %v1354
      %1363 = vst [vmem:[#allocation3 + $0x1a0] sm:$0xff] %v1355
      %1364 = vst [vmem:[#allocation3 + $0x1a8] sm:$0xff] %v1356
      %1365 = vst [vmem:[#allocation3 + $0x1b0] sm:$0xff] %v1357
      %1366 = vst [vmem:[#allocation3 + $0x1b8] sm:$0xff] %v1358
      %1367 = vrot.lane.b32.xlu0 %v819, 112
      %v1368 = vpop.permute.xlu0 %1367
      %1369 = vrot.lane.b32.xlu0 %v821, 112
      %v1370 = vpop.permute.xlu0 %1369
      %1371 = vrot.lane.b32.xlu0 %v823, 112
      %v1372 = vpop.permute.xlu0 %1371
      %1373 = vrot.lane.b32.xlu0 %v825, 112
      %v1374 = vpop.permute.xlu0 %1373
      %1375 = vrot.lane.b32.xlu0 %v827, 112
      %v1376 = vpop.permute.xlu0 %1375
      %1377 = vrot.lane.b32.xlu0 %v829, 112
      %v1378 = vpop.permute.xlu0 %1377
      %1379 = vrot.lane.b32.xlu0 %v831, 112
      %v1380 = vpop.permute.xlu0 %1379
      %1381 = vrot.lane.b32.xlu0 %v833, 112
      %v1382 = vpop.permute.xlu0 %1381
      %1383 = vrot.lane.b32.xlu0 %v820, 112
      %v1384 = vpop.permute.xlu0 %1383
      %1385 = vrot.lane.b32.xlu0 %v822, 112
      %v1386 = vpop.permute.xlu0 %1385
      %1387 = vrot.lane.b32.xlu0 %v824, 112
      %v1388 = vpop.permute.xlu0 %1387
      %1389 = vrot.lane.b32.xlu0 %v826, 112
      %v1390 = vpop.permute.xlu0 %1389
      %1391 = vrot.lane.b32.xlu0 %v828, 112
      %v1392 = vpop.permute.xlu0 %1391
      %1393 = vrot.lane.b32.xlu0 %v830, 112
      %v1394 = vpop.permute.xlu0 %1393
      %1395 = vrot.lane.b32.xlu0 %v832, 112
      %v1396 = vpop.permute.xlu0 %1395
      %1397 = vrot.lane.b32.xlu0 %v834, 112
      %v1398 = vpop.permute.xlu0 %1397
      %v1399 = vsel %vm607, %v1368, %v1384
      %v1400 = vsel %vm607, %v1370, %v1386
      %v1401 = vsel %vm607, %v1372, %v1388
      %v1402 = vsel %vm607, %v1374, %v1390
      %v1403 = vsel %vm607, %v1376, %v1392
      %v1404 = vsel %vm607, %v1378, %v1394
      %v1405 = vsel %vm607, %v1380, %v1396
      %v1406 = vsel %vm607, %v1382, %v1398
      %v1407 = vsel %vm607, %v1384, %v1368
      %v1408 = vsel %vm607, %v1386, %v1370
      %v1409 = vsel %vm607, %v1388, %v1372
      %v1410 = vsel %vm607, %v1390, %v1374
      %v1411 = vsel %vm607, %v1392, %v1376
      %v1412 = vsel %vm607, %v1394, %v1378
      %v1413 = vsel %vm607, %v1396, %v1380
      %v1414 = vsel %vm607, %v1398, %v1382
      %v1415 = vld [vmem:[%s610] ss:$8 sm:$0x3]
      %v1417 = vperm.slane %v1415, 0
      %v1418 = vperm.slane %v1415, 1
      %v1421 = vmul.f32 %v1399, %v1417
      %v1422 = vmul.f32 %v1407, %v1418
      %v1423 = vmul.f32 %v1400, %v1417
      %v1424 = vmul.f32 %v1408, %v1418
      %v1425 = vmul.f32 %v1401, %v1417
      %v1426 = vmul.f32 %v1409, %v1418
      %v1427 = vmul.f32 %v1402, %v1417
      %v1428 = vmul.f32 %v1410, %v1418
      %v1429 = vmul.f32 %v1403, %v1417
      %v1430 = vmul.f32 %v1411, %v1418
      %v1431 = vmul.f32 %v1404, %v1417
      %v1432 = vmul.f32 %v1412, %v1418
      %v1433 = vmul.f32 %v1405, %v1417
      %v1434 = vmul.f32 %v1413, %v1418
      %v1435 = vmul.f32 %v1406, %v1417
      %v1436 = vmul.f32 %v1414, %v1418
      %v1437 = vpack.c.bf16 %v1422, %v1421
      %v1438 = vpack.c.bf16 %v1424, %v1423
      %v1439 = vpack.c.bf16 %v1426, %v1425
      %v1440 = vpack.c.bf16 %v1428, %v1427
      %v1441 = vpack.c.bf16 %v1430, %v1429
      %v1442 = vpack.c.bf16 %v1432, %v1431
      %v1443 = vpack.c.bf16 %v1434, %v1433
      %v1444 = vpack.c.bf16 %v1436, %v1435
      %1445 = vst [vmem:[#allocation3 + $0x1c0] sm:$0xff] %v1437
      %1446 = vst [vmem:[#allocation3 + $0x1c8] sm:$0xff] %v1438
      %1447 = vst [vmem:[#allocation3 + $0x1d0] sm:$0xff] %v1439
      %1448 = vst [vmem:[#allocation3 + $0x1d8] sm:$0xff] %v1440
      %1449 = vst [vmem:[#allocation3 + $0x1e0] sm:$0xff] %v1441
      %1450 = vst [vmem:[#allocation3 + $0x1e8] sm:$0xff] %v1442
      %1451 = vst [vmem:[#allocation3 + $0x1f0] sm:$0xff] %v1443
      %1452 = vst [vmem:[#allocation3 + $0x1f8] sm:$0xff] %v1444
      %1453 = vrot.lane.b32.xlu0 %v819, 111
      %v1454 = vpop.permute.xlu0 %1453
      %1455 = vrot.lane.b32.xlu0 %v821, 111
      %v1456 = vpop.permute.xlu0 %1455
      %1457 = vrot.lane.b32.xlu0 %v823, 111
      %v1458 = vpop.permute.xlu0 %1457
      %1459 = vrot.lane.b32.xlu0 %v825, 111
      %v1460 = vpop.permute.xlu0 %1459
      %1461 = vrot.lane.b32.xlu0 %v827, 111
      %v1462 = vpop.permute.xlu0 %1461
      %1463 = vrot.lane.b32.xlu0 %v829, 111
      %v1464 = vpop.permute.xlu0 %1463
      %1465 = vrot.lane.b32.xlu0 %v831, 111
      %v1466 = vpop.permute.xlu0 %1465
      %1467 = vrot.lane.b32.xlu0 %v833, 111
      %v1468 = vpop.permute.xlu0 %1467
      %1469 = vrot.lane.b32.xlu0 %v820, 111
      %v1470 = vpop.permute.xlu0 %1469
      %1471 = vrot.lane.b32.xlu0 %v822, 111
      %v1472 = vpop.permute.xlu0 %1471
      %1473 = vrot.lane.b32.xlu0 %v824, 111
      %v1474 = vpop.permute.xlu0 %1473
      %1475 = vrot.lane.b32.xlu0 %v826, 111
      %v1476 = vpop.permute.xlu0 %1475
      %1477 = vrot.lane.b32.xlu0 %v828, 111
      %v1478 = vpop.permute.xlu0 %1477
      %1479 = vrot.lane.b32.xlu0 %v830, 111
      %v1480 = vpop.permute.xlu0 %1479
      %1481 = vrot.lane.b32.xlu0 %v832, 111
      %v1482 = vpop.permute.xlu0 %1481
      %1483 = vrot.lane.b32.xlu0 %v834, 111
      %v1484 = vpop.permute.xlu0 %1483
      %v1485 = vsel %vm636, %v1454, %v1470
      %v1486 = vsel %vm636, %v1456, %v1472
      %v1487 = vsel %vm636, %v1458, %v1474
      %v1488 = vsel %vm636, %v1460, %v1476
      %v1489 = vsel %vm636, %v1462, %v1478
      %v1490 = vsel %vm636, %v1464, %v1480
      %v1491 = vsel %vm636, %v1466, %v1482
      %v1492 = vsel %vm636, %v1468, %v1484
      %v1493 = vsel %vm636, %v1470, %v1454
      %v1494 = vsel %vm636, %v1472, %v1456
      %v1495 = vsel %vm636, %v1474, %v1458
      %v1496 = vsel %vm636, %v1476, %v1460
      %v1497 = vsel %vm636, %v1478, %v1462
      %v1498 = vsel %vm636, %v1480, %v1464
      %v1499 = vsel %vm636, %v1482, %v1466
      %v1500 = vsel %vm636, %v1484, %v1468
      %v1501 = vld [vmem:[%s639] ss:$8 sm:$0x3]
      %v1503 = vperm.slane %v1501, 0
      %v1504 = vperm.slane %v1501, 1
      %v1507 = vmul.f32 %v1485, %v1503
      %v1508 = vmul.f32 %v1493, %v1504
      %v1509 = vmul.f32 %v1486, %v1503
      %v1510 = vmul.f32 %v1494, %v1504
      %v1511 = vmul.f32 %v1487, %v1503
      %v1512 = vmul.f32 %v1495, %v1504
      %v1513 = vmul.f32 %v1488, %v1503
      %v1514 = vmul.f32 %v1496, %v1504
      %v1515 = vmul.f32 %v1489, %v1503
      %v1516 = vmul.f32 %v1497, %v1504
      %v1517 = vmul.f32 %v1490, %v1503
      %v1518 = vmul.f32 %v1498, %v1504
      %v1519 = vmul.f32 %v1491, %v1503
      %v1520 = vmul.f32 %v1499, %v1504
      %v1521 = vmul.f32 %v1492, %v1503
      %v1522 = vmul.f32 %v1500, %v1504
      %v1523 = vpack.c.bf16 %v1508, %v1507
      %v1524 = vpack.c.bf16 %v1510, %v1509
      %v1525 = vpack.c.bf16 %v1512, %v1511
      %v1526 = vpack.c.bf16 %v1514, %v1513
      %v1527 = vpack.c.bf16 %v1516, %v1515
      %v1528 = vpack.c.bf16 %v1518, %v1517
      %v1529 = vpack.c.bf16 %v1520, %v1519
      %v1530 = vpack.c.bf16 %v1522, %v1521
      %1531 = vst [vmem:[#allocation3 + $0x200] sm:$0xff] %v1523
      %1532 = vst [vmem:[#allocation3 + $0x208] sm:$0xff] %v1524
      %1533 = vst [vmem:[#allocation3 + $0x210] sm:$0xff] %v1525
      %1534 = vst [vmem:[#allocation3 + $0x218] sm:$0xff] %v1526
      %1535 = vst [vmem:[#allocation3 + $0x220] sm:$0xff] %v1527
      %1536 = vst [vmem:[#allocation3 + $0x228] sm:$0xff] %v1528
      %1537 = vst [vmem:[#allocation3 + $0x230] sm:$0xff] %v1529
      %1538 = vst [vmem:[#allocation3 + $0x238] sm:$0xff] %v1530
      %v1539 = vld [vmem:[%s4] sm:$0xff]
      %v1540 = vld [vmem:[%s4 + $0x8] sm:$0xff]
      %v1541 = vld [vmem:[%s4 + $0x10] sm:$0xf]
      %v1542 = vld [vmem:[%s4 + $0x14] sm:$0xff]
      %v1543 = vld [vmem:[%s4 + $0x1c] sm:$0xff]
      %v1544 = vld [vmem:[%s4 + $0x24] sm:$0xf]
      %v1545 = vld [vmem:[%s4 + $0x28] sm:$0xff]
      %v1546 = vld [vmem:[%s4 + $0x30] sm:$0xff]
      %v1547 = vld [vmem:[%s4 + $0x38] sm:$0xf]
      %v1548 = vld [vmem:[%s4 + $0x3c] sm:$0xff]
      %v1549 = vld [vmem:[%s4 + $0x44] sm:$0xff]
      %v1550 = vld [vmem:[%s4 + $0x4c] sm:$0xf]
      %v1551 = vld [vmem:[%s4 + $0x50] sm:$0xff]
      %v1552 = vld [vmem:[%s4 + $0x58] sm:$0xff]
      %v1553 = vld [vmem:[%s4 + $0x60] sm:$0xf]
      %v1554 = vld [vmem:[%s4 + $0x64] sm:$0xff]
      %v1555 = vld [vmem:[%s4 + $0x6c] sm:$0xff]
      %v1556 = vld [vmem:[%s4 + $0x74] sm:$0xf]
      %v1557 = vld [vmem:[%s4 + $0x78] sm:$0xff]
      %v1558 = vld [vmem:[%s4 + $0x80] sm:$0xff]
      %v1559 = vld [vmem:[%s4 + $0x88] sm:$0xf]
      %v1560 = vld [vmem:[%s4 + $0x8c] sm:$0xff]
      %v1561 = vld [vmem:[%s4 + $0x94] sm:$0xff]
      %v1562 = vld [vmem:[%s4 + $0x9c] sm:$0xf]
      %v1563 = vld [vmem:[%s4 + $0xa0] sm:$0xff]
      %v1564 = vld [vmem:[%s4 + $0xa8] sm:$0xff]
      %v1565 = vld [vmem:[%s4 + $0xb0] sm:$0xf]
      %v1566 = vld [vmem:[%s4 + $0xb4] sm:$0xff]
      %v1567 = vld [vmem:[%s4 + $0xbc] sm:$0xff]
      %v1568 = vld [vmem:[%s4 + $0xc4] sm:$0xf]
      %v1569 = vld [vmem:[%s4 + $0xc8] sm:$0xff]
      %v1570 = vld [vmem:[%s4 + $0xd0] sm:$0xff]
      %v1571 = vld [vmem:[%s4 + $0xd8] sm:$0xf]
      %v1572 = vld [vmem:[%s4 + $0xdc] sm:$0xff]
      %v1573 = vld [vmem:[%s4 + $0xe4] sm:$0xff]
      %v1574 = vld [vmem:[%s4 + $0xec] sm:$0xf]
      %v1575 = vld [vmem:[%s4 + $0xf0] sm:$0xff]
      %v1576 = vld [vmem:[%s4 + $0xf8] sm:$0xff]
      %v1577 = vld [vmem:[%s4 + $0x100] sm:$0xf]
      %v1578 = vld [vmem:[%s4 + $0x104] sm:$0xff]
      %v1579 = vld [vmem:[%s4 + $0x10c] sm:$0xff]
      %v1580 = vld [vmem:[%s4 + $0x114] sm:$0xf]
      %v1581 = vld [vmem:[%s4 + $0x118] sm:$0xff]
      %v1582 = vld [vmem:[%s4 + $0x120] sm:$0xff]
      %v1583 = vld [vmem:[%s4 + $0x128] sm:$0xf]
      %v1584 = vld [vmem:[%s4 + $0x12c] sm:$0xff]
      %v1585 = vld [vmem:[%s4 + $0x134] sm:$0xff]
      %v1586 = vld [vmem:[%s4 + $0x13c] sm:$0xf]
      %v1587 = vld [vmem:[#allocation3] sm:$0xff]
      %v1588 = vld [vmem:[#allocation3 + $0x8] sm:$0xff]
      %v1589 = vld [vmem:[#allocation3 + $0x10] sm:$0xff]
      %v1590 = vld [vmem:[#allocation3 + $0x18] sm:$0xff]
      %v1591 = vld [vmem:[#allocation3 + $0x20] sm:$0xff]
      %v1592 = vld [vmem:[#allocation3 + $0x28] sm:$0xff]
      %v1593 = vld [vmem:[#allocation3 + $0x30] sm:$0xff]
      %v1594 = vld [vmem:[#allocation3 + $0x38] sm:$0xff]
      %v1595 = vld [vmem:[#allocation3 + $0x40] sm:$0xff]
      %v1596 = vld [vmem:[#allocation3 + $0x48] sm:$0xff]
      %v1597 = vld [vmem:[#allocation3 + $0x50] sm:$0xff]
      %v1598 = vld [vmem:[#allocation3 + $0x58] sm:$0xff]
      %v1599 = vld [vmem:[#allocation3 + $0x60] sm:$0xff]
      %v1600 = vld [vmem:[#allocation3 + $0x68] sm:$0xff]
      %v1601 = vld [vmem:[#allocation3 + $0x70] sm:$0xff]
      %v1602 = vld [vmem:[#allocation3 + $0x78] sm:$0xff]
      %v1603 = vld [vmem:[#allocation3 + $0x80] sm:$0xff]
      %v1604 = vld [vmem:[#allocation3 + $0x88] sm:$0xff]
      %v1605 = vld [vmem:[#allocation3 + $0x90] sm:$0xff]
      %v1606 = vld [vmem:[#allocation3 + $0x98] sm:$0xff]
      %v1607 = vld [vmem:[#allocation3 + $0xa0] sm:$0xff]
      %v1608 = vld [vmem:[#allocation3 + $0xa8] sm:$0xff]
      %v1609 = vld [vmem:[#allocation3 + $0xb0] sm:$0xff]
      %v1610 = vld [vmem:[#allocation3 + $0xb8] sm:$0xff]
      %v1611 = vld [vmem:[#allocation3 + $0xc0] sm:$0xff]
      %v1612 = vld [vmem:[#allocation3 + $0xc8] sm:$0xff]
      %v1613 = vld [vmem:[#allocation3 + $0xd0] sm:$0xff]
      %v1614 = vld [vmem:[#allocation3 + $0xd8] sm:$0xff]
      %v1615 = vld [vmem:[#allocation3 + $0xe0] sm:$0xff]
      %v1616 = vld [vmem:[#allocation3 + $0xe8] sm:$0xff]
      %v1617 = vld [vmem:[#allocation3 + $0xf0] sm:$0xff]
      %v1618 = vld [vmem:[#allocation3 + $0xf8] sm:$0xff]
      %v1619 = vld [vmem:[#allocation3 + $0x100] sm:$0xff]
      %v1620 = vld [vmem:[#allocation3 + $0x108] sm:$0xff]
      %v1621 = vld [vmem:[#allocation3 + $0x110] sm:$0xff]
      %v1622 = vld [vmem:[#allocation3 + $0x118] sm:$0xff]
      %v1623 = vld [vmem:[#allocation3 + $0x120] sm:$0xff]
      %v1624 = vld [vmem:[#allocation3 + $0x128] sm:$0xff]
      %v1625 = vld [vmem:[#allocation3 + $0x130] sm:$0xff]
      %v1626 = vld [vmem:[#allocation3 + $0x138] sm:$0xff]
      %v1627 = vld [vmem:[#allocation3 + $0x140] sm:$0xff]
      %v1628 = vld [vmem:[#allocation3 + $0x148] sm:$0xff]
      %v1629 = vld [vmem:[#allocation3 + $0x150] sm:$0xff]
      %v1630 = vld [vmem:[#allocation3 + $0x158] sm:$0xff]
      %v1631 = vld [vmem:[#allocation3 + $0x160] sm:$0xff]
      %v1632 = vld [vmem:[#allocation3 + $0x168] sm:$0xff]
      %v1633 = vld [vmem:[#allocation3 + $0x170] sm:$0xff]
      %v1634 = vld [vmem:[#allocation3 + $0x178] sm:$0xff]
      %v1635 = vld [vmem:[#allocation3 + $0x180] sm:$0xff]
      %v1636 = vld [vmem:[#allocation3 + $0x188] sm:$0xff]
      %v1637 = vld [vmem:[#allocation3 + $0x190] sm:$0xff]
      %v1638 = vld [vmem:[#allocation3 + $0x198] sm:$0xff]
      %v1639 = vld [vmem:[#allocation3 + $0x1a0] sm:$0xff]
      %v1640 = vld [vmem:[#allocation3 + $0x1a8] sm:$0xff]
      %v1641 = vld [vmem:[#allocation3 + $0x1b0] sm:$0xff]
      %v1642 = vld [vmem:[#allocation3 + $0x1b8] sm:$0xff]
      %v1643 = vld [vmem:[#allocation3 + $0x1c0] sm:$0xff]
      %v1644 = vld [vmem:[#allocation3 + $0x1c8] sm:$0xff]
      %v1645 = vld [vmem:[#allocation3 + $0x1d0] sm:$0xff]
      %v1646 = vld [vmem:[#allocation3 + $0x1d8] sm:$0xff]
      %v1647 = vld [vmem:[#allocation3 + $0x1e0] sm:$0xff]
      %v1648 = vld [vmem:[#allocation3 + $0x1e8] sm:$0xff]
      %v1649 = vld [vmem:[#allocation3 + $0x1f0] sm:$0xff]
      %v1650 = vld [vmem:[#allocation3 + $0x1f8] sm:$0xff]
      %v1651 = vld [vmem:[#allocation3 + $0x200] sm:$0xff]
      %v1652 = vld [vmem:[#allocation3 + $0x208] sm:$0xff]
      %v1653 = vld [vmem:[#allocation3 + $0x210] sm:$0xff]
      %v1654 = vld [vmem:[#allocation3 + $0x218] sm:$0xff]
      %v1655 = vld [vmem:[#allocation3 + $0x220] sm:$0xff]
      %v1656 = vld [vmem:[#allocation3 + $0x228] sm:$0xff]
      %v1657 = vld [vmem:[#allocation3 + $0x230] sm:$0xff]
      %v1658 = vld [vmem:[#allocation3 + $0x238] sm:$0xff]
      %v1659 = vld [vmem:[%s5] sm:$0xff]
      %v1660 = vld [vmem:[%s5 + $0x8] sm:$0xff]
      %v1661 = vld [vmem:[%s5 + $0x10] sm:$0xff]
      %v1662 = vld [vmem:[%s5 + $0x18] sm:$0xff]
      %v1663 = vld [vmem:[%s5 + $0x20] sm:$0xff]
      %v1664 = vld [vmem:[%s5 + $0x28] sm:$0xff]
      %v1665 = vld [vmem:[%s5 + $0x30] sm:$0xff]
      %v1666 = vld [vmem:[%s5 + $0x38] sm:$0xff]
      %v1667 = vld [vmem:[%s5 + $0x40] sm:$0xff]
      %v1668 = vld [vmem:[%s5 + $0x48] sm:$0xff]
      %v1669 = vld [vmem:[%s5 + $0x50] sm:$0xff]
      %v1670 = vld [vmem:[%s5 + $0x58] sm:$0xff]
      %v1671 = vld [vmem:[%s5 + $0x60] sm:$0xff]
      %v1672 = vld [vmem:[%s5 + $0x68] sm:$0xff]
      %v1673 = vld [vmem:[%s5 + $0x70] sm:$0xff]
      %v1674 = vld [vmem:[%s5 + $0x78] sm:$0xff]
      %1676 = vset.pattern.permute.xlu0 0
      %1677 = vperm.xlu0 %1676, %v1659
      %v1678 = vpop.permute.xlu0 %1677
      %1681 = vset.pattern.permute.xlu0 0
      %1682 = vperm.xlu0 %1681, %v1660
      %v1683 = vpop.permute.xlu0 %1682
      %1686 = vset.pattern.permute.xlu0 0
      %1687 = vperm.xlu0 %1686, %v1661
      %v1688 = vpop.permute.xlu0 %1687
      %1691 = vset.pattern.permute.xlu0 0
      %1692 = vperm.xlu0 %1691, %v1662
      %v1693 = vpop.permute.xlu0 %1692
      %1696 = vset.pattern.permute.xlu0 0
      %1697 = vperm.xlu0 %1696, %v1663
      %v1698 = vpop.permute.xlu0 %1697
      %1701 = vset.pattern.permute.xlu0 0
      %1702 = vperm.xlu0 %1701, %v1664
      %v1703 = vpop.permute.xlu0 %1702
      %1706 = vset.pattern.permute.xlu0 0
      %1707 = vperm.xlu0 %1706, %v1665
      %v1708 = vpop.permute.xlu0 %1707
      %1711 = vset.pattern.permute.xlu0 0
      %1712 = vperm.xlu0 %1711, %v1666
      %v1713 = vpop.permute.xlu0 %1712
      %1716 = vset.pattern.permute.xlu0 0
      %1717 = vperm.xlu0 %1716, %v1667
      %v1718 = vpop.permute.xlu0 %1717
      %1721 = vset.pattern.permute.xlu0 0
      %1722 = vperm.xlu0 %1721, %v1668
      %v1723 = vpop.permute.xlu0 %1722
      %1726 = vset.pattern.permute.xlu0 0
      %1727 = vperm.xlu0 %1726, %v1669
      %v1728 = vpop.permute.xlu0 %1727
      %1731 = vset.pattern.permute.xlu0 0
      %1732 = vperm.xlu0 %1731, %v1670
      %v1733 = vpop.permute.xlu0 %1732
      %1736 = vset.pattern.permute.xlu0 0
      %1737 = vperm.xlu0 %1736, %v1671
      %v1738 = vpop.permute.xlu0 %1737
      %1741 = vset.pattern.permute.xlu0 0
      %1742 = vperm.xlu0 %1741, %v1672
      %v1743 = vpop.permute.xlu0 %1742
      %1746 = vset.pattern.permute.xlu0 0
      %1747 = vperm.xlu0 %1746, %v1673
      %v1748 = vpop.permute.xlu0 %1747
      %1751 = vset.pattern.permute.xlu0 0
      %1752 = vperm.xlu0 %1751, %v1674
      %v1753 = vpop.permute.xlu0 %1752
      %v1803 = vunpack.c.l.b16 %v1539
      %v1804 = vunpack.c.h.b16 %v1539
      %v1805 = vunpack.c.l.b16 %v1540
      %v1806 = vunpack.c.h.b16 %v1540
      %v1807 = vunpack.c.l.b16 %v1541
      %v1808 = vunpack.c.l.b16 %v1542
      %v1809 = vunpack.c.h.b16 %v1542
      %v1810 = vunpack.c.l.b16 %v1543
      %v1811 = vunpack.c.h.b16 %v1543
      %v1812 = vunpack.c.l.b16 %v1544
      %v1813 = vunpack.c.l.b16 %v1545
      %v1814 = vunpack.c.h.b16 %v1545
      %v1815 = vunpack.c.l.b16 %v1546
      %v1816 = vunpack.c.h.b16 %v1546
      %v1817 = vunpack.c.l.b16 %v1547
      %v1818 = vunpack.c.l.b16 %v1548
      %v1819 = vunpack.c.h.b16 %v1548
      %v1820 = vunpack.c.l.b16 %v1549
      %v1821 = vunpack.c.h.b16 %v1549
      %v1822 = vunpack.c.l.b16 %v1550
      %v1823 = vunpack.c.l.b16 %v1551
      %v1824 = vunpack.c.h.b16 %v1551
      %v1825 = vunpack.c.l.b16 %v1552
      %v1826 = vunpack.c.h.b16 %v1552
      %v1827 = vunpack.c.l.b16 %v1553
      %v1828 = vunpack.c.l.b16 %v1554
      %v1829 = vunpack.c.h.b16 %v1554
      %v1830 = vunpack.c.l.b16 %v1555
      %v1831 = vunpack.c.h.b16 %v1555
      %v1832 = vunpack.c.l.b16 %v1556
      %v1833 = vunpack.c.l.b16 %v1557
      %v1834 = vunpack.c.h.b16 %v1557
      %v1835 = vunpack.c.l.b16 %v1558
      %v1836 = vunpack.c.h.b16 %v1558
      %v1837 = vunpack.c.l.b16 %v1559
      %v1838 = vunpack.c.l.b16 %v1560
      %v1839 = vunpack.c.h.b16 %v1560
      %v1840 = vunpack.c.l.b16 %v1561
      %v1841 = vunpack.c.h.b16 %v1561
      %v1842 = vunpack.c.l.b16 %v1562
      %v1843 = vunpack.c.l.b16 %v1563
      %v1844 = vunpack.c.h.b16 %v1563
      %v1845 = vunpack.c.l.b16 %v1564
      %v1846 = vunpack.c.h.b16 %v1564
      %v1847 = vunpack.c.l.b16 %v1565
      %v1848 = vunpack.c.l.b16 %v1566
      %v1849 = vunpack.c.h.b16 %v1566
      %v1850 = vunpack.c.l.b16 %v1567
      %v1851 = vunpack.c.h.b16 %v1567
      %v1852 = vunpack.c.l.b16 %v1568
      %v1853 = vunpack.c.l.b16 %v1569
      %v1854 = vunpack.c.h.b16 %v1569
      %v1855 = vunpack.c.l.b16 %v1570
      %v1856 = vunpack.c.h.b16 %v1570
      %v1857 = vunpack.c.l.b16 %v1571
      %v1858 = vunpack.c.l.b16 %v1572
      %v1859 = vunpack.c.h.b16 %v1572
      %v1860 = vunpack.c.l.b16 %v1573
      %v1861 = vunpack.c.h.b16 %v1573
      %v1862 = vunpack.c.l.b16 %v1574
      %v1863 = vunpack.c.l.b16 %v1575
      %v1864 = vunpack.c.h.b16 %v1575
      %v1865 = vunpack.c.l.b16 %v1576
      %v1866 = vunpack.c.h.b16 %v1576
      %v1867 = vunpack.c.l.b16 %v1577
      %v1868 = vunpack.c.l.b16 %v1578
      %v1869 = vunpack.c.h.b16 %v1578
      %v1870 = vunpack.c.l.b16 %v1579
      %v1871 = vunpack.c.h.b16 %v1579
      %v1872 = vunpack.c.l.b16 %v1580
      %v1873 = vunpack.c.l.b16 %v1581
      %v1874 = vunpack.c.h.b16 %v1581
      %v1875 = vunpack.c.l.b16 %v1582
      %v1876 = vunpack.c.h.b16 %v1582
      %v1877 = vunpack.c.l.b16 %v1583
      %v1878 = vunpack.c.l.b16 %v1584
      %v1879 = vunpack.c.h.b16 %v1584
      %v1880 = vunpack.c.l.b16 %v1585
      %v1881 = vunpack.c.h.b16 %v1585
      %v1882 = vunpack.c.l.b16 %v1586
      %v1883 = vpack.c.b16 %v1808, %v1803
      %v1884 = vpack.c.b16 %v1809, %v1804
      %v1885 = vpack.c.b16 %v1810, %v1805
      %v1886 = vpack.c.b16 %v1811, %v1806
      %v1887 = vpack.c.b16 %v1812, %v1807
      %v1888 = vpack.c.b16 %v1818, %v1813
      %v1889 = vpack.c.b16 %v1819, %v1814
      %v1890 = vpack.c.b16 %v1820, %v1815
      %v1891 = vpack.c.b16 %v1821, %v1816
      %v1892 = vpack.c.b16 %v1822, %v1817
      %v1893 = vpack.c.b16 %v1828, %v1823
      %v1894 = vpack.c.b16 %v1829, %v1824
      %v1895 = vpack.c.b16 %v1830, %v1825
      %v1896 = vpack.c.b16 %v1831, %v1826
      %v1897 = vpack.c.b16 %v1832, %v1827
      %v1898 = vpack.c.b16 %v1838, %v1833
      %v1899 = vpack.c.b16 %v1839, %v1834
      %v1900 = vpack.c.b16 %v1840, %v1835
      %v1901 = vpack.c.b16 %v1841, %v1836
      %v1902 = vpack.c.b16 %v1842, %v1837
      %v1903 = vpack.c.b16 %v1848, %v1843
      %v1904 = vpack.c.b16 %v1849, %v1844
      %v1905 = vpack.c.b16 %v1850, %v1845
      %v1906 = vpack.c.b16 %v1851, %v1846
      %v1907 = vpack.c.b16 %v1852, %v1847
      %v1908 = vpack.c.b16 %v1858, %v1853
      %v1909 = vpack.c.b16 %v1859, %v1854
      %v1910 = vpack.c.b16 %v1860, %v1855
      %v1911 = vpack.c.b16 %v1861, %v1856
      %v1912 = vpack.c.b16 %v1862, %v1857
      %v1913 = vpack.c.b16 %v1868, %v1863
      %v1914 = vpack.c.b16 %v1869, %v1864
      %v1915 = vpack.c.b16 %v1870, %v1865
      %v1916 = vpack.c.b16 %v1871, %v1866
      %v1917 = vpack.c.b16 %v1872, %v1867
      %v1918 = vpack.c.b16 %v1878, %v1873
      %v1919 = vpack.c.b16 %v1879, %v1874
      %v1920 = vpack.c.b16 %v1880, %v1875
      %v1921 = vpack.c.b16 %v1881, %v1876
      %v1922 = vpack.c.b16 %v1882, %v1877
      %v2027 = vunpack.c.l.b16 %v1587
      %v2028 = vunpack.c.h.b16 %v1587
      %v2029 = vunpack.c.l.b16 %v1588
      %v2030 = vunpack.c.h.b16 %v1588
      %v2031 = vunpack.c.l.b16 %v1589
      %v2032 = vunpack.c.h.b16 %v1589
      %v2033 = vunpack.c.l.b16 %v1590
      %v2034 = vunpack.c.h.b16 %v1590
      %v2035 = vunpack.c.l.b16 %v1591
      %v2036 = vunpack.c.h.b16 %v1591
      %v2037 = vunpack.c.l.b16 %v1592
      %v2038 = vunpack.c.h.b16 %v1592
      %v2039 = vunpack.c.l.b16 %v1593
      %v2040 = vunpack.c.h.b16 %v1593
      %v2041 = vunpack.c.l.b16 %v1594
      %v2042 = vunpack.c.h.b16 %v1594
      %v2043 = vunpack.c.l.b16 %v1595
      %v2044 = vunpack.c.h.b16 %v1595
      %v2045 = vunpack.c.l.b16 %v1596
      %v2046 = vunpack.c.h.b16 %v1596
      %v2047 = vunpack.c.l.b16 %v1597
      %v2048 = vunpack.c.h.b16 %v1597
      %v2049 = vunpack.c.l.b16 %v1598
      %v2050 = vunpack.c.h.b16 %v1598
      %v2051 = vunpack.c.l.b16 %v1599
      %v2052 = vunpack.c.h.b16 %v1599
      %v2053 = vunpack.c.l.b16 %v1600
      %v2054 = vunpack.c.h.b16 %v1600
      %v2055 = vunpack.c.l.b16 %v1601
      %v2056 = vunpack.c.h.b16 %v1601
      %v2057 = vunpack.c.l.b16 %v1602
      %v2058 = vunpack.c.h.b16 %v1602
      %v2059 = vunpack.c.l.b16 %v1603
      %v2060 = vunpack.c.h.b16 %v1603
      %v2061 = vunpack.c.l.b16 %v1604
      %v2062 = vunpack.c.h.b16 %v1604
      %v2063 = vunpack.c.l.b16 %v1605
      %v2064 = vunpack.c.h.b16 %v1605
      %v2065 = vunpack.c.l.b16 %v1606
      %v2066 = vunpack.c.h.b16 %v1606
      %v2067 = vunpack.c.l.b16 %v1607
      %v2068 = vunpack.c.h.b16 %v1607
      %v2069 = vunpack.c.l.b16 %v1608
      %v2070 = vunpack.c.h.b16 %v1608
      %v2071 = vunpack.c.l.b16 %v1609
      %v2072 = vunpack.c.h.b16 %v1609
      %v2073 = vunpack.c.l.b16 %v1610
      %v2074 = vunpack.c.h.b16 %v1610
      %v2075 = vunpack.c.l.b16 %v1611
      %v2076 = vunpack.c.h.b16 %v1611
      %v2077 = vunpack.c.l.b16 %v1612
      %v2078 = vunpack.c.h.b16 %v1612
      %v2079 = vunpack.c.l.b16 %v1613
      %v2080 = vunpack.c.h.b16 %v1613
      %v2081 = vunpack.c.l.b16 %v1614
      %v2082 = vunpack.c.h.b16 %v1614
      %v2083 = vunpack.c.l.b16 %v1615
      %v2084 = vunpack.c.h.b16 %v1615
      %v2085 = vunpack.c.l.b16 %v1616
      %v2086 = vunpack.c.h.b16 %v1616
      %v2087 = vunpack.c.l.b16 %v1617
      %v2088 = vunpack.c.h.b16 %v1617
      %v2089 = vunpack.c.l.b16 %v1618
      %v2090 = vunpack.c.h.b16 %v1618
      %v2091 = vunpack.c.l.b16 %v1619
      %v2092 = vunpack.c.h.b16 %v1619
      %v2093 = vunpack.c.l.b16 %v1620
      %v2094 = vunpack.c.h.b16 %v1620
      %v2095 = vunpack.c.l.b16 %v1621
      %v2096 = vunpack.c.h.b16 %v1621
      %v2097 = vunpack.c.l.b16 %v1622
      %v2098 = vunpack.c.h.b16 %v1622
      %v2099 = vunpack.c.l.b16 %v1623
      %v2100 = vunpack.c.h.b16 %v1623
      %v2101 = vunpack.c.l.b16 %v1624
      %v2102 = vunpack.c.h.b16 %v1624
      %v2103 = vunpack.c.l.b16 %v1625
      %v2104 = vunpack.c.h.b16 %v1625
      %v2105 = vunpack.c.l.b16 %v1626
      %v2106 = vunpack.c.h.b16 %v1626
      %v2107 = vunpack.c.l.b16 %v1627
      %v2108 = vunpack.c.h.b16 %v1627
      %v2109 = vunpack.c.l.b16 %v1628
      %v2110 = vunpack.c.h.b16 %v1628
      %v2111 = vunpack.c.l.b16 %v1629
      %v2112 = vunpack.c.h.b16 %v1629
      %v2113 = vunpack.c.l.b16 %v1630
      %v2114 = vunpack.c.h.b16 %v1630
      %v2115 = vunpack.c.l.b16 %v1631
      %v2116 = vunpack.c.h.b16 %v1631
      %v2117 = vunpack.c.l.b16 %v1632
      %v2118 = vunpack.c.h.b16 %v1632
      %v2119 = vunpack.c.l.b16 %v1633
      %v2120 = vunpack.c.h.b16 %v1633
      %v2121 = vunpack.c.l.b16 %v1634
      %v2122 = vunpack.c.h.b16 %v1634
      %v2123 = vunpack.c.l.b16 %v1635
      %v2124 = vunpack.c.h.b16 %v1635
      %v2125 = vunpack.c.l.b16 %v1636
      %v2126 = vunpack.c.h.b16 %v1636
      %v2127 = vunpack.c.l.b16 %v1637
      %v2128 = vunpack.c.h.b16 %v1637
      %v2129 = vunpack.c.l.b16 %v1638
      %v2130 = vunpack.c.h.b16 %v1638
      %v2131 = vunpack.c.l.b16 %v1639
      %v2132 = vunpack.c.h.b16 %v1639
      %v2133 = vunpack.c.l.b16 %v1640
      %v2134 = vunpack.c.h.b16 %v1640
      %v2135 = vunpack.c.l.b16 %v1641
      %v2136 = vunpack.c.h.b16 %v1641
      %v2137 = vunpack.c.l.b16 %v1642
      %v2138 = vunpack.c.h.b16 %v1642
      %v2139 = vunpack.c.l.b16 %v1643
      %v2140 = vunpack.c.h.b16 %v1643
      %v2141 = vunpack.c.l.b16 %v1644
      %v2142 = vunpack.c.h.b16 %v1644
      %v2143 = vunpack.c.l.b16 %v1645
      %v2144 = vunpack.c.h.b16 %v1645
      %v2145 = vunpack.c.l.b16 %v1646
      %v2146 = vunpack.c.h.b16 %v1646
      %v2147 = vunpack.c.l.b16 %v1647
      %v2148 = vunpack.c.h.b16 %v1647
      %v2149 = vunpack.c.l.b16 %v1648
      %v2150 = vunpack.c.h.b16 %v1648
      %v2151 = vunpack.c.l.b16 %v1649
      %v2152 = vunpack.c.h.b16 %v1649
      %v2153 = vunpack.c.l.b16 %v1650
      %v2154 = vunpack.c.h.b16 %v1650
      %v2155 = vunpack.c.l.b16 %v1651
      %v2156 = vunpack.c.h.b16 %v1651
      %v2157 = vunpack.c.l.b16 %v1652
      %v2158 = vunpack.c.h.b16 %v1652
      %v2159 = vunpack.c.l.b16 %v1653
      %v2160 = vunpack.c.h.b16 %v1653
      %v2161 = vunpack.c.l.b16 %v1654
      %v2162 = vunpack.c.h.b16 %v1654
      %v2163 = vunpack.c.l.b16 %v1655
      %v2164 = vunpack.c.h.b16 %v1655
      %v2165 = vunpack.c.l.b16 %v1656
      %v2166 = vunpack.c.h.b16 %v1656
      %v2167 = vunpack.c.l.b16 %v1657
      %v2168 = vunpack.c.h.b16 %v1657
      %v2169 = vunpack.c.l.b16 %v1658
      %v2170 = vunpack.c.h.b16 %v1658
      %v2171 = vpack.c.b16 %v2029, %v2027
      %v2172 = vpack.c.b16 %v2030, %v2028
      %v2173 = vpack.c.b16 %v2033, %v2031
      %v2174 = vpack.c.b16 %v2034, %v2032
      %v2175 = vpack.c.b16 %v2037, %v2035
      %v2176 = vpack.c.b16 %v2038, %v2036
      %v2177 = vpack.c.b16 %v2041, %v2039
      %v2178 = vpack.c.b16 %v2042, %v2040
      %v2179 = vpack.c.b16 %v2045, %v2043
      %v2180 = vpack.c.b16 %v2046, %v2044
      %v2181 = vpack.c.b16 %v2049, %v2047
      %v2182 = vpack.c.b16 %v2050, %v2048
      %v2183 = vpack.c.b16 %v2053, %v2051
      %v2184 = vpack.c.b16 %v2054, %v2052
      %v2185 = vpack.c.b16 %v2057, %v2055
      %v2186 = vpack.c.b16 %v2058, %v2056
      %v2187 = vpack.c.b16 %v2061, %v2059
      %v2188 = vpack.c.b16 %v2062, %v2060
      %v2189 = vpack.c.b16 %v2065, %v2063
      %v2190 = vpack.c.b16 %v2066, %v2064
      %v2191 = vpack.c.b16 %v2069, %v2067
      %v2192 = vpack.c.b16 %v2070, %v2068
      %v2193 = vpack.c.b16 %v2073, %v2071
      %v2194 = vpack.c.b16 %v2074, %v2072
      %v2195 = vpack.c.b16 %v2077, %v2075
      %v2196 = vpack.c.b16 %v2078, %v2076
      %v2197 = vpack.c.b16 %v2081, %v2079
      %v2198 = vpack.c.b16 %v2082, %v2080
      %v2199 = vpack.c.b16 %v2085, %v2083
      %v2200 = vpack.c.b16 %v2086, %v2084
      %v2201 = vpack.c.b16 %v2089, %v2087
      %v2202 = vpack.c.b16 %v2090, %v2088
      %v2203 = vpack.c.b16 %v2093, %v2091
      %v2204 = vpack.c.b16 %v2094, %v2092
      %v2205 = vpack.c.b16 %v2097, %v2095
      %v2206 = vpack.c.b16 %v2098, %v2096
      %v2207 = vpack.c.b16 %v2101, %v2099
      %v2208 = vpack.c.b16 %v2102, %v2100
      %v2209 = vpack.c.b16 %v2105, %v2103
      %v2210 = vpack.c.b16 %v2106, %v2104
      %v2211 = vpack.c.b16 %v2109, %v2107
      %v2212 = vpack.c.b16 %v2110, %v2108
      %v2213 = vpack.c.b16 %v2113, %v2111
      %v2214 = vpack.c.b16 %v2114, %v2112
      %v2215 = vpack.c.b16 %v2117, %v2115
      %v2216 = vpack.c.b16 %v2118, %v2116
      %v2217 = vpack.c.b16 %v2121, %v2119
      %v2218 = vpack.c.b16 %v2122, %v2120
      %v2219 = vpack.c.b16 %v2125, %v2123
      %v2220 = vpack.c.b16 %v2126, %v2124
      %v2221 = vpack.c.b16 %v2129, %v2127
      %v2222 = vpack.c.b16 %v2130, %v2128
      %v2223 = vpack.c.b16 %v2133, %v2131
      %v2224 = vpack.c.b16 %v2134, %v2132
      %v2225 = vpack.c.b16 %v2137, %v2135
      %v2226 = vpack.c.b16 %v2138, %v2136
      %v2227 = vpack.c.b16 %v2141, %v2139
      %v2228 = vpack.c.b16 %v2142, %v2140
      %v2229 = vpack.c.b16 %v2145, %v2143
      %v2230 = vpack.c.b16 %v2146, %v2144
      %v2231 = vpack.c.b16 %v2149, %v2147
      %v2232 = vpack.c.b16 %v2150, %v2148
      %v2233 = vpack.c.b16 %v2153, %v2151
      %v2234 = vpack.c.b16 %v2154, %v2152
      %v2235 = vpack.c.b16 %v2157, %v2155
      %v2236 = vpack.c.b16 %v2158, %v2156
      %v2237 = vpack.c.b16 %v2161, %v2159
      %v2238 = vpack.c.b16 %v2162, %v2160
      %v2239 = vpack.c.b16 %v2165, %v2163
      %v2240 = vpack.c.b16 %v2166, %v2164
      %v2241 = vpack.c.b16 %v2169, %v2167
      %v2242 = vpack.c.b16 %v2170, %v2168
      %vm2315 = vcmask 523264
      %v2317 = vsel %vm2315, %v1887, 0
      %v2320 = vsel %vm2315, %v1892, 0
      %v2323 = vsel %vm2315, %v1897, 0
      %v2326 = vsel %vm2315, %v1902, 0
      %v2329 = vsel %vm2315, %v1907, 0
      %v2332 = vsel %vm2315, %v1912, 0
      %v2335 = vsel %vm2315, %v1917, 0
      %v2338 = vsel %vm2315, %v1922, 0
      %2340 = vmatpush.bf16.msra.mxu0 %v2185
      %2341 = vmatpush.bf16.msra.mxu0 %v2183
      %2342 = vmatpush.bf16.msra.mxu0 %v2181
      %2343 = vmatpush.bf16.msra.mxu0 %v2179
      %2344 = vmatpush.bf16.msra.mxu0 %v2177
      %2345 = vmatpush.bf16.msra.mxu0 %v2175
      %2346 = vmatpush.bf16.msra.mxu0 %v2173
      %2347 = vmatpush.bf16.msra.mxu0 %v2171
      %2348 = vmatmul.bf16.gmra.mxu0 %v1883
      %v2349 = vpop.f32.mrf.mxu0
      %v2350 = vadd.f32 %v1678, %v2349
      %v2351 = vpop.f32.mrf.mxu0
      %v2352 = vadd.f32 %v1683, %v2351
      %2353 = vmatmul.bf16.gmra.mxu0 %v1888
      %v2354 = vpop.f32.mrf.mxu0
      %v2355 = vadd.f32 %v1688, %v2354
      %v2356 = vpop.f32.mrf.mxu0
      %v2357 = vadd.f32 %v1693, %v2356
      %2358 = vmatmul.bf16.gmra.mxu0 %v1893
      %v2359 = vpop.f32.mrf.mxu0
      %v2360 = vadd.f32 %v1698, %v2359
      %v2361 = vpop.f32.mrf.mxu0
      %v2362 = vadd.f32 %v1703, %v2361
      %2363 = vmatmul.bf16.gmra.mxu0 %v1898
      %v2364 = vpop.f32.mrf.mxu0
      %v2365 = vadd.f32 %v1708, %v2364
      %v2366 = vpop.f32.mrf.mxu0
      %v2367 = vadd.f32 %v1713, %v2366
      %2368 = vmatmul.bf16.gmra.mxu0 %v1903
      %v2369 = vpop.f32.mrf.mxu0
      %v2370 = vadd.f32 %v1718, %v2369
      %v2371 = vpop.f32.mrf.mxu0
      %v2372 = vadd.f32 %v1723, %v2371
      %2373 = vmatmul.bf16.gmra.mxu0 %v1908
      %v2374 = vpop.f32.mrf.mxu0
      %v2375 = vadd.f32 %v1728, %v2374
      %v2376 = vpop.f32.mrf.mxu0
      %v2377 = vadd.f32 %v1733, %v2376
      %2378 = vmatmul.bf16.gmra.mxu0 %v1913
      %v2379 = vpop.f32.mrf.mxu0
      %v2380 = vadd.f32 %v1738, %v2379
      %v2381 = vpop.f32.mrf.mxu0
      %v2382 = vadd.f32 %v1743, %v2381
      %2383 = vmatmul.bf16.gmra.mxu0 %v1918
      %v2384 = vpop.f32.mrf.mxu0
      %v2385 = vadd.f32 %v1748, %v2384
      %v2386 = vpop.f32.mrf.mxu0
      %v2387 = vadd.f32 %v1753, %v2386
      %2388 = vdwg.mxu0
      %2389 = vmatpush.bf16.msra.mxu0 %v2201
      %2390 = vmatpush.bf16.msra.mxu0 %v2199
      %2391 = vmatpush.bf16.msra.mxu0 %v2197
      %2392 = vmatpush.bf16.msra.mxu0 %v2195
      %2393 = vmatpush.bf16.msra.mxu0 %v2193
      %2394 = vmatpush.bf16.msra.mxu0 %v2191
      %2395 = vmatpush.bf16.msra.mxu0 %v2189
      %2396 = vmatpush.bf16.msra.mxu0 %v2187
      %2397 = vmatmul.bf16.gmra.mxu0 %v1884
      %v2398 = vpop.f32.mrf.mxu0
      %v2399 = vadd.f32 %v2350, %v2398
      %v2400 = vpop.f32.mrf.mxu0
      %v2401 = vadd.f32 %v2352, %v2400
      %2402 = vmatmul.bf16.gmra.mxu0 %v1889
      %v2403 = vpop.f32.mrf.mxu0
      %v2404 = vadd.f32 %v2355, %v2403
      %v2405 = vpop.f32.mrf.mxu0
      %v2406 = vadd.f32 %v2357, %v2405
      %2407 = vmatmul.bf16.gmra.mxu0 %v1894
      %v2408 = vpop.f32.mrf.mxu0
      %v2409 = vadd.f32 %v2360, %v2408
      %v2410 = vpop.f32.mrf.mxu0
      %v2411 = vadd.f32 %v2362, %v2410
      %2412 = vmatmul.bf16.gmra.mxu0 %v1899
      %v2413 = vpop.f32.mrf.mxu0
      %v2414 = vadd.f32 %v2365, %v2413
      %v2415 = vpop.f32.mrf.mxu0
      %v2416 = vadd.f32 %v2367, %v2415
      %2417 = vmatmul.bf16.gmra.mxu0 %v1904
      %v2418 = vpop.f32.mrf.mxu0
      %v2419 = vadd.f32 %v2370, %v2418
      %v2420 = vpop.f32.mrf.mxu0
      %v2421 = vadd.f32 %v2372, %v2420
      %2422 = vmatmul.bf16.gmra.mxu0 %v1909
      %v2423 = vpop.f32.mrf.mxu0
      %v2424 = vadd.f32 %v2375, %v2423
      %v2425 = vpop.f32.mrf.mxu0
      %v2426 = vadd.f32 %v2377, %v2425
      %2427 = vmatmul.bf16.gmra.mxu0 %v1914
      %v2428 = vpop.f32.mrf.mxu0
      %v2429 = vadd.f32 %v2380, %v2428
      %v2430 = vpop.f32.mrf.mxu0
      %v2431 = vadd.f32 %v2382, %v2430
      %2432 = vmatmul.bf16.gmra.mxu0 %v1919
      %v2433 = vpop.f32.mrf.mxu0
      %v2434 = vadd.f32 %v2385, %v2433
      %v2435 = vpop.f32.mrf.mxu0
      %v2436 = vadd.f32 %v2387, %v2435
      %2437 = vdwg.mxu0
      %2438 = vmatpush.bf16.msra.mxu0 %v2217
      %2439 = vmatpush.bf16.msra.mxu0 %v2215
      %2440 = vmatpush.bf16.msra.mxu0 %v2213
      %2441 = vmatpush.bf16.msra.mxu0 %v2211
      %2442 = vmatpush.bf16.msra.mxu0 %v2209
      %2443 = vmatpush.bf16.msra.mxu0 %v2207
      %2444 = vmatpush.bf16.msra.mxu0 %v2205
      %2445 = vmatpush.bf16.msra.mxu0 %v2203
      %2446 = vmatmul.bf16.gmra.mxu0 %v1885
      %v2447 = vpop.f32.mrf.mxu0
      %v2448 = vadd.f32 %v2399, %v2447
      %v2449 = vpop.f32.mrf.mxu0
      %v2450 = vadd.f32 %v2401, %v2449
      %2451 = vmatmul.bf16.gmra.mxu0 %v1890
      %v2452 = vpop.f32.mrf.mxu0
      %v2453 = vadd.f32 %v2404, %v2452
      %v2454 = vpop.f32.mrf.mxu0
      %v2455 = vadd.f32 %v2406, %v2454
      %2456 = vmatmul.bf16.gmra.mxu0 %v1895
      %v2457 = vpop.f32.mrf.mxu0
      %v2458 = vadd.f32 %v2409, %v2457
      %v2459 = vpop.f32.mrf.mxu0
      %v2460 = vadd.f32 %v2411, %v2459
      %2461 = vmatmul.bf16.gmra.mxu0 %v1900
      %v2462 = vpop.f32.mrf.mxu0
      %v2463 = vadd.f32 %v2414, %v2462
      %v2464 = vpop.f32.mrf.mxu0
      %v2465 = vadd.f32 %v2416, %v2464
      %2466 = vmatmul.bf16.gmra.mxu0 %v1905
      %v2467 = vpop.f32.mrf.mxu0
      %v2468 = vadd.f32 %v2419, %v2467
      %v2469 = vpop.f32.mrf.mxu0
      %v2470 = vadd.f32 %v2421, %v2469
      %2471 = vmatmul.bf16.gmra.mxu0 %v1910
      %v2472 = vpop.f32.mrf.mxu0
      %v2473 = vadd.f32 %v2424, %v2472
      %v2474 = vpop.f32.mrf.mxu0
      %v2475 = vadd.f32 %v2426, %v2474
      %2476 = vmatmul.bf16.gmra.mxu0 %v1915
      %v2477 = vpop.f32.mrf.mxu0
      %v2478 = vadd.f32 %v2429, %v2477
      %v2479 = vpop.f32.mrf.mxu0
      %v2480 = vadd.f32 %v2431, %v2479
      %2481 = vmatmul.bf16.gmra.mxu0 %v1920
      %v2482 = vpop.f32.mrf.mxu0
      %v2483 = vadd.f32 %v2434, %v2482
      %v2484 = vpop.f32.mrf.mxu0
      %v2485 = vadd.f32 %v2436, %v2484
      %2486 = vdwg.mxu0
      %2487 = vmatpush.bf16.msra.mxu0 %v2233
      %2488 = vmatpush.bf16.msra.mxu0 %v2231
      %2489 = vmatpush.bf16.msra.mxu0 %v2229
      %2490 = vmatpush.bf16.msra.mxu0 %v2227
      %2491 = vmatpush.bf16.msra.mxu0 %v2225
      %2492 = vmatpush.bf16.msra.mxu0 %v2223
      %2493 = vmatpush.bf16.msra.mxu0 %v2221
      %2494 = vmatpush.bf16.msra.mxu0 %v2219
      %2495 = vmatmul.bf16.gmra.mxu0 %v1886
      %v2496 = vpop.f32.mrf.mxu0
      %v2497 = vadd.f32 %v2448, %v2496
      %v2498 = vpop.f32.mrf.mxu0
      %v2499 = vadd.f32 %v2450, %v2498
      %2500 = vmatmul.bf16.gmra.mxu0 %v1891
      %v2501 = vpop.f32.mrf.mxu0
      %v2502 = vadd.f32 %v2453, %v2501
      %v2503 = vpop.f32.mrf.mxu0
      %v2504 = vadd.f32 %v2455, %v2503
      %2505 = vmatmul.bf16.gmra.mxu0 %v1896
      %v2506 = vpop.f32.mrf.mxu0
      %v2507 = vadd.f32 %v2458, %v2506
      %v2508 = vpop.f32.mrf.mxu0
      %v2509 = vadd.f32 %v2460, %v2508
      %2510 = vmatmul.bf16.gmra.mxu0 %v1901
      %v2511 = vpop.f32.mrf.mxu0
      %v2512 = vadd.f32 %v2463, %v2511
      %v2513 = vpop.f32.mrf.mxu0
      %v2514 = vadd.f32 %v2465, %v2513
      %2515 = vmatmul.bf16.gmra.mxu0 %v1906
      %v2516 = vpop.f32.mrf.mxu0
      %v2517 = vadd.f32 %v2468, %v2516
      %v2518 = vpop.f32.mrf.mxu0
      %v2519 = vadd.f32 %v2470, %v2518
      %2520 = vmatmul.bf16.gmra.mxu0 %v1911
      %v2521 = vpop.f32.mrf.mxu0
      %v2522 = vadd.f32 %v2473, %v2521
      %v2523 = vpop.f32.mrf.mxu0
      %v2524 = vadd.f32 %v2475, %v2523
      %2525 = vmatmul.bf16.gmra.mxu0 %v1916
      %v2526 = vpop.f32.mrf.mxu0
      %v2527 = vadd.f32 %v2478, %v2526
      %v2528 = vpop.f32.mrf.mxu0
      %v2529 = vadd.f32 %v2480, %v2528
      %2530 = vmatmul.bf16.gmra.mxu0 %v1921
      %v2531 = vpop.f32.mrf.mxu0
      %v2532 = vadd.f32 %v2483, %v2531
      %v2533 = vpop.f32.mrf.mxu0
      %v2534 = vadd.f32 %v2485, %v2533
      %2535 = vdwg.mxu0
      %2536 = vmatpush.bf16.msra.mxu0 0
      %2537 = vmatpush.bf16.msra.mxu0 0
      %2538 = vmatpush.bf16.msra.mxu0 0
      %2539 = vmatpush.bf16.msra.mxu0 0
      %2540 = vmatpush.bf16.msra.mxu0 %v2241
      %2541 = vmatpush.bf16.msra.mxu0 %v2239
      %2542 = vmatpush.bf16.msra.mxu0 %v2237
      %2543 = vmatpush.bf16.msra.mxu0 %v2235
      %2544 = vmatmul.bf16.gmra.mxu0 %v2317
      %v2545 = vpop.f32.mrf.mxu0
      %v2546 = vadd.f32 %v2497, %v2545
      %v2547 = vpop.f32.mrf.mxu0
      %v2548 = vadd.f32 %v2499, %v2547
      %2549 = vmatmul.bf16.gmra.mxu0 %v2320
      %v2550 = vpop.f32.mrf.mxu0
      %v2551 = vadd.f32 %v2502, %v2550
      %v2552 = vpop.f32.mrf.mxu0
      %v2553 = vadd.f32 %v2504, %v2552
      %2554 = vmatmul.bf16.gmra.mxu0 %v2323
      %v2555 = vpop.f32.mrf.mxu0
      %v2556 = vadd.f32 %v2507, %v2555
      %v2557 = vpop.f32.mrf.mxu0
      %v2558 = vadd.f32 %v2509, %v2557
      %2559 = vmatmul.bf16.gmra.mxu0 %v2326
      %v2560 = vpop.f32.mrf.mxu0
      %v2561 = vadd.f32 %v2512, %v2560
      %v2562 = vpop.f32.mrf.mxu0
      %v2563 = vadd.f32 %v2514, %v2562
      %2564 = vmatmul.bf16.gmra.mxu0 %v2329
      %v2565 = vpop.f32.mrf.mxu0
      %v2566 = vadd.f32 %v2517, %v2565
      %v2567 = vpop.f32.mrf.mxu0
      %v2568 = vadd.f32 %v2519, %v2567
      %2569 = vmatmul.bf16.gmra.mxu0 %v2332
      %v2570 = vpop.f32.mrf.mxu0
      %v2571 = vadd.f32 %v2522, %v2570
      %v2572 = vpop.f32.mrf.mxu0
      %v2573 = vadd.f32 %v2524, %v2572
      %2574 = vmatmul.bf16.gmra.mxu0 %v2335
      %v2575 = vpop.f32.mrf.mxu0
      %v2576 = vadd.f32 %v2527, %v2575
      %v2577 = vpop.f32.mrf.mxu0
      %v2578 = vadd.f32 %v2529, %v2577
      %2579 = vmatmul.bf16.gmra.mxu0 %v2338
      %v2580 = vpop.f32.mrf.mxu0
      %v2581 = vadd.f32 %v2532, %v2580
      %v2582 = vpop.f32.mrf.mxu0
      %v2583 = vadd.f32 %v2534, %v2582
      %2584 = vdwg.mxu0
      %2585 = vmatpush.bf16.msra.mxu0 %v2186
      %2586 = vmatpush.bf16.msra.mxu0 %v2184
      %2587 = vmatpush.bf16.msra.mxu0 %v2182
      %2588 = vmatpush.bf16.msra.mxu0 %v2180
      %2589 = vmatpush.bf16.msra.mxu0 %v2178
      %2590 = vmatpush.bf16.msra.mxu0 %v2176
      %2591 = vmatpush.bf16.msra.mxu0 %v2174
      %2592 = vmatpush.bf16.msra.mxu0 %v2172
      %2593 = vmatmul.bf16.gmra.mxu0 %v1883
      %v2594 = vpop.f32.mrf.mxu0
      %v2595 = vadd.f32 %v1678, %v2594
      %v2596 = vpop.f32.mrf.mxu0
      %v2597 = vadd.f32 %v1683, %v2596
      %2598 = vmatmul.bf16.gmra.mxu0 %v1888
      %v2599 = vpop.f32.mrf.mxu0
      %v2600 = vadd.f32 %v1688, %v2599
      %v2601 = vpop.f32.mrf.mxu0
      %v2602 = vadd.f32 %v1693, %v2601
      %2603 = vmatmul.bf16.gmra.mxu0 %v1893
      %v2604 = vpop.f32.mrf.mxu0
      %v2605 = vadd.f32 %v1698, %v2604
      %v2606 = vpop.f32.mrf.mxu0
      %v2607 = vadd.f32 %v1703, %v2606
      %2608 = vmatmul.bf16.gmra.mxu0 %v1898
      %v2609 = vpop.f32.mrf.mxu0
      %v2610 = vadd.f32 %v1708, %v2609
      %v2611 = vpop.f32.mrf.mxu0
      %v2612 = vadd.f32 %v1713, %v2611
      %2613 = vmatmul.bf16.gmra.mxu0 %v1903
      %v2614 = vpop.f32.mrf.mxu0
      %v2615 = vadd.f32 %v1718, %v2614
      %v2616 = vpop.f32.mrf.mxu0
      %v2617 = vadd.f32 %v1723, %v2616
      %2618 = vmatmul.bf16.gmra.mxu0 %v1908
      %v2619 = vpop.f32.mrf.mxu0
      %v2620 = vadd.f32 %v1728, %v2619
      %v2621 = vpop.f32.mrf.mxu0
      %v2622 = vadd.f32 %v1733, %v2621
      %2623 = vmatmul.bf16.gmra.mxu0 %v1913
      %v2624 = vpop.f32.mrf.mxu0
      %v2625 = vadd.f32 %v1738, %v2624
      %v2626 = vpop.f32.mrf.mxu0
      %v2627 = vadd.f32 %v1743, %v2626
      %2628 = vmatmul.bf16.gmra.mxu0 %v1918
      %v2629 = vpop.f32.mrf.mxu0
      %v2630 = vadd.f32 %v1748, %v2629
      %v2631 = vpop.f32.mrf.mxu0
      %v2632 = vadd.f32 %v1753, %v2631
      %2633 = vdwg.mxu0
      %2634 = vmatpush.bf16.msra.mxu0 %v2202
      %2635 = vmatpush.bf16.msra.mxu0 %v2200
      %2636 = vmatpush.bf16.msra.mxu0 %v2198
      %2637 = vmatpush.bf16.msra.mxu0 %v2196
      %2638 = vmatpush.bf16.msra.mxu0 %v2194
      %2639 = vmatpush.bf16.msra.mxu0 %v2192
      %2640 = vmatpush.bf16.msra.mxu0 %v2190
      %2641 = vmatpush.bf16.msra.mxu0 %v2188
      %2642 = vmatmul.bf16.gmra.mxu0 %v1884
      %v2643 = vpop.f32.mrf.mxu0
      %v2644 = vadd.f32 %v2595, %v2643
      %v2645 = vpop.f32.mrf.mxu0
      %v2646 = vadd.f32 %v2597, %v2645
      %2647 = vmatmul.bf16.gmra.mxu0 %v1889
      %v2648 = vpop.f32.mrf.mxu0
      %v2649 = vadd.f32 %v2600, %v2648
      %v2650 = vpop.f32.mrf.mxu0
      %v2651 = vadd.f32 %v2602, %v2650
      %2652 = vmatmul.bf16.gmra.mxu0 %v1894
      %v2653 = vpop.f32.mrf.mxu0
      %v2654 = vadd.f32 %v2605, %v2653
      %v2655 = vpop.f32.mrf.mxu0
      %v2656 = vadd.f32 %v2607, %v2655
      %2657 = vmatmul.bf16.gmra.mxu0 %v1899
      %v2658 = vpop.f32.mrf.mxu0
      %v2659 = vadd.f32 %v2610, %v2658
      %v2660 = vpop.f32.mrf.mxu0
      %v2661 = vadd.f32 %v2612, %v2660
      %2662 = vmatmul.bf16.gmra.mxu0 %v1904
      %v2663 = vpop.f32.mrf.mxu0
      %v2664 = vadd.f32 %v2615, %v2663
      %v2665 = vpop.f32.mrf.mxu0
      %v2666 = vadd.f32 %v2617, %v2665
      %2667 = vmatmul.bf16.gmra.mxu0 %v1909
      %v2668 = vpop.f32.mrf.mxu0
      %v2669 = vadd.f32 %v2620, %v2668
      %v2670 = vpop.f32.mrf.mxu0
      %v2671 = vadd.f32 %v2622, %v2670
      %2672 = vmatmul.bf16.gmra.mxu0 %v1914
      %v2673 = vpop.f32.mrf.mxu0
      %v2674 = vadd.f32 %v2625, %v2673
      %v2675 = vpop.f32.mrf.mxu0
      %v2676 = vadd.f32 %v2627, %v2675
      %2677 = vmatmul.bf16.gmra.mxu0 %v1919
      %v2678 = vpop.f32.mrf.mxu0
      %v2679 = vadd.f32 %v2630, %v2678
      %v2680 = vpop.f32.mrf.mxu0
      %v2681 = vadd.f32 %v2632, %v2680
      %2682 = vdwg.mxu0
      %2683 = vmatpush.bf16.msra.mxu0 %v2218
      %2684 = vmatpush.bf16.msra.mxu0 %v2216
      %2685 = vmatpush.bf16.msra.mxu0 %v2214
      %2686 = vmatpush.bf16.msra.mxu0 %v2212
      %2687 = vmatpush.bf16.msra.mxu0 %v2210
      %2688 = vmatpush.bf16.msra.mxu0 %v2208
      %2689 = vmatpush.bf16.msra.mxu0 %v2206
      %2690 = vmatpush.bf16.msra.mxu0 %v2204
      %2691 = vmatmul.bf16.gmra.mxu0 %v1885
      %v2692 = vpop.f32.mrf.mxu0
      %v2693 = vadd.f32 %v2644, %v2692
      %v2694 = vpop.f32.mrf.mxu0
      %v2695 = vadd.f32 %v2646, %v2694
      %2696 = vmatmul.bf16.gmra.mxu0 %v1890
      %v2697 = vpop.f32.mrf.mxu0
      %v2698 = vadd.f32 %v2649, %v2697
      %v2699 = vpop.f32.mrf.mxu0
      %v2700 = vadd.f32 %v2651, %v2699
      %2701 = vmatmul.bf16.gmra.mxu0 %v1895
      %v2702 = vpop.f32.mrf.mxu0
      %v2703 = vadd.f32 %v2654, %v2702
      %v2704 = vpop.f32.mrf.mxu0
      %v2705 = vadd.f32 %v2656, %v2704
      %2706 = vmatmul.bf16.gmra.mxu0 %v1900
      %v2707 = vpop.f32.mrf.mxu0
      %v2708 = vadd.f32 %v2659, %v2707
      %v2709 = vpop.f32.mrf.mxu0
      %v2710 = vadd.f32 %v2661, %v2709
      %2711 = vmatmul.bf16.gmra.mxu0 %v1905
      %v2712 = vpop.f32.mrf.mxu0
      %v2713 = vadd.f32 %v2664, %v2712
      %v2714 = vpop.f32.mrf.mxu0
      %v2715 = vadd.f32 %v2666, %v2714
      %2716 = vmatmul.bf16.gmra.mxu0 %v1910
      %v2717 = vpop.f32.mrf.mxu0
      %v2718 = vadd.f32 %v2669, %v2717
      %v2719 = vpop.f32.mrf.mxu0
      %v2720 = vadd.f32 %v2671, %v2719
      %2721 = vmatmul.bf16.gmra.mxu0 %v1915
      %v2722 = vpop.f32.mrf.mxu0
      %v2723 = vadd.f32 %v2674, %v2722
      %v2724 = vpop.f32.mrf.mxu0
      %v2725 = vadd.f32 %v2676, %v2724
      %2726 = vmatmul.bf16.gmra.mxu0 %v1920
      %v2727 = vpop.f32.mrf.mxu0
      %v2728 = vadd.f32 %v2679, %v2727
      %v2729 = vpop.f32.mrf.mxu0
      %v2730 = vadd.f32 %v2681, %v2729
      %2731 = vdwg.mxu0
      %2732 = vmatpush.bf16.msra.mxu0 %v2234
      %2733 = vmatpush.bf16.msra.mxu0 %v2232
      %2734 = vmatpush.bf16.msra.mxu0 %v2230
      %2735 = vmatpush.bf16.msra.mxu0 %v2228
      %2736 = vmatpush.bf16.msra.mxu0 %v2226
      %2737 = vmatpush.bf16.msra.mxu0 %v2224
      %2738 = vmatpush.bf16.msra.mxu0 %v2222
      %2739 = vmatpush.bf16.msra.mxu0 %v2220
      %2740 = vmatmul.bf16.gmra.mxu0 %v1886
      %v2741 = vpop.f32.mrf.mxu0
      %v2742 = vadd.f32 %v2693, %v2741
      %v2743 = vpop.f32.mrf.mxu0
      %v2744 = vadd.f32 %v2695, %v2743
      %2745 = vmatmul.bf16.gmra.mxu0 %v1891
      %v2746 = vpop.f32.mrf.mxu0
      %v2747 = vadd.f32 %v2698, %v2746
      %v2748 = vpop.f32.mrf.mxu0
      %v2749 = vadd.f32 %v2700, %v2748
      %2750 = vmatmul.bf16.gmra.mxu0 %v1896
      %v2751 = vpop.f32.mrf.mxu0
      %v2752 = vadd.f32 %v2703, %v2751
      %v2753 = vpop.f32.mrf.mxu0
      %v2754 = vadd.f32 %v2705, %v2753
      %2755 = vmatmul.bf16.gmra.mxu0 %v1901
      %v2756 = vpop.f32.mrf.mxu0
      %v2757 = vadd.f32 %v2708, %v2756
      %v2758 = vpop.f32.mrf.mxu0
      %v2759 = vadd.f32 %v2710, %v2758
      %2760 = vmatmul.bf16.gmra.mxu0 %v1906
      %v2761 = vpop.f32.mrf.mxu0
      %v2762 = vadd.f32 %v2713, %v2761
      %v2763 = vpop.f32.mrf.mxu0
      %v2764 = vadd.f32 %v2715, %v2763
      %2765 = vmatmul.bf16.gmra.mxu0 %v1911
      %v2766 = vpop.f32.mrf.mxu0
      %v2767 = vadd.f32 %v2718, %v2766
      %v2768 = vpop.f32.mrf.mxu0
      %v2769 = vadd.f32 %v2720, %v2768
      %2770 = vmatmul.bf16.gmra.mxu0 %v1916
      %v2771 = vpop.f32.mrf.mxu0
      %v2772 = vadd.f32 %v2723, %v2771
      %v2773 = vpop.f32.mrf.mxu0
      %v2774 = vadd.f32 %v2725, %v2773
      %2775 = vmatmul.bf16.gmra.mxu0 %v1921
      %v2776 = vpop.f32.mrf.mxu0
      %v2777 = vadd.f32 %v2728, %v2776
      %v2778 = vpop.f32.mrf.mxu0
      %v2779 = vadd.f32 %v2730, %v2778
      %2780 = vdwg.mxu0
      %2781 = vmatpush.bf16.msra.mxu0 0
      %2782 = vmatpush.bf16.msra.mxu0 0
      %2783 = vmatpush.bf16.msra.mxu0 0
      %2784 = vmatpush.bf16.msra.mxu0 0
      %2785 = vmatpush.bf16.msra.mxu0 %v2242
      %2786 = vmatpush.bf16.msra.mxu0 %v2240
      %2787 = vmatpush.bf16.msra.mxu0 %v2238
      %2788 = vmatpush.bf16.msra.mxu0 %v2236
      %2789 = vmatmul.bf16.gmra.mxu0 %v2317
      %v2790 = vpop.f32.mrf.mxu0
      %v2791 = vadd.f32 %v2742, %v2790
      %v2792 = vpop.f32.mrf.mxu0
      %v2793 = vadd.f32 %v2744, %v2792
      %2794 = vmatmul.bf16.gmra.mxu0 %v2320
      %v2795 = vpop.f32.mrf.mxu0
      %v2796 = vadd.f32 %v2747, %v2795
      %v2797 = vpop.f32.mrf.mxu0
      %v2798 = vadd.f32 %v2749, %v2797
      %2799 = vmatmul.bf16.gmra.mxu0 %v2323
      %v2800 = vpop.f32.mrf.mxu0
      %v2801 = vadd.f32 %v2752, %v2800
      %v2802 = vpop.f32.mrf.mxu0
      %v2803 = vadd.f32 %v2754, %v2802
      %2804 = vmatmul.bf16.gmra.mxu0 %v2326
      %v2805 = vpop.f32.mrf.mxu0
      %v2806 = vadd.f32 %v2757, %v2805
      %v2807 = vpop.f32.mrf.mxu0
      %v2808 = vadd.f32 %v2759, %v2807
      %2809 = vmatmul.bf16.gmra.mxu0 %v2329
      %v2810 = vpop.f32.mrf.mxu0
      %v2811 = vadd.f32 %v2762, %v2810
      %v2812 = vpop.f32.mrf.mxu0
      %v2813 = vadd.f32 %v2764, %v2812
      %2814 = vmatmul.bf16.gmra.mxu0 %v2332
      %v2815 = vpop.f32.mrf.mxu0
      %v2816 = vadd.f32 %v2767, %v2815
      %v2817 = vpop.f32.mrf.mxu0
      %v2818 = vadd.f32 %v2769, %v2817
      %2819 = vmatmul.bf16.gmra.mxu0 %v2335
      %v2820 = vpop.f32.mrf.mxu0
      %v2821 = vadd.f32 %v2772, %v2820
      %v2822 = vpop.f32.mrf.mxu0
      %v2823 = vadd.f32 %v2774, %v2822
      %2824 = vmatmul.bf16.gmra.mxu0 %v2338
      %v2825 = vpop.f32.mrf.mxu0
      %v2826 = vadd.f32 %v2777, %v2825
      %v2827 = vpop.f32.mrf.mxu0
      %v2828 = vadd.f32 %v2779, %v2827
      %2829 = vdwg.mxu0
      %v2830 = vmax.f32 %v2546, 0.0
      %v2831 = vmax.f32 %v2791, 0.0
      %v2832 = vmax.f32 %v2548, 0.0
      %v2833 = vmax.f32 %v2793, 0.0
      %v2834 = vmax.f32 %v2551, 0.0
      %v2835 = vmax.f32 %v2796, 0.0
      %v2836 = vmax.f32 %v2553, 0.0
      %v2837 = vmax.f32 %v2798, 0.0
      %v2838 = vmax.f32 %v2556, 0.0
      %v2839 = vmax.f32 %v2801, 0.0
      %v2840 = vmax.f32 %v2558, 0.0
      %v2841 = vmax.f32 %v2803, 0.0
      %v2842 = vmax.f32 %v2561, 0.0
      %v2843 = vmax.f32 %v2806, 0.0
      %v2844 = vmax.f32 %v2563, 0.0
      %v2845 = vmax.f32 %v2808, 0.0
      %v2846 = vmax.f32 %v2566, 0.0
      %v2847 = vmax.f32 %v2811, 0.0
      %v2848 = vmax.f32 %v2568, 0.0
      %v2849 = vmax.f32 %v2813, 0.0
      %v2850 = vmax.f32 %v2571, 0.0
      %v2851 = vmax.f32 %v2816, 0.0
      %v2852 = vmax.f32 %v2573, 0.0
      %v2853 = vmax.f32 %v2818, 0.0
      %v2854 = vmax.f32 %v2576, 0.0
      %v2855 = vmax.f32 %v2821, 0.0
      %v2856 = vmax.f32 %v2578, 0.0
      %v2857 = vmax.f32 %v2823, 0.0
      %v2858 = vmax.f32 %v2581, 0.0
      %v2859 = vmax.f32 %v2826, 0.0
      %v2860 = vmax.f32 %v2583, 0.0
      %v2861 = vmax.f32 %v2828, 0.0
      %v2862 = vadd.f32 %v2830, %v2831
      %2863 = vadd.xlane.f32.xlu0 %v2862
      %v2864 = vpop.xlane.xlu0 %2863
      %v2865 = vadd.f32 %v2832, %v2833
      %2866 = vadd.xlane.f32.xlu0 %v2865
      %v2867 = vpop.xlane.xlu0 %2866
      %v2868 = vadd.f32 %v2834, %v2835
      %2869 = vadd.xlane.f32.xlu0 %v2868
      %v2870 = vpop.xlane.xlu0 %2869
      %v2871 = vadd.f32 %v2836, %v2837
      %2872 = vadd.xlane.f32.xlu0 %v2871
      %v2873 = vpop.xlane.xlu0 %2872
      %v2874 = vadd.f32 %v2838, %v2839
      %2875 = vadd.xlane.f32.xlu0 %v2874
      %v2876 = vpop.xlane.xlu0 %2875
      %v2877 = vadd.f32 %v2840, %v2841
      %2878 = vadd.xlane.f32.xlu0 %v2877
      %v2879 = vpop.xlane.xlu0 %2878
      %v2880 = vadd.f32 %v2842, %v2843
      %2881 = vadd.xlane.f32.xlu0 %v2880
      %v2882 = vpop.xlane.xlu0 %2881
      %v2883 = vadd.f32 %v2844, %v2845
      %2884 = vadd.xlane.f32.xlu0 %v2883
      %v2885 = vpop.xlane.xlu0 %2884
      %v2886 = vadd.f32 %v2846, %v2847
      %2887 = vadd.xlane.f32.xlu0 %v2886
      %v2888 = vpop.xlane.xlu0 %2887
      %v2889 = vadd.f32 %v2848, %v2849
      %2890 = vadd.xlane.f32.xlu0 %v2889
      %v2891 = vpop.xlane.xlu0 %2890
      %v2892 = vadd.f32 %v2850, %v2851
      %2893 = vadd.xlane.f32.xlu0 %v2892
      %v2894 = vpop.xlane.xlu0 %2893
      %v2895 = vadd.f32 %v2852, %v2853
      %2896 = vadd.xlane.f32.xlu0 %v2895
      %v2897 = vpop.xlane.xlu0 %2896
      %v2898 = vadd.f32 %v2854, %v2855
      %2899 = vadd.xlane.f32.xlu0 %v2898
      %v2900 = vpop.xlane.xlu0 %2899
      %v2901 = vadd.f32 %v2856, %v2857
      %2902 = vadd.xlane.f32.xlu0 %v2901
      %v2903 = vpop.xlane.xlu0 %2902
      %v2904 = vadd.f32 %v2858, %v2859
      %2905 = vadd.xlane.f32.xlu0 %v2904
      %v2906 = vpop.xlane.xlu0 %2905
      %v2907 = vadd.f32 %v2860, %v2861
      %2908 = vadd.xlane.f32.xlu0 %v2907
      %v2909 = vpop.xlane.xlu0 %2908
      %v2910 = vmul.f32 %v2864, 0.00390625
      %v2911 = vmul.f32 %v2867, 0.00390625
      %v2912 = vmul.f32 %v2870, 0.00390625
      %v2913 = vmul.f32 %v2873, 0.00390625
      %v2914 = vmul.f32 %v2876, 0.00390625
      %v2915 = vmul.f32 %v2879, 0.00390625
      %v2916 = vmul.f32 %v2882, 0.00390625
      %v2917 = vmul.f32 %v2885, 0.00390625
      %v2918 = vmul.f32 %v2888, 0.00390625
      %v2919 = vmul.f32 %v2891, 0.00390625
      %v2920 = vmul.f32 %v2894, 0.00390625
      %v2921 = vmul.f32 %v2897, 0.00390625
      %v2922 = vmul.f32 %v2900, 0.00390625
      %v2923 = vmul.f32 %v2903, 0.00390625
      %v2924 = vmul.f32 %v2906, 0.00390625
      %v2925 = vmul.f32 %v2909, 0.00390625
      %v2926 = vld [vmem:[%s10] sm:$0xff]
      %2927 = vmatpush.msra.mxu0 %v2925
      %2928 = vmatpush.msra.mxu0 %v2924
      %2929 = vmatpush.msra.mxu0 %v2923
      %2930 = vmatpush.msra.mxu0 %v2922
      %2931 = vmatpush.msra.mxu0 %v2921
      %2932 = vmatpush.msra.mxu0 %v2920
      %2933 = vmatpush.msra.mxu0 %v2919
      %2934 = vmatpush.msra.mxu0 %v2918
      %2935 = vmatpush.msra.mxu0 %v2917
      %2936 = vmatpush.msra.mxu0 %v2916
      %2937 = vmatpush.msra.mxu0 %v2915
      %2938 = vmatpush.msra.mxu0 %v2914
      %2939 = vmatpush.msra.mxu0 %v2913
      %2940 = vmatpush.msra.mxu0 %v2912
      %2941 = vmatpush.msra.mxu0 %v2911
      %2942 = vmatpush.msra.mxu0 %v2910
      %2943 = vmatmul.f32.gmra.mxu0 %v2926
      %v2944 = vpop.f32.mrf.mxu0
      %v2945 = vadd.f32 0.0, %v2944
      %2946 = vdwg.mxu0
      %v2947 = vmax.f32 %v2945, 0.0
      %v2948 = vld [vmem:[%s11] sm:$0xff]
      %v2949 = vld [vmem:[%s11 + $0x8] sm:$0xff]
      %v2950 = vld [vmem:[%s11 + $0x10] sm:$0xff]
      %v2951 = vld [vmem:[%s11 + $0x18] sm:$0xff]
      %v2952 = vld [vmem:[%s11 + $0x20] sm:$0xff]
      %v2953 = vld [vmem:[%s11 + $0x28] sm:$0xff]
      %v2954 = vld [vmem:[%s11 + $0x30] sm:$0xff]
      %v2955 = vld [vmem:[%s11 + $0x38] sm:$0xff]
      %v2956 = vld [vmem:[%s11 + $0x40] sm:$0xff]
      %v2957 = vld [vmem:[%s11 + $0x48] sm:$0xff]
      %v2958 = vld [vmem:[%s11 + $0x50] sm:$0xff]
      %v2959 = vld [vmem:[%s11 + $0x58] sm:$0xff]
      %v2960 = vld [vmem:[%s11 + $0x60] sm:$0xff]
      %v2961 = vld [vmem:[%s11 + $0x68] sm:$0xff]
      %v2962 = vld [vmem:[%s11 + $0x70] sm:$0xff]
      %v2963 = vld [vmem:[%s11 + $0x78] sm:$0xff]
      %vm2964 = vcmask 64512
      %v2966 = vsel %vm2964, %v2948, 0
      %v2969 = vsel %vm2964, %v2949, 0
      %v2972 = vsel %vm2964, %v2950, 0
      %v2975 = vsel %vm2964, %v2951, 0
      %v2978 = vsel %vm2964, %v2952, 0
      %v2981 = vsel %vm2964, %v2953, 0
      %v2984 = vsel %vm2964, %v2954, 0
      %v2987 = vsel %vm2964, %v2955, 0
      %v2990 = vsel %vm2964, %v2956, 0
      %v2993 = vsel %vm2964, %v2957, 0
      %v2996 = vsel %vm2964, %v2958, 0
      %v2999 = vsel %vm2964, %v2959, 0
      %v3002 = vsel %vm2964, %v2960, 0
      %v3005 = vsel %vm2964, %v2961, 0
      %v3008 = vsel %vm2964, %v2962, 0
      %v3011 = vsel %vm2964, %v2963, 0
      %3013 = vmatpush.msra.mxu0 0.0
      %3014 = vmatpush.msra.mxu0 0.0
      %3015 = vmatpush.msra.mxu0 0.0
      %3016 = vmatpush.msra.mxu0 0.0
      %3017 = vmatpush.msra.mxu0 0.0
      %3018 = vmatpush.msra.mxu0 0.0
      %3019 = vmatpush.msra.mxu0 0.0
      %3020 = vmatpush.msra.mxu0 0.0
      %3021 = vmatpush.msra.mxu0 0.0
      %3022 = vmatpush.msra.mxu0 0.0
      %3023 = vmatpush.msra.mxu0 0.0
      %3024 = vmatpush.msra.mxu0 0.0
      %3025 = vmatpush.msra.mxu0 0.0
      %3026 = vmatpush.msra.mxu0 0.0
      %3027 = vmatpush.msra.mxu0 0.0
      %3028 = vmatpush.msra.mxu0 %v2947
      %3029 = vmatmul.f32.gmra.mxu0 %v2966
      %v3030 = vpop.f32.mrf.mxu0
      %v3031 = vadd.f32 0.0, %v3030
      %3032 = vmatmul.f32.gmra.mxu0 %v2969
      %v3033 = vpop.f32.mrf.mxu0
      %v3034 = vadd.f32 0.0, %v3033
      %3035 = vmatmul.f32.gmra.mxu0 %v2972
      %v3036 = vpop.f32.mrf.mxu0
      %v3037 = vadd.f32 0.0, %v3036
      %3038 = vmatmul.f32.gmra.mxu0 %v2975
      %v3039 = vpop.f32.mrf.mxu0
      %v3040 = vadd.f32 0.0, %v3039
      %3041 = vmatmul.f32.gmra.mxu0 %v2978
      %v3042 = vpop.f32.mrf.mxu0
      %v3043 = vadd.f32 0.0, %v3042
      %3044 = vmatmul.f32.gmra.mxu0 %v2981
      %v3045 = vpop.f32.mrf.mxu0
      %v3046 = vadd.f32 0.0, %v3045
      %3047 = vmatmul.f32.gmra.mxu0 %v2984
      %v3048 = vpop.f32.mrf.mxu0
      %v3049 = vadd.f32 0.0, %v3048
      %3050 = vmatmul.f32.gmra.mxu0 %v2987
      %v3051 = vpop.f32.mrf.mxu0
      %v3052 = vadd.f32 0.0, %v3051
      %3053 = vmatmul.f32.gmra.mxu0 %v2990
      %v3054 = vpop.f32.mrf.mxu0
      %v3055 = vadd.f32 0.0, %v3054
      %3056 = vmatmul.f32.gmra.mxu0 %v2993
      %v3057 = vpop.f32.mrf.mxu0
      %v3058 = vadd.f32 0.0, %v3057
      %3059 = vmatmul.f32.gmra.mxu0 %v2996
      %v3060 = vpop.f32.mrf.mxu0
      %v3061 = vadd.f32 0.0, %v3060
      %3062 = vmatmul.f32.gmra.mxu0 %v2999
      %v3063 = vpop.f32.mrf.mxu0
      %v3064 = vadd.f32 0.0, %v3063
      %3065 = vmatmul.f32.gmra.mxu0 %v3002
      %v3066 = vpop.f32.mrf.mxu0
      %v3067 = vadd.f32 0.0, %v3066
      %3068 = vmatmul.f32.gmra.mxu0 %v3005
      %v3069 = vpop.f32.mrf.mxu0
      %v3070 = vadd.f32 0.0, %v3069
      %3071 = vmatmul.f32.gmra.mxu0 %v3008
      %v3072 = vpop.f32.mrf.mxu0
      %v3073 = vadd.f32 0.0, %v3072
      %3074 = vmatmul.f32.gmra.mxu0 %v3011
      %v3075 = vpop.f32.mrf.mxu0
      %v3076 = vadd.f32 0.0, %v3075
      %3077 = vdwg.mxu0
      %v3078 = vxor.u32 %v3031, 2147483648
      %v3079 = vxor.u32 %v3034, 2147483648
      %v3080 = vxor.u32 %v3037, 2147483648
      %v3081 = vxor.u32 %v3040, 2147483648
      %v3082 = vxor.u32 %v3043, 2147483648
      %v3083 = vxor.u32 %v3046, 2147483648
      %v3084 = vxor.u32 %v3049, 2147483648
      %v3085 = vxor.u32 %v3052, 2147483648
      %v3086 = vxor.u32 %v3055, 2147483648
      %v3087 = vxor.u32 %v3058, 2147483648
      %v3088 = vxor.u32 %v3061, 2147483648
      %v3089 = vxor.u32 %v3064, 2147483648
      %v3090 = vxor.u32 %v3067, 2147483648
      %v3091 = vxor.u32 %v3070, 2147483648
      %v3092 = vxor.u32 %v3073, 2147483648
      %v3093 = vxor.u32 %v3076, 2147483648
      %v3094 = vmul.f32 %v3078, 1.442695
      %v3095 = vpow.pop %v3094
      %v3096 = vmul.f32 %v3079, 1.442695
      %v3097 = vpow.pop %v3096
      %v3098 = vmul.f32 %v3080, 1.442695
      %v3099 = vpow.pop %v3098
      %v3100 = vmul.f32 %v3081, 1.442695
      %v3101 = vpow.pop %v3100
      %v3102 = vmul.f32 %v3082, 1.442695
      %v3103 = vpow.pop %v3102
      %v3104 = vmul.f32 %v3083, 1.442695
      %v3105 = vpow.pop %v3104
      %v3106 = vmul.f32 %v3084, 1.442695
      %v3107 = vpow.pop %v3106
      %v3108 = vmul.f32 %v3085, 1.442695
      %v3109 = vpow.pop %v3108
      %v3110 = vmul.f32 %v3086, 1.442695
      %v3111 = vpow.pop %v3110
      %v3112 = vmul.f32 %v3087, 1.442695
      %v3113 = vpow.pop %v3112
      %v3114 = vmul.f32 %v3088, 1.442695
      %v3115 = vpow.pop %v3114
      %v3116 = vmul.f32 %v3089, 1.442695
      %v3117 = vpow.pop %v3116
      %v3118 = vmul.f32 %v3090, 1.442695
      %v3119 = vpow.pop %v3118
      %v3120 = vmul.f32 %v3091, 1.442695
      %v3121 = vpow.pop %v3120
      %v3122 = vmul.f32 %v3092, 1.442695
      %v3123 = vpow.pop %v3122
      %v3124 = vmul.f32 %v3093, 1.442695
      %v3125 = vpow.pop %v3124
      %v3126 = vadd.f32 %v3095, 1.0
      %v3127 = vadd.f32 %v3097, 1.0
      %v3128 = vadd.f32 %v3099, 1.0
      %v3129 = vadd.f32 %v3101, 1.0
      %v3130 = vadd.f32 %v3103, 1.0
      %v3131 = vadd.f32 %v3105, 1.0
      %v3132 = vadd.f32 %v3107, 1.0
      %v3133 = vadd.f32 %v3109, 1.0
      %v3134 = vadd.f32 %v3111, 1.0
      %v3135 = vadd.f32 %v3113, 1.0
      %v3136 = vadd.f32 %v3115, 1.0
      %v3137 = vadd.f32 %v3117, 1.0
      %v3138 = vadd.f32 %v3119, 1.0
      %v3139 = vadd.f32 %v3121, 1.0
      %v3140 = vadd.f32 %v3123, 1.0
      %v3141 = vadd.f32 %v3125, 1.0
      %v3142 = vrcp.pop %v3126
      %v3143 = vmul.f32 %v3126, %v3142
      %v3144 = vsub.f32 1.0, %v3143
      %v3145 = vmul.f32 %v3142, %v3144
      %v3146 = vadd.f32 %v3142, %v3145
      %vm3147 = vweird.f32 %v3126
      %vm3148 = vweird.f32 %v3142
      %vm3149 = vmor %vm3147, %vm3148
      %v3150 = vsel %vm3149, %v3142, %v3146
      %v3151 = vand.u32 2147483647, %v3126
      %vm3152 = vcmp.eq.f32.partialorder %v3151, 8.507059e+37
      %v3153 = vand.u32 %v3126, 2147483648
      %v3154 = vor.u32 1.1754944e-38, %v3153
      %v3155 = vsel %vm3152, %v3154, %v3150
      %v3156 = vmul.f32 1.0, %v3155
      %v3157 = vrcp.pop %v3127
      %v3158 = vmul.f32 %v3127, %v3157
      %v3159 = vsub.f32 1.0, %v3158
      %v3160 = vmul.f32 %v3157, %v3159
      %v3161 = vadd.f32 %v3157, %v3160
      %vm3162 = vweird.f32 %v3127
      %vm3163 = vweird.f32 %v3157
      %vm3164 = vmor %vm3162, %vm3163
      %v3165 = vsel %vm3164, %v3157, %v3161
      %v3166 = vand.u32 2147483647, %v3127
      %vm3167 = vcmp.eq.f32.partialorder %v3166, 8.507059e+37
      %v3168 = vand.u32 %v3127, 2147483648
      %v3169 = vor.u32 1.1754944e-38, %v3168
      %v3170 = vsel %vm3167, %v3169, %v3165
      %v3171 = vmul.f32 1.0, %v3170
      %v3172 = vrcp.pop %v3128
      %v3173 = vmul.f32 %v3128, %v3172
      %v3174 = vsub.f32 1.0, %v3173
      %v3175 = vmul.f32 %v3172, %v3174
      %v3176 = vadd.f32 %v3172, %v3175
      %vm3177 = vweird.f32 %v3128
      %vm3178 = vweird.f32 %v3172
      %vm3179 = vmor %vm3177, %vm3178
      %v3180 = vsel %vm3179, %v3172, %v3176
      %v3181 = vand.u32 2147483647, %v3128
      %vm3182 = vcmp.eq.f32.partialorder %v3181, 8.507059e+37
      %v3183 = vand.u32 %v3128, 2147483648
      %v3184 = vor.u32 1.1754944e-38, %v3183
      %v3185 = vsel %vm3182, %v3184, %v3180
      %v3186 = vmul.f32 1.0, %v3185
      %v3187 = vrcp.pop %v3129
      %v3188 = vmul.f32 %v3129, %v3187
      %v3189 = vsub.f32 1.0, %v3188
      %v3190 = vmul.f32 %v3187, %v3189
      %v3191 = vadd.f32 %v3187, %v3190
      %vm3192 = vweird.f32 %v3129
      %vm3193 = vweird.f32 %v3187
      %vm3194 = vmor %vm3192, %vm3193
      %v3195 = vsel %vm3194, %v3187, %v3191
      %v3196 = vand.u32 2147483647, %v3129
      %vm3197 = vcmp.eq.f32.partialorder %v3196, 8.507059e+37
      %v3198 = vand.u32 %v3129, 2147483648
      %v3199 = vor.u32 1.1754944e-38, %v3198
      %v3200 = vsel %vm3197, %v3199, %v3195
      %v3201 = vmul.f32 1.0, %v3200
      %v3202 = vrcp.pop %v3130
      %v3203 = vmul.f32 %v3130, %v3202
      %v3204 = vsub.f32 1.0, %v3203
      %v3205 = vmul.f32 %v3202, %v3204
      %v3206 = vadd.f32 %v3202, %v3205
      %vm3207 = vweird.f32 %v3130
      %vm3208 = vweird.f32 %v3202
      %vm3209 = vmor %vm3207, %vm3208
      %v3210 = vsel %vm3209, %v3202, %v3206
      %v3211 = vand.u32 2147483647, %v3130
      %vm3212 = vcmp.eq.f32.partialorder %v3211, 8.507059e+37
      %v3213 = vand.u32 %v3130, 2147483648
      %v3214 = vor.u32 1.1754944e-38, %v3213
      %v3215 = vsel %vm3212, %v3214, %v3210
      %v3216 = vmul.f32 1.0, %v3215
      %v3217 = vrcp.pop %v3131
      %v3218 = vmul.f32 %v3131, %v3217
      %v3219 = vsub.f32 1.0, %v3218
      %v3220 = vmul.f32 %v3217, %v3219
      %v3221 = vadd.f32 %v3217, %v3220
      %vm3222 = vweird.f32 %v3131
      %vm3223 = vweird.f32 %v3217
      %vm3224 = vmor %vm3222, %vm3223
      %v3225 = vsel %vm3224, %v3217, %v3221
      %v3226 = vand.u32 2147483647, %v3131
      %vm3227 = vcmp.eq.f32.partialorder %v3226, 8.507059e+37
      %v3228 = vand.u32 %v3131, 2147483648
      %v3229 = vor.u32 1.1754944e-38, %v3228
      %v3230 = vsel %vm3227, %v3229, %v3225
      %v3231 = vmul.f32 1.0, %v3230
      %v3232 = vrcp.pop %v3132
      %v3233 = vmul.f32 %v3132, %v3232
      %v3234 = vsub.f32 1.0, %v3233
      %v3235 = vmul.f32 %v3232, %v3234
      %v3236 = vadd.f32 %v3232, %v3235
      %vm3237 = vweird.f32 %v3132
      %vm3238 = vweird.f32 %v3232
      %vm3239 = vmor %vm3237, %vm3238
      %v3240 = vsel %vm3239, %v3232, %v3236
      %v3241 = vand.u32 2147483647, %v3132
      %vm3242 = vcmp.eq.f32.partialorder %v3241, 8.507059e+37
      %v3243 = vand.u32 %v3132, 2147483648
      %v3244 = vor.u32 1.1754944e-38, %v3243
      %v3245 = vsel %vm3242, %v3244, %v3240
      %v3246 = vmul.f32 1.0, %v3245
      %v3247 = vrcp.pop %v3133
      %v3248 = vmul.f32 %v3133, %v3247
      %v3249 = vsub.f32 1.0, %v3248
      %v3250 = vmul.f32 %v3247, %v3249
      %v3251 = vadd.f32 %v3247, %v3250
      %vm3252 = vweird.f32 %v3133
      %vm3253 = vweird.f32 %v3247
      %vm3254 = vmor %vm3252, %vm3253
      %v3255 = vsel %vm3254, %v3247, %v3251
      %v3256 = vand.u32 2147483647, %v3133
      %vm3257 = vcmp.eq.f32.partialorder %v3256, 8.507059e+37
      %v3258 = vand.u32 %v3133, 2147483648
      %v3259 = vor.u32 1.1754944e-38, %v3258
      %v3260 = vsel %vm3257, %v3259, %v3255
      %v3261 = vmul.f32 1.0, %v3260
      %v3262 = vrcp.pop %v3134
      %v3263 = vmul.f32 %v3134, %v3262
      %v3264 = vsub.f32 1.0, %v3263
      %v3265 = vmul.f32 %v3262, %v3264
      %v3266 = vadd.f32 %v3262, %v3265
      %vm3267 = vweird.f32 %v3134
      %vm3268 = vweird.f32 %v3262
      %vm3269 = vmor %vm3267, %vm3268
      %v3270 = vsel %vm3269, %v3262, %v3266
      %v3271 = vand.u32 2147483647, %v3134
      %vm3272 = vcmp.eq.f32.partialorder %v3271, 8.507059e+37
      %v3273 = vand.u32 %v3134, 2147483648
      %v3274 = vor.u32 1.1754944e-38, %v3273
      %v3275 = vsel %vm3272, %v3274, %v3270
      %v3276 = vmul.f32 1.0, %v3275
      %v3277 = vrcp.pop %v3135
      %v3278 = vmul.f32 %v3135, %v3277
      %v3279 = vsub.f32 1.0, %v3278
      %v3280 = vmul.f32 %v3277, %v3279
      %v3281 = vadd.f32 %v3277, %v3280
      %vm3282 = vweird.f32 %v3135
      %vm3283 = vweird.f32 %v3277
      %vm3284 = vmor %vm3282, %vm3283
      %v3285 = vsel %vm3284, %v3277, %v3281
      %v3286 = vand.u32 2147483647, %v3135
      %vm3287 = vcmp.eq.f32.partialorder %v3286, 8.507059e+37
      %v3288 = vand.u32 %v3135, 2147483648
      %v3289 = vor.u32 1.1754944e-38, %v3288
      %v3290 = vsel %vm3287, %v3289, %v3285
      %v3291 = vmul.f32 1.0, %v3290
      %v3292 = vrcp.pop %v3136
      %v3293 = vmul.f32 %v3136, %v3292
      %v3294 = vsub.f32 1.0, %v3293
      %v3295 = vmul.f32 %v3292, %v3294
      %v3296 = vadd.f32 %v3292, %v3295
      %vm3297 = vweird.f32 %v3136
      %vm3298 = vweird.f32 %v3292
      %vm3299 = vmor %vm3297, %vm3298
      %v3300 = vsel %vm3299, %v3292, %v3296
      %v3301 = vand.u32 2147483647, %v3136
      %vm3302 = vcmp.eq.f32.partialorder %v3301, 8.507059e+37
      %v3303 = vand.u32 %v3136, 2147483648
      %v3304 = vor.u32 1.1754944e-38, %v3303
      %v3305 = vsel %vm3302, %v3304, %v3300
      %v3306 = vmul.f32 1.0, %v3305
      %v3307 = vrcp.pop %v3137
      %v3308 = vmul.f32 %v3137, %v3307
      %v3309 = vsub.f32 1.0, %v3308
      %v3310 = vmul.f32 %v3307, %v3309
      %v3311 = vadd.f32 %v3307, %v3310
      %vm3312 = vweird.f32 %v3137
      %vm3313 = vweird.f32 %v3307
      %vm3314 = vmor %vm3312, %vm3313
      %v3315 = vsel %vm3314, %v3307, %v3311
      %v3316 = vand.u32 2147483647, %v3137
      %vm3317 = vcmp.eq.f32.partialorder %v3316, 8.507059e+37
      %v3318 = vand.u32 %v3137, 2147483648
      %v3319 = vor.u32 1.1754944e-38, %v3318
      %v3320 = vsel %vm3317, %v3319, %v3315
      %v3321 = vmul.f32 1.0, %v3320
      %v3322 = vrcp.pop %v3138
      %v3323 = vmul.f32 %v3138, %v3322
      %v3324 = vsub.f32 1.0, %v3323
      %v3325 = vmul.f32 %v3322, %v3324
      %v3326 = vadd.f32 %v3322, %v3325
      %vm3327 = vweird.f32 %v3138
      %vm3328 = vweird.f32 %v3322
      %vm3329 = vmor %vm3327, %vm3328
      %v3330 = vsel %vm3329, %v3322, %v3326
      %v3331 = vand.u32 2147483647, %v3138
      %vm3332 = vcmp.eq.f32.partialorder %v3331, 8.507059e+37
      %v3333 = vand.u32 %v3138, 2147483648
      %v3334 = vor.u32 1.1754944e-38, %v3333
      %v3335 = vsel %vm3332, %v3334, %v3330
      %v3336 = vmul.f32 1.0, %v3335
      %v3337 = vrcp.pop %v3139
      %v3338 = vmul.f32 %v3139, %v3337
      %v3339 = vsub.f32 1.0, %v3338
      %v3340 = vmul.f32 %v3337, %v3339
      %v3341 = vadd.f32 %v3337, %v3340
      %vm3342 = vweird.f32 %v3139
      %vm3343 = vweird.f32 %v3337
      %vm3344 = vmor %vm3342, %vm3343
      %v3345 = vsel %vm3344, %v3337, %v3341
      %v3346 = vand.u32 2147483647, %v3139
      %vm3347 = vcmp.eq.f32.partialorder %v3346, 8.507059e+37
      %v3348 = vand.u32 %v3139, 2147483648
      %v3349 = vor.u32 1.1754944e-38, %v3348
      %v3350 = vsel %vm3347, %v3349, %v3345
      %v3351 = vmul.f32 1.0, %v3350
      %v3352 = vrcp.pop %v3140
      %v3353 = vmul.f32 %v3140, %v3352
      %v3354 = vsub.f32 1.0, %v3353
      %v3355 = vmul.f32 %v3352, %v3354
      %v3356 = vadd.f32 %v3352, %v3355
      %vm3357 = vweird.f32 %v3140
      %vm3358 = vweird.f32 %v3352
      %vm3359 = vmor %vm3357, %vm3358
      %v3360 = vsel %vm3359, %v3352, %v3356
      %v3361 = vand.u32 2147483647, %v3140
      %vm3362 = vcmp.eq.f32.partialorder %v3361, 8.507059e+37
      %v3363 = vand.u32 %v3140, 2147483648
      %v3364 = vor.u32 1.1754944e-38, %v3363
      %v3365 = vsel %vm3362, %v3364, %v3360
      %v3366 = vmul.f32 1.0, %v3365
      %v3367 = vrcp.pop %v3141
      %v3368 = vmul.f32 %v3141, %v3367
      %v3369 = vsub.f32 1.0, %v3368
      %v3370 = vmul.f32 %v3367, %v3369
      %v3371 = vadd.f32 %v3367, %v3370
      %vm3372 = vweird.f32 %v3141
      %vm3373 = vweird.f32 %v3367
      %vm3374 = vmor %vm3372, %vm3373
      %v3375 = vsel %vm3374, %v3367, %v3371
      %v3376 = vand.u32 2147483647, %v3141
      %vm3377 = vcmp.eq.f32.partialorder %v3376, 8.507059e+37
      %v3378 = vand.u32 %v3141, 2147483648
      %v3379 = vor.u32 1.1754944e-38, %v3378
      %v3380 = vsel %vm3377, %v3379, %v3375
      %v3381 = vmul.f32 1.0, %v3380
      %3383 = vset.pattern.permute.xlu0 0
      %3384 = vperm.xlu0 %3383, %v3156
      %v3385 = vpop.permute.xlu0 %3384
      %3388 = vset.pattern.permute.xlu0 0
      %3389 = vperm.xlu0 %3388, %v3171
      %v3390 = vpop.permute.xlu0 %3389
      %3393 = vset.pattern.permute.xlu0 0
      %3394 = vperm.xlu0 %3393, %v3186
      %v3395 = vpop.permute.xlu0 %3394
      %3398 = vset.pattern.permute.xlu0 0
      %3399 = vperm.xlu0 %3398, %v3201
      %v3400 = vpop.permute.xlu0 %3399
      %3403 = vset.pattern.permute.xlu0 0
      %3404 = vperm.xlu0 %3403, %v3216
      %v3405 = vpop.permute.xlu0 %3404
      %3408 = vset.pattern.permute.xlu0 0
      %3409 = vperm.xlu0 %3408, %v3231
      %v3410 = vpop.permute.xlu0 %3409
      %3413 = vset.pattern.permute.xlu0 0
      %3414 = vperm.xlu0 %3413, %v3246
      %v3415 = vpop.permute.xlu0 %3414
      %3418 = vset.pattern.permute.xlu0 0
      %3419 = vperm.xlu0 %3418, %v3261
      %v3420 = vpop.permute.xlu0 %3419
      %3423 = vset.pattern.permute.xlu0 0
      %3424 = vperm.xlu0 %3423, %v3276
      %v3425 = vpop.permute.xlu0 %3424
      %3428 = vset.pattern.permute.xlu0 0
      %3429 = vperm.xlu0 %3428, %v3291
      %v3430 = vpop.permute.xlu0 %3429
      %3433 = vset.pattern.permute.xlu0 0
      %3434 = vperm.xlu0 %3433, %v3306
      %v3435 = vpop.permute.xlu0 %3434
      %3438 = vset.pattern.permute.xlu0 0
      %3439 = vperm.xlu0 %3438, %v3321
      %v3440 = vpop.permute.xlu0 %3439
      %3443 = vset.pattern.permute.xlu0 0
      %3444 = vperm.xlu0 %3443, %v3336
      %v3445 = vpop.permute.xlu0 %3444
      %3448 = vset.pattern.permute.xlu0 0
      %3449 = vperm.xlu0 %3448, %v3351
      %v3450 = vpop.permute.xlu0 %3449
      %3453 = vset.pattern.permute.xlu0 0
      %3454 = vperm.xlu0 %3453, %v3366
      %v3455 = vpop.permute.xlu0 %3454
      %3458 = vset.pattern.permute.xlu0 0
      %3459 = vperm.xlu0 %3458, %v3381
      %v3460 = vpop.permute.xlu0 %3459
      %v3462 = vmul.f32 %v2830, %v3385
      %v3463 = vmul.f32 %v2831, %v3385
      %v3464 = vmul.f32 %v2832, %v3390
      %v3465 = vmul.f32 %v2833, %v3390
      %v3466 = vmul.f32 %v2834, %v3395
      %v3467 = vmul.f32 %v2835, %v3395
      %v3468 = vmul.f32 %v2836, %v3400
      %v3469 = vmul.f32 %v2837, %v3400
      %v3470 = vmul.f32 %v2838, %v3405
      %v3471 = vmul.f32 %v2839, %v3405
      %v3472 = vmul.f32 %v2840, %v3410
      %v3473 = vmul.f32 %v2841, %v3410
      %v3474 = vmul.f32 %v2842, %v3415
      %v3475 = vmul.f32 %v2843, %v3415
      %v3476 = vmul.f32 %v2844, %v3420
      %v3477 = vmul.f32 %v2845, %v3420
      %v3478 = vmul.f32 %v2846, %v3425
      %v3479 = vmul.f32 %v2847, %v3425
      %v3480 = vmul.f32 %v2848, %v3430
      %v3481 = vmul.f32 %v2849, %v3430
      %v3482 = vmul.f32 %v2850, %v3435
      %v3483 = vmul.f32 %v2851, %v3435
      %v3484 = vmul.f32 %v2852, %v3440
      %v3485 = vmul.f32 %v2853, %v3440
      %v3486 = vmul.f32 %v2854, %v3445
      %v3487 = vmul.f32 %v2855, %v3445
      %v3488 = vmul.f32 %v2856, %v3450
      %v3489 = vmul.f32 %v2857, %v3450
      %v3490 = vmul.f32 %v2858, %v3455
      %v3491 = vmul.f32 %v2859, %v3455
      %v3492 = vmul.f32 %v2860, %v3460
      %v3493 = vmul.f32 %v2861, %v3460
      %3494 = vrot.lane.b32.xlu0 %v3462, 17
      %v3495 = vpop.permute.xlu0 %3494
      %3496 = vrot.lane.b32.xlu0 %v3464, 17
      %v3497 = vpop.permute.xlu0 %3496
      %3498 = vrot.lane.b32.xlu0 %v3466, 17
      %v3499 = vpop.permute.xlu0 %3498
      %3500 = vrot.lane.b32.xlu0 %v3468, 17
      %v3501 = vpop.permute.xlu0 %3500
      %3502 = vrot.lane.b32.xlu0 %v3470, 17
      %v3503 = vpop.permute.xlu0 %3502
      %3504 = vrot.lane.b32.xlu0 %v3472, 17
      %v3505 = vpop.permute.xlu0 %3504
      %3506 = vrot.lane.b32.xlu0 %v3474, 17
      %v3507 = vpop.permute.xlu0 %3506
      %3508 = vrot.lane.b32.xlu0 %v3476, 17
      %v3509 = vpop.permute.xlu0 %3508
      %3510 = vrot.lane.b32.xlu0 %v3478, 17
      %v3511 = vpop.permute.xlu0 %3510
      %3512 = vrot.lane.b32.xlu0 %v3480, 17
      %v3513 = vpop.permute.xlu0 %3512
      %3514 = vrot.lane.b32.xlu0 %v3482, 17
      %v3515 = vpop.permute.xlu0 %3514
      %3516 = vrot.lane.b32.xlu0 %v3484, 17
      %v3517 = vpop.permute.xlu0 %3516
      %3518 = vrot.lane.b32.xlu0 %v3486, 17
      %v3519 = vpop.permute.xlu0 %3518
      %3520 = vrot.lane.b32.xlu0 %v3488, 17
      %v3521 = vpop.permute.xlu0 %3520
      %3522 = vrot.lane.b32.xlu0 %v3490, 17
      %v3523 = vpop.permute.xlu0 %3522
      %3524 = vrot.lane.b32.xlu0 %v3492, 17
      %v3525 = vpop.permute.xlu0 %3524
      %3526 = vrot.lane.b32.xlu0 %v3463, 17
      %v3527 = vpop.permute.xlu0 %3526
      %3528 = vrot.lane.b32.xlu0 %v3465, 17
      %v3529 = vpop.permute.xlu0 %3528
      %3530 = vrot.lane.b32.xlu0 %v3467, 17
      %v3531 = vpop.permute.xlu0 %3530
      %3532 = vrot.lane.b32.xlu0 %v3469, 17
      %v3533 = vpop.permute.xlu0 %3532
      %3534 = vrot.lane.b32.xlu0 %v3471, 17
      %v3535 = vpop.permute.xlu0 %3534
      %3536 = vrot.lane.b32.xlu0 %v3473, 17
      %v3537 = vpop.permute.xlu0 %3536
      %3538 = vrot.lane.b32.xlu0 %v3475, 17
      %v3539 = vpop.permute.xlu0 %3538
      %3540 = vrot.lane.b32.xlu0 %v3477, 17
      %v3541 = vpop.permute.xlu0 %3540
      %3542 = vrot.lane.b32.xlu0 %v3479, 17
      %v3543 = vpop.permute.xlu0 %3542
      %3544 = vrot.lane.b32.xlu0 %v3481, 17
      %v3545 = vpop.permute.xlu0 %3544
      %3546 = vrot.lane.b32.xlu0 %v3483, 17
      %v3547 = vpop.permute.xlu0 %3546
      %3548 = vrot.lane.b32.xlu0 %v3485, 17
      %v3549 = vpop.permute.xlu0 %3548
      %3550 = vrot.lane.b32.xlu0 %v3487, 17
      %v3551 = vpop.permute.xlu0 %3550
      %3552 = vrot.lane.b32.xlu0 %v3489, 17
      %v3553 = vpop.permute.xlu0 %3552
      %3554 = vrot.lane.b32.xlu0 %v3491, 17
      %v3555 = vpop.permute.xlu0 %3554
      %3556 = vrot.lane.b32.xlu0 %v3493, 17
      %v3557 = vpop.permute.xlu0 %3556
      %v3558 = vsel %vm428, %v3495, %v3527
      %v3559 = vsel %vm428, %v3497, %v3529
      %v3560 = vsel %vm428, %v3499, %v3531
      %v3561 = vsel %vm428, %v3501, %v3533
      %v3562 = vsel %vm428, %v3503, %v3535
      %v3563 = vsel %vm428, %v3505, %v3537
      %v3564 = vsel %vm428, %v3507, %v3539
      %v3565 = vsel %vm428, %v3509, %v3541
      %v3566 = vsel %vm428, %v3511, %v3543
      %v3567 = vsel %vm428, %v3513, %v3545
      %v3568 = vsel %vm428, %v3515, %v3547
      %v3569 = vsel %vm428, %v3517, %v3549
      %v3570 = vsel %vm428, %v3519, %v3551
      %v3571 = vsel %vm428, %v3521, %v3553
      %v3572 = vsel %vm428, %v3523, %v3555
      %v3573 = vsel %vm428, %v3525, %v3557
      %v3574 = vsel %vm428, %v3527, %v3495
      %v3575 = vsel %vm428, %v3529, %v3497
      %v3576 = vsel %vm428, %v3531, %v3499
      %v3577 = vsel %vm428, %v3533, %v3501
      %v3578 = vsel %vm428, %v3535, %v3503
      %v3579 = vsel %vm428, %v3537, %v3505
      %v3580 = vsel %vm428, %v3539, %v3507
      %v3581 = vsel %vm428, %v3541, %v3509
      %v3582 = vsel %vm428, %v3543, %v3511
      %v3583 = vsel %vm428, %v3545, %v3513
      %v3584 = vsel %vm428, %v3547, %v3515
      %v3585 = vsel %vm428, %v3549, %v3517
      %v3586 = vsel %vm428, %v3551, %v3519
      %v3587 = vsel %vm428, %v3553, %v3521
      %v3588 = vsel %vm428, %v3555, %v3523
      %v3589 = vsel %vm428, %v3557, %v3525
      %v3590 = vld [vmem:[%s1] ss:$8 sm:$0x3]
      %v3592 = vperm.slane %v3590, 0
      %v3593 = vperm.slane %v3590, 1
      %v3596 = vmul.f32 %v3574, %v3592
      %v3597 = vmul.f32 %v3558, %v3593
      %v3598 = vmul.f32 %v3575, %v3592
      %v3599 = vmul.f32 %v3559, %v3593
      %v3600 = vmul.f32 %v3576, %v3592
      %v3601 = vmul.f32 %v3560, %v3593
      %v3602 = vmul.f32 %v3577, %v3592
      %v3603 = vmul.f32 %v3561, %v3593
      %v3604 = vmul.f32 %v3578, %v3592
      %v3605 = vmul.f32 %v3562, %v3593
      %v3606 = vmul.f32 %v3579, %v3592
      %v3607 = vmul.f32 %v3563, %v3593
      %v3608 = vmul.f32 %v3580, %v3592
      %v3609 = vmul.f32 %v3564, %v3593
      %v3610 = vmul.f32 %v3581, %v3592
      %v3611 = vmul.f32 %v3565, %v3593
      %v3612 = vmul.f32 %v3582, %v3592
      %v3613 = vmul.f32 %v3566, %v3593
      %v3614 = vmul.f32 %v3583, %v3592
      %v3615 = vmul.f32 %v3567, %v3593
      %v3616 = vmul.f32 %v3584, %v3592
      %v3617 = vmul.f32 %v3568, %v3593
      %v3618 = vmul.f32 %v3585, %v3592
      %v3619 = vmul.f32 %v3569, %v3593
      %v3620 = vmul.f32 %v3586, %v3592
      %v3621 = vmul.f32 %v3570, %v3593
      %v3622 = vmul.f32 %v3587, %v3592
      %v3623 = vmul.f32 %v3571, %v3593
      %v3624 = vmul.f32 %v3588, %v3592
      %v3625 = vmul.f32 %v3572, %v3593
      %v3626 = vmul.f32 %v3589, %v3592
      %v3627 = vmul.f32 %v3573, %v3593
      %v3628 = vpack.c.bf16 %v3597, %v3596
      %v3629 = vpack.c.bf16 %v3599, %v3598
      %v3630 = vpack.c.bf16 %v3601, %v3600
      %v3631 = vpack.c.bf16 %v3603, %v3602
      %v3632 = vpack.c.bf16 %v3605, %v3604
      %v3633 = vpack.c.bf16 %v3607, %v3606
      %v3634 = vpack.c.bf16 %v3609, %v3608
      %v3635 = vpack.c.bf16 %v3611, %v3610
      %v3636 = vpack.c.bf16 %v3613, %v3612
      %v3637 = vpack.c.bf16 %v3615, %v3614
      %v3638 = vpack.c.bf16 %v3617, %v3616
      %v3639 = vpack.c.bf16 %v3619, %v3618
      %v3640 = vpack.c.bf16 %v3621, %v3620
      %v3641 = vpack.c.bf16 %v3623, %v3622
      %v3642 = vpack.c.bf16 %v3625, %v3624
      %v3643 = vpack.c.bf16 %v3627, %v3626
      %3644 = vst [vmem:[#allocation3] sm:$0xff] %v3628
      %3645 = vst [vmem:[#allocation3 + $0x8] sm:$0xff] %v3629
      %3646 = vst [vmem:[#allocation3 + $0x10] sm:$0xff] %v3630
      %3647 = vst [vmem:[#allocation3 + $0x18] sm:$0xff] %v3631
      %3648 = vst [vmem:[#allocation3 + $0x20] sm:$0xff] %v3632
      %3649 = vst [vmem:[#allocation3 + $0x28] sm:$0xff] %v3633
      %3650 = vst [vmem:[#allocation3 + $0x30] sm:$0xff] %v3634
      %3651 = vst [vmem:[#allocation3 + $0x38] sm:$0xff] %v3635
      %3652 = vst [vmem:[#allocation3 + $0x40] sm:$0xff] %v3636
      %3653 = vst [vmem:[#allocation3 + $0x48] sm:$0xff] %v3637
      %3654 = vst [vmem:[#allocation3 + $0x50] sm:$0xff] %v3638
      %3655 = vst [vmem:[#allocation3 + $0x58] sm:$0xff] %v3639
      %3656 = vst [vmem:[#allocation3 + $0x60] sm:$0xff] %v3640
      %3657 = vst [vmem:[#allocation3 + $0x68] sm:$0xff] %v3641
      %3658 = vst [vmem:[#allocation3 + $0x70] sm:$0xff] %v3642
      %3659 = vst [vmem:[#allocation3 + $0x78] sm:$0xff] %v3643
      %3660 = vrot.lane.b32.xlu0 %v3462, 16
      %v3661 = vpop.permute.xlu0 %3660
      %3662 = vrot.lane.b32.xlu0 %v3464, 16
      %v3663 = vpop.permute.xlu0 %3662
      %3664 = vrot.lane.b32.xlu0 %v3466, 16
      %v3665 = vpop.permute.xlu0 %3664
      %3666 = vrot.lane.b32.xlu0 %v3468, 16
      %v3667 = vpop.permute.xlu0 %3666
      %3668 = vrot.lane.b32.xlu0 %v3470, 16
      %v3669 = vpop.permute.xlu0 %3668
      %3670 = vrot.lane.b32.xlu0 %v3472, 16
      %v3671 = vpop.permute.xlu0 %3670
      %3672 = vrot.lane.b32.xlu0 %v3474, 16
      %v3673 = vpop.permute.xlu0 %3672
      %3674 = vrot.lane.b32.xlu0 %v3476, 16
      %v3675 = vpop.permute.xlu0 %3674
      %3676 = vrot.lane.b32.xlu0 %v3478, 16
      %v3677 = vpop.permute.xlu0 %3676
      %3678 = vrot.lane.b32.xlu0 %v3480, 16
      %v3679 = vpop.permute.xlu0 %3678
      %3680 = vrot.lane.b32.xlu0 %v3482, 16
      %v3681 = vpop.permute.xlu0 %3680
      %3682 = vrot.lane.b32.xlu0 %v3484, 16
      %v3683 = vpop.permute.xlu0 %3682
      %3684 = vrot.lane.b32.xlu0 %v3486, 16
      %v3685 = vpop.permute.xlu0 %3684
      %3686 = vrot.lane.b32.xlu0 %v3488, 16
      %v3687 = vpop.permute.xlu0 %3686
      %3688 = vrot.lane.b32.xlu0 %v3490, 16
      %v3689 = vpop.permute.xlu0 %3688
      %3690 = vrot.lane.b32.xlu0 %v3492, 16
      %v3691 = vpop.permute.xlu0 %3690
      %3692 = vrot.lane.b32.xlu0 %v3463, 16
      %v3693 = vpop.permute.xlu0 %3692
      %3694 = vrot.lane.b32.xlu0 %v3465, 16
      %v3695 = vpop.permute.xlu0 %3694
      %3696 = vrot.lane.b32.xlu0 %v3467, 16
      %v3697 = vpop.permute.xlu0 %3696
      %3698 = vrot.lane.b32.xlu0 %v3469, 16
      %v3699 = vpop.permute.xlu0 %3698
      %3700 = vrot.lane.b32.xlu0 %v3471, 16
      %v3701 = vpop.permute.xlu0 %3700
      %3702 = vrot.lane.b32.xlu0 %v3473, 16
      %v3703 = vpop.permute.xlu0 %3702
      %3704 = vrot.lane.b32.xlu0 %v3475, 16
      %v3705 = vpop.permute.xlu0 %3704
      %3706 = vrot.lane.b32.xlu0 %v3477, 16
      %v3707 = vpop.permute.xlu0 %3706
      %3708 = vrot.lane.b32.xlu0 %v3479, 16
      %v3709 = vpop.permute.xlu0 %3708
      %3710 = vrot.lane.b32.xlu0 %v3481, 16
      %v3711 = vpop.permute.xlu0 %3710
      %3712 = vrot.lane.b32.xlu0 %v3483, 16
      %v3713 = vpop.permute.xlu0 %3712
      %3714 = vrot.lane.b32.xlu0 %v3485, 16
      %v3715 = vpop.permute.xlu0 %3714
      %3716 = vrot.lane.b32.xlu0 %v3487, 16
      %v3717 = vpop.permute.xlu0 %3716
      %3718 = vrot.lane.b32.xlu0 %v3489, 16
      %v3719 = vpop.permute.xlu0 %3718
      %3720 = vrot.lane.b32.xlu0 %v3491, 16
      %v3721 = vpop.permute.xlu0 %3720
      %3722 = vrot.lane.b32.xlu0 %v3493, 16
      %v3723 = vpop.permute.xlu0 %3722
      %v3724 = vsel %vm450, %v3661, %v3693
      %v3725 = vsel %vm450, %v3663, %v3695
      %v3726 = vsel %vm450, %v3665, %v3697
      %v3727 = vsel %vm450, %v3667, %v3699
      %v3728 = vsel %vm450, %v3669, %v3701
      %v3729 = vsel %vm450, %v3671, %v3703
      %v3730 = vsel %vm450, %v3673, %v3705
      %v3731 = vsel %vm450, %v3675, %v3707
      %v3732 = vsel %vm450, %v3677, %v3709
      %v3733 = vsel %vm450, %v3679, %v3711
      %v3734 = vsel %vm450, %v3681, %v3713
      %v3735 = vsel %vm450, %v3683, %v3715
      %v3736 = vsel %vm450, %v3685, %v3717
      %v3737 = vsel %vm450, %v3687, %v3719
      %v3738 = vsel %vm450, %v3689, %v3721
      %v3739 = vsel %vm450, %v3691, %v3723
      %v3740 = vsel %vm450, %v3693, %v3661
      %v3741 = vsel %vm450, %v3695, %v3663
      %v3742 = vsel %vm450, %v3697, %v3665
      %v3743 = vsel %vm450, %v3699, %v3667
      %v3744 = vsel %vm450, %v3701, %v3669
      %v3745 = vsel %vm450, %v3703, %v3671
      %v3746 = vsel %vm450, %v3705, %v3673
      %v3747 = vsel %vm450, %v3707, %v3675
      %v3748 = vsel %vm450, %v3709, %v3677
      %v3749 = vsel %vm450, %v3711, %v3679
      %v3750 = vsel %vm450, %v3713, %v3681
      %v3751 = vsel %vm450, %v3715, %v3683
      %v3752 = vsel %vm450, %v3717, %v3685
      %v3753 = vsel %vm450, %v3719, %v3687
      %v3754 = vsel %vm450, %v3721, %v3689
      %v3755 = vsel %vm450, %v3723, %v3691
      %v3756 = vld [vmem:[%s453] ss:$8 sm:$0x3]
      %v3758 = vperm.slane %v3756, 0
      %v3759 = vperm.slane %v3756, 1
      %v3762 = vmul.f32 %v3740, %v3758
      %v3763 = vmul.f32 %v3724, %v3759
      %v3764 = vmul.f32 %v3741, %v3758
      %v3765 = vmul.f32 %v3725, %v3759
      %v3766 = vmul.f32 %v3742, %v3758
      %v3767 = vmul.f32 %v3726, %v3759
      %v3768 = vmul.f32 %v3743, %v3758
      %v3769 = vmul.f32 %v3727, %v3759
      %v3770 = vmul.f32 %v3744, %v3758
      %v3771 = vmul.f32 %v3728, %v3759
      %v3772 = vmul.f32 %v3745, %v3758
      %v3773 = vmul.f32 %v3729, %v3759
      %v3774 = vmul.f32 %v3746, %v3758
      %v3775 = vmul.f32 %v3730, %v3759
      %v3776 = vmul.f32 %v3747, %v3758
      %v3777 = vmul.f32 %v3731, %v3759
      %v3778 = vmul.f32 %v3748, %v3758
      %v3779 = vmul.f32 %v3732, %v3759
      %v3780 = vmul.f32 %v3749, %v3758
      %v3781 = vmul.f32 %v3733, %v3759
      %v3782 = vmul.f32 %v3750, %v3758
      %v3783 = vmul.f32 %v3734, %v3759
      %v3784 = vmul.f32 %v3751, %v3758
      %v3785 = vmul.f32 %v3735, %v3759
      %v3786 = vmul.f32 %v3752, %v3758
      %v3787 = vmul.f32 %v3736, %v3759
      %v3788 = vmul.f32 %v3753, %v3758
      %v3789 = vmul.f32 %v3737, %v3759
      %v3790 = vmul.f32 %v3754, %v3758
      %v3791 = vmul.f32 %v3738, %v3759
      %v3792 = vmul.f32 %v3755, %v3758
      %v3793 = vmul.f32 %v3739, %v3759
      %v3794 = vpack.c.bf16 %v3763, %v3762
      %v3795 = vpack.c.bf16 %v3765, %v3764
      %v3796 = vpack.c.bf16 %v3767, %v3766
      %v3797 = vpack.c.bf16 %v3769, %v3768
      %v3798 = vpack.c.bf16 %v3771, %v3770
      %v3799 = vpack.c.bf16 %v3773, %v3772
      %v3800 = vpack.c.bf16 %v3775, %v3774
      %v3801 = vpack.c.bf16 %v3777, %v3776
      %v3802 = vpack.c.bf16 %v3779, %v3778
      %v3803 = vpack.c.bf16 %v3781, %v3780
      %v3804 = vpack.c.bf16 %v3783, %v3782
      %v3805 = vpack.c.bf16 %v3785, %v3784
      %v3806 = vpack.c.bf16 %v3787, %v3786
      %v3807 = vpack.c.bf16 %v3789, %v3788
      %v3808 = vpack.c.bf16 %v3791, %v3790
      %v3809 = vpack.c.bf16 %v3793, %v3792
      %3810 = vst [vmem:[#allocation3 + $0x80] sm:$0xff] %v3794
      %3811 = vst [vmem:[#allocation3 + $0x88] sm:$0xff] %v3795
      %3812 = vst [vmem:[#allocation3 + $0x90] sm:$0xff] %v3796
      %3813 = vst [vmem:[#allocation3 + $0x98] sm:$0xff] %v3797
      %3814 = vst [vmem:[#allocation3 + $0xa0] sm:$0xff] %v3798
      %3815 = vst [vmem:[#allocation3 + $0xa8] sm:$0xff] %v3799
      %3816 = vst [vmem:[#allocation3 + $0xb0] sm:$0xff] %v3800
      %3817 = vst [vmem:[#allocation3 + $0xb8] sm:$0xff] %v3801
      %3818 = vst [vmem:[#allocation3 + $0xc0] sm:$0xff] %v3802
      %3819 = vst [vmem:[#allocation3 + $0xc8] sm:$0xff] %v3803
      %3820 = vst [vmem:[#allocation3 + $0xd0] sm:$0xff] %v3804
      %3821 = vst [vmem:[#allocation3 + $0xd8] sm:$0xff] %v3805
      %3822 = vst [vmem:[#allocation3 + $0xe0] sm:$0xff] %v3806
      %3823 = vst [vmem:[#allocation3 + $0xe8] sm:$0xff] %v3807
      %3824 = vst [vmem:[#allocation3 + $0xf0] sm:$0xff] %v3808
      %3825 = vst [vmem:[#allocation3 + $0xf8] sm:$0xff] %v3809
      %3826 = vrot.lane.b32.xlu0 %v3462, 15
      %v3827 = vpop.permute.xlu0 %3826
      %3828 = vrot.lane.b32.xlu0 %v3464, 15
      %v3829 = vpop.permute.xlu0 %3828
      %3830 = vrot.lane.b32.xlu0 %v3466, 15
      %v3831 = vpop.permute.xlu0 %3830
      %3832 = vrot.lane.b32.xlu0 %v3468, 15
      %v3833 = vpop.permute.xlu0 %3832
      %3834 = vrot.lane.b32.xlu0 %v3470, 15
      %v3835 = vpop.permute.xlu0 %3834
      %3836 = vrot.lane.b32.xlu0 %v3472, 15
      %v3837 = vpop.permute.xlu0 %3836
      %3838 = vrot.lane.b32.xlu0 %v3474, 15
      %v3839 = vpop.permute.xlu0 %3838
      %3840 = vrot.lane.b32.xlu0 %v3476, 15
      %v3841 = vpop.permute.xlu0 %3840
      %3842 = vrot.lane.b32.xlu0 %v3478, 15
      %v3843 = vpop.permute.xlu0 %3842
      %3844 = vrot.lane.b32.xlu0 %v3480, 15
      %v3845 = vpop.permute.xlu0 %3844
      %3846 = vrot.lane.b32.xlu0 %v3482, 15
      %v3847 = vpop.permute.xlu0 %3846
      %3848 = vrot.lane.b32.xlu0 %v3484, 15
      %v3849 = vpop.permute.xlu0 %3848
      %3850 = vrot.lane.b32.xlu0 %v3486, 15
      %v3851 = vpop.permute.xlu0 %3850
      %3852 = vrot.lane.b32.xlu0 %v3488, 15
      %v3853 = vpop.permute.xlu0 %3852
      %3854 = vrot.lane.b32.xlu0 %v3490, 15
      %v3855 = vpop.permute.xlu0 %3854
      %3856 = vrot.lane.b32.xlu0 %v3492, 15
      %v3857 = vpop.permute.xlu0 %3856
      %3858 = vrot.lane.b32.xlu0 %v3463, 15
      %v3859 = vpop.permute.xlu0 %3858
      %3860 = vrot.lane.b32.xlu0 %v3465, 15
      %v3861 = vpop.permute.xlu0 %3860
      %3862 = vrot.lane.b32.xlu0 %v3467, 15
      %v3863 = vpop.permute.xlu0 %3862
      %3864 = vrot.lane.b32.xlu0 %v3469, 15
      %v3865 = vpop.permute.xlu0 %3864
      %3866 = vrot.lane.b32.xlu0 %v3471, 15
      %v3867 = vpop.permute.xlu0 %3866
      %3868 = vrot.lane.b32.xlu0 %v3473, 15
      %v3869 = vpop.permute.xlu0 %3868
      %3870 = vrot.lane.b32.xlu0 %v3475, 15
      %v3871 = vpop.permute.xlu0 %3870
      %3872 = vrot.lane.b32.xlu0 %v3477, 15
      %v3873 = vpop.permute.xlu0 %3872
      %3874 = vrot.lane.b32.xlu0 %v3479, 15
      %v3875 = vpop.permute.xlu0 %3874
      %3876 = vrot.lane.b32.xlu0 %v3481, 15
      %v3877 = vpop.permute.xlu0 %3876
      %3878 = vrot.lane.b32.xlu0 %v3483, 15
      %v3879 = vpop.permute.xlu0 %3878
      %3880 = vrot.lane.b32.xlu0 %v3485, 15
      %v3881 = vpop.permute.xlu0 %3880
      %3882 = vrot.lane.b32.xlu0 %v3487, 15
      %v3883 = vpop.permute.xlu0 %3882
      %3884 = vrot.lane.b32.xlu0 %v3489, 15
      %v3885 = vpop.permute.xlu0 %3884
      %3886 = vrot.lane.b32.xlu0 %v3491, 15
      %v3887 = vpop.permute.xlu0 %3886
      %3888 = vrot.lane.b32.xlu0 %v3493, 15
      %v3889 = vpop.permute.xlu0 %3888
      %v3890 = vsel %vm479, %v3827, %v3859
      %v3891 = vsel %vm479, %v3829, %v3861
      %v3892 = vsel %vm479, %v3831, %v3863
      %v3893 = vsel %vm479, %v3833, %v3865
      %v3894 = vsel %vm479, %v3835, %v3867
      %v3895 = vsel %vm479, %v3837, %v3869
      %v3896 = vsel %vm479, %v3839, %v3871
      %v3897 = vsel %vm479, %v3841, %v3873
      %v3898 = vsel %vm479, %v3843, %v3875
      %v3899 = vsel %vm479, %v3845, %v3877
      %v3900 = vsel %vm479, %v3847, %v3879
      %v3901 = vsel %vm479, %v3849, %v3881
      %v3902 = vsel %vm479, %v3851, %v3883
      %v3903 = vsel %vm479, %v3853, %v3885
      %v3904 = vsel %vm479, %v3855, %v3887
      %v3905 = vsel %vm479, %v3857, %v3889
      %v3906 = vsel %vm479, %v3859, %v3827
      %v3907 = vsel %vm479, %v3861, %v3829
      %v3908 = vsel %vm479, %v3863, %v3831
      %v3909 = vsel %vm479, %v3865, %v3833
      %v3910 = vsel %vm479, %v3867, %v3835
      %v3911 = vsel %vm479, %v3869, %v3837
      %v3912 = vsel %vm479, %v3871, %v3839
      %v3913 = vsel %vm479, %v3873, %v3841
      %v3914 = vsel %vm479, %v3875, %v3843
      %v3915 = vsel %vm479, %v3877, %v3845
      %v3916 = vsel %vm479, %v3879, %v3847
      %v3917 = vsel %vm479, %v3881, %v3849
      %v3918 = vsel %vm479, %v3883, %v3851
      %v3919 = vsel %vm479, %v3885, %v3853
      %v3920 = vsel %vm479, %v3887, %v3855
      %v3921 = vsel %vm479, %v3889, %v3857
      %v3922 = vld [vmem:[%s482] ss:$8 sm:$0x3]
      %v3924 = vperm.slane %v3922, 0
      %v3925 = vperm.slane %v3922, 1
      %v3928 = vmul.f32 %v3906, %v3924
      %v3929 = vmul.f32 %v3890, %v3925
      %v3930 = vmul.f32 %v3907, %v3924
      %v3931 = vmul.f32 %v3891, %v3925
      %v3932 = vmul.f32 %v3908, %v3924
      %v3933 = vmul.f32 %v3892, %v3925
      %v3934 = vmul.f32 %v3909, %v3924
      %v3935 = vmul.f32 %v3893, %v3925
      %v3936 = vmul.f32 %v3910, %v3924
      %v3937 = vmul.f32 %v3894, %v3925
      %v3938 = vmul.f32 %v3911, %v3924
      %v3939 = vmul.f32 %v3895, %v3925
      %v3940 = vmul.f32 %v3912, %v3924
      %v3941 = vmul.f32 %v3896, %v3925
      %v3942 = vmul.f32 %v3913, %v3924
      %v3943 = vmul.f32 %v3897, %v3925
      %v3944 = vmul.f32 %v3914, %v3924
      %v3945 = vmul.f32 %v3898, %v3925
      %v3946 = vmul.f32 %v3915, %v3924
      %v3947 = vmul.f32 %v3899, %v3925
      %v3948 = vmul.f32 %v3916, %v3924
      %v3949 = vmul.f32 %v3900, %v3925
      %v3950 = vmul.f32 %v3917, %v3924
      %v3951 = vmul.f32 %v3901, %v3925
      %v3952 = vmul.f32 %v3918, %v3924
      %v3953 = vmul.f32 %v3902, %v3925
      %v3954 = vmul.f32 %v3919, %v3924
      %v3955 = vmul.f32 %v3903, %v3925
      %v3956 = vmul.f32 %v3920, %v3924
      %v3957 = vmul.f32 %v3904, %v3925
      %v3958 = vmul.f32 %v3921, %v3924
      %v3959 = vmul.f32 %v3905, %v3925
      %v3960 = vpack.c.bf16 %v3929, %v3928
      %v3961 = vpack.c.bf16 %v3931, %v3930
      %v3962 = vpack.c.bf16 %v3933, %v3932
      %v3963 = vpack.c.bf16 %v3935, %v3934
      %v3964 = vpack.c.bf16 %v3937, %v3936
      %v3965 = vpack.c.bf16 %v3939, %v3938
      %v3966 = vpack.c.bf16 %v3941, %v3940
      %v3967 = vpack.c.bf16 %v3943, %v3942
      %v3968 = vpack.c.bf16 %v3945, %v3944
      %v3969 = vpack.c.bf16 %v3947, %v3946
      %v3970 = vpack.c.bf16 %v3949, %v3948
      %v3971 = vpack.c.bf16 %v3951, %v3950
      %v3972 = vpack.c.bf16 %v3953, %v3952
      %v3973 = vpack.c.bf16 %v3955, %v3954
      %v3974 = vpack.c.bf16 %v3957, %v3956
      %v3975 = vpack.c.bf16 %v3959, %v3958
      %3976 = vst [vmem:[#allocation3 + $0x100] sm:$0xff] %v3960
      %3977 = vst [vmem:[#allocation3 + $0x108] sm:$0xff] %v3961
      %3978 = vst [vmem:[#allocation3 + $0x110] sm:$0xff] %v3962
      %3979 = vst [vmem:[#allocation3 + $0x118] sm:$0xff] %v3963
      %3980 = vst [vmem:[#allocation3 + $0x120] sm:$0xff] %v3964
      %3981 = vst [vmem:[#allocation3 + $0x128] sm:$0xff] %v3965
      %3982 = vst [vmem:[#allocation3 + $0x130] sm:$0xff] %v3966
      %3983 = vst [vmem:[#allocation3 + $0x138] sm:$0xff] %v3967
      %3984 = vst [vmem:[#allocation3 + $0x140] sm:$0xff] %v3968
      %3985 = vst [vmem:[#allocation3 + $0x148] sm:$0xff] %v3969
      %3986 = vst [vmem:[#allocation3 + $0x150] sm:$0xff] %v3970
      %3987 = vst [vmem:[#allocation3 + $0x158] sm:$0xff] %v3971
      %3988 = vst [vmem:[#allocation3 + $0x160] sm:$0xff] %v3972
      %3989 = vst [vmem:[#allocation3 + $0x168] sm:$0xff] %v3973
      %3990 = vst [vmem:[#allocation3 + $0x170] sm:$0xff] %v3974
      %3991 = vst [vmem:[#allocation3 + $0x178] sm:$0xff] %v3975
      %3992 = vrot.lane.b32.xlu0 %v3462, 1
      %v3993 = vpop.permute.xlu0 %3992
      %3994 = vrot.lane.b32.xlu0 %v3464, 1
      %v3995 = vpop.permute.xlu0 %3994
      %3996 = vrot.lane.b32.xlu0 %v3466, 1
      %v3997 = vpop.permute.xlu0 %3996
      %3998 = vrot.lane.b32.xlu0 %v3468, 1
      %v3999 = vpop.permute.xlu0 %3998
      %4000 = vrot.lane.b32.xlu0 %v3470, 1
      %v4001 = vpop.permute.xlu0 %4000
      %4002 = vrot.lane.b32.xlu0 %v3472, 1
      %v4003 = vpop.permute.xlu0 %4002
      %4004 = vrot.lane.b32.xlu0 %v3474, 1
      %v4005 = vpop.permute.xlu0 %4004
      %4006 = vrot.lane.b32.xlu0 %v3476, 1
      %v4007 = vpop.permute.xlu0 %4006
      %4008 = vrot.lane.b32.xlu0 %v3478, 1
      %v4009 = vpop.permute.xlu0 %4008
      %4010 = vrot.lane.b32.xlu0 %v3480, 1
      %v4011 = vpop.permute.xlu0 %4010
      %4012 = vrot.lane.b32.xlu0 %v3482, 1
      %v4013 = vpop.permute.xlu0 %4012
      %4014 = vrot.lane.b32.xlu0 %v3484, 1
      %v4015 = vpop.permute.xlu0 %4014
      %4016 = vrot.lane.b32.xlu0 %v3486, 1
      %v4017 = vpop.permute.xlu0 %4016
      %4018 = vrot.lane.b32.xlu0 %v3488, 1
      %v4019 = vpop.permute.xlu0 %4018
      %4020 = vrot.lane.b32.xlu0 %v3490, 1
      %v4021 = vpop.permute.xlu0 %4020
      %4022 = vrot.lane.b32.xlu0 %v3492, 1
      %v4023 = vpop.permute.xlu0 %4022
      %4024 = vrot.lane.b32.xlu0 %v3463, 1
      %v4025 = vpop.permute.xlu0 %4024
      %4026 = vrot.lane.b32.xlu0 %v3465, 1
      %v4027 = vpop.permute.xlu0 %4026
      %4028 = vrot.lane.b32.xlu0 %v3467, 1
      %v4029 = vpop.permute.xlu0 %4028
      %4030 = vrot.lane.b32.xlu0 %v3469, 1
      %v4031 = vpop.permute.xlu0 %4030
      %4032 = vrot.lane.b32.xlu0 %v3471, 1
      %v4033 = vpop.permute.xlu0 %4032
      %4034 = vrot.lane.b32.xlu0 %v3473, 1
      %v4035 = vpop.permute.xlu0 %4034
      %4036 = vrot.lane.b32.xlu0 %v3475, 1
      %v4037 = vpop.permute.xlu0 %4036
      %4038 = vrot.lane.b32.xlu0 %v3477, 1
      %v4039 = vpop.permute.xlu0 %4038
      %4040 = vrot.lane.b32.xlu0 %v3479, 1
      %v4041 = vpop.permute.xlu0 %4040
      %4042 = vrot.lane.b32.xlu0 %v3481, 1
      %v4043 = vpop.permute.xlu0 %4042
      %4044 = vrot.lane.b32.xlu0 %v3483, 1
      %v4045 = vpop.permute.xlu0 %4044
      %4046 = vrot.lane.b32.xlu0 %v3485, 1
      %v4047 = vpop.permute.xlu0 %4046
      %4048 = vrot.lane.b32.xlu0 %v3487, 1
      %v4049 = vpop.permute.xlu0 %4048
      %4050 = vrot.lane.b32.xlu0 %v3489, 1
      %v4051 = vpop.permute.xlu0 %4050
      %4052 = vrot.lane.b32.xlu0 %v3491, 1
      %v4053 = vpop.permute.xlu0 %4052
      %4054 = vrot.lane.b32.xlu0 %v3493, 1
      %v4055 = vpop.permute.xlu0 %4054
      %v4056 = vsel %vm510, %v3993, %v4025
      %v4057 = vsel %vm510, %v3995, %v4027
      %v4058 = vsel %vm510, %v3997, %v4029
      %v4059 = vsel %vm510, %v3999, %v4031
      %v4060 = vsel %vm510, %v4001, %v4033
      %v4061 = vsel %vm510, %v4003, %v4035
      %v4062 = vsel %vm510, %v4005, %v4037
      %v4063 = vsel %vm510, %v4007, %v4039
      %v4064 = vsel %vm510, %v4009, %v4041
      %v4065 = vsel %vm510, %v4011, %v4043
      %v4066 = vsel %vm510, %v4013, %v4045
      %v4067 = vsel %vm510, %v4015, %v4047
      %v4068 = vsel %vm510, %v4017, %v4049
      %v4069 = vsel %vm510, %v4019, %v4051
      %v4070 = vsel %vm510, %v4021, %v4053
      %v4071 = vsel %vm510, %v4023, %v4055
      %v4072 = vsel %vm510, %v4025, %v3993
      %v4073 = vsel %vm510, %v4027, %v3995
      %v4074 = vsel %vm510, %v4029, %v3997
      %v4075 = vsel %vm510, %v4031, %v3999
      %v4076 = vsel %vm510, %v4033, %v4001
      %v4077 = vsel %vm510, %v4035, %v4003
      %v4078 = vsel %vm510, %v4037, %v4005
      %v4079 = vsel %vm510, %v4039, %v4007
      %v4080 = vsel %vm510, %v4041, %v4009
      %v4081 = vsel %vm510, %v4043, %v4011
      %v4082 = vsel %vm510, %v4045, %v4013
      %v4083 = vsel %vm510, %v4047, %v4015
      %v4084 = vsel %vm510, %v4049, %v4017
      %v4085 = vsel %vm510, %v4051, %v4019
      %v4086 = vsel %vm510, %v4053, %v4021
      %v4087 = vsel %vm510, %v4055, %v4023
      %v4088 = vld [vmem:[%s513] ss:$8 sm:$0x3]
      %v4090 = vperm.slane %v4088, 0
      %v4091 = vperm.slane %v4088, 1
      %v4094 = vmul.f32 %v4072, %v4090
      %v4095 = vmul.f32 %v4056, %v4091
      %v4096 = vmul.f32 %v4073, %v4090
      %v4097 = vmul.f32 %v4057, %v4091
      %v4098 = vmul.f32 %v4074, %v4090
      %v4099 = vmul.f32 %v4058, %v4091
      %v4100 = vmul.f32 %v4075, %v4090
      %v4101 = vmul.f32 %v4059, %v4091
      %v4102 = vmul.f32 %v4076, %v4090
      %v4103 = vmul.f32 %v4060, %v4091
      %v4104 = vmul.f32 %v4077, %v4090
      %v4105 = vmul.f32 %v4061, %v4091
      %v4106 = vmul.f32 %v4078, %v4090
      %v4107 = vmul.f32 %v4062, %v4091
      %v4108 = vmul.f32 %v4079, %v4090
      %v4109 = vmul.f32 %v4063, %v4091
      %v4110 = vmul.f32 %v4080, %v4090
      %v4111 = vmul.f32 %v4064, %v4091
      %v4112 = vmul.f32 %v4081, %v4090
      %v4113 = vmul.f32 %v4065, %v4091
      %v4114 = vmul.f32 %v4082, %v4090
      %v4115 = vmul.f32 %v4066, %v4091
      %v4116 = vmul.f32 %v4083, %v4090
      %v4117 = vmul.f32 %v4067, %v4091
      %v4118 = vmul.f32 %v4084, %v4090
      %v4119 = vmul.f32 %v4068, %v4091
      %v4120 = vmul.f32 %v4085, %v4090
      %v4121 = vmul.f32 %v4069, %v4091
      %v4122 = vmul.f32 %v4086, %v4090
      %v4123 = vmul.f32 %v4070, %v4091
      %v4124 = vmul.f32 %v4087, %v4090
      %v4125 = vmul.f32 %v4071, %v4091
      %v4126 = vpack.c.bf16 %v4095, %v4094
      %v4127 = vpack.c.bf16 %v4097, %v4096
      %v4128 = vpack.c.bf16 %v4099, %v4098
      %v4129 = vpack.c.bf16 %v4101, %v4100
      %v4130 = vpack.c.bf16 %v4103, %v4102
      %v4131 = vpack.c.bf16 %v4105, %v4104
      %v4132 = vpack.c.bf16 %v4107, %v4106
      %v4133 = vpack.c.bf16 %v4109, %v4108
      %v4134 = vpack.c.bf16 %v4111, %v4110
      %v4135 = vpack.c.bf16 %v4113, %v4112
      %v4136 = vpack.c.bf16 %v4115, %v4114
      %v4137 = vpack.c.bf16 %v4117, %v4116
      %v4138 = vpack.c.bf16 %v4119, %v4118
      %v4139 = vpack.c.bf16 %v4121, %v4120
      %v4140 = vpack.c.bf16 %v4123, %v4122
      %v4141 = vpack.c.bf16 %v4125, %v4124
      %4142 = vst [vmem:[#allocation3 + $0x180] sm:$0xff] %v4126
      %4143 = vst [vmem:[#allocation3 + $0x188] sm:$0xff] %v4127
      %4144 = vst [vmem:[#allocation3 + $0x190] sm:$0xff] %v4128
      %4145 = vst [vmem:[#allocation3 + $0x198] sm:$0xff] %v4129
      %4146 = vst [vmem:[#allocation3 + $0x1a0] sm:$0xff] %v4130
      %4147 = vst [vmem:[#allocation3 + $0x1a8] sm:$0xff] %v4131
      %4148 = vst [vmem:[#allocation3 + $0x1b0] sm:$0xff] %v4132
      %4149 = vst [vmem:[#allocation3 + $0x1b8] sm:$0xff] %v4133
      %4150 = vst [vmem:[#allocation3 + $0x1c0] sm:$0xff] %v4134
      %4151 = vst [vmem:[#allocation3 + $0x1c8] sm:$0xff] %v4135
      %4152 = vst [vmem:[#allocation3 + $0x1d0] sm:$0xff] %v4136
      %4153 = vst [vmem:[#allocation3 + $0x1d8] sm:$0xff] %v4137
      %4154 = vst [vmem:[#allocation3 + $0x1e0] sm:$0xff] %v4138
      %4155 = vst [vmem:[#allocation3 + $0x1e8] sm:$0xff] %v4139
      %4156 = vst [vmem:[#allocation3 + $0x1f0] sm:$0xff] %v4140
      %4157 = vst [vmem:[#allocation3 + $0x1f8] sm:$0xff] %v4141
      %v4158 = vpack.c.bf16 %v3463, %v3462
      %v4159 = vpack.c.bf16 %v3465, %v3464
      %v4160 = vpack.c.bf16 %v3467, %v3466
      %v4161 = vpack.c.bf16 %v3469, %v3468
      %v4162 = vpack.c.bf16 %v3471, %v3470
      %v4163 = vpack.c.bf16 %v3473, %v3472
      %v4164 = vpack.c.bf16 %v3475, %v3474
      %v4165 = vpack.c.bf16 %v3477, %v3476
      %v4166 = vpack.c.bf16 %v3479, %v3478
      %v4167 = vpack.c.bf16 %v3481, %v3480
      %v4168 = vpack.c.bf16 %v3483, %v3482
      %v4169 = vpack.c.bf16 %v3485, %v3484
      %v4170 = vpack.c.bf16 %v3487, %v3486
      %v4171 = vpack.c.bf16 %v3489, %v3488
      %v4172 = vpack.c.bf16 %v3491, %v3490
      %v4173 = vpack.c.bf16 %v3493, %v3492
      %4174 = vst [vmem:[#allocation3 + $0x200] sm:$0xff] %v4158
      %4175 = vst [vmem:[#allocation3 + $0x208] sm:$0xff] %v4159
      %4176 = vst [vmem:[#allocation3 + $0x210] sm:$0xff] %v4160
      %4177 = vst [vmem:[#allocation3 + $0x218] sm:$0xff] %v4161
      %4178 = vst [vmem:[#allocation3 + $0x220] sm:$0xff] %v4162
      %4179 = vst [vmem:[#allocation3 + $0x228] sm:$0xff] %v4163
      %4180 = vst [vmem:[#allocation3 + $0x230] sm:$0xff] %v4164
      %4181 = vst [vmem:[#allocation3 + $0x238] sm:$0xff] %v4165
      %4182 = vst [vmem:[#allocation3 + $0x240] sm:$0xff] %v4166
      %4183 = vst [vmem:[#allocation3 + $0x248] sm:$0xff] %v4167
      %4184 = vst [vmem:[#allocation3 + $0x250] sm:$0xff] %v4168
      %4185 = vst [vmem:[#allocation3 + $0x258] sm:$0xff] %v4169
      %4186 = vst [vmem:[#allocation3 + $0x260] sm:$0xff] %v4170
      %4187 = vst [vmem:[#allocation3 + $0x268] sm:$0xff] %v4171
      %4188 = vst [vmem:[#allocation3 + $0x270] sm:$0xff] %v4172
      %4189 = vst [vmem:[#allocation3 + $0x278] sm:$0xff] %v4173
      %4190 = vrot.lane.b32.xlu0 %v3462, 127
      %v4191 = vpop.permute.xlu0 %4190
      %4192 = vrot.lane.b32.xlu0 %v3464, 127
      %v4193 = vpop.permute.xlu0 %4192
      %4194 = vrot.lane.b32.xlu0 %v3466, 127
      %v4195 = vpop.permute.xlu0 %4194
      %4196 = vrot.lane.b32.xlu0 %v3468, 127
      %v4197 = vpop.permute.xlu0 %4196
      %4198 = vrot.lane.b32.xlu0 %v3470, 127
      %v4199 = vpop.permute.xlu0 %4198
      %4200 = vrot.lane.b32.xlu0 %v3472, 127
      %v4201 = vpop.permute.xlu0 %4200
      %4202 = vrot.lane.b32.xlu0 %v3474, 127
      %v4203 = vpop.permute.xlu0 %4202
      %4204 = vrot.lane.b32.xlu0 %v3476, 127
      %v4205 = vpop.permute.xlu0 %4204
      %4206 = vrot.lane.b32.xlu0 %v3478, 127
      %v4207 = vpop.permute.xlu0 %4206
      %4208 = vrot.lane.b32.xlu0 %v3480, 127
      %v4209 = vpop.permute.xlu0 %4208
      %4210 = vrot.lane.b32.xlu0 %v3482, 127
      %v4211 = vpop.permute.xlu0 %4210
      %4212 = vrot.lane.b32.xlu0 %v3484, 127
      %v4213 = vpop.permute.xlu0 %4212
      %4214 = vrot.lane.b32.xlu0 %v3486, 127
      %v4215 = vpop.permute.xlu0 %4214
      %4216 = vrot.lane.b32.xlu0 %v3488, 127
      %v4217 = vpop.permute.xlu0 %4216
      %4218 = vrot.lane.b32.xlu0 %v3490, 127
      %v4219 = vpop.permute.xlu0 %4218
      %4220 = vrot.lane.b32.xlu0 %v3492, 127
      %v4221 = vpop.permute.xlu0 %4220
      %4222 = vrot.lane.b32.xlu0 %v3463, 127
      %v4223 = vpop.permute.xlu0 %4222
      %4224 = vrot.lane.b32.xlu0 %v3465, 127
      %v4225 = vpop.permute.xlu0 %4224
      %4226 = vrot.lane.b32.xlu0 %v3467, 127
      %v4227 = vpop.permute.xlu0 %4226
      %4228 = vrot.lane.b32.xlu0 %v3469, 127
      %v4229 = vpop.permute.xlu0 %4228
      %4230 = vrot.lane.b32.xlu0 %v3471, 127
      %v4231 = vpop.permute.xlu0 %4230
      %4232 = vrot.lane.b32.xlu0 %v3473, 127
      %v4233 = vpop.permute.xlu0 %4232
      %4234 = vrot.lane.b32.xlu0 %v3475, 127
      %v4235 = vpop.permute.xlu0 %4234
      %4236 = vrot.lane.b32.xlu0 %v3477, 127
      %v4237 = vpop.permute.xlu0 %4236
      %4238 = vrot.lane.b32.xlu0 %v3479, 127
      %v4239 = vpop.permute.xlu0 %4238
      %4240 = vrot.lane.b32.xlu0 %v3481, 127
      %v4241 = vpop.permute.xlu0 %4240
      %4242 = vrot.lane.b32.xlu0 %v3483, 127
      %v4243 = vpop.permute.xlu0 %4242
      %4244 = vrot.lane.b32.xlu0 %v3485, 127
      %v4245 = vpop.permute.xlu0 %4244
      %4246 = vrot.lane.b32.xlu0 %v3487, 127
      %v4247 = vpop.permute.xlu0 %4246
      %4248 = vrot.lane.b32.xlu0 %v3489, 127
      %v4249 = vpop.permute.xlu0 %4248
      %4250 = vrot.lane.b32.xlu0 %v3491, 127
      %v4251 = vpop.permute.xlu0 %4250
      %4252 = vrot.lane.b32.xlu0 %v3493, 127
      %v4253 = vpop.permute.xlu0 %4252
      %v4254 = vsel %vm547, %v4191, %v4223
      %v4255 = vsel %vm547, %v4193, %v4225
      %v4256 = vsel %vm547, %v4195, %v4227
      %v4257 = vsel %vm547, %v4197, %v4229
      %v4258 = vsel %vm547, %v4199, %v4231
      %v4259 = vsel %vm547, %v4201, %v4233
      %v4260 = vsel %vm547, %v4203, %v4235
      %v4261 = vsel %vm547, %v4205, %v4237
      %v4262 = vsel %vm547, %v4207, %v4239
      %v4263 = vsel %vm547, %v4209, %v4241
      %v4264 = vsel %vm547, %v4211, %v4243
      %v4265 = vsel %vm547, %v4213, %v4245
      %v4266 = vsel %vm547, %v4215, %v4247
      %v4267 = vsel %vm547, %v4217, %v4249
      %v4268 = vsel %vm547, %v4219, %v4251
      %v4269 = vsel %vm547, %v4221, %v4253
      %v4270 = vsel %vm547, %v4223, %v4191
      %v4271 = vsel %vm547, %v4225, %v4193
      %v4272 = vsel %vm547, %v4227, %v4195
      %v4273 = vsel %vm547, %v4229, %v4197
      %v4274 = vsel %vm547, %v4231, %v4199
      %v4275 = vsel %vm547, %v4233, %v4201
      %v4276 = vsel %vm547, %v4235, %v4203
      %v4277 = vsel %vm547, %v4237, %v4205
      %v4278 = vsel %vm547, %v4239, %v4207
      %v4279 = vsel %vm547, %v4241, %v4209
      %v4280 = vsel %vm547, %v4243, %v4211
      %v4281 = vsel %vm547, %v4245, %v4213
      %v4282 = vsel %vm547, %v4247, %v4215
      %v4283 = vsel %vm547, %v4249, %v4217
      %v4284 = vsel %vm547, %v4251, %v4219
      %v4285 = vsel %vm547, %v4253, %v4221
      %v4286 = vld [vmem:[%s550] ss:$8 sm:$0x3]
      %v4288 = vperm.slane %v4286, 0
      %v4289 = vperm.slane %v4286, 1
      %v4292 = vmul.f32 %v4254, %v4288
      %v4293 = vmul.f32 %v4270, %v4289
      %v4294 = vmul.f32 %v4255, %v4288
      %v4295 = vmul.f32 %v4271, %v4289
      %v4296 = vmul.f32 %v4256, %v4288
      %v4297 = vmul.f32 %v4272, %v4289
      %v4298 = vmul.f32 %v4257, %v4288
      %v4299 = vmul.f32 %v4273, %v4289
      %v4300 = vmul.f32 %v4258, %v4288
      %v4301 = vmul.f32 %v4274, %v4289
      %v4302 = vmul.f32 %v4259, %v4288
      %v4303 = vmul.f32 %v4275, %v4289
      %v4304 = vmul.f32 %v4260, %v4288
      %v4305 = vmul.f32 %v4276, %v4289
      %v4306 = vmul.f32 %v4261, %v4288
      %v4307 = vmul.f32 %v4277, %v4289
      %v4308 = vmul.f32 %v4262, %v4288
      %v4309 = vmul.f32 %v4278, %v4289
      %v4310 = vmul.f32 %v4263, %v4288
      %v4311 = vmul.f32 %v4279, %v4289
      %v4312 = vmul.f32 %v4264, %v4288
      %v4313 = vmul.f32 %v4280, %v4289
      %v4314 = vmul.f32 %v4265, %v4288
      %v4315 = vmul.f32 %v4281, %v4289
      %v4316 = vmul.f32 %v4266, %v4288
      %v4317 = vmul.f32 %v4282, %v4289
      %v4318 = vmul.f32 %v4267, %v4288
      %v4319 = vmul.f32 %v4283, %v4289
      %v4320 = vmul.f32 %v4268, %v4288
      %v4321 = vmul.f32 %v4284, %v4289
      %v4322 = vmul.f32 %v4269, %v4288
      %v4323 = vmul.f32 %v4285, %v4289
      %v4324 = vpack.c.bf16 %v4293, %v4292
      %v4325 = vpack.c.bf16 %v4295, %v4294
      %v4326 = vpack.c.bf16 %v4297, %v4296
      %v4327 = vpack.c.bf16 %v4299, %v4298
      %v4328 = vpack.c.bf16 %v4301, %v4300
      %v4329 = vpack.c.bf16 %v4303, %v4302
      %v4330 = vpack.c.bf16 %v4305, %v4304
      %v4331 = vpack.c.bf16 %v4307, %v4306
      %v4332 = vpack.c.bf16 %v4309, %v4308
      %v4333 = vpack.c.bf16 %v4311, %v4310
      %v4334 = vpack.c.bf16 %v4313, %v4312
      %v4335 = vpack.c.bf16 %v4315, %v4314
      %v4336 = vpack.c.bf16 %v4317, %v4316
      %v4337 = vpack.c.bf16 %v4319, %v4318
      %v4338 = vpack.c.bf16 %v4321, %v4320
      %v4339 = vpack.c.bf16 %v4323, %v4322
      %4340 = vst [vmem:[#allocation3 + $0x280] sm:$0xff] %v4324
      %4341 = vst [vmem:[#allocation3 + $0x288] sm:$0xff] %v4325
      %4342 = vst [vmem:[#allocation3 + $0x290] sm:$0xff] %v4326
      %4343 = vst [vmem:[#allocation3 + $0x298] sm:$0xff] %v4327
      %4344 = vst [vmem:[#allocation3 + $0x2a0] sm:$0xff] %v4328
      %4345 = vst [vmem:[#allocation3 + $0x2a8] sm:$0xff] %v4329
      %4346 = vst [vmem:[#allocation3 + $0x2b0] sm:$0xff] %v4330
      %4347 = vst [vmem:[#allocation3 + $0x2b8] sm:$0xff] %v4331
      %4348 = vst [vmem:[#allocation3 + $0x2c0] sm:$0xff] %v4332
      %4349 = vst [vmem:[#allocation3 + $0x2c8] sm:$0xff] %v4333
      %4350 = vst [vmem:[#allocation3 + $0x2d0] sm:$0xff] %v4334
      %4351 = vst [vmem:[#allocation3 + $0x2d8] sm:$0xff] %v4335
      %4352 = vst [vmem:[#allocation3 + $0x2e0] sm:$0xff] %v4336
      %4353 = vst [vmem:[#allocation3 + $0x2e8] sm:$0xff] %v4337
      %4354 = vst [vmem:[#allocation3 + $0x2f0] sm:$0xff] %v4338
      %4355 = vst [vmem:[#allocation3 + $0x2f8] sm:$0xff] %v4339
      %4356 = vrot.lane.b32.xlu0 %v3462, 113
      %v4357 = vpop.permute.xlu0 %4356
      %4358 = vrot.lane.b32.xlu0 %v3464, 113
      %v4359 = vpop.permute.xlu0 %4358
      %4360 = vrot.lane.b32.xlu0 %v3466, 113
      %v4361 = vpop.permute.xlu0 %4360
      %4362 = vrot.lane.b32.xlu0 %v3468, 113
      %v4363 = vpop.permute.xlu0 %4362
      %4364 = vrot.lane.b32.xlu0 %v3470, 113
      %v4365 = vpop.permute.xlu0 %4364
      %4366 = vrot.lane.b32.xlu0 %v3472, 113
      %v4367 = vpop.permute.xlu0 %4366
      %4368 = vrot.lane.b32.xlu0 %v3474, 113
      %v4369 = vpop.permute.xlu0 %4368
      %4370 = vrot.lane.b32.xlu0 %v3476, 113
      %v4371 = vpop.permute.xlu0 %4370
      %4372 = vrot.lane.b32.xlu0 %v3478, 113
      %v4373 = vpop.permute.xlu0 %4372
      %4374 = vrot.lane.b32.xlu0 %v3480, 113
      %v4375 = vpop.permute.xlu0 %4374
      %4376 = vrot.lane.b32.xlu0 %v3482, 113
      %v4377 = vpop.permute.xlu0 %4376
      %4378 = vrot.lane.b32.xlu0 %v3484, 113
      %v4379 = vpop.permute.xlu0 %4378
      %4380 = vrot.lane.b32.xlu0 %v3486, 113
      %v4381 = vpop.permute.xlu0 %4380
      %4382 = vrot.lane.b32.xlu0 %v3488, 113
      %v4383 = vpop.permute.xlu0 %4382
      %4384 = vrot.lane.b32.xlu0 %v3490, 113
      %v4385 = vpop.permute.xlu0 %4384
      %4386 = vrot.lane.b32.xlu0 %v3492, 113
      %v4387 = vpop.permute.xlu0 %4386
      %4388 = vrot.lane.b32.xlu0 %v3463, 113
      %v4389 = vpop.permute.xlu0 %4388
      %4390 = vrot.lane.b32.xlu0 %v3465, 113
      %v4391 = vpop.permute.xlu0 %4390
      %4392 = vrot.lane.b32.xlu0 %v3467, 113
      %v4393 = vpop.permute.xlu0 %4392
      %4394 = vrot.lane.b32.xlu0 %v3469, 113
      %v4395 = vpop.permute.xlu0 %4394
      %4396 = vrot.lane.b32.xlu0 %v3471, 113
      %v4397 = vpop.permute.xlu0 %4396
      %4398 = vrot.lane.b32.xlu0 %v3473, 113
      %v4399 = vpop.permute.xlu0 %4398
      %4400 = vrot.lane.b32.xlu0 %v3475, 113
      %v4401 = vpop.permute.xlu0 %4400
      %4402 = vrot.lane.b32.xlu0 %v3477, 113
      %v4403 = vpop.permute.xlu0 %4402
      %4404 = vrot.lane.b32.xlu0 %v3479, 113
      %v4405 = vpop.permute.xlu0 %4404
      %4406 = vrot.lane.b32.xlu0 %v3481, 113
      %v4407 = vpop.permute.xlu0 %4406
      %4408 = vrot.lane.b32.xlu0 %v3483, 113
      %v4409 = vpop.permute.xlu0 %4408
      %4410 = vrot.lane.b32.xlu0 %v3485, 113
      %v4411 = vpop.permute.xlu0 %4410
      %4412 = vrot.lane.b32.xlu0 %v3487, 113
      %v4413 = vpop.permute.xlu0 %4412
      %4414 = vrot.lane.b32.xlu0 %v3489, 113
      %v4415 = vpop.permute.xlu0 %4414
      %4416 = vrot.lane.b32.xlu0 %v3491, 113
      %v4417 = vpop.permute.xlu0 %4416
      %4418 = vrot.lane.b32.xlu0 %v3493, 113
      %v4419 = vpop.permute.xlu0 %4418
      %v4420 = vsel %vm578, %v4357, %v4389
      %v4421 = vsel %vm578, %v4359, %v4391
      %v4422 = vsel %vm578, %v4361, %v4393
      %v4423 = vsel %vm578, %v4363, %v4395
      %v4424 = vsel %vm578, %v4365, %v4397
      %v4425 = vsel %vm578, %v4367, %v4399
      %v4426 = vsel %vm578, %v4369, %v4401
      %v4427 = vsel %vm578, %v4371, %v4403
      %v4428 = vsel %vm578, %v4373, %v4405
      %v4429 = vsel %vm578, %v4375, %v4407
      %v4430 = vsel %vm578, %v4377, %v4409
      %v4431 = vsel %vm578, %v4379, %v4411
      %v4432 = vsel %vm578, %v4381, %v4413
      %v4433 = vsel %vm578, %v4383, %v4415
      %v4434 = vsel %vm578, %v4385, %v4417
      %v4435 = vsel %vm578, %v4387, %v4419
      %v4436 = vsel %vm578, %v4389, %v4357
      %v4437 = vsel %vm578, %v4391, %v4359
      %v4438 = vsel %vm578, %v4393, %v4361
      %v4439 = vsel %vm578, %v4395, %v4363
      %v4440 = vsel %vm578, %v4397, %v4365
      %v4441 = vsel %vm578, %v4399, %v4367
      %v4442 = vsel %vm578, %v4401, %v4369
      %v4443 = vsel %vm578, %v4403, %v4371
      %v4444 = vsel %vm578, %v4405, %v4373
      %v4445 = vsel %vm578, %v4407, %v4375
      %v4446 = vsel %vm578, %v4409, %v4377
      %v4447 = vsel %vm578, %v4411, %v4379
      %v4448 = vsel %vm578, %v4413, %v4381
      %v4449 = vsel %vm578, %v4415, %v4383
      %v4450 = vsel %vm578, %v4417, %v4385
      %v4451 = vsel %vm578, %v4419, %v4387
      %v4452 = vld [vmem:[%s581] ss:$8 sm:$0x3]
      %v4454 = vperm.slane %v4452, 0
      %v4455 = vperm.slane %v4452, 1
      %v4458 = vmul.f32 %v4420, %v4454
      %v4459 = vmul.f32 %v4436, %v4455
      %v4460 = vmul.f32 %v4421, %v4454
      %v4461 = vmul.f32 %v4437, %v4455
      %v4462 = vmul.f32 %v4422, %v4454
      %v4463 = vmul.f32 %v4438, %v4455
      %v4464 = vmul.f32 %v4423, %v4454
      %v4465 = vmul.f32 %v4439, %v4455
      %v4466 = vmul.f32 %v4424, %v4454
      %v4467 = vmul.f32 %v4440, %v4455
      %v4468 = vmul.f32 %v4425, %v4454
      %v4469 = vmul.f32 %v4441, %v4455
      %v4470 = vmul.f32 %v4426, %v4454
      %v4471 = vmul.f32 %v4442, %v4455
      %v4472 = vmul.f32 %v4427, %v4454
      %v4473 = vmul.f32 %v4443, %v4455
      %v4474 = vmul.f32 %v4428, %v4454
      %v4475 = vmul.f32 %v4444, %v4455
      %v4476 = vmul.f32 %v4429, %v4454
      %v4477 = vmul.f32 %v4445, %v4455
      %v4478 = vmul.f32 %v4430, %v4454
      %v4479 = vmul.f32 %v4446, %v4455
      %v4480 = vmul.f32 %v4431, %v4454
      %v4481 = vmul.f32 %v4447, %v4455
      %v4482 = vmul.f32 %v4432, %v4454
      %v4483 = vmul.f32 %v4448, %v4455
      %v4484 = vmul.f32 %v4433, %v4454
      %v4485 = vmul.f32 %v4449, %v4455
      %v4486 = vmul.f32 %v4434, %v4454
      %v4487 = vmul.f32 %v4450, %v4455
      %v4488 = vmul.f32 %v4435, %v4454
      %v4489 = vmul.f32 %v4451, %v4455
      %v4490 = vpack.c.bf16 %v4459, %v4458
      %v4491 = vpack.c.bf16 %v4461, %v4460
      %v4492 = vpack.c.bf16 %v4463, %v4462
      %v4493 = vpack.c.bf16 %v4465, %v4464
      %v4494 = vpack.c.bf16 %v4467, %v4466
      %v4495 = vpack.c.bf16 %v4469, %v4468
      %v4496 = vpack.c.bf16 %v4471, %v4470
      %v4497 = vpack.c.bf16 %v4473, %v4472
      %v4498 = vpack.c.bf16 %v4475, %v4474
      %v4499 = vpack.c.bf16 %v4477, %v4476
      %v4500 = vpack.c.bf16 %v4479, %v4478
      %v4501 = vpack.c.bf16 %v4481, %v4480
      %v4502 = vpack.c.bf16 %v4483, %v4482
      %v4503 = vpack.c.bf16 %v4485, %v4484
      %v4504 = vpack.c.bf16 %v4487, %v4486
      %v4505 = vpack.c.bf16 %v4489, %v4488
      %4506 = vst [vmem:[#allocation3 + $0x300] sm:$0xff] %v4490
      %4507 = vst [vmem:[#allocation3 + $0x308] sm:$0xff] %v4491
      %4508 = vst [vmem:[#allocation3 + $0x310] sm:$0xff] %v4492
      %4509 = vst [vmem:[#allocation3 + $0x318] sm:$0xff] %v4493
      %4510 = vst [vmem:[#allocation3 + $0x320] sm:$0xff] %v4494
      %4511 = vst [vmem:[#allocation3 + $0x328] sm:$0xff] %v4495
      %4512 = vst [vmem:[#allocation3 + $0x330] sm:$0xff] %v4496
      %4513 = vst [vmem:[#allocation3 + $0x338] sm:$0xff] %v4497
      %4514 = vst [vmem:[#allocation3 + $0x340] sm:$0xff] %v4498
      %4515 = vst [vmem:[#allocation3 + $0x348] sm:$0xff] %v4499
      %4516 = vst [vmem:[#allocation3 + $0x350] sm:$0xff] %v4500
      %4517 = vst [vmem:[#allocation3 + $0x358] sm:$0xff] %v4501
      %4518 = vst [vmem:[#allocation3 + $0x360] sm:$0xff] %v4502
      %4519 = vst [vmem:[#allocation3 + $0x368] sm:$0xff] %v4503
      %4520 = vst [vmem:[#allocation3 + $0x370] sm:$0xff] %v4504
      %4521 = vst [vmem:[#allocation3 + $0x378] sm:$0xff] %v4505
      %4522 = vrot.lane.b32.xlu0 %v3462, 112
      %v4523 = vpop.permute.xlu0 %4522
      %4524 = vrot.lane.b32.xlu0 %v3464, 112
      %v4525 = vpop.permute.xlu0 %4524
      %4526 = vrot.lane.b32.xlu0 %v3466, 112
      %v4527 = vpop.permute.xlu0 %4526
      %4528 = vrot.lane.b32.xlu0 %v3468, 112
      %v4529 = vpop.permute.xlu0 %4528
      %4530 = vrot.lane.b32.xlu0 %v3470, 112
      %v4531 = vpop.permute.xlu0 %4530
      %4532 = vrot.lane.b32.xlu0 %v3472, 112
      %v4533 = vpop.permute.xlu0 %4532
      %4534 = vrot.lane.b32.xlu0 %v3474, 112
      %v4535 = vpop.permute.xlu0 %4534
      %4536 = vrot.lane.b32.xlu0 %v3476, 112
      %v4537 = vpop.permute.xlu0 %4536
      %4538 = vrot.lane.b32.xlu0 %v3478, 112
      %v4539 = vpop.permute.xlu0 %4538
      %4540 = vrot.lane.b32.xlu0 %v3480, 112
      %v4541 = vpop.permute.xlu0 %4540
      %4542 = vrot.lane.b32.xlu0 %v3482, 112
      %v4543 = vpop.permute.xlu0 %4542
      %4544 = vrot.lane.b32.xlu0 %v3484, 112
      %v4545 = vpop.permute.xlu0 %4544
      %4546 = vrot.lane.b32.xlu0 %v3486, 112
      %v4547 = vpop.permute.xlu0 %4546
      %4548 = vrot.lane.b32.xlu0 %v3488, 112
      %v4549 = vpop.permute.xlu0 %4548
      %4550 = vrot.lane.b32.xlu0 %v3490, 112
      %v4551 = vpop.permute.xlu0 %4550
      %4552 = vrot.lane.b32.xlu0 %v3492, 112
      %v4553 = vpop.permute.xlu0 %4552
      %4554 = vrot.lane.b32.xlu0 %v3463, 112
      %v4555 = vpop.permute.xlu0 %4554
      %4556 = vrot.lane.b32.xlu0 %v3465, 112
      %v4557 = vpop.permute.xlu0 %4556
      %4558 = vrot.lane.b32.xlu0 %v3467, 112
      %v4559 = vpop.permute.xlu0 %4558
      %4560 = vrot.lane.b32.xlu0 %v3469, 112
      %v4561 = vpop.permute.xlu0 %4560
      %4562 = vrot.lane.b32.xlu0 %v3471, 112
      %v4563 = vpop.permute.xlu0 %4562
      %4564 = vrot.lane.b32.xlu0 %v3473, 112
      %v4565 = vpop.permute.xlu0 %4564
      %4566 = vrot.lane.b32.xlu0 %v3475, 112
      %v4567 = vpop.permute.xlu0 %4566
      %4568 = vrot.lane.b32.xlu0 %v3477, 112
      %v4569 = vpop.permute.xlu0 %4568
      %4570 = vrot.lane.b32.xlu0 %v3479, 112
      %v4571 = vpop.permute.xlu0 %4570
      %4572 = vrot.lane.b32.xlu0 %v3481, 112
      %v4573 = vpop.permute.xlu0 %4572
      %4574 = vrot.lane.b32.xlu0 %v3483, 112
      %v4575 = vpop.permute.xlu0 %4574
      %4576 = vrot.lane.b32.xlu0 %v3485, 112
      %v4577 = vpop.permute.xlu0 %4576
      %4578 = vrot.lane.b32.xlu0 %v3487, 112
      %v4579 = vpop.permute.xlu0 %4578
      %4580 = vrot.lane.b32.xlu0 %v3489, 112
      %v4581 = vpop.permute.xlu0 %4580
      %4582 = vrot.lane.b32.xlu0 %v3491, 112
      %v4583 = vpop.permute.xlu0 %4582
      %4584 = vrot.lane.b32.xlu0 %v3493, 112
      %v4585 = vpop.permute.xlu0 %4584
      %v4586 = vsel %vm607, %v4523, %v4555
      %v4587 = vsel %vm607, %v4525, %v4557
      %v4588 = vsel %vm607, %v4527, %v4559
      %v4589 = vsel %vm607, %v4529, %v4561
      %v4590 = vsel %vm607, %v4531, %v4563
      %v4591 = vsel %vm607, %v4533, %v4565
      %v4592 = vsel %vm607, %v4535, %v4567
      %v4593 = vsel %vm607, %v4537, %v4569
      %v4594 = vsel %vm607, %v4539, %v4571
      %v4595 = vsel %vm607, %v4541, %v4573
      %v4596 = vsel %vm607, %v4543, %v4575
      %v4597 = vsel %vm607, %v4545, %v4577
      %v4598 = vsel %vm607, %v4547, %v4579
      %v4599 = vsel %vm607, %v4549, %v4581
      %v4600 = vsel %vm607, %v4551, %v4583
      %v4601 = vsel %vm607, %v4553, %v4585
      %v4602 = vsel %vm607, %v4555, %v4523
      %v4603 = vsel %vm607, %v4557, %v4525
      %v4604 = vsel %vm607, %v4559, %v4527
      %v4605 = vsel %vm607, %v4561, %v4529
      %v4606 = vsel %vm607, %v4563, %v4531
      %v4607 = vsel %vm607, %v4565, %v4533
      %v4608 = vsel %vm607, %v4567, %v4535
      %v4609 = vsel %vm607, %v4569, %v4537
      %v4610 = vsel %vm607, %v4571, %v4539
      %v4611 = vsel %vm607, %v4573, %v4541
      %v4612 = vsel %vm607, %v4575, %v4543
      %v4613 = vsel %vm607, %v4577, %v4545
      %v4614 = vsel %vm607, %v4579, %v4547
      %v4615 = vsel %vm607, %v4581, %v4549
      %v4616 = vsel %vm607, %v4583, %v4551
      %v4617 = vsel %vm607, %v4585, %v4553
      %v4618 = vld [vmem:[%s610] ss:$8 sm:$0x3]
      %v4620 = vperm.slane %v4618, 0
      %v4621 = vperm.slane %v4618, 1
      %v4624 = vmul.f32 %v4586, %v4620
      %v4625 = vmul.f32 %v4602, %v4621
      %v4626 = vmul.f32 %v4587, %v4620
      %v4627 = vmul.f32 %v4603, %v4621
      %v4628 = vmul.f32 %v4588, %v4620
      %v4629 = vmul.f32 %v4604, %v4621
      %v4630 = vmul.f32 %v4589, %v4620
      %v4631 = vmul.f32 %v4605, %v4621
      %v4632 = vmul.f32 %v4590, %v4620
      %v4633 = vmul.f32 %v4606, %v4621
      %v4634 = vmul.f32 %v4591, %v4620
      %v4635 = vmul.f32 %v4607, %v4621
      %v4636 = vmul.f32 %v4592, %v4620
      %v4637 = vmul.f32 %v4608, %v4621
      %v4638 = vmul.f32 %v4593, %v4620
      %v4639 = vmul.f32 %v4609, %v4621
      %v4640 = vmul.f32 %v4594, %v4620
      %v4641 = vmul.f32 %v4610, %v4621
      %v4642 = vmul.f32 %v4595, %v4620
      %v4643 = vmul.f32 %v4611, %v4621
      %v4644 = vmul.f32 %v4596, %v4620
      %v4645 = vmul.f32 %v4612, %v4621
      %v4646 = vmul.f32 %v4597, %v4620
      %v4647 = vmul.f32 %v4613, %v4621
      %v4648 = vmul.f32 %v4598, %v4620
      %v4649 = vmul.f32 %v4614, %v4621
      %v4650 = vmul.f32 %v4599, %v4620
      %v4651 = vmul.f32 %v4615, %v4621
      %v4652 = vmul.f32 %v4600, %v4620
      %v4653 = vmul.f32 %v4616, %v4621
      %v4654 = vmul.f32 %v4601, %v4620
      %v4655 = vmul.f32 %v4617, %v4621
      %v4656 = vpack.c.bf16 %v4625, %v4624
      %v4657 = vpack.c.bf16 %v4627, %v4626
      %v4658 = vpack.c.bf16 %v4629, %v4628
      %v4659 = vpack.c.bf16 %v4631, %v4630
      %v4660 = vpack.c.bf16 %v4633, %v4632
      %v4661 = vpack.c.bf16 %v4635, %v4634
      %v4662 = vpack.c.bf16 %v4637, %v4636
      %v4663 = vpack.c.bf16 %v4639, %v4638
      %v4664 = vpack.c.bf16 %v4641, %v4640
      %v4665 = vpack.c.bf16 %v4643, %v4642
      %v4666 = vpack.c.bf16 %v4645, %v4644
      %v4667 = vpack.c.bf16 %v4647, %v4646
      %v4668 = vpack.c.bf16 %v4649, %v4648
      %v4669 = vpack.c.bf16 %v4651, %v4650
      %v4670 = vpack.c.bf16 %v4653, %v4652
      %v4671 = vpack.c.bf16 %v4655, %v4654
      %4672 = vst [vmem:[#allocation3 + $0x380] sm:$0xff] %v4656
      %4673 = vst [vmem:[#allocation3 + $0x388] sm:$0xff] %v4657
      %4674 = vst [vmem:[#allocation3 + $0x390] sm:$0xff] %v4658
      %4675 = vst [vmem:[#allocation3 + $0x398] sm:$0xff] %v4659
      %4676 = vst [vmem:[#allocation3 + $0x3a0] sm:$0xff] %v4660
      %4677 = vst [vmem:[#allocation3 + $0x3a8] sm:$0xff] %v4661
      %4678 = vst [vmem:[#allocation3 + $0x3b0] sm:$0xff] %v4662
      %4679 = vst [vmem:[#allocation3 + $0x3b8] sm:$0xff] %v4663
      %4680 = vst [vmem:[#allocation3 + $0x3c0] sm:$0xff] %v4664
      %4681 = vst [vmem:[#allocation3 + $0x3c8] sm:$0xff] %v4665
      %4682 = vst [vmem:[#allocation3 + $0x3d0] sm:$0xff] %v4666
      %4683 = vst [vmem:[#allocation3 + $0x3d8] sm:$0xff] %v4667
      %4684 = vst [vmem:[#allocation3 + $0x3e0] sm:$0xff] %v4668
      %4685 = vst [vmem:[#allocation3 + $0x3e8] sm:$0xff] %v4669
      %4686 = vst [vmem:[#allocation3 + $0x3f0] sm:$0xff] %v4670
      %4687 = vst [vmem:[#allocation3 + $0x3f8] sm:$0xff] %v4671
      %4688 = vrot.lane.b32.xlu0 %v3462, 111
      %v4689 = vpop.permute.xlu0 %4688
      %4690 = vrot.lane.b32.xlu0 %v3464, 111
      %v4691 = vpop.permute.xlu0 %4690
      %4692 = vrot.lane.b32.xlu0 %v3466, 111
      %v4693 = vpop.permute.xlu0 %4692
      %4694 = vrot.lane.b32.xlu0 %v3468, 111
      %v4695 = vpop.permute.xlu0 %4694
      %4696 = vrot.lane.b32.xlu0 %v3470, 111
      %v4697 = vpop.permute.xlu0 %4696
      %4698 = vrot.lane.b32.xlu0 %v3472, 111
      %v4699 = vpop.permute.xlu0 %4698
      %4700 = vrot.lane.b32.xlu0 %v3474, 111
      %v4701 = vpop.permute.xlu0 %4700
      %4702 = vrot.lane.b32.xlu0 %v3476, 111
      %v4703 = vpop.permute.xlu0 %4702
      %4704 = vrot.lane.b32.xlu0 %v3478, 111
      %v4705 = vpop.permute.xlu0 %4704
      %4706 = vrot.lane.b32.xlu0 %v3480, 111
      %v4707 = vpop.permute.xlu0 %4706
      %4708 = vrot.lane.b32.xlu0 %v3482, 111
      %v4709 = vpop.permute.xlu0 %4708
      %4710 = vrot.lane.b32.xlu0 %v3484, 111
      %v4711 = vpop.permute.xlu0 %4710
      %4712 = vrot.lane.b32.xlu0 %v3486, 111
      %v4713 = vpop.permute.xlu0 %4712
      %4714 = vrot.lane.b32.xlu0 %v3488, 111
      %v4715 = vpop.permute.xlu0 %4714
      %4716 = vrot.lane.b32.xlu0 %v3490, 111
      %v4717 = vpop.permute.xlu0 %4716
      %4718 = vrot.lane.b32.xlu0 %v3492, 111
      %v4719 = vpop.permute.xlu0 %4718
      %4720 = vrot.lane.b32.xlu0 %v3463, 111
      %v4721 = vpop.permute.xlu0 %4720
      %4722 = vrot.lane.b32.xlu0 %v3465, 111
      %v4723 = vpop.permute.xlu0 %4722
      %4724 = vrot.lane.b32.xlu0 %v3467, 111
      %v4725 = vpop.permute.xlu0 %4724
      %4726 = vrot.lane.b32.xlu0 %v3469, 111
      %v4727 = vpop.permute.xlu0 %4726
      %4728 = vrot.lane.b32.xlu0 %v3471, 111
      %v4729 = vpop.permute.xlu0 %4728
      %4730 = vrot.lane.b32.xlu0 %v3473, 111
      %v4731 = vpop.permute.xlu0 %4730
      %4732 = vrot.lane.b32.xlu0 %v3475, 111
      %v4733 = vpop.permute.xlu0 %4732
      %4734 = vrot.lane.b32.xlu0 %v3477, 111
      %v4735 = vpop.permute.xlu0 %4734
      %4736 = vrot.lane.b32.xlu0 %v3479, 111
      %v4737 = vpop.permute.xlu0 %4736
      %4738 = vrot.lane.b32.xlu0 %v3481, 111
      %v4739 = vpop.permute.xlu0 %4738
      %4740 = vrot.lane.b32.xlu0 %v3483, 111
      %v4741 = vpop.permute.xlu0 %4740
      %4742 = vrot.lane.b32.xlu0 %v3485, 111
      %v4743 = vpop.permute.xlu0 %4742
      %4744 = vrot.lane.b32.xlu0 %v3487, 111
      %v4745 = vpop.permute.xlu0 %4744
      %4746 = vrot.lane.b32.xlu0 %v3489, 111
      %v4747 = vpop.permute.xlu0 %4746
      %4748 = vrot.lane.b32.xlu0 %v3491, 111
      %v4749 = vpop.permute.xlu0 %4748
      %4750 = vrot.lane.b32.xlu0 %v3493, 111
      %v4751 = vpop.permute.xlu0 %4750
      %v4752 = vsel %vm636, %v4689, %v4721
      %v4753 = vsel %vm636, %v4691, %v4723
      %v4754 = vsel %vm636, %v4693, %v4725
      %v4755 = vsel %vm636, %v4695, %v4727
      %v4756 = vsel %vm636, %v4697, %v4729
      %v4757 = vsel %vm636, %v4699, %v4731
      %v4758 = vsel %vm636, %v4701, %v4733
      %v4759 = vsel %vm636, %v4703, %v4735
      %v4760 = vsel %vm636, %v4705, %v4737
      %v4761 = vsel %vm636, %v4707, %v4739
      %v4762 = vsel %vm636, %v4709, %v4741
      %v4763 = vsel %vm636, %v4711, %v4743
      %v4764 = vsel %vm636, %v4713, %v4745
      %v4765 = vsel %vm636, %v4715, %v4747
      %v4766 = vsel %vm636, %v4717, %v4749
      %v4767 = vsel %vm636, %v4719, %v4751
      %v4768 = vsel %vm636, %v4721, %v4689
      %v4769 = vsel %vm636, %v4723, %v4691
      %v4770 = vsel %vm636, %v4725, %v4693
      %v4771 = vsel %vm636, %v4727, %v4695
      %v4772 = vsel %vm636, %v4729, %v4697
      %v4773 = vsel %vm636, %v4731, %v4699
      %v4774 = vsel %vm636, %v4733, %v4701
      %v4775 = vsel %vm636, %v4735, %v4703
      %v4776 = vsel %vm636, %v4737, %v4705
      %v4777 = vsel %vm636, %v4739, %v4707
      %v4778 = vsel %vm636, %v4741, %v4709
      %v4779 = vsel %vm636, %v4743, %v4711
      %v4780 = vsel %vm636, %v4745, %v4713
      %v4781 = vsel %vm636, %v4747, %v4715
      %v4782 = vsel %vm636, %v4749, %v4717
      %v4783 = vsel %vm636, %v4751, %v4719
      %v4784 = vld [vmem:[%s639] ss:$8 sm:$0x3]
      %v4786 = vperm.slane %v4784, 0
      %v4787 = vperm.slane %v4784, 1
      %v4790 = vmul.f32 %v4752, %v4786
      %v4791 = vmul.f32 %v4768, %v4787
      %v4792 = vmul.f32 %v4753, %v4786
      %v4793 = vmul.f32 %v4769, %v4787
      %v4794 = vmul.f32 %v4754, %v4786
      %v4795 = vmul.f32 %v4770, %v4787
      %v4796 = vmul.f32 %v4755, %v4786
      %v4797 = vmul.f32 %v4771, %v4787
      %v4798 = vmul.f32 %v4756, %v4786
      %v4799 = vmul.f32 %v4772, %v4787
      %v4800 = vmul.f32 %v4757, %v4786
      %v4801 = vmul.f32 %v4773, %v4787
      %v4802 = vmul.f32 %v4758, %v4786
      %v4803 = vmul.f32 %v4774, %v4787
      %v4804 = vmul.f32 %v4759, %v4786
      %v4805 = vmul.f32 %v4775, %v4787
      %v4806 = vmul.f32 %v4760, %v4786
      %v4807 = vmul.f32 %v4776, %v4787
      %v4808 = vmul.f32 %v4761, %v4786
      %v4809 = vmul.f32 %v4777, %v4787
      %v4810 = vmul.f32 %v4762, %v4786
      %v4811 = vmul.f32 %v4778, %v4787
      %v4812 = vmul.f32 %v4763, %v4786
      %v4813 = vmul.f32 %v4779, %v4787
      %v4814 = vmul.f32 %v4764, %v4786
      %v4815 = vmul.f32 %v4780, %v4787
      %v4816 = vmul.f32 %v4765, %v4786
      %v4817 = vmul.f32 %v4781, %v4787
      %v4818 = vmul.f32 %v4766, %v4786
      %v4819 = vmul.f32 %v4782, %v4787
      %v4820 = vmul.f32 %v4767, %v4786
      %v4821 = vmul.f32 %v4783, %v4787
      %v4822 = vpack.c.bf16 %v4791, %v4790
      %v4823 = vpack.c.bf16 %v4793, %v4792
      %v4824 = vpack.c.bf16 %v4795, %v4794
      %v4825 = vpack.c.bf16 %v4797, %v4796
      %v4826 = vpack.c.bf16 %v4799, %v4798
      %v4827 = vpack.c.bf16 %v4801, %v4800
      %v4828 = vpack.c.bf16 %v4803, %v4802
      %v4829 = vpack.c.bf16 %v4805, %v4804
      %v4830 = vpack.c.bf16 %v4807, %v4806
      %v4831 = vpack.c.bf16 %v4809, %v4808
      %v4832 = vpack.c.bf16 %v4811, %v4810
      %v4833 = vpack.c.bf16 %v4813, %v4812
      %v4834 = vpack.c.bf16 %v4815, %v4814
      %v4835 = vpack.c.bf16 %v4817, %v4816
      %v4836 = vpack.c.bf16 %v4819, %v4818
      %v4837 = vpack.c.bf16 %v4821, %v4820
      %4838 = vst [vmem:[#allocation3 + $0x400] sm:$0xff] %v4822
      %4839 = vst [vmem:[#allocation3 + $0x408] sm:$0xff] %v4823
      %4840 = vst [vmem:[#allocation3 + $0x410] sm:$0xff] %v4824
      %4841 = vst [vmem:[#allocation3 + $0x418] sm:$0xff] %v4825
      %4842 = vst [vmem:[#allocation3 + $0x420] sm:$0xff] %v4826
      %4843 = vst [vmem:[#allocation3 + $0x428] sm:$0xff] %v4827
      %4844 = vst [vmem:[#allocation3 + $0x430] sm:$0xff] %v4828
      %4845 = vst [vmem:[#allocation3 + $0x438] sm:$0xff] %v4829
      %4846 = vst [vmem:[#allocation3 + $0x440] sm:$0xff] %v4830
      %4847 = vst [vmem:[#allocation3 + $0x448] sm:$0xff] %v4831
      %4848 = vst [vmem:[#allocation3 + $0x450] sm:$0xff] %v4832
      %4849 = vst [vmem:[#allocation3 + $0x458] sm:$0xff] %v4833
      %4850 = vst [vmem:[#allocation3 + $0x460] sm:$0xff] %v4834
      %4851 = vst [vmem:[#allocation3 + $0x468] sm:$0xff] %v4835
      %4852 = vst [vmem:[#allocation3 + $0x470] sm:$0xff] %v4836
      %4853 = vst [vmem:[#allocation3 + $0x478] sm:$0xff] %v4837
      %v4854 = vld [vmem:[%s6] sm:$0xff]
      %v4855 = vld [vmem:[%s6 + $0x8] sm:$0xff]
      %v4856 = vld [vmem:[%s6 + $0x10] sm:$0xff]
      %v4857 = vld [vmem:[%s6 + $0x18] sm:$0xff]
      %v4858 = vld [vmem:[%s6 + $0x20] sm:$0xf]
      %v4859 = vld [vmem:[%s6 + $0x24] sm:$0xff]
      %v4860 = vld [vmem:[%s6 + $0x2c] sm:$0xff]
      %v4861 = vld [vmem:[%s6 + $0x34] sm:$0xff]
      %v4862 = vld [vmem:[%s6 + $0x3c] sm:$0xff]
      %v4863 = vld [vmem:[%s6 + $0x44] sm:$0xf]
      %v4864 = vld [vmem:[%s6 + $0x48] sm:$0xff]
      %v4865 = vld [vmem:[%s6 + $0x50] sm:$0xff]
      %v4866 = vld [vmem:[%s6 + $0x58] sm:$0xff]
      %v4867 = vld [vmem:[%s6 + $0x60] sm:$0xff]
      %v4868 = vld [vmem:[%s6 + $0x68] sm:$0xf]
      %v4869 = vld [vmem:[%s6 + $0x6c] sm:$0xff]
      %v4870 = vld [vmem:[%s6 + $0x74] sm:$0xff]
      %v4871 = vld [vmem:[%s6 + $0x7c] sm:$0xff]
      %v4872 = vld [vmem:[%s6 + $0x84] sm:$0xff]
      %v4873 = vld [vmem:[%s6 + $0x8c] sm:$0xf]
      %v4874 = vld [vmem:[%s6 + $0x90] sm:$0xff]
      %v4875 = vld [vmem:[%s6 + $0x98] sm:$0xff]
      %v4876 = vld [vmem:[%s6 + $0xa0] sm:$0xff]
      %v4877 = vld [vmem:[%s6 + $0xa8] sm:$0xff]
      %v4878 = vld [vmem:[%s6 + $0xb0] sm:$0xf]
      %v4879 = vld [vmem:[%s6 + $0xb4] sm:$0xff]
      %v4880 = vld [vmem:[%s6 + $0xbc] sm:$0xff]
      %v4881 = vld [vmem:[%s6 + $0xc4] sm:$0xff]
      %v4882 = vld [vmem:[%s6 + $0xcc] sm:$0xff]
      %v4883 = vld [vmem:[%s6 + $0xd4] sm:$0xf]
      %v4884 = vld [vmem:[%s6 + $0xd8] sm:$0xff]
      %v4885 = vld [vmem:[%s6 + $0xe0] sm:$0xff]
      %v4886 = vld [vmem:[%s6 + $0xe8] sm:$0xff]
      %v4887 = vld [vmem:[%s6 + $0xf0] sm:$0xff]
      %v4888 = vld [vmem:[%s6 + $0xf8] sm:$0xf]
      %v4889 = vld [vmem:[%s6 + $0xfc] sm:$0xff]
      %v4890 = vld [vmem:[%s6 + $0x104] sm:$0xff]
      %v4891 = vld [vmem:[%s6 + $0x10c] sm:$0xff]
      %v4892 = vld [vmem:[%s6 + $0x114] sm:$0xff]
      %v4893 = vld [vmem:[%s6 + $0x11c] sm:$0xf]
      %v4894 = vld [vmem:[%s6 + $0x120] sm:$0xff]
      %v4895 = vld [vmem:[%s6 + $0x128] sm:$0xff]
      %v4896 = vld [vmem:[%s6 + $0x130] sm:$0xff]
      %v4897 = vld [vmem:[%s6 + $0x138] sm:$0xff]
      %v4898 = vld [vmem:[%s6 + $0x140] sm:$0xf]
      %v4899 = vld [vmem:[%s6 + $0x144] sm:$0xff]
      %v4900 = vld [vmem:[%s6 + $0x14c] sm:$0xff]
      %v4901 = vld [vmem:[%s6 + $0x154] sm:$0xff]
      %v4902 = vld [vmem:[%s6 + $0x15c] sm:$0xff]
      %v4903 = vld [vmem:[%s6 + $0x164] sm:$0xf]
      %v4904 = vld [vmem:[%s6 + $0x168] sm:$0xff]
      %v4905 = vld [vmem:[%s6 + $0x170] sm:$0xff]
      %v4906 = vld [vmem:[%s6 + $0x178] sm:$0xff]
      %v4907 = vld [vmem:[%s6 + $0x180] sm:$0xff]
      %v4908 = vld [vmem:[%s6 + $0x188] sm:$0xf]
      %v4909 = vld [vmem:[%s6 + $0x18c] sm:$0xff]
      %v4910 = vld [vmem:[%s6 + $0x194] sm:$0xff]
      %v4911 = vld [vmem:[%s6 + $0x19c] sm:$0xff]
      %v4912 = vld [vmem:[%s6 + $0x1a4] sm:$0xff]
      %v4913 = vld [vmem:[%s6 + $0x1ac] sm:$0xf]
      %v4914 = vld [vmem:[%s6 + $0x1b0] sm:$0xff]
      %v4915 = vld [vmem:[%s6 + $0x1b8] sm:$0xff]
      %v4916 = vld [vmem:[%s6 + $0x1c0] sm:$0xff]
      %v4917 = vld [vmem:[%s6 + $0x1c8] sm:$0xff]
      %v4918 = vld [vmem:[%s6 + $0x1d0] sm:$0xf]
      %v4919 = vld [vmem:[%s6 + $0x1d4] sm:$0xff]
      %v4920 = vld [vmem:[%s6 + $0x1dc] sm:$0xff]
      %v4921 = vld [vmem:[%s6 + $0x1e4] sm:$0xff]
      %v4922 = vld [vmem:[%s6 + $0x1ec] sm:$0xff]
      %v4923 = vld [vmem:[%s6 + $0x1f4] sm:$0xf]
      %v4924 = vld [vmem:[%s6 + $0x1f8] sm:$0xff]
      %v4925 = vld [vmem:[%s6 + $0x200] sm:$0xff]
      %v4926 = vld [vmem:[%s6 + $0x208] sm:$0xff]
      %v4927 = vld [vmem:[%s6 + $0x210] sm:$0xff]
      %v4928 = vld [vmem:[%s6 + $0x218] sm:$0xf]
      %v4929 = vld [vmem:[%s6 + $0x21c] sm:$0xff]
      %v4930 = vld [vmem:[%s6 + $0x224] sm:$0xff]
      %v4931 = vld [vmem:[%s6 + $0x22c] sm:$0xff]
      %v4932 = vld [vmem:[%s6 + $0x234] sm:$0xff]
      %v4933 = vld [vmem:[%s6 + $0x23c] sm:$0xf]
      %v4934 = vld [vmem:[#allocation3] sm:$0xff]
      %v4935 = vld [vmem:[#allocation3 + $0x8] sm:$0xff]
      %v4936 = vld [vmem:[#allocation3 + $0x10] sm:$0xff]
      %v4937 = vld [vmem:[#allocation3 + $0x18] sm:$0xff]
      %v4938 = vld [vmem:[#allocation3 + $0x20] sm:$0xff]
      %v4939 = vld [vmem:[#allocation3 + $0x28] sm:$0xff]
      %v4940 = vld [vmem:[#allocation3 + $0x30] sm:$0xff]
      %v4941 = vld [vmem:[#allocation3 + $0x38] sm:$0xff]
      %v4942 = vld [vmem:[#allocation3 + $0x40] sm:$0xff]
      %v4943 = vld [vmem:[#allocation3 + $0x48] sm:$0xff]
      %v4944 = vld [vmem:[#allocation3 + $0x50] sm:$0xff]
      %v4945 = vld [vmem:[#allocation3 + $0x58] sm:$0xff]
      %v4946 = vld [vmem:[#allocation3 + $0x60] sm:$0xff]
      %v4947 = vld [vmem:[#allocation3 + $0x68] sm:$0xff]
      %v4948 = vld [vmem:[#allocation3 + $0x70] sm:$0xff]
      %v4949 = vld [vmem:[#allocation3 + $0x78] sm:$0xff]
      %v4950 = vld [vmem:[#allocation3 + $0x80] sm:$0xff]
      %v4951 = vld [vmem:[#allocation3 + $0x88] sm:$0xff]
      %v4952 = vld [vmem:[#allocation3 + $0x90] sm:$0xff]
      %v4953 = vld [vmem:[#allocation3 + $0x98] sm:$0xff]
      %v4954 = vld [vmem:[#allocation3 + $0xa0] sm:$0xff]
      %v4955 = vld [vmem:[#allocation3 + $0xa8] sm:$0xff]
      %v4956 = vld [vmem:[#allocation3 + $0xb0] sm:$0xff]
      %v4957 = vld [vmem:[#allocation3 + $0xb8] sm:$0xff]
      %v4958 = vld [vmem:[#allocation3 + $0xc0] sm:$0xff]
      %v4959 = vld [vmem:[#allocation3 + $0xc8] sm:$0xff]
      %v4960 = vld [vmem:[#allocation3 + $0xd0] sm:$0xff]
      %v4961 = vld [vmem:[#allocation3 + $0xd8] sm:$0xff]
      %v4962 = vld [vmem:[#allocation3 + $0xe0] sm:$0xff]
      %v4963 = vld [vmem:[#allocation3 + $0xe8] sm:$0xff]
      %v4964 = vld [vmem:[#allocation3 + $0xf0] sm:$0xff]
      %v4965 = vld [vmem:[#allocation3 + $0xf8] sm:$0xff]
      %v4966 = vld [vmem:[#allocation3 + $0x100] sm:$0xff]
      %v4967 = vld [vmem:[#allocation3 + $0x108] sm:$0xff]
      %v4968 = vld [vmem:[#allocation3 + $0x110] sm:$0xff]
      %v4969 = vld [vmem:[#allocation3 + $0x118] sm:$0xff]
      %v4970 = vld [vmem:[#allocation3 + $0x120] sm:$0xff]
      %v4971 = vld [vmem:[#allocation3 + $0x128] sm:$0xff]
      %v4972 = vld [vmem:[#allocation3 + $0x130] sm:$0xff]
      %v4973 = vld [vmem:[#allocation3 + $0x138] sm:$0xff]
      %v4974 = vld [vmem:[#allocation3 + $0x140] sm:$0xff]
      %v4975 = vld [vmem:[#allocation3 + $0x148] sm:$0xff]
      %v4976 = vld [vmem:[#allocation3 + $0x150] sm:$0xff]
      %v4977 = vld [vmem:[#allocation3 + $0x158] sm:$0xff]
      %v4978 = vld [vmem:[#allocation3 + $0x160] sm:$0xff]
      %v4979 = vld [vmem:[#allocation3 + $0x168] sm:$0xff]
      %v4980 = vld [vmem:[#allocation3 + $0x170] sm:$0xff]
      %v4981 = vld [vmem:[#allocation3 + $0x178] sm:$0xff]
      %v4982 = vld [vmem:[#allocation3 + $0x180] sm:$0xff]
      %v4983 = vld [vmem:[#allocation3 + $0x188] sm:$0xff]
      %v4984 = vld [vmem:[#allocation3 + $0x190] sm:$0xff]
      %v4985 = vld [vmem:[#allocation3 + $0x198] sm:$0xff]
      %v4986 = vld [vmem:[#allocation3 + $0x1a0] sm:$0xff]
      %v4987 = vld [vmem:[#allocation3 + $0x1a8] sm:$0xff]
      %v4988 = vld [vmem:[#allocation3 + $0x1b0] sm:$0xff]
      %v4989 = vld [vmem:[#allocation3 + $0x1b8] sm:$0xff]
      %v4990 = vld [vmem:[#allocation3 + $0x1c0] sm:$0xff]
      %v4991 = vld [vmem:[#allocation3 + $0x1c8] sm:$0xff]
      %v4992 = vld [vmem:[#allocation3 + $0x1d0] sm:$0xff]
      %v4993 = vld [vmem:[#allocation3 + $0x1d8] sm:$0xff]
      %v4994 = vld [vmem:[#allocation3 + $0x1e0] sm:$0xff]
      %v4995 = vld [vmem:[#allocation3 + $0x1e8] sm:$0xff]
      %v4996 = vld [vmem:[#allocation3 + $0x1f0] sm:$0xff]
      %v4997 = vld [vmem:[#allocation3 + $0x1f8] sm:$0xff]
      %v4998 = vld [vmem:[#allocation3 + $0x200] sm:$0xff]
      %v4999 = vld [vmem:[#allocation3 + $0x208] sm:$0xff]
      %v5000 = vld [vmem:[#allocation3 + $0x210] sm:$0xff]
      %v5001 = vld [vmem:[#allocation3 + $0x218] sm:$0xff]
      %v5002 = vld [vmem:[#allocation3 + $0x220] sm:$0xff]
      %v5003 = vld [vmem:[#allocation3 + $0x228] sm:$0xff]
      %v5004 = vld [vmem:[#allocation3 + $0x230] sm:$0xff]
      %v5005 = vld [vmem:[#allocation3 + $0x238] sm:$0xff]
      %v5006 = vld [vmem:[#allocation3 + $0x240] sm:$0xff]
      %v5007 = vld [vmem:[#allocation3 + $0x248] sm:$0xff]
      %v5008 = vld [vmem:[#allocation3 + $0x250] sm:$0xff]
      %v5009 = vld [vmem:[#allocation3 + $0x258] sm:$0xff]
      %v5010 = vld [vmem:[#allocation3 + $0x260] sm:$0xff]
      %v5011 = vld [vmem:[#allocation3 + $0x268] sm:$0xff]
      %v5012 = vld [vmem:[#allocation3 + $0x270] sm:$0xff]
      %v5013 = vld [vmem:[#allocation3 + $0x278] sm:$0xff]
      %v5014 = vld [vmem:[#allocation3 + $0x280] sm:$0xff]
      %v5015 = vld [vmem:[#allocation3 + $0x288] sm:$0xff]
      %v5016 = vld [vmem:[#allocation3 + $0x290] sm:$0xff]
      %v5017 = vld [vmem:[#allocation3 + $0x298] sm:$0xff]
      %v5018 = vld [vmem:[#allocation3 + $0x2a0] sm:$0xff]
      %v5019 = vld [vmem:[#allocation3 + $0x2a8] sm:$0xff]
      %v5020 = vld [vmem:[#allocation3 + $0x2b0] sm:$0xff]
      %v5021 = vld [vmem:[#allocation3 + $0x2b8] sm:$0xff]
      %v5022 = vld [vmem:[#allocation3 + $0x2c0] sm:$0xff]
      %v5023 = vld [vmem:[#allocation3 + $0x2c8] sm:$0xff]
      %v5024 = vld [vmem:[#allocation3 + $0x2d0] sm:$0xff]
      %v5025 = vld [vmem:[#allocation3 + $0x2d8] sm:$0xff]
      %v5026 = vld [vmem:[#allocation3 + $0x2e0] sm:$0xff]
      %v5027 = vld [vmem:[#allocation3 + $0x2e8] sm:$0xff]
      %v5028 = vld [vmem:[#allocation3 + $0x2f0] sm:$0xff]
      %v5029 = vld [vmem:[#allocation3 + $0x2f8] sm:$0xff]
      %v5030 = vld [vmem:[#allocation3 + $0x300] sm:$0xff]
      %v5031 = vld [vmem:[#allocation3 + $0x308] sm:$0xff]
      %v5032 = vld [vmem:[#allocation3 + $0x310] sm:$0xff]
      %v5033 = vld [vmem:[#allocation3 + $0x318] sm:$0xff]
      %v5034 = vld [vmem:[#allocation3 + $0x320] sm:$0xff]
      %v5035 = vld [vmem:[#allocation3 + $0x328] sm:$0xff]
      %v5036 = vld [vmem:[#allocation3 + $0x330] sm:$0xff]
      %v5037 = vld [vmem:[#allocation3 + $0x338] sm:$0xff]
      %v5038 = vld [vmem:[#allocation3 + $0x340] sm:$0xff]
      %v5039 = vld [vmem:[#allocation3 + $0x348] sm:$0xff]
      %v5040 = vld [vmem:[#allocation3 + $0x350] sm:$0xff]
      %v5041 = vld [vmem:[#allocation3 + $0x358] sm:$0xff]
      %v5042 = vld [vmem:[#allocation3 + $0x360] sm:$0xff]
      %v5043 = vld [vmem:[#allocation3 + $0x368] sm:$0xff]
      %v5044 = vld [vmem:[#allocation3 + $0x370] sm:$0xff]
      %v5045 = vld [vmem:[#allocation3 + $0x378] sm:$0xff]
      %v5046 = vld [vmem:[#allocation3 + $0x380] sm:$0xff]
      %v5047 = vld [vmem:[#allocation3 + $0x388] sm:$0xff]
      %v5048 = vld [vmem:[#allocation3 + $0x390] sm:$0xff]
      %v5049 = vld [vmem:[#allocation3 + $0x398] sm:$0xff]
      %v5050 = vld [vmem:[#allocation3 + $0x3a0] sm:$0xff]
      %v5051 = vld [vmem:[#allocation3 + $0x3a8] sm:$0xff]
      %v5052 = vld [vmem:[#allocation3 + $0x3b0] sm:$0xff]
      %v5053 = vld [vmem:[#allocation3 + $0x3b8] sm:$0xff]
      %v5054 = vld [vmem:[#allocation3 + $0x3c0] sm:$0xff]
      %v5055 = vld [vmem:[#allocation3 + $0x3c8] sm:$0xff]
      %v5056 = vld [vmem:[#allocation3 + $0x3d0] sm:$0xff]
      %v5057 = vld [vmem:[#allocation3 + $0x3d8] sm:$0xff]
      %v5058 = vld [vmem:[#allocation3 + $0x3e0] sm:$0xff]
      %v5059 = vld [vmem:[#allocation3 + $0x3e8] sm:$0xff]
      %v5060 = vld [vmem:[#allocation3 + $0x3f0] sm:$0xff]
      %v5061 = vld [vmem:[#allocation3 + $0x3f8] sm:$0xff]
      %v5062 = vld [vmem:[#allocation3 + $0x400] sm:$0xff]
      %v5063 = vld [vmem:[#allocation3 + $0x408] sm:$0xff]
      %v5064 = vld [vmem:[#allocation3 + $0x410] sm:$0xff]
      %v5065 = vld [vmem:[#allocation3 + $0x418] sm:$0xff]
      %v5066 = vld [vmem:[#allocation3 + $0x420] sm:$0xff]
      %v5067 = vld [vmem:[#allocation3 + $0x428] sm:$0xff]
      %v5068 = vld [vmem:[#allocation3 + $0x430] sm:$0xff]
      %v5069 = vld [vmem:[#allocation3 + $0x438] sm:$0xff]
      %v5070 = vld [vmem:[#allocation3 + $0x440] sm:$0xff]
      %v5071 = vld [vmem:[#allocation3 + $0x448] sm:$0xff]
      %v5072 = vld [vmem:[#allocation3 + $0x450] sm:$0xff]
      %v5073 = vld [vmem:[#allocation3 + $0x458] sm:$0xff]
      %v5074 = vld [vmem:[#allocation3 + $0x460] sm:$0xff]
      %v5075 = vld [vmem:[#allocation3 + $0x468] sm:$0xff]
      %v5076 = vld [vmem:[#allocation3 + $0x470] sm:$0xff]
      %v5077 = vld [vmem:[#allocation3 + $0x478] sm:$0xff]
      %v5078 = vld [vmem:[%s7] sm:$0xff]
      %v5079 = vld [vmem:[%s7 + $0x8] sm:$0xff]
      %v5080 = vld [vmem:[%s7 + $0x10] sm:$0xff]
      %v5081 = vld [vmem:[%s7 + $0x18] sm:$0xff]
      %v5082 = vld [vmem:[%s7 + $0x20] sm:$0xff]
      %v5083 = vld [vmem:[%s7 + $0x28] sm:$0xff]
      %v5084 = vld [vmem:[%s7 + $0x30] sm:$0xff]
      %v5085 = vld [vmem:[%s7 + $0x38] sm:$0xff]
      %v5086 = vld [vmem:[%s7 + $0x40] sm:$0xff]
      %v5087 = vld [vmem:[%s7 + $0x48] sm:$0xff]
      %v5088 = vld [vmem:[%s7 + $0x50] sm:$0xff]
      %v5089 = vld [vmem:[%s7 + $0x58] sm:$0xff]
      %v5090 = vld [vmem:[%s7 + $0x60] sm:$0xff]
      %v5091 = vld [vmem:[%s7 + $0x68] sm:$0xff]
      %v5092 = vld [vmem:[%s7 + $0x70] sm:$0xff]
      %v5093 = vld [vmem:[%s7 + $0x78] sm:$0xff]
      %5095 = vset.pattern.permute.xlu0 0
      %5096 = vperm.xlu0 %5095, %v5078
      %v5097 = vpop.permute.xlu0 %5096
      %5100 = vset.pattern.permute.xlu0 0
      %5101 = vperm.xlu0 %5100, %v5079
      %v5102 = vpop.permute.xlu0 %5101
      %5105 = vset.pattern.permute.xlu0 0
      %5106 = vperm.xlu0 %5105, %v5080
      %v5107 = vpop.permute.xlu0 %5106
      %5110 = vset.pattern.permute.xlu0 0
      %5111 = vperm.xlu0 %5110, %v5081
      %v5112 = vpop.permute.xlu0 %5111
      %5115 = vset.pattern.permute.xlu0 0
      %5116 = vperm.xlu0 %5115, %v5082
      %v5117 = vpop.permute.xlu0 %5116
      %5120 = vset.pattern.permute.xlu0 0
      %5121 = vperm.xlu0 %5120, %v5083
      %v5122 = vpop.permute.xlu0 %5121
      %5125 = vset.pattern.permute.xlu0 0
      %5126 = vperm.xlu0 %5125, %v5084
      %v5127 = vpop.permute.xlu0 %5126
      %5130 = vset.pattern.permute.xlu0 0
      %5131 = vperm.xlu0 %5130, %v5085
      %v5132 = vpop.permute.xlu0 %5131
      %5135 = vset.pattern.permute.xlu0 0
      %5136 = vperm.xlu0 %5135, %v5086
      %v5137 = vpop.permute.xlu0 %5136
      %5140 = vset.pattern.permute.xlu0 0
      %5141 = vperm.xlu0 %5140, %v5087
      %v5142 = vpop.permute.xlu0 %5141
      %5145 = vset.pattern.permute.xlu0 0
      %5146 = vperm.xlu0 %5145, %v5088
      %v5147 = vpop.permute.xlu0 %5146
      %5150 = vset.pattern.permute.xlu0 0
      %5151 = vperm.xlu0 %5150, %v5089
      %v5152 = vpop.permute.xlu0 %5151
      %5155 = vset.pattern.permute.xlu0 0
      %5156 = vperm.xlu0 %5155, %v5090
      %v5157 = vpop.permute.xlu0 %5156
      %5160 = vset.pattern.permute.xlu0 0
      %5161 = vperm.xlu0 %5160, %v5091
      %v5162 = vpop.permute.xlu0 %5161
      %5165 = vset.pattern.permute.xlu0 0
      %5166 = vperm.xlu0 %5165, %v5092
      %v5167 = vpop.permute.xlu0 %5166
      %5170 = vset.pattern.permute.xlu0 0
      %5171 = vperm.xlu0 %5170, %v5093
      %v5172 = vpop.permute.xlu0 %5171
      %v5254 = vunpack.c.l.b16 %v4854
      %v5255 = vunpack.c.h.b16 %v4854
      %v5256 = vunpack.c.l.b16 %v4855
      %v5257 = vunpack.c.h.b16 %v4855
      %v5258 = vunpack.c.l.b16 %v4856
      %v5259 = vunpack.c.h.b16 %v4856
      %v5260 = vunpack.c.l.b16 %v4857
      %v5261 = vunpack.c.h.b16 %v4857
      %v5262 = vunpack.c.l.b16 %v4858
      %v5263 = vunpack.c.l.b16 %v4859
      %v5264 = vunpack.c.h.b16 %v4859
      %v5265 = vunpack.c.l.b16 %v4860
      %v5266 = vunpack.c.h.b16 %v4860
      %v5267 = vunpack.c.l.b16 %v4861
      %v5268 = vunpack.c.h.b16 %v4861
      %v5269 = vunpack.c.l.b16 %v4862
      %v5270 = vunpack.c.h.b16 %v4862
      %v5271 = vunpack.c.l.b16 %v4863
      %v5272 = vunpack.c.l.b16 %v4864
      %v5273 = vunpack.c.h.b16 %v4864
      %v5274 = vunpack.c.l.b16 %v4865
      %v5275 = vunpack.c.h.b16 %v4865
      %v5276 = vunpack.c.l.b16 %v4866
      %v5277 = vunpack.c.h.b16 %v4866
      %v5278 = vunpack.c.l.b16 %v4867
      %v5279 = vunpack.c.h.b16 %v4867
      %v5280 = vunpack.c.l.b16 %v4868
      %v5281 = vunpack.c.l.b16 %v4869
      %v5282 = vunpack.c.h.b16 %v4869
      %v5283 = vunpack.c.l.b16 %v4870
      %v5284 = vunpack.c.h.b16 %v4870
      %v5285 = vunpack.c.l.b16 %v4871
      %v5286 = vunpack.c.h.b16 %v4871
      %v5287 = vunpack.c.l.b16 %v4872
      %v5288 = vunpack.c.h.b16 %v4872
      %v5289 = vunpack.c.l.b16 %v4873
      %v5290 = vunpack.c.l.b16 %v4874
      %v5291 = vunpack.c.h.b16 %v4874
      %v5292 = vunpack.c.l.b16 %v4875
      %v5293 = vunpack.c.h.b16 %v4875
      %v5294 = vunpack.c.l.b16 %v4876
      %v5295 = vunpack.c.h.b16 %v4876
      %v5296 = vunpack.c.l.b16 %v4877
      %v5297 = vunpack.c.h.b16 %v4877
      %v5298 = vunpack.c.l.b16 %v4878
      %v5299 = vunpack.c.l.b16 %v4879
      %v5300 = vunpack.c.h.b16 %v4879
      %v5301 = vunpack.c.l.b16 %v4880
      %v5302 = vunpack.c.h.b16 %v4880
      %v5303 = vunpack.c.l.b16 %v4881
      %v5304 = vunpack.c.h.b16 %v4881
      %v5305 = vunpack.c.l.b16 %v4882
      %v5306 = vunpack.c.h.b16 %v4882
      %v5307 = vunpack.c.l.b16 %v4883
      %v5308 = vunpack.c.l.b16 %v4884
      %v5309 = vunpack.c.h.b16 %v4884
      %v5310 = vunpack.c.l.b16 %v4885
      %v5311 = vunpack.c.h.b16 %v4885
      %v5312 = vunpack.c.l.b16 %v4886
      %v5313 = vunpack.c.h.b16 %v4886
      %v5314 = vunpack.c.l.b16 %v4887
      %v5315 = vunpack.c.h.b16 %v4887
      %v5316 = vunpack.c.l.b16 %v4888
      %v5317 = vunpack.c.l.b16 %v4889
      %v5318 = vunpack.c.h.b16 %v4889
      %v5319 = vunpack.c.l.b16 %v4890
      %v5320 = vunpack.c.h.b16 %v4890
      %v5321 = vunpack.c.l.b16 %v4891
      %v5322 = vunpack.c.h.b16 %v4891
      %v5323 = vunpack.c.l.b16 %v4892
      %v5324 = vunpack.c.h.b16 %v4892
      %v5325 = vunpack.c.l.b16 %v4893
      %v5326 = vunpack.c.l.b16 %v4894
      %v5327 = vunpack.c.h.b16 %v4894
      %v5328 = vunpack.c.l.b16 %v4895
      %v5329 = vunpack.c.h.b16 %v4895
      %v5330 = vunpack.c.l.b16 %v4896
      %v5331 = vunpack.c.h.b16 %v4896
      %v5332 = vunpack.c.l.b16 %v4897
      %v5333 = vunpack.c.h.b16 %v4897
      %v5334 = vunpack.c.l.b16 %v4898
      %v5335 = vunpack.c.l.b16 %v4899
      %v5336 = vunpack.c.h.b16 %v4899
      %v5337 = vunpack.c.l.b16 %v4900
      %v5338 = vunpack.c.h.b16 %v4900
      %v5339 = vunpack.c.l.b16 %v4901
      %v5340 = vunpack.c.h.b16 %v4901
      %v5341 = vunpack.c.l.b16 %v4902
      %v5342 = vunpack.c.h.b16 %v4902
      %v5343 = vunpack.c.l.b16 %v4903
      %v5344 = vunpack.c.l.b16 %v4904
      %v5345 = vunpack.c.h.b16 %v4904
      %v5346 = vunpack.c.l.b16 %v4905
      %v5347 = vunpack.c.h.b16 %v4905
      %v5348 = vunpack.c.l.b16 %v4906
      %v5349 = vunpack.c.h.b16 %v4906
      %v5350 = vunpack.c.l.b16 %v4907
      %v5351 = vunpack.c.h.b16 %v4907
      %v5352 = vunpack.c.l.b16 %v4908
      %v5353 = vunpack.c.l.b16 %v4909
      %v5354 = vunpack.c.h.b16 %v4909
      %v5355 = vunpack.c.l.b16 %v4910
      %v5356 = vunpack.c.h.b16 %v4910
      %v5357 = vunpack.c.l.b16 %v4911
      %v5358 = vunpack.c.h.b16 %v4911
      %v5359 = vunpack.c.l.b16 %v4912
      %v5360 = vunpack.c.h.b16 %v4912
      %v5361 = vunpack.c.l.b16 %v4913
      %v5362 = vunpack.c.l.b16 %v4914
      %v5363 = vunpack.c.h.b16 %v4914
      %v5364 = vunpack.c.l.b16 %v4915
      %v5365 = vunpack.c.h.b16 %v4915
      %v5366 = vunpack.c.l.b16 %v4916
      %v5367 = vunpack.c.h.b16 %v4916
      %v5368 = vunpack.c.l.b16 %v4917
      %v5369 = vunpack.c.h.b16 %v4917
      %v5370 = vunpack.c.l.b16 %v4918
      %v5371 = vunpack.c.l.b16 %v4919
      %v5372 = vunpack.c.h.b16 %v4919
      %v5373 = vunpack.c.l.b16 %v4920
      %v5374 = vunpack.c.h.b16 %v4920
      %v5375 = vunpack.c.l.b16 %v4921
      %v5376 = vunpack.c.h.b16 %v4921
      %v5377 = vunpack.c.l.b16 %v4922
      %v5378 = vunpack.c.h.b16 %v4922
      %v5379 = vunpack.c.l.b16 %v4923
      %v5380 = vunpack.c.l.b16 %v4924
      %v5381 = vunpack.c.h.b16 %v4924
      %v5382 = vunpack.c.l.b16 %v4925
      %v5383 = vunpack.c.h.b16 %v4925
      %v5384 = vunpack.c.l.b16 %v4926
      %v5385 = vunpack.c.h.b16 %v4926
      %v5386 = vunpack.c.l.b16 %v4927
      %v5387 = vunpack.c.h.b16 %v4927
      %v5388 = vunpack.c.l.b16 %v4928
      %v5389 = vunpack.c.l.b16 %v4929
      %v5390 = vunpack.c.h.b16 %v4929
      %v5391 = vunpack.c.l.b16 %v4930
      %v5392 = vunpack.c.h.b16 %v4930
      %v5393 = vunpack.c.l.b16 %v4931
      %v5394 = vunpack.c.h.b16 %v4931
      %v5395 = vunpack.c.l.b16 %v4932
      %v5396 = vunpack.c.h.b16 %v4932
      %v5397 = vunpack.c.l.b16 %v4933
      %v5398 = vpack.c.b16 %v5263, %v5254
      %v5399 = vpack.c.b16 %v5264, %v5255
      %v5400 = vpack.c.b16 %v5265, %v5256
      %v5401 = vpack.c.b16 %v5266, %v5257
      %v5402 = vpack.c.b16 %v5267, %v5258
      %v5403 = vpack.c.b16 %v5268, %v5259
      %v5404 = vpack.c.b16 %v5269, %v5260
      %v5405 = vpack.c.b16 %v5270, %v5261
      %v5406 = vpack.c.b16 %v5271, %v5262
      %v5407 = vpack.c.b16 %v5281, %v5272
      %v5408 = vpack.c.b16 %v5282, %v5273
      %v5409 = vpack.c.b16 %v5283, %v5274
      %v5410 = vpack.c.b16 %v5284, %v5275
      %v5411 = vpack.c.b16 %v5285, %v5276
      %v5412 = vpack.c.b16 %v5286, %v5277
      %v5413 = vpack.c.b16 %v5287, %v5278
      %v5414 = vpack.c.b16 %v5288, %v5279
      %v5415 = vpack.c.b16 %v5289, %v5280
      %v5416 = vpack.c.b16 %v5299, %v5290
      %v5417 = vpack.c.b16 %v5300, %v5291
      %v5418 = vpack.c.b16 %v5301, %v5292
      %v5419 = vpack.c.b16 %v5302, %v5293
      %v5420 = vpack.c.b16 %v5303, %v5294
      %v5421 = vpack.c.b16 %v5304, %v5295
      %v5422 = vpack.c.b16 %v5305, %v5296
      %v5423 = vpack.c.b16 %v5306, %v5297
      %v5424 = vpack.c.b16 %v5307, %v5298
      %v5425 = vpack.c.b16 %v5317, %v5308
      %v5426 = vpack.c.b16 %v5318, %v5309
      %v5427 = vpack.c.b16 %v5319, %v5310
      %v5428 = vpack.c.b16 %v5320, %v5311
      %v5429 = vpack.c.b16 %v5321, %v5312
      %v5430 = vpack.c.b16 %v5322, %v5313
      %v5431 = vpack.c.b16 %v5323, %v5314
      %v5432 = vpack.c.b16 %v5324, %v5315
      %v5433 = vpack.c.b16 %v5325, %v5316
      %v5434 = vpack.c.b16 %v5335, %v5326
      %v5435 = vpack.c.b16 %v5336, %v5327
      %v5436 = vpack.c.b16 %v5337, %v5328
      %v5437 = vpack.c.b16 %v5338, %v5329
      %v5438 = vpack.c.b16 %v5339, %v5330
      %v5439 = vpack.c.b16 %v5340, %v5331
      %v5440 = vpack.c.b16 %v5341, %v5332
      %v5441 = vpack.c.b16 %v5342, %v5333
      %v5442 = vpack.c.b16 %v5343, %v5334
      %v5443 = vpack.c.b16 %v5353, %v5344
      %v5444 = vpack.c.b16 %v5354, %v5345
      %v5445 = vpack.c.b16 %v5355, %v5346
      %v5446 = vpack.c.b16 %v5356, %v5347
      %v5447 = vpack.c.b16 %v5357, %v5348
      %v5448 = vpack.c.b16 %v5358, %v5349
      %v5449 = vpack.c.b16 %v5359, %v5350
      %v5450 = vpack.c.b16 %v5360, %v5351
      %v5451 = vpack.c.b16 %v5361, %v5352
      %v5452 = vpack.c.b16 %v5371, %v5362
      %v5453 = vpack.c.b16 %v5372, %v5363
      %v5454 = vpack.c.b16 %v5373, %v5364
      %v5455 = vpack.c.b16 %v5374, %v5365
      %v5456 = vpack.c.b16 %v5375, %v5366
      %v5457 = vpack.c.b16 %v5376, %v5367
      %v5458 = vpack.c.b16 %v5377, %v5368
      %v5459 = vpack.c.b16 %v5378, %v5369
      %v5460 = vpack.c.b16 %v5379, %v5370
      %v5461 = vpack.c.b16 %v5389, %v5380
      %v5462 = vpack.c.b16 %v5390, %v5381
      %v5463 = vpack.c.b16 %v5391, %v5382
      %v5464 = vpack.c.b16 %v5392, %v5383
      %v5465 = vpack.c.b16 %v5393, %v5384
      %v5466 = vpack.c.b16 %v5394, %v5385
      %v5467 = vpack.c.b16 %v5395, %v5386
      %v5468 = vpack.c.b16 %v5396, %v5387
      %v5469 = vpack.c.b16 %v5397, %v5388
      %v5686 = vunpack.c.l.b16 %v4934
      %v5687 = vunpack.c.h.b16 %v4934
      %v5688 = vunpack.c.l.b16 %v4935
      %v5689 = vunpack.c.h.b16 %v4935
      %v5690 = vunpack.c.l.b16 %v4936
      %v5691 = vunpack.c.h.b16 %v4936
      %v5692 = vunpack.c.l.b16 %v4937
      %v5693 = vunpack.c.h.b16 %v4937
      %v5694 = vunpack.c.l.b16 %v4938
      %v5695 = vunpack.c.h.b16 %v4938
      %v5696 = vunpack.c.l.b16 %v4939
      %v5697 = vunpack.c.h.b16 %v4939
      %v5698 = vunpack.c.l.b16 %v4940
      %v5699 = vunpack.c.h.b16 %v4940
      %v5700 = vunpack.c.l.b16 %v4941
      %v5701 = vunpack.c.h.b16 %v4941
      %v5702 = vunpack.c.l.b16 %v4942
      %v5703 = vunpack.c.h.b16 %v4942
      %v5704 = vunpack.c.l.b16 %v4943
      %v5705 = vunpack.c.h.b16 %v4943
      %v5706 = vunpack.c.l.b16 %v4944
      %v5707 = vunpack.c.h.b16 %v4944
      %v5708 = vunpack.c.l.b16 %v4945
      %v5709 = vunpack.c.h.b16 %v4945
      %v5710 = vunpack.c.l.b16 %v4946
      %v5711 = vunpack.c.h.b16 %v4946
      %v5712 = vunpack.c.l.b16 %v4947
      %v5713 = vunpack.c.h.b16 %v4947
      %v5714 = vunpack.c.l.b16 %v4948
      %v5715 = vunpack.c.h.b16 %v4948
      %v5716 = vunpack.c.l.b16 %v4949
      %v5717 = vunpack.c.h.b16 %v4949
      %v5718 = vunpack.c.l.b16 %v4950
      %v5719 = vunpack.c.h.b16 %v4950
      %v5720 = vunpack.c.l.b16 %v4951
      %v5721 = vunpack.c.h.b16 %v4951
      %v5722 = vunpack.c.l.b16 %v4952
      %v5723 = vunpack.c.h.b16 %v4952
      %v5724 = vunpack.c.l.b16 %v4953
      %v5725 = vunpack.c.h.b16 %v4953
      %v5726 = vunpack.c.l.b16 %v4954
      %v5727 = vunpack.c.h.b16 %v4954
      %v5728 = vunpack.c.l.b16 %v4955
      %v5729 = vunpack.c.h.b16 %v4955
      %v5730 = vunpack.c.l.b16 %v4956
      %v5731 = vunpack.c.h.b16 %v4956
      %v5732 = vunpack.c.l.b16 %v4957
      %v5733 = vunpack.c.h.b16 %v4957
      %v5734 = vunpack.c.l.b16 %v4958
      %v5735 = vunpack.c.h.b16 %v4958
      %v5736 = vunpack.c.l.b16 %v4959
      %v5737 = vunpack.c.h.b16 %v4959
      %v5738 = vunpack.c.l.b16 %v4960
      %v5739 = vunpack.c.h.b16 %v4960
      %v5740 = vunpack.c.l.b16 %v4961
      %v5741 = vunpack.c.h.b16 %v4961
      %v5742 = vunpack.c.l.b16 %v4962
      %v5743 = vunpack.c.h.b16 %v4962
      %v5744 = vunpack.c.l.b16 %v4963
      %v5745 = vunpack.c.h.b16 %v4963
      %v5746 = vunpack.c.l.b16 %v4964
      %v5747 = vunpack.c.h.b16 %v4964
      %v5748 = vunpack.c.l.b16 %v4965
      %v5749 = vunpack.c.h.b16 %v4965
      %v5750 = vunpack.c.l.b16 %v4966
      %v5751 = vunpack.c.h.b16 %v4966
      %v5752 = vunpack.c.l.b16 %v4967
      %v5753 = vunpack.c.h.b16 %v4967
      %v5754 = vunpack.c.l.b16 %v4968
      %v5755 = vunpack.c.h.b16 %v4968
      %v5756 = vunpack.c.l.b16 %v4969
      %v5757 = vunpack.c.h.b16 %v4969
      %v5758 = vunpack.c.l.b16 %v4970
      %v5759 = vunpack.c.h.b16 %v4970
      %v5760 = vunpack.c.l.b16 %v4971
      %v5761 = vunpack.c.h.b16 %v4971
      %v5762 = vunpack.c.l.b16 %v4972
      %v5763 = vunpack.c.h.b16 %v4972
      %v5764 = vunpack.c.l.b16 %v4973
      %v5765 = vunpack.c.h.b16 %v4973
      %v5766 = vunpack.c.l.b16 %v4974
      %v5767 = vunpack.c.h.b16 %v4974
      %v5768 = vunpack.c.l.b16 %v4975
      %v5769 = vunpack.c.h.b16 %v4975
      %v5770 = vunpack.c.l.b16 %v4976
      %v5771 = vunpack.c.h.b16 %v4976
      %v5772 = vunpack.c.l.b16 %v4977
      %v5773 = vunpack.c.h.b16 %v4977
      %v5774 = vunpack.c.l.b16 %v4978
      %v5775 = vunpack.c.h.b16 %v4978
      %v5776 = vunpack.c.l.b16 %v4979
      %v5777 = vunpack.c.h.b16 %v4979
      %v5778 = vunpack.c.l.b16 %v4980
      %v5779 = vunpack.c.h.b16 %v4980
      %v5780 = vunpack.c.l.b16 %v4981
      %v5781 = vunpack.c.h.b16 %v4981
      %v5782 = vunpack.c.l.b16 %v4982
      %v5783 = vunpack.c.h.b16 %v4982
      %v5784 = vunpack.c.l.b16 %v4983
      %v5785 = vunpack.c.h.b16 %v4983
      %v5786 = vunpack.c.l.b16 %v4984
      %v5787 = vunpack.c.h.b16 %v4984
      %v5788 = vunpack.c.l.b16 %v4985
      %v5789 = vunpack.c.h.b16 %v4985
      %v5790 = vunpack.c.l.b16 %v4986
      %v5791 = vunpack.c.h.b16 %v4986
      %v5792 = vunpack.c.l.b16 %v4987
      %v5793 = vunpack.c.h.b16 %v4987
      %v5794 = vunpack.c.l.b16 %v4988
      %v5795 = vunpack.c.h.b16 %v4988
      %v5796 = vunpack.c.l.b16 %v4989
      %v5797 = vunpack.c.h.b16 %v4989
      %v5798 = vunpack.c.l.b16 %v4990
      %v5799 = vunpack.c.h.b16 %v4990
      %v5800 = vunpack.c.l.b16 %v4991
      %v5801 = vunpack.c.h.b16 %v4991
      %v5802 = vunpack.c.l.b16 %v4992
      %v5803 = vunpack.c.h.b16 %v4992
      %v5804 = vunpack.c.l.b16 %v4993
      %v5805 = vunpack.c.h.b16 %v4993
      %v5806 = vunpack.c.l.b16 %v4994
      %v5807 = vunpack.c.h.b16 %v4994
      %v5808 = vunpack.c.l.b16 %v4995
      %v5809 = vunpack.c.h.b16 %v4995
      %v5810 = vunpack.c.l.b16 %v4996
      %v5811 = vunpack.c.h.b16 %v4996
      %v5812 = vunpack.c.l.b16 %v4997
      %v5813 = vunpack.c.h.b16 %v4997
      %v5814 = vunpack.c.l.b16 %v4998
      %v5815 = vunpack.c.h.b16 %v4998
      %v5816 = vunpack.c.l.b16 %v4999
      %v5817 = vunpack.c.h.b16 %v4999
      %v5818 = vunpack.c.l.b16 %v5000
      %v5819 = vunpack.c.h.b16 %v5000
      %v5820 = vunpack.c.l.b16 %v5001
      %v5821 = vunpack.c.h.b16 %v5001
      %v5822 = vunpack.c.l.b16 %v5002
      %v5823 = vunpack.c.h.b16 %v5002
      %v5824 = vunpack.c.l.b16 %v5003
      %v5825 = vunpack.c.h.b16 %v5003
      %v5826 = vunpack.c.l.b16 %v5004
      %v5827 = vunpack.c.h.b16 %v5004
      %v5828 = vunpack.c.l.b16 %v5005
      %v5829 = vunpack.c.h.b16 %v5005
      %v5830 = vunpack.c.l.b16 %v5006
      %v5831 = vunpack.c.h.b16 %v5006
      %v5832 = vunpack.c.l.b16 %v5007
      %v5833 = vunpack.c.h.b16 %v5007
      %v5834 = vunpack.c.l.b16 %v5008
      %v5835 = vunpack.c.h.b16 %v5008
      %v5836 = vunpack.c.l.b16 %v5009
      %v5837 = vunpack.c.h.b16 %v5009
      %v5838 = vunpack.c.l.b16 %v5010
      %v5839 = vunpack.c.h.b16 %v5010
      %v5840 = vunpack.c.l.b16 %v5011
      %v5841 = vunpack.c.h.b16 %v5011
      %v5842 = vunpack.c.l.b16 %v5012
      %v5843 = vunpack.c.h.b16 %v5012
      %v5844 = vunpack.c.l.b16 %v5013
      %v5845 = vunpack.c.h.b16 %v5013
      %v5846 = vunpack.c.l.b16 %v5014
      %v5847 = vunpack.c.h.b16 %v5014
      %v5848 = vunpack.c.l.b16 %v5015
      %v5849 = vunpack.c.h.b16 %v5015
      %v5850 = vunpack.c.l.b16 %v5016
      %v5851 = vunpack.c.h.b16 %v5016
      %v5852 = vunpack.c.l.b16 %v5017
      %v5853 = vunpack.c.h.b16 %v5017
      %v5854 = vunpack.c.l.b16 %v5018
      %v5855 = vunpack.c.h.b16 %v5018
      %v5856 = vunpack.c.l.b16 %v5019
      %v5857 = vunpack.c.h.b16 %v5019
      %v5858 = vunpack.c.l.b16 %v5020
      %v5859 = vunpack.c.h.b16 %v5020
      %v5860 = vunpack.c.l.b16 %v5021
      %v5861 = vunpack.c.h.b16 %v5021
      %v5862 = vunpack.c.l.b16 %v5022
      %v5863 = vunpack.c.h.b16 %v5022
      %v5864 = vunpack.c.l.b16 %v5023
      %v5865 = vunpack.c.h.b16 %v5023
      %v5866 = vunpack.c.l.b16 %v5024
      %v5867 = vunpack.c.h.b16 %v5024
      %v5868 = vunpack.c.l.b16 %v5025
      %v5869 = vunpack.c.h.b16 %v5025
      %v5870 = vunpack.c.l.b16 %v5026
      %v5871 = vunpack.c.h.b16 %v5026
      %v5872 = vunpack.c.l.b16 %v5027
      %v5873 = vunpack.c.h.b16 %v5027
      %v5874 = vunpack.c.l.b16 %v5028
      %v5875 = vunpack.c.h.b16 %v5028
      %v5876 = vunpack.c.l.b16 %v5029
      %v5877 = vunpack.c.h.b16 %v5029
      %v5878 = vunpack.c.l.b16 %v5030
      %v5879 = vunpack.c.h.b16 %v5030
      %v5880 = vunpack.c.l.b16 %v5031
      %v5881 = vunpack.c.h.b16 %v5031
      %v5882 = vunpack.c.l.b16 %v5032
      %v5883 = vunpack.c.h.b16 %v5032
      %v5884 = vunpack.c.l.b16 %v5033
      %v5885 = vunpack.c.h.b16 %v5033
      %v5886 = vunpack.c.l.b16 %v5034
      %v5887 = vunpack.c.h.b16 %v5034
      %v5888 = vunpack.c.l.b16 %v5035
      %v5889 = vunpack.c.h.b16 %v5035
      %v5890 = vunpack.c.l.b16 %v5036
      %v5891 = vunpack.c.h.b16 %v5036
      %v5892 = vunpack.c.l.b16 %v5037
      %v5893 = vunpack.c.h.b16 %v5037
      %v5894 = vunpack.c.l.b16 %v5038
      %v5895 = vunpack.c.h.b16 %v5038
      %v5896 = vunpack.c.l.b16 %v5039
      %v5897 = vunpack.c.h.b16 %v5039
      %v5898 = vunpack.c.l.b16 %v5040
      %v5899 = vunpack.c.h.b16 %v5040
      %v5900 = vunpack.c.l.b16 %v5041
      %v5901 = vunpack.c.h.b16 %v5041
      %v5902 = vunpack.c.l.b16 %v5042
      %v5903 = vunpack.c.h.b16 %v5042
      %v5904 = vunpack.c.l.b16 %v5043
      %v5905 = vunpack.c.h.b16 %v5043
      %v5906 = vunpack.c.l.b16 %v5044
      %v5907 = vunpack.c.h.b16 %v5044
      %v5908 = vunpack.c.l.b16 %v5045
      %v5909 = vunpack.c.h.b16 %v5045
      %v5910 = vunpack.c.l.b16 %v5046
      %v5911 = vunpack.c.h.b16 %v5046
      %v5912 = vunpack.c.l.b16 %v5047
      %v5913 = vunpack.c.h.b16 %v5047
      %v5914 = vunpack.c.l.b16 %v5048
      %v5915 = vunpack.c.h.b16 %v5048
      %v5916 = vunpack.c.l.b16 %v5049
      %v5917 = vunpack.c.h.b16 %v5049
      %v5918 = vunpack.c.l.b16 %v5050
      %v5919 = vunpack.c.h.b16 %v5050
      %v5920 = vunpack.c.l.b16 %v5051
      %v5921 = vunpack.c.h.b16 %v5051
      %v5922 = vunpack.c.l.b16 %v5052
      %v5923 = vunpack.c.h.b16 %v5052
      %v5924 = vunpack.c.l.b16 %v5053
      %v5925 = vunpack.c.h.b16 %v5053
      %v5926 = vunpack.c.l.b16 %v5054
      %v5927 = vunpack.c.h.b16 %v5054
      %v5928 = vunpack.c.l.b16 %v5055
      %v5929 = vunpack.c.h.b16 %v5055
      %v5930 = vunpack.c.l.b16 %v5056
      %v5931 = vunpack.c.h.b16 %v5056
      %v5932 = vunpack.c.l.b16 %v5057
      %v5933 = vunpack.c.h.b16 %v5057
      %v5934 = vunpack.c.l.b16 %v5058
      %v5935 = vunpack.c.h.b16 %v5058
      %v5936 = vunpack.c.l.b16 %v5059
      %v5937 = vunpack.c.h.b16 %v5059
      %v5938 = vunpack.c.l.b16 %v5060
      %v5939 = vunpack.c.h.b16 %v5060
      %v5940 = vunpack.c.l.b16 %v5061
      %v5941 = vunpack.c.h.b16 %v5061
      %v5942 = vunpack.c.l.b16 %v5062
      %v5943 = vunpack.c.h.b16 %v5062
      %v5944 = vunpack.c.l.b16 %v5063
      %v5945 = vunpack.c.h.b16 %v5063
      %v5946 = vunpack.c.l.b16 %v5064
      %v5947 = vunpack.c.h.b16 %v5064
      %v5948 = vunpack.c.l.b16 %v5065
      %v5949 = vunpack.c.h.b16 %v5065
      %v5950 = vunpack.c.l.b16 %v5066
      %v5951 = vunpack.c.h.b16 %v5066
      %v5952 = vunpack.c.l.b16 %v5067
      %v5953 = vunpack.c.h.b16 %v5067
      %v5954 = vunpack.c.l.b16 %v5068
      %v5955 = vunpack.c.h.b16 %v5068
      %v5956 = vunpack.c.l.b16 %v5069
      %v5957 = vunpack.c.h.b16 %v5069
      %v5958 = vunpack.c.l.b16 %v5070
      %v5959 = vunpack.c.h.b16 %v5070
      %v5960 = vunpack.c.l.b16 %v5071
      %v5961 = vunpack.c.h.b16 %v5071
      %v5962 = vunpack.c.l.b16 %v5072
      %v5963 = vunpack.c.h.b16 %v5072
      %v5964 = vunpack.c.l.b16 %v5073
      %v5965 = vunpack.c.h.b16 %v5073
      %v5966 = vunpack.c.l.b16 %v5074
      %v5967 = vunpack.c.h.b16 %v5074
      %v5968 = vunpack.c.l.b16 %v5075
      %v5969 = vunpack.c.h.b16 %v5075
      %v5970 = vunpack.c.l.b16 %v5076
      %v5971 = vunpack.c.h.b16 %v5076
      %v5972 = vunpack.c.l.b16 %v5077
      %v5973 = vunpack.c.h.b16 %v5077
      %v5974 = vpack.c.b16 %v5688, %v5686
      %v5975 = vpack.c.b16 %v5689, %v5687
      %v5976 = vpack.c.b16 %v5692, %v5690
      %v5977 = vpack.c.b16 %v5693, %v5691
      %v5978 = vpack.c.b16 %v5696, %v5694
      %v5979 = vpack.c.b16 %v5697, %v5695
      %v5980 = vpack.c.b16 %v5700, %v5698
      %v5981 = vpack.c.b16 %v5701, %v5699
      %v5982 = vpack.c.b16 %v5704, %v5702
      %v5983 = vpack.c.b16 %v5705, %v5703
      %v5984 = vpack.c.b16 %v5708, %v5706
      %v5985 = vpack.c.b16 %v5709, %v5707
      %v5986 = vpack.c.b16 %v5712, %v5710
      %v5987 = vpack.c.b16 %v5713, %v5711
      %v5988 = vpack.c.b16 %v5716, %v5714
      %v5989 = vpack.c.b16 %v5717, %v5715
      %v5990 = vpack.c.b16 %v5720, %v5718
      %v5991 = vpack.c.b16 %v5721, %v5719
      %v5992 = vpack.c.b16 %v5724, %v5722
      %v5993 = vpack.c.b16 %v5725, %v5723
      %v5994 = vpack.c.b16 %v5728, %v5726
      %v5995 = vpack.c.b16 %v5729, %v5727
      %v5996 = vpack.c.b16 %v5732, %v5730
      %v5997 = vpack.c.b16 %v5733, %v5731
      %v5998 = vpack.c.b16 %v5736, %v5734
      %v5999 = vpack.c.b16 %v5737, %v5735
      %v6000 = vpack.c.b16 %v5740, %v5738
      %v6001 = vpack.c.b16 %v5741, %v5739
      %v6002 = vpack.c.b16 %v5744, %v5742
      %v6003 = vpack.c.b16 %v5745, %v5743
      %v6004 = vpack.c.b16 %v5748, %v5746
      %v6005 = vpack.c.b16 %v5749, %v5747
      %v6006 = vpack.c.b16 %v5752, %v5750
      %v6007 = vpack.c.b16 %v5753, %v5751
      %v6008 = vpack.c.b16 %v5756, %v5754
      %v6009 = vpack.c.b16 %v5757, %v5755
      %v6010 = vpack.c.b16 %v5760, %v5758
      %v6011 = vpack.c.b16 %v5761, %v5759
      %v6012 = vpack.c.b16 %v5764, %v5762
      %v6013 = vpack.c.b16 %v5765, %v5763
      %v6014 = vpack.c.b16 %v5768, %v5766
      %v6015 = vpack.c.b16 %v5769, %v5767
      %v6016 = vpack.c.b16 %v5772, %v5770
      %v6017 = vpack.c.b16 %v5773, %v5771
      %v6018 = vpack.c.b16 %v5776, %v5774
      %v6019 = vpack.c.b16 %v5777, %v5775
      %v6020 = vpack.c.b16 %v5780, %v5778
      %v6021 = vpack.c.b16 %v5781, %v5779
      %v6022 = vpack.c.b16 %v5784, %v5782
      %v6023 = vpack.c.b16 %v5785, %v5783
      %v6024 = vpack.c.b16 %v5788, %v5786
      %v6025 = vpack.c.b16 %v5789, %v5787
      %v6026 = vpack.c.b16 %v5792, %v5790
      %v6027 = vpack.c.b16 %v5793, %v5791
      %v6028 = vpack.c.b16 %v5796, %v5794
      %v6029 = vpack.c.b16 %v5797, %v5795
      %v6030 = vpack.c.b16 %v5800, %v5798
      %v6031 = vpack.c.b16 %v5801, %v5799
      %v6032 = vpack.c.b16 %v5804, %v5802
      %v6033 = vpack.c.b16 %v5805, %v5803
      %v6034 = vpack.c.b16 %v5808, %v5806
      %v6035 = vpack.c.b16 %v5809, %v5807
      %v6036 = vpack.c.b16 %v5812, %v5810
      %v6037 = vpack.c.b16 %v5813, %v5811
      %v6038 = vpack.c.b16 %v5816, %v5814
      %v6039 = vpack.c.b16 %v5817, %v5815
      %v6040 = vpack.c.b16 %v5820, %v5818
      %v6041 = vpack.c.b16 %v5821, %v5819
      %v6042 = vpack.c.b16 %v5824, %v5822
      %v6043 = vpack.c.b16 %v5825, %v5823
      %v6044 = vpack.c.b16 %v5828, %v5826
      %v6045 = vpack.c.b16 %v5829, %v5827
      %v6046 = vpack.c.b16 %v5832, %v5830
      %v6047 = vpack.c.b16 %v5833, %v5831
      %v6048 = vpack.c.b16 %v5836, %v5834
      %v6049 = vpack.c.b16 %v5837, %v5835
      %v6050 = vpack.c.b16 %v5840, %v5838
      %v6051 = vpack.c.b16 %v5841, %v5839
      %v6052 = vpack.c.b16 %v5844, %v5842
      %v6053 = vpack.c.b16 %v5845, %v5843
      %v6054 = vpack.c.b16 %v5848, %v5846
      %v6055 = vpack.c.b16 %v5849, %v5847
      %v6056 = vpack.c.b16 %v5852, %v5850
      %v6057 = vpack.c.b16 %v5853, %v5851
      %v6058 = vpack.c.b16 %v5856, %v5854
      %v6059 = vpack.c.b16 %v5857, %v5855
      %v6060 = vpack.c.b16 %v5860, %v5858
      %v6061 = vpack.c.b16 %v5861, %v5859
      %v6062 = vpack.c.b16 %v5864, %v5862
      %v6063 = vpack.c.b16 %v5865, %v5863
      %v6064 = vpack.c.b16 %v5868, %v5866
      %v6065 = vpack.c.b16 %v5869, %v5867
      %v6066 = vpack.c.b16 %v5872, %v5870
      %v6067 = vpack.c.b16 %v5873, %v5871
      %v6068 = vpack.c.b16 %v5876, %v5874
      %v6069 = vpack.c.b16 %v5877, %v5875
      %v6070 = vpack.c.b16 %v5880, %v5878
      %v6071 = vpack.c.b16 %v5881, %v5879
      %v6072 = vpack.c.b16 %v5884, %v5882
      %v6073 = vpack.c.b16 %v5885, %v5883
      %v6074 = vpack.c.b16 %v5888, %v5886
      %v6075 = vpack.c.b16 %v5889, %v5887
      %v6076 = vpack.c.b16 %v5892, %v5890
      %v6077 = vpack.c.b16 %v5893, %v5891
      %v6078 = vpack.c.b16 %v5896, %v5894
      %v6079 = vpack.c.b16 %v5897, %v5895
      %v6080 = vpack.c.b16 %v5900, %v5898
      %v6081 = vpack.c.b16 %v5901, %v5899
      %v6082 = vpack.c.b16 %v5904, %v5902
      %v6083 = vpack.c.b16 %v5905, %v5903
      %v6084 = vpack.c.b16 %v5908, %v5906
      %v6085 = vpack.c.b16 %v5909, %v5907
      %v6086 = vpack.c.b16 %v5912, %v5910
      %v6087 = vpack.c.b16 %v5913, %v5911
      %v6088 = vpack.c.b16 %v5916, %v5914
      %v6089 = vpack.c.b16 %v5917, %v5915
      %v6090 = vpack.c.b16 %v5920, %v5918
      %v6091 = vpack.c.b16 %v5921, %v5919
      %v6092 = vpack.c.b16 %v5924, %v5922
      %v6093 = vpack.c.b16 %v5925, %v5923
      %v6094 = vpack.c.b16 %v5928, %v5926
      %v6095 = vpack.c.b16 %v5929, %v5927
      %v6096 = vpack.c.b16 %v5932, %v5930
      %v6097 = vpack.c.b16 %v5933, %v5931
      %v6098 = vpack.c.b16 %v5936, %v5934
      %v6099 = vpack.c.b16 %v5937, %v5935
      %v6100 = vpack.c.b16 %v5940, %v5938
      %v6101 = vpack.c.b16 %v5941, %v5939
      %v6102 = vpack.c.b16 %v5944, %v5942
      %v6103 = vpack.c.b16 %v5945, %v5943
      %v6104 = vpack.c.b16 %v5948, %v5946
      %v6105 = vpack.c.b16 %v5949, %v5947
      %v6106 = vpack.c.b16 %v5952, %v5950
      %v6107 = vpack.c.b16 %v5953, %v5951
      %v6108 = vpack.c.b16 %v5956, %v5954
      %v6109 = vpack.c.b16 %v5957, %v5955
      %v6110 = vpack.c.b16 %v5960, %v5958
      %v6111 = vpack.c.b16 %v5961, %v5959
      %v6112 = vpack.c.b16 %v5964, %v5962
      %v6113 = vpack.c.b16 %v5965, %v5963
      %v6114 = vpack.c.b16 %v5968, %v5966
      %v6115 = vpack.c.b16 %v5969, %v5967
      %v6116 = vpack.c.b16 %v5972, %v5970
      %v6117 = vpack.c.b16 %v5973, %v5971
      %6262 = vmatpush.bf16.msra.mxu0 %v5988
      %6263 = vmatpush.bf16.msra.mxu0 %v5986
      %6264 = vmatpush.bf16.msra.mxu0 %v5984
      %6265 = vmatpush.bf16.msra.mxu0 %v5982
      %6266 = vmatpush.bf16.msra.mxu0 %v5980
      %6267 = vmatpush.bf16.msra.mxu0 %v5978
      %6268 = vmatpush.bf16.msra.mxu0 %v5976
      %6269 = vmatpush.bf16.msra.mxu0 %v5974
      %6270 = vmatmul.bf16.gmra.mxu0 %v5398
      %v6271 = vpop.f32.mrf.mxu0
      %v6272 = vadd.f32 %v5097, %v6271
      %v6273 = vpop.f32.mrf.mxu0
      %v6274 = vadd.f32 %v5102, %v6273
      %6275 = vmatmul.bf16.gmra.mxu0 %v5407
      %v6276 = vpop.f32.mrf.mxu0
      %v6277 = vadd.f32 %v5107, %v6276
      %v6278 = vpop.f32.mrf.mxu0
      %v6279 = vadd.f32 %v5112, %v6278
      %6280 = vmatmul.bf16.gmra.mxu0 %v5416
      %v6281 = vpop.f32.mrf.mxu0
      %v6282 = vadd.f32 %v5117, %v6281
      %v6283 = vpop.f32.mrf.mxu0
      %v6284 = vadd.f32 %v5122, %v6283
      %6285 = vmatmul.bf16.gmra.mxu0 %v5425
      %v6286 = vpop.f32.mrf.mxu0
      %v6287 = vadd.f32 %v5127, %v6286
      %v6288 = vpop.f32.mrf.mxu0
      %v6289 = vadd.f32 %v5132, %v6288
      %6290 = vmatmul.bf16.gmra.mxu0 %v5434
      %v6291 = vpop.f32.mrf.mxu0
      %v6292 = vadd.f32 %v5137, %v6291
      %v6293 = vpop.f32.mrf.mxu0
      %v6294 = vadd.f32 %v5142, %v6293
      %6295 = vmatmul.bf16.gmra.mxu0 %v5443
      %v6296 = vpop.f32.mrf.mxu0
      %v6297 = vadd.f32 %v5147, %v6296
      %v6298 = vpop.f32.mrf.mxu0
      %v6299 = vadd.f32 %v5152, %v6298
      %6300 = vmatmul.bf16.gmra.mxu0 %v5452
      %v6301 = vpop.f32.mrf.mxu0
      %v6302 = vadd.f32 %v5157, %v6301
      %v6303 = vpop.f32.mrf.mxu0
      %v6304 = vadd.f32 %v5162, %v6303
      %6305 = vmatmul.bf16.gmra.mxu0 %v5461
      %v6306 = vpop.f32.mrf.mxu0
      %v6307 = vadd.f32 %v5167, %v6306
      %v6308 = vpop.f32.mrf.mxu0
      %v6309 = vadd.f32 %v5172, %v6308
      %6310 = vdwg.mxu0
      %6311 = vmatpush.bf16.msra.mxu0 %v6004
      %6312 = vmatpush.bf16.msra.mxu0 %v6002
      %6313 = vmatpush.bf16.msra.mxu0 %v6000
      %6314 = vmatpush.bf16.msra.mxu0 %v5998
      %6315 = vmatpush.bf16.msra.mxu0 %v5996
      %6316 = vmatpush.bf16.msra.mxu0 %v5994
      %6317 = vmatpush.bf16.msra.mxu0 %v5992
      %6318 = vmatpush.bf16.msra.mxu0 %v5990
      %6319 = vmatmul.bf16.gmra.mxu0 %v5399
      %v6320 = vpop.f32.mrf.mxu0
      %v6321 = vadd.f32 %v6272, %v6320
      %v6322 = vpop.f32.mrf.mxu0
      %v6323 = vadd.f32 %v6274, %v6322
      %6324 = vmatmul.bf16.gmra.mxu0 %v5408
      %v6325 = vpop.f32.mrf.mxu0
      %v6326 = vadd.f32 %v6277, %v6325
      %v6327 = vpop.f32.mrf.mxu0
      %v6328 = vadd.f32 %v6279, %v6327
      %6329 = vmatmul.bf16.gmra.mxu0 %v5417
      %v6330 = vpop.f32.mrf.mxu0
      %v6331 = vadd.f32 %v6282, %v6330
      %v6332 = vpop.f32.mrf.mxu0
      %v6333 = vadd.f32 %v6284, %v6332
      %6334 = vmatmul.bf16.gmra.mxu0 %v5426
      %v6335 = vpop.f32.mrf.mxu0
      %v6336 = vadd.f32 %v6287, %v6335
      %v6337 = vpop.f32.mrf.mxu0
      %v6338 = vadd.f32 %v6289, %v6337
      %6339 = vmatmul.bf16.gmra.mxu0 %v5435
      %v6340 = vpop.f32.mrf.mxu0
      %v6341 = vadd.f32 %v6292, %v6340
      %v6342 = vpop.f32.mrf.mxu0
      %v6343 = vadd.f32 %v6294, %v6342
      %6344 = vmatmul.bf16.gmra.mxu0 %v5444
      %v6345 = vpop.f32.mrf.mxu0
      %v6346 = vadd.f32 %v6297, %v6345
      %v6347 = vpop.f32.mrf.mxu0
      %v6348 = vadd.f32 %v6299, %v6347
      %6349 = vmatmul.bf16.gmra.mxu0 %v5453
      %v6350 = vpop.f32.mrf.mxu0
      %v6351 = vadd.f32 %v6302, %v6350
      %v6352 = vpop.f32.mrf.mxu0
      %v6353 = vadd.f32 %v6304, %v6352
      %6354 = vmatmul.bf16.gmra.mxu0 %v5462
      %v6355 = vpop.f32.mrf.mxu0
      %v6356 = vadd.f32 %v6307, %v6355
      %v6357 = vpop.f32.mrf.mxu0
      %v6358 = vadd.f32 %v6309, %v6357
      %6359 = vdwg.mxu0
      %6360 = vmatpush.bf16.msra.mxu0 %v6020
      %6361 = vmatpush.bf16.msra.mxu0 %v6018
      %6362 = vmatpush.bf16.msra.mxu0 %v6016
      %6363 = vmatpush.bf16.msra.mxu0 %v6014
      %6364 = vmatpush.bf16.msra.mxu0 %v6012
      %6365 = vmatpush.bf16.msra.mxu0 %v6010
      %6366 = vmatpush.bf16.msra.mxu0 %v6008
      %6367 = vmatpush.bf16.msra.mxu0 %v6006
      %6368 = vmatmul.bf16.gmra.mxu0 %v5400
      %v6369 = vpop.f32.mrf.mxu0
      %v6370 = vadd.f32 %v6321, %v6369
      %v6371 = vpop.f32.mrf.mxu0
      %v6372 = vadd.f32 %v6323, %v6371
      %6373 = vmatmul.bf16.gmra.mxu0 %v5409
      %v6374 = vpop.f32.mrf.mxu0
      %v6375 = vadd.f32 %v6326, %v6374
      %v6376 = vpop.f32.mrf.mxu0
      %v6377 = vadd.f32 %v6328, %v6376
      %6378 = vmatmul.bf16.gmra.mxu0 %v5418
      %v6379 = vpop.f32.mrf.mxu0
      %v6380 = vadd.f32 %v6331, %v6379
      %v6381 = vpop.f32.mrf.mxu0
      %v6382 = vadd.f32 %v6333, %v6381
      %6383 = vmatmul.bf16.gmra.mxu0 %v5427
      %v6384 = vpop.f32.mrf.mxu0
      %v6385 = vadd.f32 %v6336, %v6384
      %v6386 = vpop.f32.mrf.mxu0
      %v6387 = vadd.f32 %v6338, %v6386
      %6388 = vmatmul.bf16.gmra.mxu0 %v5436
      %v6389 = vpop.f32.mrf.mxu0
      %v6390 = vadd.f32 %v6341, %v6389
      %v6391 = vpop.f32.mrf.mxu0
      %v6392 = vadd.f32 %v6343, %v6391
      %6393 = vmatmul.bf16.gmra.mxu0 %v5445
      %v6394 = vpop.f32.mrf.mxu0
      %v6395 = vadd.f32 %v6346, %v6394
      %v6396 = vpop.f32.mrf.mxu0
      %v6397 = vadd.f32 %v6348, %v6396
      %6398 = vmatmul.bf16.gmra.mxu0 %v5454
      %v6399 = vpop.f32.mrf.mxu0
      %v6400 = vadd.f32 %v6351, %v6399
      %v6401 = vpop.f32.mrf.mxu0
      %v6402 = vadd.f32 %v6353, %v6401
      %6403 = vmatmul.bf16.gmra.mxu0 %v5463
      %v6404 = vpop.f32.mrf.mxu0
      %v6405 = vadd.f32 %v6356, %v6404
      %v6406 = vpop.f32.mrf.mxu0
      %v6407 = vadd.f32 %v6358, %v6406
      %6408 = vdwg.mxu0
      %6409 = vmatpush.bf16.msra.mxu0 %v6036
      %6410 = vmatpush.bf16.msra.mxu0 %v6034
      %6411 = vmatpush.bf16.msra.mxu0 %v6032
      %6412 = vmatpush.bf16.msra.mxu0 %v6030
      %6413 = vmatpush.bf16.msra.mxu0 %v6028
      %6414 = vmatpush.bf16.msra.mxu0 %v6026
      %6415 = vmatpush.bf16.msra.mxu0 %v6024
      %6416 = vmatpush.bf16.msra.mxu0 %v6022
      %6417 = vmatmul.bf16.gmra.mxu0 %v5401
      %v6418 = vpop.f32.mrf.mxu0
      %v6419 = vadd.f32 %v6370, %v6418
      %v6420 = vpop.f32.mrf.mxu0
      %v6421 = vadd.f32 %v6372, %v6420
      %6422 = vmatmul.bf16.gmra.mxu0 %v5410
      %v6423 = vpop.f32.mrf.mxu0
      %v6424 = vadd.f32 %v6375, %v6423
      %v6425 = vpop.f32.mrf.mxu0
      %v6426 = vadd.f32 %v6377, %v6425
      %6427 = vmatmul.bf16.gmra.mxu0 %v5419
      %v6428 = vpop.f32.mrf.mxu0
      %v6429 = vadd.f32 %v6380, %v6428
      %v6430 = vpop.f32.mrf.mxu0
      %v6431 = vadd.f32 %v6382, %v6430
      %6432 = vmatmul.bf16.gmra.mxu0 %v5428
      %v6433 = vpop.f32.mrf.mxu0
      %v6434 = vadd.f32 %v6385, %v6433
      %v6435 = vpop.f32.mrf.mxu0
      %v6436 = vadd.f32 %v6387, %v6435
      %6437 = vmatmul.bf16.gmra.mxu0 %v5437
      %v6438 = vpop.f32.mrf.mxu0
      %v6439 = vadd.f32 %v6390, %v6438
      %v6440 = vpop.f32.mrf.mxu0
      %v6441 = vadd.f32 %v6392, %v6440
      %6442 = vmatmul.bf16.gmra.mxu0 %v5446
      %v6443 = vpop.f32.mrf.mxu0
      %v6444 = vadd.f32 %v6395, %v6443
      %v6445 = vpop.f32.mrf.mxu0
      %v6446 = vadd.f32 %v6397, %v6445
      %6447 = vmatmul.bf16.gmra.mxu0 %v5455
      %v6448 = vpop.f32.mrf.mxu0
      %v6449 = vadd.f32 %v6400, %v6448
      %v6450 = vpop.f32.mrf.mxu0
      %v6451 = vadd.f32 %v6402, %v6450
      %6452 = vmatmul.bf16.gmra.mxu0 %v5464
      %v6453 = vpop.f32.mrf.mxu0
      %v6454 = vadd.f32 %v6405, %v6453
      %v6455 = vpop.f32.mrf.mxu0
      %v6456 = vadd.f32 %v6407, %v6455
      %6457 = vdwg.mxu0
      %6458 = vmatpush.bf16.msra.mxu0 %v6052
      %6459 = vmatpush.bf16.msra.mxu0 %v6050
      %6460 = vmatpush.bf16.msra.mxu0 %v6048
      %6461 = vmatpush.bf16.msra.mxu0 %v6046
      %6462 = vmatpush.bf16.msra.mxu0 %v6044
      %6463 = vmatpush.bf16.msra.mxu0 %v6042
      %6464 = vmatpush.bf16.msra.mxu0 %v6040
      %6465 = vmatpush.bf16.msra.mxu0 %v6038
      %6466 = vmatmul.bf16.gmra.mxu0 %v5402
      %v6467 = vpop.f32.mrf.mxu0
      %v6468 = vadd.f32 %v6419, %v6467
      %v6469 = vpop.f32.mrf.mxu0
      %v6470 = vadd.f32 %v6421, %v6469
      %6471 = vmatmul.bf16.gmra.mxu0 %v5411
      %v6472 = vpop.f32.mrf.mxu0
      %v6473 = vadd.f32 %v6424, %v6472
      %v6474 = vpop.f32.mrf.mxu0
      %v6475 = vadd.f32 %v6426, %v6474
      %6476 = vmatmul.bf16.gmra.mxu0 %v5420
      %v6477 = vpop.f32.mrf.mxu0
      %v6478 = vadd.f32 %v6429, %v6477
      %v6479 = vpop.f32.mrf.mxu0
      %v6480 = vadd.f32 %v6431, %v6479
      %6481 = vmatmul.bf16.gmra.mxu0 %v5429
      %v6482 = vpop.f32.mrf.mxu0
      %v6483 = vadd.f32 %v6434, %v6482
      %v6484 = vpop.f32.mrf.mxu0
      %v6485 = vadd.f32 %v6436, %v6484
      %6486 = vmatmul.bf16.gmra.mxu0 %v5438
      %v6487 = vpop.f32.mrf.mxu0
      %v6488 = vadd.f32 %v6439, %v6487
      %v6489 = vpop.f32.mrf.mxu0
      %v6490 = vadd.f32 %v6441, %v6489
      %6491 = vmatmul.bf16.gmra.mxu0 %v5447
      %v6492 = vpop.f32.mrf.mxu0
      %v6493 = vadd.f32 %v6444, %v6492
      %v6494 = vpop.f32.mrf.mxu0
      %v6495 = vadd.f32 %v6446, %v6494
      %6496 = vmatmul.bf16.gmra.mxu0 %v5456
      %v6497 = vpop.f32.mrf.mxu0
      %v6498 = vadd.f32 %v6449, %v6497
      %v6499 = vpop.f32.mrf.mxu0
      %v6500 = vadd.f32 %v6451, %v6499
      %6501 = vmatmul.bf16.gmra.mxu0 %v5465
      %v6502 = vpop.f32.mrf.mxu0
      %v6503 = vadd.f32 %v6454, %v6502
      %v6504 = vpop.f32.mrf.mxu0
      %v6505 = vadd.f32 %v6456, %v6504
      %6506 = vdwg.mxu0
      %6507 = vmatpush.bf16.msra.mxu0 %v6068
      %6508 = vmatpush.bf16.msra.mxu0 %v6066
      %6509 = vmatpush.bf16.msra.mxu0 %v6064
      %6510 = vmatpush.bf16.msra.mxu0 %v6062
      %6511 = vmatpush.bf16.msra.mxu0 %v6060
      %6512 = vmatpush.bf16.msra.mxu0 %v6058
      %6513 = vmatpush.bf16.msra.mxu0 %v6056
      %6514 = vmatpush.bf16.msra.mxu0 %v6054
      %6515 = vmatmul.bf16.gmra.mxu0 %v5403
      %v6516 = vpop.f32.mrf.mxu0
      %v6517 = vadd.f32 %v6468, %v6516
      %v6518 = vpop.f32.mrf.mxu0
      %v6519 = vadd.f32 %v6470, %v6518
      %6520 = vmatmul.bf16.gmra.mxu0 %v5412
      %v6521 = vpop.f32.mrf.mxu0
      %v6522 = vadd.f32 %v6473, %v6521
      %v6523 = vpop.f32.mrf.mxu0
      %v6524 = vadd.f32 %v6475, %v6523
      %6525 = vmatmul.bf16.gmra.mxu0 %v5421
      %v6526 = vpop.f32.mrf.mxu0
      %v6527 = vadd.f32 %v6478, %v6526
      %v6528 = vpop.f32.mrf.mxu0
      %v6529 = vadd.f32 %v6480, %v6528
      %6530 = vmatmul.bf16.gmra.mxu0 %v5430
      %v6531 = vpop.f32.mrf.mxu0
      %v6532 = vadd.f32 %v6483, %v6531
      %v6533 = vpop.f32.mrf.mxu0
      %v6534 = vadd.f32 %v6485, %v6533
      %6535 = vmatmul.bf16.gmra.mxu0 %v5439
      %v6536 = vpop.f32.mrf.mxu0
      %v6537 = vadd.f32 %v6488, %v6536
      %v6538 = vpop.f32.mrf.mxu0
      %v6539 = vadd.f32 %v6490, %v6538
      %6540 = vmatmul.bf16.gmra.mxu0 %v5448
      %v6541 = vpop.f32.mrf.mxu0
      %v6542 = vadd.f32 %v6493, %v6541
      %v6543 = vpop.f32.mrf.mxu0
      %v6544 = vadd.f32 %v6495, %v6543
      %6545 = vmatmul.bf16.gmra.mxu0 %v5457
      %v6546 = vpop.f32.mrf.mxu0
      %v6547 = vadd.f32 %v6498, %v6546
      %v6548 = vpop.f32.mrf.mxu0
      %v6549 = vadd.f32 %v6500, %v6548
      %6550 = vmatmul.bf16.gmra.mxu0 %v5466
      %v6551 = vpop.f32.mrf.mxu0
      %v6552 = vadd.f32 %v6503, %v6551
      %v6553 = vpop.f32.mrf.mxu0
      %v6554 = vadd.f32 %v6505, %v6553
      %6555 = vdwg.mxu0
      %6556 = vmatpush.bf16.msra.mxu0 %v6084
      %6557 = vmatpush.bf16.msra.mxu0 %v6082
      %6558 = vmatpush.bf16.msra.mxu0 %v6080
      %6559 = vmatpush.bf16.msra.mxu0 %v6078
      %6560 = vmatpush.bf16.msra.mxu0 %v6076
      %6561 = vmatpush.bf16.msra.mxu0 %v6074
      %6562 = vmatpush.bf16.msra.mxu0 %v6072
      %6563 = vmatpush.bf16.msra.mxu0 %v6070
      %6564 = vmatmul.bf16.gmra.mxu0 %v5404
      %v6565 = vpop.f32.mrf.mxu0
      %v6566 = vadd.f32 %v6517, %v6565
      %v6567 = vpop.f32.mrf.mxu0
      %v6568 = vadd.f32 %v6519, %v6567
      %6569 = vmatmul.bf16.gmra.mxu0 %v5413
      %v6570 = vpop.f32.mrf.mxu0
      %v6571 = vadd.f32 %v6522, %v6570
      %v6572 = vpop.f32.mrf.mxu0
      %v6573 = vadd.f32 %v6524, %v6572
      %6574 = vmatmul.bf16.gmra.mxu0 %v5422
      %v6575 = vpop.f32.mrf.mxu0
      %v6576 = vadd.f32 %v6527, %v6575
      %v6577 = vpop.f32.mrf.mxu0
      %v6578 = vadd.f32 %v6529, %v6577
      %6579 = vmatmul.bf16.gmra.mxu0 %v5431
      %v6580 = vpop.f32.mrf.mxu0
      %v6581 = vadd.f32 %v6532, %v6580
      %v6582 = vpop.f32.mrf.mxu0
      %v6583 = vadd.f32 %v6534, %v6582
      %6584 = vmatmul.bf16.gmra.mxu0 %v5440
      %v6585 = vpop.f32.mrf.mxu0
      %v6586 = vadd.f32 %v6537, %v6585
      %v6587 = vpop.f32.mrf.mxu0
      %v6588 = vadd.f32 %v6539, %v6587
      %6589 = vmatmul.bf16.gmra.mxu0 %v5449
      %v6590 = vpop.f32.mrf.mxu0
      %v6591 = vadd.f32 %v6542, %v6590
      %v6592 = vpop.f32.mrf.mxu0
      %v6593 = vadd.f32 %v6544, %v6592
      %6594 = vmatmul.bf16.gmra.mxu0 %v5458
      %v6595 = vpop.f32.mrf.mxu0
      %v6596 = vadd.f32 %v6547, %v6595
      %v6597 = vpop.f32.mrf.mxu0
      %v6598 = vadd.f32 %v6549, %v6597
      %6599 = vmatmul.bf16.gmra.mxu0 %v5467
      %v6600 = vpop.f32.mrf.mxu0
      %v6601 = vadd.f32 %v6552, %v6600
      %v6602 = vpop.f32.mrf.mxu0
      %v6603 = vadd.f32 %v6554, %v6602
      %6604 = vdwg.mxu0
      %6605 = vmatpush.bf16.msra.mxu0 %v6100
      %6606 = vmatpush.bf16.msra.mxu0 %v6098
      %6607 = vmatpush.bf16.msra.mxu0 %v6096
      %6608 = vmatpush.bf16.msra.mxu0 %v6094
      %6609 = vmatpush.bf16.msra.mxu0 %v6092
      %6610 = vmatpush.bf16.msra.mxu0 %v6090
      %6611 = vmatpush.bf16.msra.mxu0 %v6088
      %6612 = vmatpush.bf16.msra.mxu0 %v6086
      %6613 = vmatmul.bf16.gmra.mxu0 %v5405
      %v6614 = vpop.f32.mrf.mxu0
      %v6615 = vadd.f32 %v6566, %v6614
      %v6616 = vpop.f32.mrf.mxu0
      %v6617 = vadd.f32 %v6568, %v6616
      %6618 = vmatmul.bf16.gmra.mxu0 %v5414
      %v6619 = vpop.f32.mrf.mxu0
      %v6620 = vadd.f32 %v6571, %v6619
      %v6621 = vpop.f32.mrf.mxu0
      %v6622 = vadd.f32 %v6573, %v6621
      %6623 = vmatmul.bf16.gmra.mxu0 %v5423
      %v6624 = vpop.f32.mrf.mxu0
      %v6625 = vadd.f32 %v6576, %v6624
      %v6626 = vpop.f32.mrf.mxu0
      %v6627 = vadd.f32 %v6578, %v6626
      %6628 = vmatmul.bf16.gmra.mxu0 %v5432
      %v6629 = vpop.f32.mrf.mxu0
      %v6630 = vadd.f32 %v6581, %v6629
      %v6631 = vpop.f32.mrf.mxu0
      %v6632 = vadd.f32 %v6583, %v6631
      %6633 = vmatmul.bf16.gmra.mxu0 %v5441
      %v6634 = vpop.f32.mrf.mxu0
      %v6635 = vadd.f32 %v6586, %v6634
      %v6636 = vpop.f32.mrf.mxu0
      %v6637 = vadd.f32 %v6588, %v6636
      %6638 = vmatmul.bf16.gmra.mxu0 %v5450
      %v6639 = vpop.f32.mrf.mxu0
      %v6640 = vadd.f32 %v6591, %v6639
      %v6641 = vpop.f32.mrf.mxu0
      %v6642 = vadd.f32 %v6593, %v6641
      %6643 = vmatmul.bf16.gmra.mxu0 %v5459
      %v6644 = vpop.f32.mrf.mxu0
      %v6645 = vadd.f32 %v6596, %v6644
      %v6646 = vpop.f32.mrf.mxu0
      %v6647 = vadd.f32 %v6598, %v6646
      %6648 = vmatmul.bf16.gmra.mxu0 %v5468
      %v6649 = vpop.f32.mrf.mxu0
      %v6650 = vadd.f32 %v6601, %v6649
      %v6651 = vpop.f32.mrf.mxu0
      %v6652 = vadd.f32 %v6603, %v6651
      %6653 = vdwg.mxu0
      %6654 = vmatpush.bf16.msra.mxu0 %v6116
      %6655 = vmatpush.bf16.msra.mxu0 %v6114
      %6656 = vmatpush.bf16.msra.mxu0 %v6112
      %6657 = vmatpush.bf16.msra.mxu0 %v6110
      %6658 = vmatpush.bf16.msra.mxu0 %v6108
      %6659 = vmatpush.bf16.msra.mxu0 %v6106
      %6660 = vmatpush.bf16.msra.mxu0 %v6104
      %6661 = vmatpush.bf16.msra.mxu0 %v6102
      %6662 = vmatmul.bf16.gmra.mxu0 %v5406
      %v6663 = vpop.f32.mrf.mxu0
      %v6664 = vadd.f32 %v6615, %v6663
      %v6665 = vpop.f32.mrf.mxu0
      %v6666 = vadd.f32 %v6617, %v6665
      %6667 = vmatmul.bf16.gmra.mxu0 %v5415
      %v6668 = vpop.f32.mrf.mxu0
      %v6669 = vadd.f32 %v6620, %v6668
      %v6670 = vpop.f32.mrf.mxu0
      %v6671 = vadd.f32 %v6622, %v6670
      %6672 = vmatmul.bf16.gmra.mxu0 %v5424
      %v6673 = vpop.f32.mrf.mxu0
      %v6674 = vadd.f32 %v6625, %v6673
      %v6675 = vpop.f32.mrf.mxu0
      %v6676 = vadd.f32 %v6627, %v6675
      %6677 = vmatmul.bf16.gmra.mxu0 %v5433
      %v6678 = vpop.f32.mrf.mxu0
      %v6679 = vadd.f32 %v6630, %v6678
      %v6680 = vpop.f32.mrf.mxu0
      %v6681 = vadd.f32 %v6632, %v6680
      %6682 = vmatmul.bf16.gmra.mxu0 %v5442
      %v6683 = vpop.f32.mrf.mxu0
      %v6684 = vadd.f32 %v6635, %v6683
      %v6685 = vpop.f32.mrf.mxu0
      %v6686 = vadd.f32 %v6637, %v6685
      %6687 = vmatmul.bf16.gmra.mxu0 %v5451
      %v6688 = vpop.f32.mrf.mxu0
      %v6689 = vadd.f32 %v6640, %v6688
      %v6690 = vpop.f32.mrf.mxu0
      %v6691 = vadd.f32 %v6642, %v6690
      %6692 = vmatmul.bf16.gmra.mxu0 %v5460
      %v6693 = vpop.f32.mrf.mxu0
      %v6694 = vadd.f32 %v6645, %v6693
      %v6695 = vpop.f32.mrf.mxu0
      %v6696 = vadd.f32 %v6647, %v6695
      %6697 = vmatmul.bf16.gmra.mxu0 %v5469
      %v6698 = vpop.f32.mrf.mxu0
      %v6699 = vadd.f32 %v6650, %v6698
      %v6700 = vpop.f32.mrf.mxu0
      %v6701 = vadd.f32 %v6652, %v6700
      %6702 = vdwg.mxu0
      %6703 = vmatpush.bf16.msra.mxu0 %v5989
      %6704 = vmatpush.bf16.msra.mxu0 %v5987
      %6705 = vmatpush.bf16.msra.mxu0 %v5985
      %6706 = vmatpush.bf16.msra.mxu0 %v5983
      %6707 = vmatpush.bf16.msra.mxu0 %v5981
      %6708 = vmatpush.bf16.msra.mxu0 %v5979
      %6709 = vmatpush.bf16.msra.mxu0 %v5977
      %6710 = vmatpush.bf16.msra.mxu0 %v5975
      %6711 = vmatmul.bf16.gmra.mxu0 %v5398
      %v6712 = vpop.f32.mrf.mxu0
      %v6713 = vadd.f32 %v5097, %v6712
      %v6714 = vpop.f32.mrf.mxu0
      %v6715 = vadd.f32 %v5102, %v6714
      %6716 = vmatmul.bf16.gmra.mxu0 %v5407
      %v6717 = vpop.f32.mrf.mxu0
      %v6718 = vadd.f32 %v5107, %v6717
      %v6719 = vpop.f32.mrf.mxu0
      %v6720 = vadd.f32 %v5112, %v6719
      %6721 = vmatmul.bf16.gmra.mxu0 %v5416
      %v6722 = vpop.f32.mrf.mxu0
      %v6723 = vadd.f32 %v5117, %v6722
      %v6724 = vpop.f32.mrf.mxu0
      %v6725 = vadd.f32 %v5122, %v6724
      %6726 = vmatmul.bf16.gmra.mxu0 %v5425
      %v6727 = vpop.f32.mrf.mxu0
      %v6728 = vadd.f32 %v5127, %v6727
      %v6729 = vpop.f32.mrf.mxu0
      %v6730 = vadd.f32 %v5132, %v6729
      %6731 = vmatmul.bf16.gmra.mxu0 %v5434
      %v6732 = vpop.f32.mrf.mxu0
      %v6733 = vadd.f32 %v5137, %v6732
      %v6734 = vpop.f32.mrf.mxu0
      %v6735 = vadd.f32 %v5142, %v6734
      %6736 = vmatmul.bf16.gmra.mxu0 %v5443
      %v6737 = vpop.f32.mrf.mxu0
      %v6738 = vadd.f32 %v5147, %v6737
      %v6739 = vpop.f32.mrf.mxu0
      %v6740 = vadd.f32 %v5152, %v6739
      %6741 = vmatmul.bf16.gmra.mxu0 %v5452
      %v6742 = vpop.f32.mrf.mxu0
      %v6743 = vadd.f32 %v5157, %v6742
      %v6744 = vpop.f32.mrf.mxu0
      %v6745 = vadd.f32 %v5162, %v6744
      %6746 = vmatmul.bf16.gmra.mxu0 %v5461
      %v6747 = vpop.f32.mrf.mxu0
      %v6748 = vadd.f32 %v5167, %v6747
      %v6749 = vpop.f32.mrf.mxu0
      %v6750 = vadd.f32 %v5172, %v6749
      %6751 = vdwg.mxu0
      %6752 = vmatpush.bf16.msra.mxu0 %v6005
      %6753 = vmatpush.bf16.msra.mxu0 %v6003
      %6754 = vmatpush.bf16.msra.mxu0 %v6001
      %6755 = vmatpush.bf16.msra.mxu0 %v5999
      %6756 = vmatpush.bf16.msra.mxu0 %v5997
      %6757 = vmatpush.bf16.msra.mxu0 %v5995
      %6758 = vmatpush.bf16.msra.mxu0 %v5993
      %6759 = vmatpush.bf16.msra.mxu0 %v5991
      %6760 = vmatmul.bf16.gmra.mxu0 %v5399
      %v6761 = vpop.f32.mrf.mxu0
      %v6762 = vadd.f32 %v6713, %v6761
      %v6763 = vpop.f32.mrf.mxu0
      %v6764 = vadd.f32 %v6715, %v6763
      %6765 = vmatmul.bf16.gmra.mxu0 %v5408
      %v6766 = vpop.f32.mrf.mxu0
      %v6767 = vadd.f32 %v6718, %v6766
      %v6768 = vpop.f32.mrf.mxu0
      %v6769 = vadd.f32 %v6720, %v6768
      %6770 = vmatmul.bf16.gmra.mxu0 %v5417
      %v6771 = vpop.f32.mrf.mxu0
      %v6772 = vadd.f32 %v6723, %v6771
      %v6773 = vpop.f32.mrf.mxu0
      %v6774 = vadd.f32 %v6725, %v6773
      %6775 = vmatmul.bf16.gmra.mxu0 %v5426
      %v6776 = vpop.f32.mrf.mxu0
      %v6777 = vadd.f32 %v6728, %v6776
      %v6778 = vpop.f32.mrf.mxu0
      %v6779 = vadd.f32 %v6730, %v6778
      %6780 = vmatmul.bf16.gmra.mxu0 %v5435
      %v6781 = vpop.f32.mrf.mxu0
      %v6782 = vadd.f32 %v6733, %v6781
      %v6783 = vpop.f32.mrf.mxu0
      %v6784 = vadd.f32 %v6735, %v6783
      %6785 = vmatmul.bf16.gmra.mxu0 %v5444
      %v6786 = vpop.f32.mrf.mxu0
      %v6787 = vadd.f32 %v6738, %v6786
      %v6788 = vpop.f32.mrf.mxu0
      %v6789 = vadd.f32 %v6740, %v6788
      %6790 = vmatmul.bf16.gmra.mxu0 %v5453
      %v6791 = vpop.f32.mrf.mxu0
      %v6792 = vadd.f32 %v6743, %v6791
      %v6793 = vpop.f32.mrf.mxu0
      %v6794 = vadd.f32 %v6745, %v6793
      %6795 = vmatmul.bf16.gmra.mxu0 %v5462
      %v6796 = vpop.f32.mrf.mxu0
      %v6797 = vadd.f32 %v6748, %v6796
      %v6798 = vpop.f32.mrf.mxu0
      %v6799 = vadd.f32 %v6750, %v6798
      %6800 = vdwg.mxu0
      %6801 = vmatpush.bf16.msra.mxu0 %v6021
      %6802 = vmatpush.bf16.msra.mxu0 %v6019
      %6803 = vmatpush.bf16.msra.mxu0 %v6017
      %6804 = vmatpush.bf16.msra.mxu0 %v6015
      %6805 = vmatpush.bf16.msra.mxu0 %v6013
      %6806 = vmatpush.bf16.msra.mxu0 %v6011
      %6807 = vmatpush.bf16.msra.mxu0 %v6009
      %6808 = vmatpush.bf16.msra.mxu0 %v6007
      %6809 = vmatmul.bf16.gmra.mxu0 %v5400
      %v6810 = vpop.f32.mrf.mxu0
      %v6811 = vadd.f32 %v6762, %v6810
      %v6812 = vpop.f32.mrf.mxu0
      %v6813 = vadd.f32 %v6764, %v6812
      %6814 = vmatmul.bf16.gmra.mxu0 %v5409
      %v6815 = vpop.f32.mrf.mxu0
      %v6816 = vadd.f32 %v6767, %v6815
      %v6817 = vpop.f32.mrf.mxu0
      %v6818 = vadd.f32 %v6769, %v6817
      %6819 = vmatmul.bf16.gmra.mxu0 %v5418
      %v6820 = vpop.f32.mrf.mxu0
      %v6821 = vadd.f32 %v6772, %v6820
      %v6822 = vpop.f32.mrf.mxu0
      %v6823 = vadd.f32 %v6774, %v6822
      %6824 = vmatmul.bf16.gmra.mxu0 %v5427
      %v6825 = vpop.f32.mrf.mxu0
      %v6826 = vadd.f32 %v6777, %v6825
      %v6827 = vpop.f32.mrf.mxu0
      %v6828 = vadd.f32 %v6779, %v6827
      %6829 = vmatmul.bf16.gmra.mxu0 %v5436
      %v6830 = vpop.f32.mrf.mxu0
      %v6831 = vadd.f32 %v6782, %v6830
      %v6832 = vpop.f32.mrf.mxu0
      %v6833 = vadd.f32 %v6784, %v6832
      %6834 = vmatmul.bf16.gmra.mxu0 %v5445
      %v6835 = vpop.f32.mrf.mxu0
      %v6836 = vadd.f32 %v6787, %v6835
      %v6837 = vpop.f32.mrf.mxu0
      %v6838 = vadd.f32 %v6789, %v6837
      %6839 = vmatmul.bf16.gmra.mxu0 %v5454
      %v6840 = vpop.f32.mrf.mxu0
      %v6841 = vadd.f32 %v6792, %v6840
      %v6842 = vpop.f32.mrf.mxu0
      %v6843 = vadd.f32 %v6794, %v6842
      %6844 = vmatmul.bf16.gmra.mxu0 %v5463
      %v6845 = vpop.f32.mrf.mxu0
      %v6846 = vadd.f32 %v6797, %v6845
      %v6847 = vpop.f32.mrf.mxu0
      %v6848 = vadd.f32 %v6799, %v6847
      %6849 = vdwg.mxu0
      %6850 = vmatpush.bf16.msra.mxu0 %v6037
      %6851 = vmatpush.bf16.msra.mxu0 %v6035
      %6852 = vmatpush.bf16.msra.mxu0 %v6033
      %6853 = vmatpush.bf16.msra.mxu0 %v6031
      %6854 = vmatpush.bf16.msra.mxu0 %v6029
      %6855 = vmatpush.bf16.msra.mxu0 %v6027
      %6856 = vmatpush.bf16.msra.mxu0 %v6025
      %6857 = vmatpush.bf16.msra.mxu0 %v6023
      %6858 = vmatmul.bf16.gmra.mxu0 %v5401
      %v6859 = vpop.f32.mrf.mxu0
      %v6860 = vadd.f32 %v6811, %v6859
      %v6861 = vpop.f32.mrf.mxu0
      %v6862 = vadd.f32 %v6813, %v6861
      %6863 = vmatmul.bf16.gmra.mxu0 %v5410
      %v6864 = vpop.f32.mrf.mxu0
      %v6865 = vadd.f32 %v6816, %v6864
      %v6866 = vpop.f32.mrf.mxu0
      %v6867 = vadd.f32 %v6818, %v6866
      %6868 = vmatmul.bf16.gmra.mxu0 %v5419
      %v6869 = vpop.f32.mrf.mxu0
      %v6870 = vadd.f32 %v6821, %v6869
      %v6871 = vpop.f32.mrf.mxu0
      %v6872 = vadd.f32 %v6823, %v6871
      %6873 = vmatmul.bf16.gmra.mxu0 %v5428
      %v6874 = vpop.f32.mrf.mxu0
      %v6875 = vadd.f32 %v6826, %v6874
      %v6876 = vpop.f32.mrf.mxu0
      %v6877 = vadd.f32 %v6828, %v6876
      %6878 = vmatmul.bf16.gmra.mxu0 %v5437
      %v6879 = vpop.f32.mrf.mxu0
      %v6880 = vadd.f32 %v6831, %v6879
      %v6881 = vpop.f32.mrf.mxu0
      %v6882 = vadd.f32 %v6833, %v6881
      %6883 = vmatmul.bf16.gmra.mxu0 %v5446
      %v6884 = vpop.f32.mrf.mxu0
      %v6885 = vadd.f32 %v6836, %v6884
      %v6886 = vpop.f32.mrf.mxu0
      %v6887 = vadd.f32 %v6838, %v6886
      %6888 = vmatmul.bf16.gmra.mxu0 %v5455
      %v6889 = vpop.f32.mrf.mxu0
      %v6890 = vadd.f32 %v6841, %v6889
      %v6891 = vpop.f32.mrf.mxu0
      %v6892 = vadd.f32 %v6843, %v6891
      %6893 = vmatmul.bf16.gmra.mxu0 %v5464
      %v6894 = vpop.f32.mrf.mxu0
      %v6895 = vadd.f32 %v6846, %v6894
      %v6896 = vpop.f32.mrf.mxu0
      %v6897 = vadd.f32 %v6848, %v6896
      %6898 = vdwg.mxu0
      %6899 = vmatpush.bf16.msra.mxu0 %v6053
      %6900 = vmatpush.bf16.msra.mxu0 %v6051
      %6901 = vmatpush.bf16.msra.mxu0 %v6049
      %6902 = vmatpush.bf16.msra.mxu0 %v6047
      %6903 = vmatpush.bf16.msra.mxu0 %v6045
      %6904 = vmatpush.bf16.msra.mxu0 %v6043
      %6905 = vmatpush.bf16.msra.mxu0 %v6041
      %6906 = vmatpush.bf16.msra.mxu0 %v6039
      %6907 = vmatmul.bf16.gmra.mxu0 %v5402
      %v6908 = vpop.f32.mrf.mxu0
      %v6909 = vadd.f32 %v6860, %v6908
      %v6910 = vpop.f32.mrf.mxu0
      %v6911 = vadd.f32 %v6862, %v6910
      %6912 = vmatmul.bf16.gmra.mxu0 %v5411
      %v6913 = vpop.f32.mrf.mxu0
      %v6914 = vadd.f32 %v6865, %v6913
      %v6915 = vpop.f32.mrf.mxu0
      %v6916 = vadd.f32 %v6867, %v6915
      %6917 = vmatmul.bf16.gmra.mxu0 %v5420
      %v6918 = vpop.f32.mrf.mxu0
      %v6919 = vadd.f32 %v6870, %v6918
      %v6920 = vpop.f32.mrf.mxu0
      %v6921 = vadd.f32 %v6872, %v6920
      %6922 = vmatmul.bf16.gmra.mxu0 %v5429
      %v6923 = vpop.f32.mrf.mxu0
      %v6924 = vadd.f32 %v6875, %v6923
      %v6925 = vpop.f32.mrf.mxu0
      %v6926 = vadd.f32 %v6877, %v6925
      %6927 = vmatmul.bf16.gmra.mxu0 %v5438
      %v6928 = vpop.f32.mrf.mxu0
      %v6929 = vadd.f32 %v6880, %v6928
      %v6930 = vpop.f32.mrf.mxu0
      %v6931 = vadd.f32 %v6882, %v6930
      %6932 = vmatmul.bf16.gmra.mxu0 %v5447
      %v6933 = vpop.f32.mrf.mxu0
      %v6934 = vadd.f32 %v6885, %v6933
      %v6935 = vpop.f32.mrf.mxu0
      %v6936 = vadd.f32 %v6887, %v6935
      %6937 = vmatmul.bf16.gmra.mxu0 %v5456
      %v6938 = vpop.f32.mrf.mxu0
      %v6939 = vadd.f32 %v6890, %v6938
      %v6940 = vpop.f32.mrf.mxu0
      %v6941 = vadd.f32 %v6892, %v6940
      %6942 = vmatmul.bf16.gmra.mxu0 %v5465
      %v6943 = vpop.f32.mrf.mxu0
      %v6944 = vadd.f32 %v6895, %v6943
      %v6945 = vpop.f32.mrf.mxu0
      %v6946 = vadd.f32 %v6897, %v6945
      %6947 = vdwg.mxu0
      %6948 = vmatpush.bf16.msra.mxu0 %v6069
      %6949 = vmatpush.bf16.msra.mxu0 %v6067
      %6950 = vmatpush.bf16.msra.mxu0 %v6065
      %6951 = vmatpush.bf16.msra.mxu0 %v6063
      %6952 = vmatpush.bf16.msra.mxu0 %v6061
      %6953 = vmatpush.bf16.msra.mxu0 %v6059
      %6954 = vmatpush.bf16.msra.mxu0 %v6057
      %6955 = vmatpush.bf16.msra.mxu0 %v6055
      %6956 = vmatmul.bf16.gmra.mxu0 %v5403
      %v6957 = vpop.f32.mrf.mxu0
      %v6958 = vadd.f32 %v6909, %v6957
      %v6959 = vpop.f32.mrf.mxu0
      %v6960 = vadd.f32 %v6911, %v6959
      %6961 = vmatmul.bf16.gmra.mxu0 %v5412
      %v6962 = vpop.f32.mrf.mxu0
      %v6963 = vadd.f32 %v6914, %v6962
      %v6964 = vpop.f32.mrf.mxu0
      %v6965 = vadd.f32 %v6916, %v6964
      %6966 = vmatmul.bf16.gmra.mxu0 %v5421
      %v6967 = vpop.f32.mrf.mxu0
      %v6968 = vadd.f32 %v6919, %v6967
      %v6969 = vpop.f32.mrf.mxu0
      %v6970 = vadd.f32 %v6921, %v6969
      %6971 = vmatmul.bf16.gmra.mxu0 %v5430
      %v6972 = vpop.f32.mrf.mxu0
      %v6973 = vadd.f32 %v6924, %v6972
      %v6974 = vpop.f32.mrf.mxu0
      %v6975 = vadd.f32 %v6926, %v6974
      %6976 = vmatmul.bf16.gmra.mxu0 %v5439
      %v6977 = vpop.f32.mrf.mxu0
      %v6978 = vadd.f32 %v6929, %v6977
      %v6979 = vpop.f32.mrf.mxu0
      %v6980 = vadd.f32 %v6931, %v6979
      %6981 = vmatmul.bf16.gmra.mxu0 %v5448
      %v6982 = vpop.f32.mrf.mxu0
      %v6983 = vadd.f32 %v6934, %v6982
      %v6984 = vpop.f32.mrf.mxu0
      %v6985 = vadd.f32 %v6936, %v6984
      %6986 = vmatmul.bf16.gmra.mxu0 %v5457
      %v6987 = vpop.f32.mrf.mxu0
      %v6988 = vadd.f32 %v6939, %v6987
      %v6989 = vpop.f32.mrf.mxu0
      %v6990 = vadd.f32 %v6941, %v6989
      %6991 = vmatmul.bf16.gmra.mxu0 %v5466
      %v6992 = vpop.f32.mrf.mxu0
      %v6993 = vadd.f32 %v6944, %v6992
      %v6994 = vpop.f32.mrf.mxu0
      %v6995 = vadd.f32 %v6946, %v6994
      %6996 = vdwg.mxu0
      %6997 = vmatpush.bf16.msra.mxu0 %v6085
      %6998 = vmatpush.bf16.msra.mxu0 %v6083
      %6999 = vmatpush.bf16.msra.mxu0 %v6081
      %7000 = vmatpush.bf16.msra.mxu0 %v6079
      %7001 = vmatpush.bf16.msra.mxu0 %v6077
      %7002 = vmatpush.bf16.msra.mxu0 %v6075
      %7003 = vmatpush.bf16.msra.mxu0 %v6073
      %7004 = vmatpush.bf16.msra.mxu0 %v6071
      %7005 = vmatmul.bf16.gmra.mxu0 %v5404
      %v7006 = vpop.f32.mrf.mxu0
      %v7007 = vadd.f32 %v6958, %v7006
      %v7008 = vpop.f32.mrf.mxu0
      %v7009 = vadd.f32 %v6960, %v7008
      %7010 = vmatmul.bf16.gmra.mxu0 %v5413
      %v7011 = vpop.f32.mrf.mxu0
      %v7012 = vadd.f32 %v6963, %v7011
      %v7013 = vpop.f32.mrf.mxu0
      %v7014 = vadd.f32 %v6965, %v7013
      %7015 = vmatmul.bf16.gmra.mxu0 %v5422
      %v7016 = vpop.f32.mrf.mxu0
      %v7017 = vadd.f32 %v6968, %v7016
      %v7018 = vpop.f32.mrf.mxu0
      %v7019 = vadd.f32 %v6970, %v7018
      %7020 = vmatmul.bf16.gmra.mxu0 %v5431
      %v7021 = vpop.f32.mrf.mxu0
      %v7022 = vadd.f32 %v6973, %v7021
      %v7023 = vpop.f32.mrf.mxu0
      %v7024 = vadd.f32 %v6975, %v7023
      %7025 = vmatmul.bf16.gmra.mxu0 %v5440
      %v7026 = vpop.f32.mrf.mxu0
      %v7027 = vadd.f32 %v6978, %v7026
      %v7028 = vpop.f32.mrf.mxu0
      %v7029 = vadd.f32 %v6980, %v7028
      %7030 = vmatmul.bf16.gmra.mxu0 %v5449
      %v7031 = vpop.f32.mrf.mxu0
      %v7032 = vadd.f32 %v6983, %v7031
      %v7033 = vpop.f32.mrf.mxu0
      %v7034 = vadd.f32 %v6985, %v7033
      %7035 = vmatmul.bf16.gmra.mxu0 %v5458
      %v7036 = vpop.f32.mrf.mxu0
      %v7037 = vadd.f32 %v6988, %v7036
      %v7038 = vpop.f32.mrf.mxu0
      %v7039 = vadd.f32 %v6990, %v7038
      %7040 = vmatmul.bf16.gmra.mxu0 %v5467
      %v7041 = vpop.f32.mrf.mxu0
      %v7042 = vadd.f32 %v6993, %v7041
      %v7043 = vpop.f32.mrf.mxu0
      %v7044 = vadd.f32 %v6995, %v7043
      %7045 = vdwg.mxu0
      %7046 = vmatpush.bf16.msra.mxu0 %v6101
      %7047 = vmatpush.bf16.msra.mxu0 %v6099
      %7048 = vmatpush.bf16.msra.mxu0 %v6097
      %7049 = vmatpush.bf16.msra.mxu0 %v6095
      %7050 = vmatpush.bf16.msra.mxu0 %v6093
      %7051 = vmatpush.bf16.msra.mxu0 %v6091
      %7052 = vmatpush.bf16.msra.mxu0 %v6089
      %7053 = vmatpush.bf16.msra.mxu0 %v6087
      %7054 = vmatmul.bf16.gmra.mxu0 %v5405
      %v7055 = vpop.f32.mrf.mxu0
      %v7056 = vadd.f32 %v7007, %v7055
      %v7057 = vpop.f32.mrf.mxu0
      %v7058 = vadd.f32 %v7009, %v7057
      %7059 = vmatmul.bf16.gmra.mxu0 %v5414
      %v7060 = vpop.f32.mrf.mxu0
      %v7061 = vadd.f32 %v7012, %v7060
      %v7062 = vpop.f32.mrf.mxu0
      %v7063 = vadd.f32 %v7014, %v7062
      %7064 = vmatmul.bf16.gmra.mxu0 %v5423
      %v7065 = vpop.f32.mrf.mxu0
      %v7066 = vadd.f32 %v7017, %v7065
      %v7067 = vpop.f32.mrf.mxu0
      %v7068 = vadd.f32 %v7019, %v7067
      %7069 = vmatmul.bf16.gmra.mxu0 %v5432
      %v7070 = vpop.f32.mrf.mxu0
      %v7071 = vadd.f32 %v7022, %v7070
      %v7072 = vpop.f32.mrf.mxu0
      %v7073 = vadd.f32 %v7024, %v7072
      %7074 = vmatmul.bf16.gmra.mxu0 %v5441
      %v7075 = vpop.f32.mrf.mxu0
      %v7076 = vadd.f32 %v7027, %v7075
      %v7077 = vpop.f32.mrf.mxu0
      %v7078 = vadd.f32 %v7029, %v7077
      %7079 = vmatmul.bf16.gmra.mxu0 %v5450
      %v7080 = vpop.f32.mrf.mxu0
      %v7081 = vadd.f32 %v7032, %v7080
      %v7082 = vpop.f32.mrf.mxu0
      %v7083 = vadd.f32 %v7034, %v7082
      %7084 = vmatmul.bf16.gmra.mxu0 %v5459
      %v7085 = vpop.f32.mrf.mxu0
      %v7086 = vadd.f32 %v7037, %v7085
      %v7087 = vpop.f32.mrf.mxu0
      %v7088 = vadd.f32 %v7039, %v7087
      %7089 = vmatmul.bf16.gmra.mxu0 %v5468
      %v7090 = vpop.f32.mrf.mxu0
      %v7091 = vadd.f32 %v7042, %v7090
      %v7092 = vpop.f32.mrf.mxu0
      %v7093 = vadd.f32 %v7044, %v7092
      %7094 = vdwg.mxu0
      %7095 = vmatpush.bf16.msra.mxu0 %v6117
      %7096 = vmatpush.bf16.msra.mxu0 %v6115
      %7097 = vmatpush.bf16.msra.mxu0 %v6113
      %7098 = vmatpush.bf16.msra.mxu0 %v6111
      %7099 = vmatpush.bf16.msra.mxu0 %v6109
      %7100 = vmatpush.bf16.msra.mxu0 %v6107
      %7101 = vmatpush.bf16.msra.mxu0 %v6105
      %7102 = vmatpush.bf16.msra.mxu0 %v6103
      %7103 = vmatmul.bf16.gmra.mxu0 %v5406
      %v7104 = vpop.f32.mrf.mxu0
      %v7105 = vadd.f32 %v7056, %v7104
      %v7106 = vpop.f32.mrf.mxu0
      %v7107 = vadd.f32 %v7058, %v7106
      %7108 = vmatmul.bf16.gmra.mxu0 %v5415
      %v7109 = vpop.f32.mrf.mxu0
      %v7110 = vadd.f32 %v7061, %v7109
      %v7111 = vpop.f32.mrf.mxu0
      %v7112 = vadd.f32 %v7063, %v7111
      %7113 = vmatmul.bf16.gmra.mxu0 %v5424
      %v7114 = vpop.f32.mrf.mxu0
      %v7115 = vadd.f32 %v7066, %v7114
      %v7116 = vpop.f32.mrf.mxu0
      %v7117 = vadd.f32 %v7068, %v7116
      %7118 = vmatmul.bf16.gmra.mxu0 %v5433
      %v7119 = vpop.f32.mrf.mxu0
      %v7120 = vadd.f32 %v7071, %v7119
      %v7121 = vpop.f32.mrf.mxu0
      %v7122 = vadd.f32 %v7073, %v7121
      %7123 = vmatmul.bf16.gmra.mxu0 %v5442
      %v7124 = vpop.f32.mrf.mxu0
      %v7125 = vadd.f32 %v7076, %v7124
      %v7126 = vpop.f32.mrf.mxu0
      %v7127 = vadd.f32 %v7078, %v7126
      %7128 = vmatmul.bf16.gmra.mxu0 %v5451
      %v7129 = vpop.f32.mrf.mxu0
      %v7130 = vadd.f32 %v7081, %v7129
      %v7131 = vpop.f32.mrf.mxu0
      %v7132 = vadd.f32 %v7083, %v7131
      %7133 = vmatmul.bf16.gmra.mxu0 %v5460
      %v7134 = vpop.f32.mrf.mxu0
      %v7135 = vadd.f32 %v7086, %v7134
      %v7136 = vpop.f32.mrf.mxu0
      %v7137 = vadd.f32 %v7088, %v7136
      %7138 = vmatmul.bf16.gmra.mxu0 %v5469
      %v7139 = vpop.f32.mrf.mxu0
      %v7140 = vadd.f32 %v7091, %v7139
      %v7141 = vpop.f32.mrf.mxu0
      %v7142 = vadd.f32 %v7093, %v7141
      %7143 = vdwg.mxu0
      %v7144 = vmax.f32 %v6664, 0.0
      %v7145 = vmax.f32 %v7105, 0.0
      %v7146 = vmax.f32 %v6666, 0.0
      %v7147 = vmax.f32 %v7107, 0.0
      %v7148 = vmax.f32 %v6669, 0.0
      %v7149 = vmax.f32 %v7110, 0.0
      %v7150 = vmax.f32 %v6671, 0.0
      %v7151 = vmax.f32 %v7112, 0.0
      %v7152 = vmax.f32 %v6674, 0.0
      %v7153 = vmax.f32 %v7115, 0.0
      %v7154 = vmax.f32 %v6676, 0.0
      %v7155 = vmax.f32 %v7117, 0.0
      %v7156 = vmax.f32 %v6679, 0.0
      %v7157 = vmax.f32 %v7120, 0.0
      %v7158 = vmax.f32 %v6681, 0.0
      %v7159 = vmax.f32 %v7122, 0.0
      %v7160 = vmax.f32 %v6684, 0.0
      %v7161 = vmax.f32 %v7125, 0.0
      %v7162 = vmax.f32 %v6686, 0.0
      %v7163 = vmax.f32 %v7127, 0.0
      %v7164 = vmax.f32 %v6689, 0.0
      %v7165 = vmax.f32 %v7130, 0.0
      %v7166 = vmax.f32 %v6691, 0.0
      %v7167 = vmax.f32 %v7132, 0.0
      %v7168 = vmax.f32 %v6694, 0.0
      %v7169 = vmax.f32 %v7135, 0.0
      %v7170 = vmax.f32 %v6696, 0.0
      %v7171 = vmax.f32 %v7137, 0.0
      %v7172 = vmax.f32 %v6699, 0.0
      %v7173 = vmax.f32 %v7140, 0.0
      %v7174 = vmax.f32 %v6701, 0.0
      %v7175 = vmax.f32 %v7142, 0.0
      %7176 = vrot.lane.b32.xlu0 %v7144, 17
      %v7177 = vpop.permute.xlu0 %7176
      %7178 = vrot.lane.b32.xlu0 %v7146, 17
      %v7179 = vpop.permute.xlu0 %7178
      %7180 = vrot.lane.b32.xlu0 %v7148, 17
      %v7181 = vpop.permute.xlu0 %7180
      %7182 = vrot.lane.b32.xlu0 %v7150, 17
      %v7183 = vpop.permute.xlu0 %7182
      %7184 = vrot.lane.b32.xlu0 %v7152, 17
      %v7185 = vpop.permute.xlu0 %7184
      %7186 = vrot.lane.b32.xlu0 %v7154, 17
      %v7187 = vpop.permute.xlu0 %7186
      %7188 = vrot.lane.b32.xlu0 %v7156, 17
      %v7189 = vpop.permute.xlu0 %7188
      %7190 = vrot.lane.b32.xlu0 %v7158, 17
      %v7191 = vpop.permute.xlu0 %7190
      %7192 = vrot.lane.b32.xlu0 %v7160, 17
      %v7193 = vpop.permute.xlu0 %7192
      %7194 = vrot.lane.b32.xlu0 %v7162, 17
      %v7195 = vpop.permute.xlu0 %7194
      %7196 = vrot.lane.b32.xlu0 %v7164, 17
      %v7197 = vpop.permute.xlu0 %7196
      %7198 = vrot.lane.b32.xlu0 %v7166, 17
      %v7199 = vpop.permute.xlu0 %7198
      %7200 = vrot.lane.b32.xlu0 %v7168, 17
      %v7201 = vpop.permute.xlu0 %7200
      %7202 = vrot.lane.b32.xlu0 %v7170, 17
      %v7203 = vpop.permute.xlu0 %7202
      %7204 = vrot.lane.b32.xlu0 %v7172, 17
      %v7205 = vpop.permute.xlu0 %7204
      %7206 = vrot.lane.b32.xlu0 %v7174, 17
      %v7207 = vpop.permute.xlu0 %7206
      %7208 = vrot.lane.b32.xlu0 %v7145, 17
      %v7209 = vpop.permute.xlu0 %7208
      %7210 = vrot.lane.b32.xlu0 %v7147, 17
      %v7211 = vpop.permute.xlu0 %7210
      %7212 = vrot.lane.b32.xlu0 %v7149, 17
      %v7213 = vpop.permute.xlu0 %7212
      %7214 = vrot.lane.b32.xlu0 %v7151, 17
      %v7215 = vpop.permute.xlu0 %7214
      %7216 = vrot.lane.b32.xlu0 %v7153, 17
      %v7217 = vpop.permute.xlu0 %7216
      %7218 = vrot.lane.b32.xlu0 %v7155, 17
      %v7219 = vpop.permute.xlu0 %7218
      %7220 = vrot.lane.b32.xlu0 %v7157, 17
      %v7221 = vpop.permute.xlu0 %7220
      %7222 = vrot.lane.b32.xlu0 %v7159, 17
      %v7223 = vpop.permute.xlu0 %7222
      %7224 = vrot.lane.b32.xlu0 %v7161, 17
      %v7225 = vpop.permute.xlu0 %7224
      %7226 = vrot.lane.b32.xlu0 %v7163, 17
      %v7227 = vpop.permute.xlu0 %7226
      %7228 = vrot.lane.b32.xlu0 %v7165, 17
      %v7229 = vpop.permute.xlu0 %7228
      %7230 = vrot.lane.b32.xlu0 %v7167, 17
      %v7231 = vpop.permute.xlu0 %7230
      %7232 = vrot.lane.b32.xlu0 %v7169, 17
      %v7233 = vpop.permute.xlu0 %7232
      %7234 = vrot.lane.b32.xlu0 %v7171, 17
      %v7235 = vpop.permute.xlu0 %7234
      %7236 = vrot.lane.b32.xlu0 %v7173, 17
      %v7237 = vpop.permute.xlu0 %7236
      %7238 = vrot.lane.b32.xlu0 %v7175, 17
      %v7239 = vpop.permute.xlu0 %7238
      %v7240 = vsel %vm428, %v7177, %v7209
      %v7241 = vsel %vm428, %v7179, %v7211
      %v7242 = vsel %vm428, %v7181, %v7213
      %v7243 = vsel %vm428, %v7183, %v7215
      %v7244 = vsel %vm428, %v7185, %v7217
      %v7245 = vsel %vm428, %v7187, %v7219
      %v7246 = vsel %vm428, %v7189, %v7221
      %v7247 = vsel %vm428, %v7191, %v7223
      %v7248 = vsel %vm428, %v7193, %v7225
      %v7249 = vsel %vm428, %v7195, %v7227
      %v7250 = vsel %vm428, %v7197, %v7229
      %v7251 = vsel %vm428, %v7199, %v7231
      %v7252 = vsel %vm428, %v7201, %v7233
      %v7253 = vsel %vm428, %v7203, %v7235
      %v7254 = vsel %vm428, %v7205, %v7237
      %v7255 = vsel %vm428, %v7207, %v7239
      %v7256 = vsel %vm428, %v7209, %v7177
      %v7257 = vsel %vm428, %v7211, %v7179
      %v7258 = vsel %vm428, %v7213, %v7181
      %v7259 = vsel %vm428, %v7215, %v7183
      %v7260 = vsel %vm428, %v7217, %v7185
      %v7261 = vsel %vm428, %v7219, %v7187
      %v7262 = vsel %vm428, %v7221, %v7189
      %v7263 = vsel %vm428, %v7223, %v7191
      %v7264 = vsel %vm428, %v7225, %v7193
      %v7265 = vsel %vm428, %v7227, %v7195
      %v7266 = vsel %vm428, %v7229, %v7197
      %v7267 = vsel %vm428, %v7231, %v7199
      %v7268 = vsel %vm428, %v7233, %v7201
      %v7269 = vsel %vm428, %v7235, %v7203
      %v7270 = vsel %vm428, %v7237, %v7205
      %v7271 = vsel %vm428, %v7239, %v7207
      %v7272 = vld [vmem:[%s8] sm:$0xf]
      %v7273 = vpack.c.bf16 %v7257, %v7256
      %v7274 = vpack.c.bf16 %v7241, %v7240
      %v7275 = vpack.c.bf16 %v7259, %v7258
      %v7276 = vpack.c.bf16 %v7243, %v7242
      %v7277 = vpack.c.bf16 %v7261, %v7260
      %v7278 = vpack.c.bf16 %v7245, %v7244
      %v7279 = vpack.c.bf16 %v7263, %v7262
      %v7280 = vpack.c.bf16 %v7247, %v7246
      %v7281 = vpack.c.bf16 %v7265, %v7264
      %v7282 = vpack.c.bf16 %v7249, %v7248
      %v7283 = vpack.c.bf16 %v7267, %v7266
      %v7284 = vpack.c.bf16 %v7251, %v7250
      %v7285 = vpack.c.bf16 %v7269, %v7268
      %v7286 = vpack.c.bf16 %v7253, %v7252
      %v7287 = vpack.c.bf16 %v7271, %v7270
      %v7288 = vpack.c.bf16 %v7255, %v7254
      %7289 = vmatpush.bf16.msra.mxu0 %v7287
      %7290 = vmatpush.bf16.msra.mxu0 %v7285
      %7291 = vmatpush.bf16.msra.mxu0 %v7283
      %7292 = vmatpush.bf16.msra.mxu0 %v7281
      %7293 = vmatpush.bf16.msra.mxu0 %v7279
      %7294 = vmatpush.bf16.msra.mxu0 %v7277
      %7295 = vmatpush.bf16.msra.mxu0 %v7275
      %7296 = vmatpush.bf16.msra.mxu0 %v7273
      %7297 = vmatmul.bf16.gmra.mxu0 %v7272
      %v7298 = vpop.f32.mrf.mxu0
      %v7299 = vadd.f32 0.0, %v7298
      %v7300 = vpop.f32.mrf.mxu0
      %7301 = vdwg.mxu0
      %7302 = vmatpush.bf16.msra.mxu0 %v7288
      %7303 = vmatpush.bf16.msra.mxu0 %v7286
      %7304 = vmatpush.bf16.msra.mxu0 %v7284
      %7305 = vmatpush.bf16.msra.mxu0 %v7282
      %7306 = vmatpush.bf16.msra.mxu0 %v7280
      %7307 = vmatpush.bf16.msra.mxu0 %v7278
      %7308 = vmatpush.bf16.msra.mxu0 %v7276
      %7309 = vmatpush.bf16.msra.mxu0 %v7274
      %7310 = vmatmul.bf16.gmra.mxu0 %v7272
      %v7311 = vpop.f32.mrf.mxu0
      %v7312 = vadd.f32 0.0, %v7311
      %v7313 = vpop.f32.mrf.mxu0
      %7314 = vdwg.mxu0
      %v7315 = vld [vmem:[%s1] ss:$8 sm:$0x3]
      %v7317 = vperm.slane %v7315, 0
      %v7318 = vperm.slane %v7315, 1
      %v7321 = vmul.f32 %v7299, %v7317
      %v7322 = vmul.f32 %v7312, %v7318
      %v7323 = vadd.f32 %v7321, 0.0
      %v7324 = vadd.f32 %v7322, 0.0
      %7325 = vrot.lane.b32.xlu0 %v7144, 16
      %v7326 = vpop.permute.xlu0 %7325
      %7327 = vrot.lane.b32.xlu0 %v7146, 16
      %v7328 = vpop.permute.xlu0 %7327
      %7329 = vrot.lane.b32.xlu0 %v7148, 16
      %v7330 = vpop.permute.xlu0 %7329
      %7331 = vrot.lane.b32.xlu0 %v7150, 16
      %v7332 = vpop.permute.xlu0 %7331
      %7333 = vrot.lane.b32.xlu0 %v7152, 16
      %v7334 = vpop.permute.xlu0 %7333
      %7335 = vrot.lane.b32.xlu0 %v7154, 16
      %v7336 = vpop.permute.xlu0 %7335
      %7337 = vrot.lane.b32.xlu0 %v7156, 16
      %v7338 = vpop.permute.xlu0 %7337
      %7339 = vrot.lane.b32.xlu0 %v7158, 16
      %v7340 = vpop.permute.xlu0 %7339
      %7341 = vrot.lane.b32.xlu0 %v7160, 16
      %v7342 = vpop.permute.xlu0 %7341
      %7343 = vrot.lane.b32.xlu0 %v7162, 16
      %v7344 = vpop.permute.xlu0 %7343
      %7345 = vrot.lane.b32.xlu0 %v7164, 16
      %v7346 = vpop.permute.xlu0 %7345
      %7347 = vrot.lane.b32.xlu0 %v7166, 16
      %v7348 = vpop.permute.xlu0 %7347
      %7349 = vrot.lane.b32.xlu0 %v7168, 16
      %v7350 = vpop.permute.xlu0 %7349
      %7351 = vrot.lane.b32.xlu0 %v7170, 16
      %v7352 = vpop.permute.xlu0 %7351
      %7353 = vrot.lane.b32.xlu0 %v7172, 16
      %v7354 = vpop.permute.xlu0 %7353
      %7355 = vrot.lane.b32.xlu0 %v7174, 16
      %v7356 = vpop.permute.xlu0 %7355
      %7357 = vrot.lane.b32.xlu0 %v7145, 16
      %v7358 = vpop.permute.xlu0 %7357
      %7359 = vrot.lane.b32.xlu0 %v7147, 16
      %v7360 = vpop.permute.xlu0 %7359
      %7361 = vrot.lane.b32.xlu0 %v7149, 16
      %v7362 = vpop.permute.xlu0 %7361
      %7363 = vrot.lane.b32.xlu0 %v7151, 16
      %v7364 = vpop.permute.xlu0 %7363
      %7365 = vrot.lane.b32.xlu0 %v7153, 16
      %v7366 = vpop.permute.xlu0 %7365
      %7367 = vrot.lane.b32.xlu0 %v7155, 16
      %v7368 = vpop.permute.xlu0 %7367
      %7369 = vrot.lane.b32.xlu0 %v7157, 16
      %v7370 = vpop.permute.xlu0 %7369
      %7371 = vrot.lane.b32.xlu0 %v7159, 16
      %v7372 = vpop.permute.xlu0 %7371
      %7373 = vrot.lane.b32.xlu0 %v7161, 16
      %v7374 = vpop.permute.xlu0 %7373
      %7375 = vrot.lane.b32.xlu0 %v7163, 16
      %v7376 = vpop.permute.xlu0 %7375
      %7377 = vrot.lane.b32.xlu0 %v7165, 16
      %v7378 = vpop.permute.xlu0 %7377
      %7379 = vrot.lane.b32.xlu0 %v7167, 16
      %v7380 = vpop.permute.xlu0 %7379
      %7381 = vrot.lane.b32.xlu0 %v7169, 16
      %v7382 = vpop.permute.xlu0 %7381
      %7383 = vrot.lane.b32.xlu0 %v7171, 16
      %v7384 = vpop.permute.xlu0 %7383
      %7385 = vrot.lane.b32.xlu0 %v7173, 16
      %v7386 = vpop.permute.xlu0 %7385
      %7387 = vrot.lane.b32.xlu0 %v7175, 16
      %v7388 = vpop.permute.xlu0 %7387
      %v7389 = vsel %vm450, %v7326, %v7358
      %v7390 = vsel %vm450, %v7328, %v7360
      %v7391 = vsel %vm450, %v7330, %v7362
      %v7392 = vsel %vm450, %v7332, %v7364
      %v7393 = vsel %vm450, %v7334, %v7366
      %v7394 = vsel %vm450, %v7336, %v7368
      %v7395 = vsel %vm450, %v7338, %v7370
      %v7396 = vsel %vm450, %v7340, %v7372
      %v7397 = vsel %vm450, %v7342, %v7374
      %v7398 = vsel %vm450, %v7344, %v7376
      %v7399 = vsel %vm450, %v7346, %v7378
      %v7400 = vsel %vm450, %v7348, %v7380
      %v7401 = vsel %vm450, %v7350, %v7382
      %v7402 = vsel %vm450, %v7352, %v7384
      %v7403 = vsel %vm450, %v7354, %v7386
      %v7404 = vsel %vm450, %v7356, %v7388
      %v7405 = vsel %vm450, %v7358, %v7326
      %v7406 = vsel %vm450, %v7360, %v7328
      %v7407 = vsel %vm450, %v7362, %v7330
      %v7408 = vsel %vm450, %v7364, %v7332
      %v7409 = vsel %vm450, %v7366, %v7334
      %v7410 = vsel %vm450, %v7368, %v7336
      %v7411 = vsel %vm450, %v7370, %v7338
      %v7412 = vsel %vm450, %v7372, %v7340
      %v7413 = vsel %vm450, %v7374, %v7342
      %v7414 = vsel %vm450, %v7376, %v7344
      %v7415 = vsel %vm450, %v7378, %v7346
      %v7416 = vsel %vm450, %v7380, %v7348
      %v7417 = vsel %vm450, %v7382, %v7350
      %v7418 = vsel %vm450, %v7384, %v7352
      %v7419 = vsel %vm450, %v7386, %v7354
      %v7420 = vsel %vm450, %v7388, %v7356
      %s7421 = scalar_lea.vmem %s8, 4
      %v7422 = vld [vmem:[%s7421] sm:$0xf]
      %v7423 = vpack.c.bf16 %v7406, %v7405
      %v7424 = vpack.c.bf16 %v7390, %v7389
      %v7425 = vpack.c.bf16 %v7408, %v7407
      %v7426 = vpack.c.bf16 %v7392, %v7391
      %v7427 = vpack.c.bf16 %v7410, %v7409
      %v7428 = vpack.c.bf16 %v7394, %v7393
      %v7429 = vpack.c.bf16 %v7412, %v7411
      %v7430 = vpack.c.bf16 %v7396, %v7395
      %v7431 = vpack.c.bf16 %v7414, %v7413
      %v7432 = vpack.c.bf16 %v7398, %v7397
      %v7433 = vpack.c.bf16 %v7416, %v7415
      %v7434 = vpack.c.bf16 %v7400, %v7399
      %v7435 = vpack.c.bf16 %v7418, %v7417
      %v7436 = vpack.c.bf16 %v7402, %v7401
      %v7437 = vpack.c.bf16 %v7420, %v7419
      %v7438 = vpack.c.bf16 %v7404, %v7403
      %7439 = vmatpush.bf16.msra.mxu0 %v7437
      %7440 = vmatpush.bf16.msra.mxu0 %v7435
      %7441 = vmatpush.bf16.msra.mxu0 %v7433
      %7442 = vmatpush.bf16.msra.mxu0 %v7431
      %7443 = vmatpush.bf16.msra.mxu0 %v7429
      %7444 = vmatpush.bf16.msra.mxu0 %v7427
      %7445 = vmatpush.bf16.msra.mxu0 %v7425
      %7446 = vmatpush.bf16.msra.mxu0 %v7423
      %7447 = vmatmul.bf16.gmra.mxu0 %v7422
      %v7448 = vpop.f32.mrf.mxu0
      %v7449 = vadd.f32 0.0, %v7448
      %v7450 = vpop.f32.mrf.mxu0
      %7451 = vdwg.mxu0
      %7452 = vmatpush.bf16.msra.mxu0 %v7438
      %7453 = vmatpush.bf16.msra.mxu0 %v7436
      %7454 = vmatpush.bf16.msra.mxu0 %v7434
      %7455 = vmatpush.bf16.msra.mxu0 %v7432
      %7456 = vmatpush.bf16.msra.mxu0 %v7430
      %7457 = vmatpush.bf16.msra.mxu0 %v7428
      %7458 = vmatpush.bf16.msra.mxu0 %v7426
      %7459 = vmatpush.bf16.msra.mxu0 %v7424
      %7460 = vmatmul.bf16.gmra.mxu0 %v7422
      %v7461 = vpop.f32.mrf.mxu0
      %v7462 = vadd.f32 0.0, %v7461
      %v7463 = vpop.f32.mrf.mxu0
      %7464 = vdwg.mxu0
      %v7465 = vld [vmem:[%s453] ss:$8 sm:$0x3]
      %v7467 = vperm.slane %v7465, 0
      %v7468 = vperm.slane %v7465, 1
      %v7471 = vmul.f32 %v7449, %v7467
      %v7472 = vmul.f32 %v7462, %v7468
      %v7473 = vadd.f32 %v7323, %v7471
      %v7474 = vadd.f32 %v7324, %v7472
      %7475 = vrot.lane.b32.xlu0 %v7144, 15
      %v7476 = vpop.permute.xlu0 %7475
      %7477 = vrot.lane.b32.xlu0 %v7146, 15
      %v7478 = vpop.permute.xlu0 %7477
      %7479 = vrot.lane.b32.xlu0 %v7148, 15
      %v7480 = vpop.permute.xlu0 %7479
      %7481 = vrot.lane.b32.xlu0 %v7150, 15
      %v7482 = vpop.permute.xlu0 %7481
      %7483 = vrot.lane.b32.xlu0 %v7152, 15
      %v7484 = vpop.permute.xlu0 %7483
      %7485 = vrot.lane.b32.xlu0 %v7154, 15
      %v7486 = vpop.permute.xlu0 %7485
      %7487 = vrot.lane.b32.xlu0 %v7156, 15
      %v7488 = vpop.permute.xlu0 %7487
      %7489 = vrot.lane.b32.xlu0 %v7158, 15
      %v7490 = vpop.permute.xlu0 %7489
      %7491 = vrot.lane.b32.xlu0 %v7160, 15
      %v7492 = vpop.permute.xlu0 %7491
      %7493 = vrot.lane.b32.xlu0 %v7162, 15
      %v7494 = vpop.permute.xlu0 %7493
      %7495 = vrot.lane.b32.xlu0 %v7164, 15
      %v7496 = vpop.permute.xlu0 %7495
      %7497 = vrot.lane.b32.xlu0 %v7166, 15
      %v7498 = vpop.permute.xlu0 %7497
      %7499 = vrot.lane.b32.xlu0 %v7168, 15
      %v7500 = vpop.permute.xlu0 %7499
      %7501 = vrot.lane.b32.xlu0 %v7170, 15
      %v7502 = vpop.permute.xlu0 %7501
      %7503 = vrot.lane.b32.xlu0 %v7172, 15
      %v7504 = vpop.permute.xlu0 %7503
      %7505 = vrot.lane.b32.xlu0 %v7174, 15
      %v7506 = vpop.permute.xlu0 %7505
      %7507 = vrot.lane.b32.xlu0 %v7145, 15
      %v7508 = vpop.permute.xlu0 %7507
      %7509 = vrot.lane.b32.xlu0 %v7147, 15
      %v7510 = vpop.permute.xlu0 %7509
      %7511 = vrot.lane.b32.xlu0 %v7149, 15
      %v7512 = vpop.permute.xlu0 %7511
      %7513 = vrot.lane.b32.xlu0 %v7151, 15
      %v7514 = vpop.permute.xlu0 %7513
      %7515 = vrot.lane.b32.xlu0 %v7153, 15
      %v7516 = vpop.permute.xlu0 %7515
      %7517 = vrot.lane.b32.xlu0 %v7155, 15
      %v7518 = vpop.permute.xlu0 %7517
      %7519 = vrot.lane.b32.xlu0 %v7157, 15
      %v7520 = vpop.permute.xlu0 %7519
      %7521 = vrot.lane.b32.xlu0 %v7159, 15
      %v7522 = vpop.permute.xlu0 %7521
      %7523 = vrot.lane.b32.xlu0 %v7161, 15
      %v7524 = vpop.permute.xlu0 %7523
      %7525 = vrot.lane.b32.xlu0 %v7163, 15
      %v7526 = vpop.permute.xlu0 %7525
      %7527 = vrot.lane.b32.xlu0 %v7165, 15
      %v7528 = vpop.permute.xlu0 %7527
      %7529 = vrot.lane.b32.xlu0 %v7167, 15
      %v7530 = vpop.permute.xlu0 %7529
      %7531 = vrot.lane.b32.xlu0 %v7169, 15
      %v7532 = vpop.permute.xlu0 %7531
      %7533 = vrot.lane.b32.xlu0 %v7171, 15
      %v7534 = vpop.permute.xlu0 %7533
      %7535 = vrot.lane.b32.xlu0 %v7173, 15
      %v7536 = vpop.permute.xlu0 %7535
      %7537 = vrot.lane.b32.xlu0 %v7175, 15
      %v7538 = vpop.permute.xlu0 %7537
      %v7539 = vsel %vm479, %v7476, %v7508
      %v7540 = vsel %vm479, %v7478, %v7510
      %v7541 = vsel %vm479, %v7480, %v7512
      %v7542 = vsel %vm479, %v7482, %v7514
      %v7543 = vsel %vm479, %v7484, %v7516
      %v7544 = vsel %vm479, %v7486, %v7518
      %v7545 = vsel %vm479, %v7488, %v7520
      %v7546 = vsel %vm479, %v7490, %v7522
      %v7547 = vsel %vm479, %v7492, %v7524
      %v7548 = vsel %vm479, %v7494, %v7526
      %v7549 = vsel %vm479, %v7496, %v7528
      %v7550 = vsel %vm479, %v7498, %v7530
      %v7551 = vsel %vm479, %v7500, %v7532
      %v7552 = vsel %vm479, %v7502, %v7534
      %v7553 = vsel %vm479, %v7504, %v7536
      %v7554 = vsel %vm479, %v7506, %v7538
      %v7555 = vsel %vm479, %v7508, %v7476
      %v7556 = vsel %vm479, %v7510, %v7478
      %v7557 = vsel %vm479, %v7512, %v7480
      %v7558 = vsel %vm479, %v7514, %v7482
      %v7559 = vsel %vm479, %v7516, %v7484
      %v7560 = vsel %vm479, %v7518, %v7486
      %v7561 = vsel %vm479, %v7520, %v7488
      %v7562 = vsel %vm479, %v7522, %v7490
      %v7563 = vsel %vm479, %v7524, %v7492
      %v7564 = vsel %vm479, %v7526, %v7494
      %v7565 = vsel %vm479, %v7528, %v7496
      %v7566 = vsel %vm479, %v7530, %v7498
      %v7567 = vsel %vm479, %v7532, %v7500
      %v7568 = vsel %vm479, %v7534, %v7502
      %v7569 = vsel %vm479, %v7536, %v7504
      %v7570 = vsel %vm479, %v7538, %v7506
      %s7571 = scalar_lea.vmem %s8, 8
      %v7572 = vld [vmem:[%s7571] sm:$0xf]
      %v7573 = vpack.c.bf16 %v7556, %v7555
      %v7574 = vpack.c.bf16 %v7540, %v7539
      %v7575 = vpack.c.bf16 %v7558, %v7557
      %v7576 = vpack.c.bf16 %v7542, %v7541
      %v7577 = vpack.c.bf16 %v7560, %v7559
      %v7578 = vpack.c.bf16 %v7544, %v7543
      %v7579 = vpack.c.bf16 %v7562, %v7561
      %v7580 = vpack.c.bf16 %v7546, %v7545
      %v7581 = vpack.c.bf16 %v7564, %v7563
      %v7582 = vpack.c.bf16 %v7548, %v7547
      %v7583 = vpack.c.bf16 %v7566, %v7565
      %v7584 = vpack.c.bf16 %v7550, %v7549
      %v7585 = vpack.c.bf16 %v7568, %v7567
      %v7586 = vpack.c.bf16 %v7552, %v7551
      %v7587 = vpack.c.bf16 %v7570, %v7569
      %v7588 = vpack.c.bf16 %v7554, %v7553
      %7589 = vmatpush.bf16.msra.mxu0 %v7587
      %7590 = vmatpush.bf16.msra.mxu0 %v7585
      %7591 = vmatpush.bf16.msra.mxu0 %v7583
      %7592 = vmatpush.bf16.msra.mxu0 %v7581
      %7593 = vmatpush.bf16.msra.mxu0 %v7579
      %7594 = vmatpush.bf16.msra.mxu0 %v7577
      %7595 = vmatpush.bf16.msra.mxu0 %v7575
      %7596 = vmatpush.bf16.msra.mxu0 %v7573
      %7597 = vmatmul.bf16.gmra.mxu0 %v7572
      %v7598 = vpop.f32.mrf.mxu0
      %v7599 = vadd.f32 0.0, %v7598
      %v7600 = vpop.f32.mrf.mxu0
      %7601 = vdwg.mxu0
      %7602 = vmatpush.bf16.msra.mxu0 %v7588
      %7603 = vmatpush.bf16.msra.mxu0 %v7586
      %7604 = vmatpush.bf16.msra.mxu0 %v7584
      %7605 = vmatpush.bf16.msra.mxu0 %v7582
      %7606 = vmatpush.bf16.msra.mxu0 %v7580
      %7607 = vmatpush.bf16.msra.mxu0 %v7578
      %7608 = vmatpush.bf16.msra.mxu0 %v7576
      %7609 = vmatpush.bf16.msra.mxu0 %v7574
      %7610 = vmatmul.bf16.gmra.mxu0 %v7572
      %v7611 = vpop.f32.mrf.mxu0
      %v7612 = vadd.f32 0.0, %v7611
      %v7613 = vpop.f32.mrf.mxu0
      %7614 = vdwg.mxu0
      %v7615 = vld [vmem:[%s482] ss:$8 sm:$0x3]
      %v7617 = vperm.slane %v7615, 0
      %v7618 = vperm.slane %v7615, 1
      %v7621 = vmul.f32 %v7599, %v7617
      %v7622 = vmul.f32 %v7612, %v7618
      %v7623 = vadd.f32 %v7473, %v7621
      %v7624 = vadd.f32 %v7474, %v7622
      %7625 = vrot.lane.b32.xlu0 %v7144, 1
      %v7626 = vpop.permute.xlu0 %7625
      %7627 = vrot.lane.b32.xlu0 %v7146, 1
      %v7628 = vpop.permute.xlu0 %7627
      %7629 = vrot.lane.b32.xlu0 %v7148, 1
      %v7630 = vpop.permute.xlu0 %7629
      %7631 = vrot.lane.b32.xlu0 %v7150, 1
      %v7632 = vpop.permute.xlu0 %7631
      %7633 = vrot.lane.b32.xlu0 %v7152, 1
      %v7634 = vpop.permute.xlu0 %7633
      %7635 = vrot.lane.b32.xlu0 %v7154, 1
      %v7636 = vpop.permute.xlu0 %7635
      %7637 = vrot.lane.b32.xlu0 %v7156, 1
      %v7638 = vpop.permute.xlu0 %7637
      %7639 = vrot.lane.b32.xlu0 %v7158, 1
      %v7640 = vpop.permute.xlu0 %7639
      %7641 = vrot.lane.b32.xlu0 %v7160, 1
      %v7642 = vpop.permute.xlu0 %7641
      %7643 = vrot.lane.b32.xlu0 %v7162, 1
      %v7644 = vpop.permute.xlu0 %7643
      %7645 = vrot.lane.b32.xlu0 %v7164, 1
      %v7646 = vpop.permute.xlu0 %7645
      %7647 = vrot.lane.b32.xlu0 %v7166, 1
      %v7648 = vpop.permute.xlu0 %7647
      %7649 = vrot.lane.b32.xlu0 %v7168, 1
      %v7650 = vpop.permute.xlu0 %7649
      %7651 = vrot.lane.b32.xlu0 %v7170, 1
      %v7652 = vpop.permute.xlu0 %7651
      %7653 = vrot.lane.b32.xlu0 %v7172, 1
      %v7654 = vpop.permute.xlu0 %7653
      %7655 = vrot.lane.b32.xlu0 %v7174, 1
      %v7656 = vpop.permute.xlu0 %7655
      %7657 = vrot.lane.b32.xlu0 %v7145, 1
      %v7658 = vpop.permute.xlu0 %7657
      %7659 = vrot.lane.b32.xlu0 %v7147, 1
      %v7660 = vpop.permute.xlu0 %7659
      %7661 = vrot.lane.b32.xlu0 %v7149, 1
      %v7662 = vpop.permute.xlu0 %7661
      %7663 = vrot.lane.b32.xlu0 %v7151, 1
      %v7664 = vpop.permute.xlu0 %7663
      %7665 = vrot.lane.b32.xlu0 %v7153, 1
      %v7666 = vpop.permute.xlu0 %7665
      %7667 = vrot.lane.b32.xlu0 %v7155, 1
      %v7668 = vpop.permute.xlu0 %7667
      %7669 = vrot.lane.b32.xlu0 %v7157, 1
      %v7670 = vpop.permute.xlu0 %7669
      %7671 = vrot.lane.b32.xlu0 %v7159, 1
      %v7672 = vpop.permute.xlu0 %7671
      %7673 = vrot.lane.b32.xlu0 %v7161, 1
      %v7674 = vpop.permute.xlu0 %7673
      %7675 = vrot.lane.b32.xlu0 %v7163, 1
      %v7676 = vpop.permute.xlu0 %7675
      %7677 = vrot.lane.b32.xlu0 %v7165, 1
      %v7678 = vpop.permute.xlu0 %7677
      %7679 = vrot.lane.b32.xlu0 %v7167, 1
      %v7680 = vpop.permute.xlu0 %7679
      %7681 = vrot.lane.b32.xlu0 %v7169, 1
      %v7682 = vpop.permute.xlu0 %7681
      %7683 = vrot.lane.b32.xlu0 %v7171, 1
      %v7684 = vpop.permute.xlu0 %7683
      %7685 = vrot.lane.b32.xlu0 %v7173, 1
      %v7686 = vpop.permute.xlu0 %7685
      %7687 = vrot.lane.b32.xlu0 %v7175, 1
      %v7688 = vpop.permute.xlu0 %7687
      %v7689 = vsel %vm510, %v7626, %v7658
      %v7690 = vsel %vm510, %v7628, %v7660
      %v7691 = vsel %vm510, %v7630, %v7662
      %v7692 = vsel %vm510, %v7632, %v7664
      %v7693 = vsel %vm510, %v7634, %v7666
      %v7694 = vsel %vm510, %v7636, %v7668
      %v7695 = vsel %vm510, %v7638, %v7670
      %v7696 = vsel %vm510, %v7640, %v7672
      %v7697 = vsel %vm510, %v7642, %v7674
      %v7698 = vsel %vm510, %v7644, %v7676
      %v7699 = vsel %vm510, %v7646, %v7678
      %v7700 = vsel %vm510, %v7648, %v7680
      %v7701 = vsel %vm510, %v7650, %v7682
      %v7702 = vsel %vm510, %v7652, %v7684
      %v7703 = vsel %vm510, %v7654, %v7686
      %v7704 = vsel %vm510, %v7656, %v7688
      %v7705 = vsel %vm510, %v7658, %v7626
      %v7706 = vsel %vm510, %v7660, %v7628
      %v7707 = vsel %vm510, %v7662, %v7630
      %v7708 = vsel %vm510, %v7664, %v7632
      %v7709 = vsel %vm510, %v7666, %v7634
      %v7710 = vsel %vm510, %v7668, %v7636
      %v7711 = vsel %vm510, %v7670, %v7638
      %v7712 = vsel %vm510, %v7672, %v7640
      %v7713 = vsel %vm510, %v7674, %v7642
      %v7714 = vsel %vm510, %v7676, %v7644
      %v7715 = vsel %vm510, %v7678, %v7646
      %v7716 = vsel %vm510, %v7680, %v7648
      %v7717 = vsel %vm510, %v7682, %v7650
      %v7718 = vsel %vm510, %v7684, %v7652
      %v7719 = vsel %vm510, %v7686, %v7654
      %v7720 = vsel %vm510, %v7688, %v7656
      %s7721 = scalar_lea.vmem %s8, 12
      %v7722 = vld [vmem:[%s7721] sm:$0xf]
      %v7723 = vpack.c.bf16 %v7706, %v7705
      %v7724 = vpack.c.bf16 %v7690, %v7689
      %v7725 = vpack.c.bf16 %v7708, %v7707
      %v7726 = vpack.c.bf16 %v7692, %v7691
      %v7727 = vpack.c.bf16 %v7710, %v7709
      %v7728 = vpack.c.bf16 %v7694, %v7693
      %v7729 = vpack.c.bf16 %v7712, %v7711
      %v7730 = vpack.c.bf16 %v7696, %v7695
      %v7731 = vpack.c.bf16 %v7714, %v7713
      %v7732 = vpack.c.bf16 %v7698, %v7697
      %v7733 = vpack.c.bf16 %v7716, %v7715
      %v7734 = vpack.c.bf16 %v7700, %v7699
      %v7735 = vpack.c.bf16 %v7718, %v7717
      %v7736 = vpack.c.bf16 %v7702, %v7701
      %v7737 = vpack.c.bf16 %v7720, %v7719
      %v7738 = vpack.c.bf16 %v7704, %v7703
      %7739 = vmatpush.bf16.msra.mxu0 %v7737
      %7740 = vmatpush.bf16.msra.mxu0 %v7735
      %7741 = vmatpush.bf16.msra.mxu0 %v7733
      %7742 = vmatpush.bf16.msra.mxu0 %v7731
      %7743 = vmatpush.bf16.msra.mxu0 %v7729
      %7744 = vmatpush.bf16.msra.mxu0 %v7727
      %7745 = vmatpush.bf16.msra.mxu0 %v7725
      %7746 = vmatpush.bf16.msra.mxu0 %v7723
      %7747 = vmatmul.bf16.gmra.mxu0 %v7722
      %v7748 = vpop.f32.mrf.mxu0
      %v7749 = vadd.f32 0.0, %v7748
      %v7750 = vpop.f32.mrf.mxu0
      %7751 = vdwg.mxu0
      %7752 = vmatpush.bf16.msra.mxu0 %v7738
      %7753 = vmatpush.bf16.msra.mxu0 %v7736
      %7754 = vmatpush.bf16.msra.mxu0 %v7734
      %7755 = vmatpush.bf16.msra.mxu0 %v7732
      %7756 = vmatpush.bf16.msra.mxu0 %v7730
      %7757 = vmatpush.bf16.msra.mxu0 %v7728
      %7758 = vmatpush.bf16.msra.mxu0 %v7726
      %7759 = vmatpush.bf16.msra.mxu0 %v7724
      %7760 = vmatmul.bf16.gmra.mxu0 %v7722
      %v7761 = vpop.f32.mrf.mxu0
      %v7762 = vadd.f32 0.0, %v7761
      %v7763 = vpop.f32.mrf.mxu0
      %7764 = vdwg.mxu0
      %v7765 = vld [vmem:[%s513] ss:$8 sm:$0x3]
      %v7767 = vperm.slane %v7765, 0
      %v7768 = vperm.slane %v7765, 1
      %v7771 = vmul.f32 %v7749, %v7767
      %v7772 = vmul.f32 %v7762, %v7768
      %v7773 = vadd.f32 %v7623, %v7771
      %v7774 = vadd.f32 %v7624, %v7772
      %s7775 = scalar_lea.vmem %s8, 16
      %v7776 = vld [vmem:[%s7775] sm:$0xf]
      %v7777 = vpack.c.bf16 %v7146, %v7144
      %v7778 = vpack.c.bf16 %v7147, %v7145
      %v7779 = vpack.c.bf16 %v7150, %v7148
      %v7780 = vpack.c.bf16 %v7151, %v7149
      %v7781 = vpack.c.bf16 %v7154, %v7152
      %v7782 = vpack.c.bf16 %v7155, %v7153
      %v7783 = vpack.c.bf16 %v7158, %v7156
      %v7784 = vpack.c.bf16 %v7159, %v7157
      %v7785 = vpack.c.bf16 %v7162, %v7160
      %v7786 = vpack.c.bf16 %v7163, %v7161
      %v7787 = vpack.c.bf16 %v7166, %v7164
      %v7788 = vpack.c.bf16 %v7167, %v7165
      %v7789 = vpack.c.bf16 %v7170, %v7168
      %v7790 = vpack.c.bf16 %v7171, %v7169
      %v7791 = vpack.c.bf16 %v7174, %v7172
      %v7792 = vpack.c.bf16 %v7175, %v7173
      %7793 = vmatpush.bf16.msra.mxu0 %v7791
      %7794 = vmatpush.bf16.msra.mxu0 %v7789
      %7795 = vmatpush.bf16.msra.mxu0 %v7787
      %7796 = vmatpush.bf16.msra.mxu0 %v7785
      %7797 = vmatpush.bf16.msra.mxu0 %v7783
      %7798 = vmatpush.bf16.msra.mxu0 %v7781
      %7799 = vmatpush.bf16.msra.mxu0 %v7779
      %7800 = vmatpush.bf16.msra.mxu0 %v7777
      %7801 = vmatmul.bf16.gmra.mxu0 %v7776
      %v7802 = vpop.f32.mrf.mxu0
      %v7803 = vadd.f32 0.0, %v7802
      %v7804 = vpop.f32.mrf.mxu0
      %7805 = vdwg.mxu0
      %7806 = vmatpush.bf16.msra.mxu0 %v7792
      %7807 = vmatpush.bf16.msra.mxu0 %v7790
      %7808 = vmatpush.bf16.msra.mxu0 %v7788
      %7809 = vmatpush.bf16.msra.mxu0 %v7786
      %7810 = vmatpush.bf16.msra.mxu0 %v7784
      %7811 = vmatpush.bf16.msra.mxu0 %v7782
      %7812 = vmatpush.bf16.msra.mxu0 %v7780
      %7813 = vmatpush.bf16.msra.mxu0 %v7778
      %7814 = vmatmul.bf16.gmra.mxu0 %v7776
      %v7815 = vpop.f32.mrf.mxu0
      %v7816 = vadd.f32 0.0, %v7815
      %v7817 = vpop.f32.mrf.mxu0
      %7818 = vdwg.mxu0
      %v7819 = vadd.f32 %v7773, %v7803
      %v7820 = vadd.f32 %v7774, %v7816
      %7821 = vrot.lane.b32.xlu0 %v7144, 127
      %v7822 = vpop.permute.xlu0 %7821
      %7823 = vrot.lane.b32.xlu0 %v7146, 127
      %v7824 = vpop.permute.xlu0 %7823
      %7825 = vrot.lane.b32.xlu0 %v7148, 127
      %v7826 = vpop.permute.xlu0 %7825
      %7827 = vrot.lane.b32.xlu0 %v7150, 127
      %v7828 = vpop.permute.xlu0 %7827
      %7829 = vrot.lane.b32.xlu0 %v7152, 127
      %v7830 = vpop.permute.xlu0 %7829
      %7831 = vrot.lane.b32.xlu0 %v7154, 127
      %v7832 = vpop.permute.xlu0 %7831
      %7833 = vrot.lane.b32.xlu0 %v7156, 127
      %v7834 = vpop.permute.xlu0 %7833
      %7835 = vrot.lane.b32.xlu0 %v7158, 127
      %v7836 = vpop.permute.xlu0 %7835
      %7837 = vrot.lane.b32.xlu0 %v7160, 127
      %v7838 = vpop.permute.xlu0 %7837
      %7839 = vrot.lane.b32.xlu0 %v7162, 127
      %v7840 = vpop.permute.xlu0 %7839
      %7841 = vrot.lane.b32.xlu0 %v7164, 127
      %v7842 = vpop.permute.xlu0 %7841
      %7843 = vrot.lane.b32.xlu0 %v7166, 127
      %v7844 = vpop.permute.xlu0 %7843
      %7845 = vrot.lane.b32.xlu0 %v7168, 127
      %v7846 = vpop.permute.xlu0 %7845
      %7847 = vrot.lane.b32.xlu0 %v7170, 127
      %v7848 = vpop.permute.xlu0 %7847
      %7849 = vrot.lane.b32.xlu0 %v7172, 127
      %v7850 = vpop.permute.xlu0 %7849
      %7851 = vrot.lane.b32.xlu0 %v7174, 127
      %v7852 = vpop.permute.xlu0 %7851
      %7853 = vrot.lane.b32.xlu0 %v7145, 127
      %v7854 = vpop.permute.xlu0 %7853
      %7855 = vrot.lane.b32.xlu0 %v7147, 127
      %v7856 = vpop.permute.xlu0 %7855
      %7857 = vrot.lane.b32.xlu0 %v7149, 127
      %v7858 = vpop.permute.xlu0 %7857
      %7859 = vrot.lane.b32.xlu0 %v7151, 127
      %v7860 = vpop.permute.xlu0 %7859
      %7861 = vrot.lane.b32.xlu0 %v7153, 127
      %v7862 = vpop.permute.xlu0 %7861
      %7863 = vrot.lane.b32.xlu0 %v7155, 127
      %v7864 = vpop.permute.xlu0 %7863
      %7865 = vrot.lane.b32.xlu0 %v7157, 127
      %v7866 = vpop.permute.xlu0 %7865
      %7867 = vrot.lane.b32.xlu0 %v7159, 127
      %v7868 = vpop.permute.xlu0 %7867
      %7869 = vrot.lane.b32.xlu0 %v7161, 127
      %v7870 = vpop.permute.xlu0 %7869
      %7871 = vrot.lane.b32.xlu0 %v7163, 127
      %v7872 = vpop.permute.xlu0 %7871
      %7873 = vrot.lane.b32.xlu0 %v7165, 127
      %v7874 = vpop.permute.xlu0 %7873
      %7875 = vrot.lane.b32.xlu0 %v7167, 127
      %v7876 = vpop.permute.xlu0 %7875
      %7877 = vrot.lane.b32.xlu0 %v7169, 127
      %v7878 = vpop.permute.xlu0 %7877
      %7879 = vrot.lane.b32.xlu0 %v7171, 127
      %v7880 = vpop.permute.xlu0 %7879
      %7881 = vrot.lane.b32.xlu0 %v7173, 127
      %v7882 = vpop.permute.xlu0 %7881
      %7883 = vrot.lane.b32.xlu0 %v7175, 127
      %v7884 = vpop.permute.xlu0 %7883
      %v7885 = vsel %vm547, %v7822, %v7854
      %v7886 = vsel %vm547, %v7824, %v7856
      %v7887 = vsel %vm547, %v7826, %v7858
      %v7888 = vsel %vm547, %v7828, %v7860
      %v7889 = vsel %vm547, %v7830, %v7862
      %v7890 = vsel %vm547, %v7832, %v7864
      %v7891 = vsel %vm547, %v7834, %v7866
      %v7892 = vsel %vm547, %v7836, %v7868
      %v7893 = vsel %vm547, %v7838, %v7870
      %v7894 = vsel %vm547, %v7840, %v7872
      %v7895 = vsel %vm547, %v7842, %v7874
      %v7896 = vsel %vm547, %v7844, %v7876
      %v7897 = vsel %vm547, %v7846, %v7878
      %v7898 = vsel %vm547, %v7848, %v7880
      %v7899 = vsel %vm547, %v7850, %v7882
      %v7900 = vsel %vm547, %v7852, %v7884
      %v7901 = vsel %vm547, %v7854, %v7822
      %v7902 = vsel %vm547, %v7856, %v7824
      %v7903 = vsel %vm547, %v7858, %v7826
      %v7904 = vsel %vm547, %v7860, %v7828
      %v7905 = vsel %vm547, %v7862, %v7830
      %v7906 = vsel %vm547, %v7864, %v7832
      %v7907 = vsel %vm547, %v7866, %v7834
      %v7908 = vsel %vm547, %v7868, %v7836
      %v7909 = vsel %vm547, %v7870, %v7838
      %v7910 = vsel %vm547, %v7872, %v7840
      %v7911 = vsel %vm547, %v7874, %v7842
      %v7912 = vsel %vm547, %v7876, %v7844
      %v7913 = vsel %vm547, %v7878, %v7846
      %v7914 = vsel %vm547, %v7880, %v7848
      %v7915 = vsel %vm547, %v7882, %v7850
      %v7916 = vsel %vm547, %v7884, %v7852
      %s7917 = scalar_lea.vmem %s8, 20
      %v7918 = vld [vmem:[%s7917] sm:$0xf]
      %v7919 = vpack.c.bf16 %v7886, %v7885
      %v7920 = vpack.c.bf16 %v7902, %v7901
      %v7921 = vpack.c.bf16 %v7888, %v7887
      %v7922 = vpack.c.bf16 %v7904, %v7903
      %v7923 = vpack.c.bf16 %v7890, %v7889
      %v7924 = vpack.c.bf16 %v7906, %v7905
      %v7925 = vpack.c.bf16 %v7892, %v7891
      %v7926 = vpack.c.bf16 %v7908, %v7907
      %v7927 = vpack.c.bf16 %v7894, %v7893
      %v7928 = vpack.c.bf16 %v7910, %v7909
      %v7929 = vpack.c.bf16 %v7896, %v7895
      %v7930 = vpack.c.bf16 %v7912, %v7911
      %v7931 = vpack.c.bf16 %v7898, %v7897
      %v7932 = vpack.c.bf16 %v7914, %v7913
      %v7933 = vpack.c.bf16 %v7900, %v7899
      %v7934 = vpack.c.bf16 %v7916, %v7915
      %7935 = vmatpush.bf16.msra.mxu0 %v7933
      %7936 = vmatpush.bf16.msra.mxu0 %v7931
      %7937 = vmatpush.bf16.msra.mxu0 %v7929
      %7938 = vmatpush.bf16.msra.mxu0 %v7927
      %7939 = vmatpush.bf16.msra.mxu0 %v7925
      %7940 = vmatpush.bf16.msra.mxu0 %v7923
      %7941 = vmatpush.bf16.msra.mxu0 %v7921
      %7942 = vmatpush.bf16.msra.mxu0 %v7919
      %7943 = vmatmul.bf16.gmra.mxu0 %v7918
      %v7944 = vpop.f32.mrf.mxu0
      %v7945 = vadd.f32 0.0, %v7944
      %v7946 = vpop.f32.mrf.mxu0
      %7947 = vdwg.mxu0
      %7948 = vmatpush.bf16.msra.mxu0 %v7934
      %7949 = vmatpush.bf16.msra.mxu0 %v7932
      %7950 = vmatpush.bf16.msra.mxu0 %v7930
      %7951 = vmatpush.bf16.msra.mxu0 %v7928
      %7952 = vmatpush.bf16.msra.mxu0 %v7926
      %7953 = vmatpush.bf16.msra.mxu0 %v7924
      %7954 = vmatpush.bf16.msra.mxu0 %v7922
      %7955 = vmatpush.bf16.msra.mxu0 %v7920
      %7956 = vmatmul.bf16.gmra.mxu0 %v7918
      %v7957 = vpop.f32.mrf.mxu0
      %v7958 = vadd.f32 0.0, %v7957
      %v7959 = vpop.f32.mrf.mxu0
      %7960 = vdwg.mxu0
      %v7961 = vld [vmem:[%s550] ss:$8 sm:$0x3]
      %v7963 = vperm.slane %v7961, 0
      %v7964 = vperm.slane %v7961, 1
      %v7967 = vmul.f32 %v7945, %v7963
      %v7968 = vmul.f32 %v7958, %v7964
      %v7969 = vadd.f32 %v7819, %v7967
      %v7970 = vadd.f32 %v7820, %v7968
      %7971 = vrot.lane.b32.xlu0 %v7144, 113
      %v7972 = vpop.permute.xlu0 %7971
      %7973 = vrot.lane.b32.xlu0 %v7146, 113
      %v7974 = vpop.permute.xlu0 %7973
      %7975 = vrot.lane.b32.xlu0 %v7148, 113
      %v7976 = vpop.permute.xlu0 %7975
      %7977 = vrot.lane.b32.xlu0 %v7150, 113
      %v7978 = vpop.permute.xlu0 %7977
      %7979 = vrot.lane.b32.xlu0 %v7152, 113
      %v7980 = vpop.permute.xlu0 %7979
      %7981 = vrot.lane.b32.xlu0 %v7154, 113
      %v7982 = vpop.permute.xlu0 %7981
      %7983 = vrot.lane.b32.xlu0 %v7156, 113
      %v7984 = vpop.permute.xlu0 %7983
      %7985 = vrot.lane.b32.xlu0 %v7158, 113
      %v7986 = vpop.permute.xlu0 %7985
      %7987 = vrot.lane.b32.xlu0 %v7160, 113
      %v7988 = vpop.permute.xlu0 %7987
      %7989 = vrot.lane.b32.xlu0 %v7162, 113
      %v7990 = vpop.permute.xlu0 %7989
      %7991 = vrot.lane.b32.xlu0 %v7164, 113
      %v7992 = vpop.permute.xlu0 %7991
      %7993 = vrot.lane.b32.xlu0 %v7166, 113
      %v7994 = vpop.permute.xlu0 %7993
      %7995 = vrot.lane.b32.xlu0 %v7168, 113
      %v7996 = vpop.permute.xlu0 %7995
      %7997 = vrot.lane.b32.xlu0 %v7170, 113
      %v7998 = vpop.permute.xlu0 %7997
      %7999 = vrot.lane.b32.xlu0 %v7172, 113
      %v8000 = vpop.permute.xlu0 %7999
      %8001 = vrot.lane.b32.xlu0 %v7174, 113
      %v8002 = vpop.permute.xlu0 %8001
      %8003 = vrot.lane.b32.xlu0 %v7145, 113
      %v8004 = vpop.permute.xlu0 %8003
      %8005 = vrot.lane.b32.xlu0 %v7147, 113
      %v8006 = vpop.permute.xlu0 %8005
      %8007 = vrot.lane.b32.xlu0 %v7149, 113
      %v8008 = vpop.permute.xlu0 %8007
      %8009 = vrot.lane.b32.xlu0 %v7151, 113
      %v8010 = vpop.permute.xlu0 %8009
      %8011 = vrot.lane.b32.xlu0 %v7153, 113
      %v8012 = vpop.permute.xlu0 %8011
      %8013 = vrot.lane.b32.xlu0 %v7155, 113
      %v8014 = vpop.permute.xlu0 %8013
      %8015 = vrot.lane.b32.xlu0 %v7157, 113
      %v8016 = vpop.permute.xlu0 %8015
      %8017 = vrot.lane.b32.xlu0 %v7159, 113
      %v8018 = vpop.permute.xlu0 %8017
      %8019 = vrot.lane.b32.xlu0 %v7161, 113
      %v8020 = vpop.permute.xlu0 %8019
      %8021 = vrot.lane.b32.xlu0 %v7163, 113
      %v8022 = vpop.permute.xlu0 %8021
      %8023 = vrot.lane.b32.xlu0 %v7165, 113
      %v8024 = vpop.permute.xlu0 %8023
      %8025 = vrot.lane.b32.xlu0 %v7167, 113
      %v8026 = vpop.permute.xlu0 %8025
      %8027 = vrot.lane.b32.xlu0 %v7169, 113
      %v8028 = vpop.permute.xlu0 %8027
      %8029 = vrot.lane.b32.xlu0 %v7171, 113
      %v8030 = vpop.permute.xlu0 %8029
      %8031 = vrot.lane.b32.xlu0 %v7173, 113
      %v8032 = vpop.permute.xlu0 %8031
      %8033 = vrot.lane.b32.xlu0 %v7175, 113
      %v8034 = vpop.permute.xlu0 %8033
      %v8035 = vsel %vm578, %v7972, %v8004
      %v8036 = vsel %vm578, %v7974, %v8006
      %v8037 = vsel %vm578, %v7976, %v8008
      %v8038 = vsel %vm578, %v7978, %v8010
      %v8039 = vsel %vm578, %v7980, %v8012
      %v8040 = vsel %vm578, %v7982, %v8014
      %v8041 = vsel %vm578, %v7984, %v8016
      %v8042 = vsel %vm578, %v7986, %v8018
      %v8043 = vsel %vm578, %v7988, %v8020
      %v8044 = vsel %vm578, %v7990, %v8022
      %v8045 = vsel %vm578, %v7992, %v8024
      %v8046 = vsel %vm578, %v7994, %v8026
      %v8047 = vsel %vm578, %v7996, %v8028
      %v8048 = vsel %vm578, %v7998, %v8030
      %v8049 = vsel %vm578, %v8000, %v8032
      %v8050 = vsel %vm578, %v8002, %v8034
      %v8051 = vsel %vm578, %v8004, %v7972
      %v8052 = vsel %vm578, %v8006, %v7974
      %v8053 = vsel %vm578, %v8008, %v7976
      %v8054 = vsel %vm578, %v8010, %v7978
      %v8055 = vsel %vm578, %v8012, %v7980
      %v8056 = vsel %vm578, %v8014, %v7982
      %v8057 = vsel %vm578, %v8016, %v7984
      %v8058 = vsel %vm578, %v8018, %v7986
      %v8059 = vsel %vm578, %v8020, %v7988
      %v8060 = vsel %vm578, %v8022, %v7990
      %v8061 = vsel %vm578, %v8024, %v7992
      %v8062 = vsel %vm578, %v8026, %v7994
      %v8063 = vsel %vm578, %v8028, %v7996
      %v8064 = vsel %vm578, %v8030, %v7998
      %v8065 = vsel %vm578, %v8032, %v8000
      %v8066 = vsel %vm578, %v8034, %v8002
      %s8067 = scalar_lea.vmem %s8, 24
      %v8068 = vld [vmem:[%s8067] sm:$0xf]
      %v8069 = vpack.c.bf16 %v8036, %v8035
      %v8070 = vpack.c.bf16 %v8052, %v8051
      %v8071 = vpack.c.bf16 %v8038, %v8037
      %v8072 = vpack.c.bf16 %v8054, %v8053
      %v8073 = vpack.c.bf16 %v8040, %v8039
      %v8074 = vpack.c.bf16 %v8056, %v8055
      %v8075 = vpack.c.bf16 %v8042, %v8041
      %v8076 = vpack.c.bf16 %v8058, %v8057
      %v8077 = vpack.c.bf16 %v8044, %v8043
      %v8078 = vpack.c.bf16 %v8060, %v8059
      %v8079 = vpack.c.bf16 %v8046, %v8045
      %v8080 = vpack.c.bf16 %v8062, %v8061
      %v8081 = vpack.c.bf16 %v8048, %v8047
      %v8082 = vpack.c.bf16 %v8064, %v8063
      %v8083 = vpack.c.bf16 %v8050, %v8049
      %v8084 = vpack.c.bf16 %v8066, %v8065
      %8085 = vmatpush.bf16.msra.mxu0 %v8083
      %8086 = vmatpush.bf16.msra.mxu0 %v8081
      %8087 = vmatpush.bf16.msra.mxu0 %v8079
      %8088 = vmatpush.bf16.msra.mxu0 %v8077
      %8089 = vmatpush.bf16.msra.mxu0 %v8075
      %8090 = vmatpush.bf16.msra.mxu0 %v8073
      %8091 = vmatpush.bf16.msra.mxu0 %v8071
      %8092 = vmatpush.bf16.msra.mxu0 %v8069
      %8093 = vmatmul.bf16.gmra.mxu0 %v8068
      %v8094 = vpop.f32.mrf.mxu0
      %v8095 = vadd.f32 0.0, %v8094
      %v8096 = vpop.f32.mrf.mxu0
      %8097 = vdwg.mxu0
      %8098 = vmatpush.bf16.msra.mxu0 %v8084
      %8099 = vmatpush.bf16.msra.mxu0 %v8082
      %8100 = vmatpush.bf16.msra.mxu0 %v8080
      %8101 = vmatpush.bf16.msra.mxu0 %v8078
      %8102 = vmatpush.bf16.msra.mxu0 %v8076
      %8103 = vmatpush.bf16.msra.mxu0 %v8074
      %8104 = vmatpush.bf16.msra.mxu0 %v8072
      %8105 = vmatpush.bf16.msra.mxu0 %v8070
      %8106 = vmatmul.bf16.gmra.mxu0 %v8068
      %v8107 = vpop.f32.mrf.mxu0
      %v8108 = vadd.f32 0.0, %v8107
      %v8109 = vpop.f32.mrf.mxu0
      %8110 = vdwg.mxu0
      %v8111 = vld [vmem:[%s581] ss:$8 sm:$0x3]
      %v8113 = vperm.slane %v8111, 0
      %v8114 = vperm.slane %v8111, 1
      %v8117 = vmul.f32 %v8095, %v8113
      %v8118 = vmul.f32 %v8108, %v8114
      %v8119 = vadd.f32 %v7969, %v8117
      %v8120 = vadd.f32 %v7970, %v8118
      %8121 = vrot.lane.b32.xlu0 %v7144, 112
      %v8122 = vpop.permute.xlu0 %8121
      %8123 = vrot.lane.b32.xlu0 %v7146, 112
      %v8124 = vpop.permute.xlu0 %8123
      %8125 = vrot.lane.b32.xlu0 %v7148, 112
      %v8126 = vpop.permute.xlu0 %8125
      %8127 = vrot.lane.b32.xlu0 %v7150, 112
      %v8128 = vpop.permute.xlu0 %8127
      %8129 = vrot.lane.b32.xlu0 %v7152, 112
      %v8130 = vpop.permute.xlu0 %8129
      %8131 = vrot.lane.b32.xlu0 %v7154, 112
      %v8132 = vpop.permute.xlu0 %8131
      %8133 = vrot.lane.b32.xlu0 %v7156, 112
      %v8134 = vpop.permute.xlu0 %8133
      %8135 = vrot.lane.b32.xlu0 %v7158, 112
      %v8136 = vpop.permute.xlu0 %8135
      %8137 = vrot.lane.b32.xlu0 %v7160, 112
      %v8138 = vpop.permute.xlu0 %8137
      %8139 = vrot.lane.b32.xlu0 %v7162, 112
      %v8140 = vpop.permute.xlu0 %8139
      %8141 = vrot.lane.b32.xlu0 %v7164, 112
      %v8142 = vpop.permute.xlu0 %8141
      %8143 = vrot.lane.b32.xlu0 %v7166, 112
      %v8144 = vpop.permute.xlu0 %8143
      %8145 = vrot.lane.b32.xlu0 %v7168, 112
      %v8146 = vpop.permute.xlu0 %8145
      %8147 = vrot.lane.b32.xlu0 %v7170, 112
      %v8148 = vpop.permute.xlu0 %8147
      %8149 = vrot.lane.b32.xlu0 %v7172, 112
      %v8150 = vpop.permute.xlu0 %8149
      %8151 = vrot.lane.b32.xlu0 %v7174, 112
      %v8152 = vpop.permute.xlu0 %8151
      %8153 = vrot.lane.b32.xlu0 %v7145, 112
      %v8154 = vpop.permute.xlu0 %8153
      %8155 = vrot.lane.b32.xlu0 %v7147, 112
      %v8156 = vpop.permute.xlu0 %8155
      %8157 = vrot.lane.b32.xlu0 %v7149, 112
      %v8158 = vpop.permute.xlu0 %8157
      %8159 = vrot.lane.b32.xlu0 %v7151, 112
      %v8160 = vpop.permute.xlu0 %8159
      %8161 = vrot.lane.b32.xlu0 %v7153, 112
      %v8162 = vpop.permute.xlu0 %8161
      %8163 = vrot.lane.b32.xlu0 %v7155, 112
      %v8164 = vpop.permute.xlu0 %8163
      %8165 = vrot.lane.b32.xlu0 %v7157, 112
      %v8166 = vpop.permute.xlu0 %8165
      %8167 = vrot.lane.b32.xlu0 %v7159, 112
      %v8168 = vpop.permute.xlu0 %8167
      %8169 = vrot.lane.b32.xlu0 %v7161, 112
      %v8170 = vpop.permute.xlu0 %8169
      %8171 = vrot.lane.b32.xlu0 %v7163, 112
      %v8172 = vpop.permute.xlu0 %8171
      %8173 = vrot.lane.b32.xlu0 %v7165, 112
      %v8174 = vpop.permute.xlu0 %8173
      %8175 = vrot.lane.b32.xlu0 %v7167, 112
      %v8176 = vpop.permute.xlu0 %8175
      %8177 = vrot.lane.b32.xlu0 %v7169, 112
      %v8178 = vpop.permute.xlu0 %8177
      %8179 = vrot.lane.b32.xlu0 %v7171, 112
      %v8180 = vpop.permute.xlu0 %8179
      %8181 = vrot.lane.b32.xlu0 %v7173, 112
      %v8182 = vpop.permute.xlu0 %8181
      %8183 = vrot.lane.b32.xlu0 %v7175, 112
      %v8184 = vpop.permute.xlu0 %8183
      %v8185 = vsel %vm607, %v8122, %v8154
      %v8186 = vsel %vm607, %v8124, %v8156
      %v8187 = vsel %vm607, %v8126, %v8158
      %v8188 = vsel %vm607, %v8128, %v8160
      %v8189 = vsel %vm607, %v8130, %v8162
      %v8190 = vsel %vm607, %v8132, %v8164
      %v8191 = vsel %vm607, %v8134, %v8166
      %v8192 = vsel %vm607, %v8136, %v8168
      %v8193 = vsel %vm607, %v8138, %v8170
      %v8194 = vsel %vm607, %v8140, %v8172
      %v8195 = vsel %vm607, %v8142, %v8174
      %v8196 = vsel %vm607, %v8144, %v8176
      %v8197 = vsel %vm607, %v8146, %v8178
      %v8198 = vsel %vm607, %v8148, %v8180
      %v8199 = vsel %vm607, %v8150, %v8182
      %v8200 = vsel %vm607, %v8152, %v8184
      %v8201 = vsel %vm607, %v8154, %v8122
      %v8202 = vsel %vm607, %v8156, %v8124
      %v8203 = vsel %vm607, %v8158, %v8126
      %v8204 = vsel %vm607, %v8160, %v8128
      %v8205 = vsel %vm607, %v8162, %v8130
      %v8206 = vsel %vm607, %v8164, %v8132
      %v8207 = vsel %vm607, %v8166, %v8134
      %v8208 = vsel %vm607, %v8168, %v8136
      %v8209 = vsel %vm607, %v8170, %v8138
      %v8210 = vsel %vm607, %v8172, %v8140
      %v8211 = vsel %vm607, %v8174, %v8142
      %v8212 = vsel %vm607, %v8176, %v8144
      %v8213 = vsel %vm607, %v8178, %v8146
      %v8214 = vsel %vm607, %v8180, %v8148
      %v8215 = vsel %vm607, %v8182, %v8150
      %v8216 = vsel %vm607, %v8184, %v8152
      %s8217 = scalar_lea.vmem %s8, 28
      %v8218 = vld [vmem:[%s8217] sm:$0xf]
      %v8219 = vpack.c.bf16 %v8186, %v8185
      %v8220 = vpack.c.bf16 %v8202, %v8201
      %v8221 = vpack.c.bf16 %v8188, %v8187
      %v8222 = vpack.c.bf16 %v8204, %v8203
      %v8223 = vpack.c.bf16 %v8190, %v8189
      %v8224 = vpack.c.bf16 %v8206, %v8205
      %v8225 = vpack.c.bf16 %v8192, %v8191
      %v8226 = vpack.c.bf16 %v8208, %v8207
      %v8227 = vpack.c.bf16 %v8194, %v8193
      %v8228 = vpack.c.bf16 %v8210, %v8209
      %v8229 = vpack.c.bf16 %v8196, %v8195
      %v8230 = vpack.c.bf16 %v8212, %v8211
      %v8231 = vpack.c.bf16 %v8198, %v8197
      %v8232 = vpack.c.bf16 %v8214, %v8213
      %v8233 = vpack.c.bf16 %v8200, %v8199
      %v8234 = vpack.c.bf16 %v8216, %v8215
      %8235 = vmatpush.bf16.msra.mxu0 %v8233
      %8236 = vmatpush.bf16.msra.mxu0 %v8231
      %8237 = vmatpush.bf16.msra.mxu0 %v8229
      %8238 = vmatpush.bf16.msra.mxu0 %v8227
      %8239 = vmatpush.bf16.msra.mxu0 %v8225
      %8240 = vmatpush.bf16.msra.mxu0 %v8223
      %8241 = vmatpush.bf16.msra.mxu0 %v8221
      %8242 = vmatpush.bf16.msra.mxu0 %v8219
      %8243 = vmatmul.bf16.gmra.mxu0 %v8218
      %v8244 = vpop.f32.mrf.mxu0
      %v8245 = vadd.f32 0.0, %v8244
      %v8246 = vpop.f32.mrf.mxu0
      %8247 = vdwg.mxu0
      %8248 = vmatpush.bf16.msra.mxu0 %v8234
      %8249 = vmatpush.bf16.msra.mxu0 %v8232
      %8250 = vmatpush.bf16.msra.mxu0 %v8230
      %8251 = vmatpush.bf16.msra.mxu0 %v8228
      %8252 = vmatpush.bf16.msra.mxu0 %v8226
      %8253 = vmatpush.bf16.msra.mxu0 %v8224
      %8254 = vmatpush.bf16.msra.mxu0 %v8222
      %8255 = vmatpush.bf16.msra.mxu0 %v8220
      %8256 = vmatmul.bf16.gmra.mxu0 %v8218
      %v8257 = vpop.f32.mrf.mxu0
      %v8258 = vadd.f32 0.0, %v8257
      %v8259 = vpop.f32.mrf.mxu0
      %8260 = vdwg.mxu0
      %v8261 = vld [vmem:[%s610] ss:$8 sm:$0x3]
      %v8263 = vperm.slane %v8261, 0
      %v8264 = vperm.slane %v8261, 1
      %v8267 = vmul.f32 %v8245, %v8263
      %v8268 = vmul.f32 %v8258, %v8264
      %v8269 = vadd.f32 %v8119, %v8267
      %v8270 = vadd.f32 %v8120, %v8268
      %8271 = vrot.lane.b32.xlu0 %v7144, 111
      %v8272 = vpop.permute.xlu0 %8271
      %8273 = vrot.lane.b32.xlu0 %v7146, 111
      %v8274 = vpop.permute.xlu0 %8273
      %8275 = vrot.lane.b32.xlu0 %v7148, 111
      %v8276 = vpop.permute.xlu0 %8275
      %8277 = vrot.lane.b32.xlu0 %v7150, 111
      %v8278 = vpop.permute.xlu0 %8277
      %8279 = vrot.lane.b32.xlu0 %v7152, 111
      %v8280 = vpop.permute.xlu0 %8279
      %8281 = vrot.lane.b32.xlu0 %v7154, 111
      %v8282 = vpop.permute.xlu0 %8281
      %8283 = vrot.lane.b32.xlu0 %v7156, 111
      %v8284 = vpop.permute.xlu0 %8283
      %8285 = vrot.lane.b32.xlu0 %v7158, 111
      %v8286 = vpop.permute.xlu0 %8285
      %8287 = vrot.lane.b32.xlu0 %v7160, 111
      %v8288 = vpop.permute.xlu0 %8287
      %8289 = vrot.lane.b32.xlu0 %v7162, 111
      %v8290 = vpop.permute.xlu0 %8289
      %8291 = vrot.lane.b32.xlu0 %v7164, 111
      %v8292 = vpop.permute.xlu0 %8291
      %8293 = vrot.lane.b32.xlu0 %v7166, 111
      %v8294 = vpop.permute.xlu0 %8293
      %8295 = vrot.lane.b32.xlu0 %v7168, 111
      %v8296 = vpop.permute.xlu0 %8295
      %8297 = vrot.lane.b32.xlu0 %v7170, 111
      %v8298 = vpop.permute.xlu0 %8297
      %8299 = vrot.lane.b32.xlu0 %v7172, 111
      %v8300 = vpop.permute.xlu0 %8299
      %8301 = vrot.lane.b32.xlu0 %v7174, 111
      %v8302 = vpop.permute.xlu0 %8301
      %8303 = vrot.lane.b32.xlu0 %v7145, 111
      %v8304 = vpop.permute.xlu0 %8303
      %8305 = vrot.lane.b32.xlu0 %v7147, 111
      %v8306 = vpop.permute.xlu0 %8305
      %8307 = vrot.lane.b32.xlu0 %v7149, 111
      %v8308 = vpop.permute.xlu0 %8307
      %8309 = vrot.lane.b32.xlu0 %v7151, 111
      %v8310 = vpop.permute.xlu0 %8309
      %8311 = vrot.lane.b32.xlu0 %v7153, 111
      %v8312 = vpop.permute.xlu0 %8311
      %8313 = vrot.lane.b32.xlu0 %v7155, 111
      %v8314 = vpop.permute.xlu0 %8313
      %8315 = vrot.lane.b32.xlu0 %v7157, 111
      %v8316 = vpop.permute.xlu0 %8315
      %8317 = vrot.lane.b32.xlu0 %v7159, 111
      %v8318 = vpop.permute.xlu0 %8317
      %8319 = vrot.lane.b32.xlu0 %v7161, 111
      %v8320 = vpop.permute.xlu0 %8319
      %8321 = vrot.lane.b32.xlu0 %v7163, 111
      %v8322 = vpop.permute.xlu0 %8321
      %8323 = vrot.lane.b32.xlu0 %v7165, 111
      %v8324 = vpop.permute.xlu0 %8323
      %8325 = vrot.lane.b32.xlu0 %v7167, 111
      %v8326 = vpop.permute.xlu0 %8325
      %8327 = vrot.lane.b32.xlu0 %v7169, 111
      %v8328 = vpop.permute.xlu0 %8327
      %8329 = vrot.lane.b32.xlu0 %v7171, 111
      %v8330 = vpop.permute.xlu0 %8329
      %8331 = vrot.lane.b32.xlu0 %v7173, 111
      %v8332 = vpop.permute.xlu0 %8331
      %8333 = vrot.lane.b32.xlu0 %v7175, 111
      %v8334 = vpop.permute.xlu0 %8333
      %v8335 = vsel %vm636, %v8272, %v8304
      %v8336 = vsel %vm636, %v8274, %v8306
      %v8337 = vsel %vm636, %v8276, %v8308
      %v8338 = vsel %vm636, %v8278, %v8310
      %v8339 = vsel %vm636, %v8280, %v8312
      %v8340 = vsel %vm636, %v8282, %v8314
      %v8341 = vsel %vm636, %v8284, %v8316
      %v8342 = vsel %vm636, %v8286, %v8318
      %v8343 = vsel %vm636, %v8288, %v8320
      %v8344 = vsel %vm636, %v8290, %v8322
      %v8345 = vsel %vm636, %v8292, %v8324
      %v8346 = vsel %vm636, %v8294, %v8326
      %v8347 = vsel %vm636, %v8296, %v8328
      %v8348 = vsel %vm636, %v8298, %v8330
      %v8349 = vsel %vm636, %v8300, %v8332
      %v8350 = vsel %vm636, %v8302, %v8334
      %v8351 = vsel %vm636, %v8304, %v8272
      %v8352 = vsel %vm636, %v8306, %v8274
      %v8353 = vsel %vm636, %v8308, %v8276
      %v8354 = vsel %vm636, %v8310, %v8278
      %v8355 = vsel %vm636, %v8312, %v8280
      %v8356 = vsel %vm636, %v8314, %v8282
      %v8357 = vsel %vm636, %v8316, %v8284
      %v8358 = vsel %vm636, %v8318, %v8286
      %v8359 = vsel %vm636, %v8320, %v8288
      %v8360 = vsel %vm636, %v8322, %v8290
      %v8361 = vsel %vm636, %v8324, %v8292
      %v8362 = vsel %vm636, %v8326, %v8294
      %v8363 = vsel %vm636, %v8328, %v8296
      %v8364 = vsel %vm636, %v8330, %v8298
      %v8365 = vsel %vm636, %v8332, %v8300
      %v8366 = vsel %vm636, %v8334, %v8302
      %s8367 = scalar_lea.vmem %s8, 32
      %v8368 = vld [vmem:[%s8367] sm:$0xf]
      %v8369 = vpack.c.bf16 %v8336, %v8335
      %v8370 = vpack.c.bf16 %v8352, %v8351
      %v8371 = vpack.c.bf16 %v8338, %v8337
      %v8372 = vpack.c.bf16 %v8354, %v8353
      %v8373 = vpack.c.bf16 %v8340, %v8339
      %v8374 = vpack.c.bf16 %v8356, %v8355
      %v8375 = vpack.c.bf16 %v8342, %v8341
      %v8376 = vpack.c.bf16 %v8358, %v8357
      %v8377 = vpack.c.bf16 %v8344, %v8343
      %v8378 = vpack.c.bf16 %v8360, %v8359
      %v8379 = vpack.c.bf16 %v8346, %v8345
      %v8380 = vpack.c.bf16 %v8362, %v8361
      %v8381 = vpack.c.bf16 %v8348, %v8347
      %v8382 = vpack.c.bf16 %v8364, %v8363
      %v8383 = vpack.c.bf16 %v8350, %v8349
      %v8384 = vpack.c.bf16 %v8366, %v8365
      %8385 = vmatpush.bf16.msra.mxu0 %v8383
      %8386 = vmatpush.bf16.msra.mxu0 %v8381
      %8387 = vmatpush.bf16.msra.mxu0 %v8379
      %8388 = vmatpush.bf16.msra.mxu0 %v8377
      %8389 = vmatpush.bf16.msra.mxu0 %v8375
      %8390 = vmatpush.bf16.msra.mxu0 %v8373
      %8391 = vmatpush.bf16.msra.mxu0 %v8371
      %8392 = vmatpush.bf16.msra.mxu0 %v8369
      %8393 = vmatmul.bf16.gmra.mxu0 %v8368
      %v8394 = vpop.f32.mrf.mxu0
      %v8395 = vadd.f32 0.0, %v8394
      %v8396 = vpop.f32.mrf.mxu0
      %8397 = vdwg.mxu0
      %8398 = vmatpush.bf16.msra.mxu0 %v8384
      %8399 = vmatpush.bf16.msra.mxu0 %v8382
      %8400 = vmatpush.bf16.msra.mxu0 %v8380
      %8401 = vmatpush.bf16.msra.mxu0 %v8378
      %8402 = vmatpush.bf16.msra.mxu0 %v8376
      %8403 = vmatpush.bf16.msra.mxu0 %v8374
      %8404 = vmatpush.bf16.msra.mxu0 %v8372
      %8405 = vmatpush.bf16.msra.mxu0 %v8370
      %8406 = vmatmul.bf16.gmra.mxu0 %v8368
      %v8407 = vpop.f32.mrf.mxu0
      %v8408 = vadd.f32 0.0, %v8407
      %v8409 = vpop.f32.mrf.mxu0
      %8410 = vdwg.mxu0
      %v8411 = vld [vmem:[%s639] ss:$8 sm:$0x3]
      %v8413 = vperm.slane %v8411, 0
      %v8414 = vperm.slane %v8411, 1
      %v8417 = vmul.f32 %v8395, %v8413
      %v8418 = vmul.f32 %v8408, %v8414
      %v8419 = vadd.f32 %v8269, %v8417
      %v8420 = vadd.f32 %v8270, %v8418
      %v8421 = vld [vmem:[%s9] sm:$0x7]
      %8423 = vset.pattern.permute.xlu0 0
      %8424 = vperm.xlu0 %8423, %v8421
      %v8425 = vpop.permute.xlu0 %8424
      %v8427 = vadd.f32 %v8419, %v8425
      %v8428 = vadd.f32 %v8420, %v8425
      %8429 = vst [vmem:[#allocation1] ss:$2 sm:$0xff] %v415
      %v8430 = vld.sshfl [vmem:[#allocation1] sm:$0xff pattern:$0x75316420]
      %v8431 = vld.sshfl [vmem:[#allocation1 + $0x8] sm:$0xff pattern:$0x75316420]
      %v8434 = vadd.f32 %v8427, %v8430
      %v8435 = vadd.f32 %v8428, %v8431
      %v8438 = vrot.slane %v8435, 4
      %vm8439 = vcmask 1043456
      %v8440 = vsel %vm8439, %v8434, %v8438
      %8442 = vst [vmem:[%s413] sm:$0x77] %v8440
      %p8443 = scmp.lt.s32.totalorder %s23, 1
      %s8444 = scalar_select %p8443, %s23, 1
      %s8445 = smul.addr %s8444, 2
      %s8446 = smul.addr %s8445, 4
      %s8447 = scalar_lea.vmem %s12, %s8446
      // Predicated region
      $region69: #{deblur_forward.1} parent=67 // pred_check
        %p8448 = pneg %p298
      $region70: #{deblur_forward.1} parent=67 // pred_check_branch
        %8450 = sbr.rel (%p8448) target = $region72
      $region71: #{deblur_forward.1} parent=67 // pred_region
        _
      $region72: #{deblur_forward.1} parent=67 // pred_fallthru
        _
    $region68: #{deblur_forward.1} parent=5 // pred_fallthru
      _
    %p8451 = scmp.le.s32.totalorder 2, %s18
    // Predicated region
    $region73: #{deblur_forward.1} parent=5 // pred_check
      %p8452 = pneg %p8451
    $region74: #{deblur_forward.1} parent=5 // pred_check_branch
      %8454 = sbr.rel (%p8452) target = $region76
    $region75: #{deblur_forward.1} parent=5 // pred_region
      %s8455 = ssub.s32 %s18, 2
      // Predicated region
      $region77: #{deblur_forward.1} parent=75 // pred_check
        %p8456 = pneg %p304
      $region78: #{deblur_forward.1} parent=75 // pred_check_branch
        %8458 = sbr.rel (%p8456) target = $region80
      $region79: #{deblur_forward.1} parent=75 // pred_region
        %p8459 = scmp.lt.s32.totalorder %s24, 1
        %s8460 = scalar_select %p8459, %s24, 1
        %s8461 = smul.addr %s8460, 2
        %s8462 = smul.addr %s8461, 4
        %s8463 = scalar_lea.vmem %s12, %s8462
      $region80: #{deblur_forward.1} parent=75 // pred_fallthru
        _
    $region76: #{deblur_forward.1} parent=5 // pred_fallthru
      _
  $region6: #{deblur_forward.1} parent=0 // loop_footer
    %s22 = sadd.s32 1, %s18
  $region7: #{deblur_forward.1} parent=0 // loop_footer_branch
    %17 = sbr.rel target = $region3
  $region8: #{deblur_forward.1} parent=0 // loop_exit
    _

</llo_original>
